<compile_context>
chip_gen: v7x
topology: tpu7x:2x2x1
jax: 0.10.0
libtpu: 0.0.40
codegen_flags: <defaults>
</compile_context>

<pallas_src>
import functools

import jax
import jax.numpy as jnp
from jax import lax
from jax.experimental import pallas as pl
from jax.experimental.pallas import tpu as pltpu  # noqa: F401  (TPU backend)


# --------------------------------------------------------------------------
# Helpers copied from / matching the PyTorch module.
# --------------------------------------------------------------------------
def get_conv_mp_out_size(in_size, last_layer, mps):
    size = in_size
    for mp in mps:
        size = round((size - mp["kernel_size"]) / mp["stride"] + 1)
    size = size + 1 if size % 2 != 0 else size
    return int(size * last_layer["out_channels"])


def _pool_sizes(length):
    # Static shapes through conv1(k3,p1) -> maxpool(3,2) -> conv2(k2,p1) -> maxpool(2,2).
    p1 = (length - 3) // 2 + 1          # maxpool1 (floor mode)
    l2 = p1 + 1                         # conv2: L + 2*pad - k + 1
    p2 = (l2 - 2) // 2 + 1              # maxpool2 (floor mode)
    return p1, l2, p2


# --------------------------------------------------------------------------
# Kernel 1: fused GatedGraphConv (all layers, h stays in VMEM).
# --------------------------------------------------------------------------
def _ggc_fused_kernel(adj_t_ref, x_ref, wbig_ref, wih_ref, bih_ref, bhh_ref,
                      o_ref, *, hidden, num_layers, emb):
    f32 = jnp.float32
    H = hidden
    n_nodes = x_ref.shape[0]

    adj_t = adj_t_ref[...]                 # (N, N)
    wih = wih_ref[...]                     # (H, 3H)
    bih = bih_ref[...]                     # (1, 3H)
    bhh = bhh_ref[...]                     # (1, 3H)

    # GatedGraphConv zero-pads the input features up to out_channels.
    x = x_ref[...]
    if H > emb:
        h = jnp.concatenate([x, jnp.zeros((n_nodes, H - emb), f32)], axis=1)
    else:
        h = x

    # TODO(synk): for large num_layers switch to lax.fori_loop / a grid axis; with
    # num_layers=2 a static unroll keeps everything VMEM-resident and zero-risk.
    for layer in range(num_layers):
        # One MXU pass computes both h@W_layer and the GRU hidden gates:
        # wbig[layer] = [W_layer | Whh^T]  -> big = [hW | gh_raw]
        big = jnp.dot(h, wbig_ref[layer], preferred_element_type=f32)   # (N, 4H)
        hw = big[:, :H]
        gh = big[:, H:] + bhh                                           # (N, 3H)
        m = jnp.dot(adj_t, hw, preferred_element_type=f32)              # sum aggregation
        gi = jnp.dot(m, wih, preferred_element_type=f32) + bih          # (N, 3H)
        r = jax.nn.sigmoid(gi[:, 0:H] + gh[:, 0:H])
        z = jax.nn.sigmoid(gi[:, H:2 * H] + gh[:, H:2 * H])
        ngate = jnp.tanh(gi[:, 2 * H:] + r * gh[:, 2 * H:])
        h = (1.0 - z) * ngate + z * h

    o_ref[...] = h


# --------------------------------------------------------------------------
# Kernel 2: fused Readout (both branches + mlp heads + final multiply).
# --------------------------------------------------------------------------
def _readout_fused_kernel(h_ref, x_ref, w1_ref, b1_ref, w2_ref, b2_ref,
                          m1w_ref, m1b_ref, m2w_ref, m2b_ref, o_ref,
                          *, max_nodes, batch, hidden, emb):
    f32 = jnp.float32

    b1 = b1_ref[...]                       # (128, 1)
    b2 = b2_ref[...]                       # (16, 1)
    w1 = [w1_ref[k] for k in range(3)]     # each (128, 8)   = conv1_w[:, :, k]
    w2 = [w2_ref[k] for k in range(2)]     # each (16, 128)  = conv2_w[:, :, k]
    m1w = m1w_ref[...]                     # (16, 75)  mlp1 weight in (C, L) grid
    m2w0 = m2w_ref[0]                      # (16, 64)
    m2w1 = m2w_ref[1]                      # (16, 64)
    m1b = m1b_ref[...]                     # (1, 1)
    m2b = m2b_ref[...]                     # (1, 2)

    def decim(n_in, n_out):
        # 0/1 selection matrix: (X @ decim)[:, j] == X[:, 2*j]   (stride-2 pooling pick)
        r = lax.broadcasted_iota(jnp.int32, (n_in, n_out), 0)
        c = lax.broadcasted_iota(jnp.int32, (n_in, n_out), 1)
        return (r == 2 * c).astype(f32)

    d_z = hidden + emb
    d_y = hidden
    p1z, l2z, _ = _pool_sizes(d_z)
    p1y, l2y, _ = _pool_sizes(d_y)
    dec1_z = decim(d_z - 2, p1z)
    dec2_z = decim(l2z - 1, _pool_sizes(d_z)[2])
    dec1_y = decim(d_y - 2, p1y)
    dec2_y = decim(l2y - 1, _pool_sizes(d_y)[2])

    def conv_pool(feat, length, dec1, dec2):
        # feat: (max_nodes, length) channels-first Conv1d input for one graph.
        p1_len, l2, _ = _pool_sizes(length)
        zc = jnp.zeros((max_nodes, 1), f32)
        fp = jnp.concatenate([zc, feat, zc], axis=1)                       # pad=1
        c1 = (jnp.dot(w1[0], fp[:, 0:length], preferred_element_type=f32)
              + jnp.dot(w1[1], fp[:, 1:length + 1], preferred_element_type=f32)
              + jnp.dot(w1[2], fp[:, 2:length + 2], preferred_element_type=f32)
              + b1)
        c1 = jnp.maximum(c1, 0.0)                                          # (128, L)
        # maxpool1 (k=3, s=2): sliding 3-max then pick every 2nd column.
        m1 = jnp.maximum(jnp.maximum(c1[:, 0:length - 2], c1[:, 1:length - 1]),
                         c1[:, 2:length])
        p1 = jnp.dot(m1, dec1, preferred_element_type=f32)                 # (128, P1)
        zc2 = jnp.zeros((128, 1), f32)
        pp = jnp.concatenate([zc2, p1, zc2], axis=1)                       # pad=1
        c2 = (jnp.dot(w2[0], pp[:, 0:l2], preferred_element_type=f32)
              + jnp.dot(w2[1], pp[:, 1:l2 + 1], preferred_element_type=f32)
              + b2)
        c2 = jnp.maximum(c2, 0.0)                                          # (16, L2)
        # maxpool2 (k=2, s=2)
        m2 = jnp.maximum(c2[:, 0:l2 - 1], c2[:, 1:l2])
        return jnp.dot(m2, dec2, preferred_element_type=f32)               # (16, P2)

    def sum_all(v):                         # full reduce -> (1, 1)
        return jnp.sum(jnp.sum(v, axis=1, keepdims=True), axis=0, keepdims=True)

    rows = []
    for g in range(batch):
        lo = g * max_nodes
        hb = h_ref[lo:lo + max_nodes, :]                                   # (8, 256)
        xb = x_ref[lo:lo + max_nodes, :]                                   # (8, 44)
        zfeat = jnp.concatenate([hb, xb], axis=1)                          # (8, 300)

        p2z = conv_pool(zfeat, d_z, dec1_z, dec2_z)                        # (16, 75)
        p2y = conv_pool(hb, d_y, dec1_y, dec2_y)                           # (16, 64)

        # mlp heads: PyTorch flatten is (C, L) channel-major, matching p2* layout.
        oz = sum_all(p2z * m1w) + m1b                                      # (1, 1)
        oy = jnp.concatenate([sum_all(p2y * m2w0),
                              sum_all(p2y * m2w1)], axis=1) + m2b          # (1, 2)
        rows.append(oz * oy)                                               # broadcast mul

    o_ref[...] = jnp.concatenate(rows, axis=0)                             # (B, 2)


# --------------------------------------------------------------------------
# Parameters (PyTorch layouts) and one-time kernel-layout preparation.
# --------------------------------------------------------------------------
def init_params(key, emb_size, hidden, num_layers, max_nodes, mlp2_in):
    ks = jax.random.split(key, 13)

    def rnd(k, shape, scale=0.1):
        return scale * jax.random.normal(k, shape, dtype=jnp.float32)

    return dict(
        ggc_w=rnd(ks[0], (num_layers, hidden, hidden)),
        gru_wih=rnd(ks[1], (3 * hidden, hidden)),   # PyTorch GRUCell layout (3H, H)
        gru_whh=rnd(ks[2], (3 * hidden, hidden)),
        gru_bih=rnd(ks[3], (3 * hidden,)),
        gru_bhh=rnd(ks[4], (3 * hidden,)),
        conv1_w=rnd(ks[5], (128, max_nodes, 3)),    # Conv1d (Cout, Cin, K)
        conv1_b=rnd(ks[6], (128,)),
        conv2_w=rnd(ks[7], (16, 128, 2)),
        conv2_b=rnd(ks[8], (16,)),
        mlp1_w=rnd(ks[9], (1, 1200)),               # PyTorch Linear layout (out, in)
        mlp1_b=rnd(ks[10], (1,)),
        mlp2_w=rnd(ks[11], (2, mlp2_in)),
        mlp2_b=rnd(ks[12], (2,)),
    )


def prepare_params(p, *, num_layers, hidden, emb):
    # One-time re-layout of the PyTorch-format weights into kernel-friendly form.
    _, _, p2z = _pool_sizes(hidden + emb)
    _, _, p2y = _pool_sizes(hidden)
    assert 16 * p2z == p["mlp1_w"].shape[1], "mlp1 expects 1200 inputs (hidden+emb==300)"
    assert 16 * p2y == p["mlp2_w"].shape[1], "mlp2 input size mismatch"

    whh_t = p["gru_whh"].T                                              # (H, 3H)
    wbig = jnp.concatenate(
        [p["ggc_w"],
         jnp.broadcast_to(whh_t[None], (num_layers, hidden, 3 * hidden))],
        axis=2)                                                         # (L, H, 4H)
    return dict(
        ggc_wbig=wbig,
        gru_wih_t=p["gru_wih"].T,                                       # (H, 3H)
        gru_bih=p["gru_bih"].reshape(1, -1),
        gru_bhh=p["gru_bhh"].reshape(1, -1),
        conv1_w=jnp.transpose(p["conv1_w"], (2, 0, 1)),                 # (3, 128, 8)
        conv1_b=p["conv1_b"].reshape(-1, 1),                            # (128, 1)
        conv2_w=jnp.transpose(p["conv2_w"], (2, 0, 1)),                 # (2, 16, 128)
        conv2_b=p["conv2_b"].reshape(-1, 1),                            # (16, 1)
        mlp1_w=p["mlp1_w"].reshape(16, p2z),                            # (C, L) grid
        mlp1_b=p["mlp1_b"].reshape(1, 1),
        mlp2_w=p["mlp2_w"].reshape(2, 16, p2y),
        mlp2_b=p["mlp2_b"].reshape(1, 2),
    )


# --------------------------------------------------------------------------
# Forward pass: 2 fused pallas_calls + tiny XLA glue for the edge scatter.
# --------------------------------------------------------------------------
def net_forward(prep, x, edge_index, *, max_nodes, hidden, num_layers):
    n_nodes, emb = x.shape
    batch = n_nodes // max_nodes

    # TODO(synk): sparse edge scatter is realized as a dense adjacency matmul
    # (exact for 'add' aggregation); built with an XLA scatter-add since Pallas
    # has no clean small-scatter primitive.  adj_t[i, j] = #edges j -> i.
    src, dst = edge_index[0], edge_index[1]
    adj_t = jnp.zeros((n_nodes, n_nodes), jnp.float32).at[dst, src].add(1.0)

    h = pl.pallas_call(
        functools.partial(_ggc_fused_kernel, hidden=hidden,
                          num_layers=num_layers, emb=emb),
        out_shape=jax.ShapeDtypeStruct((n_nodes, hidden), jnp.float32),
    )(adj_t, x, prep["ggc_wbig"], prep["gru_wih_t"], prep["gru_bih"], prep["gru_bhh"])

    out = pl.pallas_call(
        functools.partial(_readout_fused_kernel, max_nodes=max_nodes, batch=batch,
                          hidden=hidden, emb=emb),
        out_shape=jax.ShapeDtypeStruct((batch, 2), jnp.float32),
    )(h, x, prep["conv1_w"], prep["conv1_b"], prep["conv2_w"], prep["conv2_b"],
      prep["mlp1_w"], prep["mlp1_b"], prep["mlp2_w"], prep["mlp2_b"])
    return out


# --------------------------------------------------------------------------
if __name__ == "__main__":
    emb_size = 44          # data.x feature size
    hidden = 256           # gated_graph_conv out_channels (>= emb_size, +emb == 300)
    num_layers = 2
    max_nodes = 8
    batch = 2
    num_nodes = batch * max_nodes
    num_edges = 40

    conv2_size = {"in_channels": 128, "out_channels": 16, "kernel_size": 2, "padding": 1}
    maxp1_size = {"kernel_size": 3, "stride": 2}
    maxp2_size = {"kernel_size": 2, "stride": 2}
    mlp2_in = get_conv_mp_out_size(hidden, conv2_size, [maxp1_size, maxp2_size])

    key = jax.random.PRNGKey(0)
    k_x, k_src, k_dst, k_p = jax.random.split(key, 4)
    x = jax.random.normal(k_x, (num_nodes, emb_size), dtype=jnp.float32)
    src = jax.random.randint(k_src, (num_edges,), 0, num_nodes, dtype=jnp.int32)
    dst = jax.random.randint(k_dst, (num_edges,), 0, num_nodes, dtype=jnp.int32)
    edge_index = jnp.stack([src, dst], axis=0)

    params = init_params(k_p, emb_size, hidden, num_layers, max_nodes, mlp2_in)
    prep = prepare_params(params, num_layers=num_layers, hidden=hidden, emb=emb_size)

    fwd = jax.jit(functools.partial(net_forward, max_nodes=max_nodes,
                                    hidden=hidden, num_layers=num_layers))
    out = fwd(prep, x, edge_index)
    out = jax.block_until_ready(out)
    assert out.shape == (batch, 2), out.shape
    assert bool(jnp.all(jnp.isfinite(out)))
    print("KERNEL_OK")
</pallas_src>

<mosaic_0001>
module attributes {stable_mosaic.version = 11 : i64} {
  func.func @_ggc_fused_kernel(%arg0: memref<16x16xf32, #tpu.memory_space<vmem>>, %arg1: memref<16x44xf32, #tpu.memory_space<vmem>>, %arg2: memref<2x256x1024xf32, #tpu.memory_space<vmem>>, %arg3: memref<256x768xf32, #tpu.memory_space<vmem>>, %arg4: memref<1x768xf32, #tpu.memory_space<vmem>>, %arg5: memref<1x768xf32, #tpu.memory_space<vmem>>, %arg6: memref<16x256xf32, #tpu.memory_space<vmem>>) attributes {dimension_semantics = [], scalar_prefetch = 0 : i64, scratch_operands = 0 : i64, tpu.core_type = #tpu.core_type<tc>} {
    %c0 = arith.constant 0 : index
    %c0_0 = arith.constant 0 : index
    %0 = vector.load %arg0[%c0, %c0_0] : memref<16x16xf32, #tpu.memory_space<vmem>>, vector<16x16xf32>
    %c0_1 = arith.constant 0 : index
    %c0_2 = arith.constant 0 : index
    %1 = vector.load %arg3[%c0_1, %c0_2] : memref<256x768xf32, #tpu.memory_space<vmem>>, vector<256x768xf32>
    %c0_3 = arith.constant 0 : index
    %c0_4 = arith.constant 0 : index
    %2 = vector.load %arg4[%c0_3, %c0_4] : memref<1x768xf32, #tpu.memory_space<vmem>>, vector<1x768xf32>
    %c0_5 = arith.constant 0 : index
    %c0_6 = arith.constant 0 : index
    %3 = vector.load %arg5[%c0_5, %c0_6] : memref<1x768xf32, #tpu.memory_space<vmem>>, vector<1x768xf32>
    %c0_7 = arith.constant 0 : index
    %c0_8 = arith.constant 0 : index
    %4 = vector.load %arg1[%c0_7, %c0_8] : memref<16x44xf32, #tpu.memory_space<vmem>>, vector<16x44xf32>
    %cst = arith.constant 0.000000e+00 : f32
    %5 = vector.broadcast %cst : f32 to vector<16x212xf32>
    %6 = tpu.concatenate %4, %5 in 1 : vector<16x44xf32>, vector<16x212xf32> -> vector<16x256xf32>
    %c0_9 = arith.constant 0 : index
    %c0_10 = arith.constant 0 : index
    %c0_11 = arith.constant 0 : index
    %7 = vector.load %arg2[%c0_9, %c0_10, %c0_11] : memref<2x256x1024xf32, #tpu.memory_space<vmem>>, vector<1x256x1024xf32>
    %8 = vector.shape_cast %7 : vector<1x256x1024xf32> to vector<256x1024xf32>
    %cst_12 = arith.constant dense<0.000000e+00> : vector<16x1024xf32>
    %9 = tpu.matmul %6, %8, %cst_12 {dimension_numbers = #tpu.dot_dimension_numbers<[1], [0], [0], [1], [0, 0, 1, 1], [], []>} : vector<16x256xf32>, vector<256x1024xf32>, vector<16x1024xf32> -> vector<16x1024xf32>
    %10 = vector.extract_strided_slice %9 {offsets = [0, 0], sizes = [16, 256], strides = [1, 1]} : vector<16x1024xf32> to vector<16x256xf32>
    %11 = vector.extract_strided_slice %9 {offsets = [0, 256], sizes = [16, 768], strides = [1, 1]} : vector<16x1024xf32> to vector<16x768xf32>
    %12 = vector.broadcast %3 : vector<1x768xf32> to vector<16x768xf32>
    %13 = arith.addf %11, %12 : vector<16x768xf32>
    %cst_13 = arith.constant dense<0.000000e+00> : vector<16x256xf32>
    %14 = tpu.matmul %0, %10, %cst_13 {dimension_numbers = #tpu.dot_dimension_numbers<[1], [0], [0], [1], [0, 0, 1, 1], [], []>} : vector<16x16xf32>, vector<16x256xf32>, vector<16x256xf32> -> vector<16x256xf32>
    %cst_14 = arith.constant dense<0.000000e+00> : vector<16x768xf32>
    %15 = tpu.matmul %14, %1, %cst_14 {dimension_numbers = #tpu.dot_dimension_numbers<[1], [0], [0], [1], [0, 0, 1, 1], [], []>} : vector<16x256xf32>, vector<256x768xf32>, vector<16x768xf32> -> vector<16x768xf32>
    %16 = vector.broadcast %2 : vector<1x768xf32> to vector<16x768xf32>
    %17 = arith.addf %15, %16 : vector<16x768xf32>
    %18 = vector.extract_strided_slice %17 {offsets = [0, 0], sizes = [16, 256], strides = [1, 1]} : vector<16x768xf32> to vector<16x256xf32>
    %19 = vector.extract_strided_slice %13 {offsets = [0, 0], sizes = [16, 256], strides = [1, 1]} : vector<16x768xf32> to vector<16x256xf32>
    %20 = arith.addf %18, %19 : vector<16x256xf32>
    %21 = arith.negf %20 : vector<16x256xf32>
    %22 = math.exp %21 : vector<16x256xf32>
    %cst_15 = arith.constant 1.000000e+00 : f32
    %23 = vector.broadcast %cst_15 : f32 to vector<16x256xf32>
    %24 = arith.addf %23, %22 : vector<16x256xf32>
    %25 = arith.divf %23, %24 : vector<16x256xf32>
    %26 = vector.extract_strided_slice %17 {offsets = [0, 256], sizes = [16, 256], strides = [1, 1]} : vector<16x768xf32> to vector<16x256xf32>
    %27 = vector.extract_strided_slice %13 {offsets = [0, 256], sizes = [16, 256], strides = [1, 1]} : vector<16x768xf32> to vector<16x256xf32>
    %28 = arith.addf %26, %27 : vector<16x256xf32>
    %29 = arith.negf %28 : vector<16x256xf32>
    %30 = math.exp %29 : vector<16x256xf32>
    %cst_16 = arith.constant 1.000000e+00 : f32
    %31 = vector.broadcast %cst_16 : f32 to vector<16x256xf32>
    %32 = arith.addf %31, %30 : vector<16x256xf32>
    %33 = arith.divf %31, %32 : vector<16x256xf32>
    %34 = vector.extract_strided_slice %17 {offsets = [0, 512], sizes = [16, 256], strides = [1, 1]} : vector<16x768xf32> to vector<16x256xf32>
    %35 = vector.extract_strided_slice %13 {offsets = [0, 512], sizes = [16, 256], strides = [1, 1]} : vector<16x768xf32> to vector<16x256xf32>
    %36 = arith.mulf %25, %35 : vector<16x256xf32>
    %37 = arith.addf %34, %36 : vector<16x256xf32>
    %38 = math.tanh %37 : vector<16x256xf32>
    %cst_17 = arith.constant 1.000000e+00 : f32
    %39 = vector.broadcast %cst_17 : f32 to vector<16x256xf32>
    %40 = arith.subf %39, %33 : vector<16x256xf32>
    %41 = arith.mulf %40, %38 : vector<16x256xf32>
    %42 = arith.mulf %33, %6 : vector<16x256xf32>
    %43 = arith.addf %41, %42 : vector<16x256xf32>
    %c1 = arith.constant 1 : index
    %c0_18 = arith.constant 0 : index
    %c0_19 = arith.constant 0 : index
    %44 = vector.load %arg2[%c1, %c0_18, %c0_19] : memref<2x256x1024xf32, #tpu.memory_space<vmem>>, vector<1x256x1024xf32>
    %45 = vector.shape_cast %44 : vector<1x256x1024xf32> to vector<256x1024xf32>
    %cst_20 = arith.constant dense<0.000000e+00> : vector<16x1024xf32>
    %46 = tpu.matmul %43, %45, %cst_20 {dimension_numbers = #tpu.dot_dimension_numbers<[1], [0], [0], [1], [0, 0, 1, 1], [], []>} : vector<16x256xf32>, vector<256x1024xf32>, vector<16x1024xf32> -> vector<16x1024xf32>
    %47 = vector.extract_strided_slice %46 {offsets = [0, 0], sizes = [16, 256], strides = [1, 1]} : vector<16x1024xf32> to vector<16x256xf32>
    %48 = vector.extract_strided_slice %46 {offsets = [0, 256], sizes = [16, 768], strides = [1, 1]} : vector<16x1024xf32> to vector<16x768xf32>
    %49 = vector.broadcast %3 : vector<1x768xf32> to vector<16x768xf32>
    %50 = arith.addf %48, %49 : vector<16x768xf32>
    %cst_21 = arith.constant dense<0.000000e+00> : vector<16x256xf32>
    %51 = tpu.matmul %0, %47, %cst_21 {dimension_numbers = #tpu.dot_dimension_numbers<[1], [0], [0], [1], [0, 0, 1, 1], [], []>} : vector<16x16xf32>, vector<16x256xf32>, vector<16x256xf32> -> vector<16x256xf32>
    %cst_22 = arith.constant dense<0.000000e+00> : vector<16x768xf32>
    %52 = tpu.matmul %51, %1, %cst_22 {dimension_numbers = #tpu.dot_dimension_numbers<[1], [0], [0], [1], [0, 0, 1, 1], [], []>} : vector<16x256xf32>, vector<256x768xf32>, vector<16x768xf32> -> vector<16x768xf32>
    %53 = vector.broadcast %2 : vector<1x768xf32> to vector<16x768xf32>
    %54 = arith.addf %52, %53 : vector<16x768xf32>
    %55 = vector.extract_strided_slice %54 {offsets = [0, 0], sizes = [16, 256], strides = [1, 1]} : vector<16x768xf32> to vector<16x256xf32>
    %56 = vector.extract_strided_slice %50 {offsets = [0, 0], sizes = [16, 256], strides = [1, 1]} : vector<16x768xf32> to vector<16x256xf32>
    %57 = arith.addf %55, %56 : vector<16x256xf32>
    %58 = arith.negf %57 : vector<16x256xf32>
    %59 = math.exp %58 : vector<16x256xf32>
    %cst_23 = arith.constant 1.000000e+00 : f32
    %60 = vector.broadcast %cst_23 : f32 to vector<16x256xf32>
    %61 = arith.addf %60, %59 : vector<16x256xf32>
    %62 = arith.divf %60, %61 : vector<16x256xf32>
    %63 = vector.extract_strided_slice %54 {offsets = [0, 256], sizes = [16, 256], strides = [1, 1]} : vector<16x768xf32> to vector<16x256xf32>
    %64 = vector.extract_strided_slice %50 {offsets = [0, 256], sizes = [16, 256], strides = [1, 1]} : vector<16x768xf32> to vector<16x256xf32>
    %65 = arith.addf %63, %64 : vector<16x256xf32>
    %66 = arith.negf %65 : vector<16x256xf32>
    %67 = math.exp %66 : vector<16x256xf32>
    %cst_24 = arith.constant 1.000000e+00 : f32
    %68 = vector.broadcast %cst_24 : f32 to vector<16x256xf32>
    %69 = arith.addf %68, %67 : vector<16x256xf32>
    %70 = arith.divf %68, %69 : vector<16x256xf32>
    %71 = vector.extract_strided_slice %54 {offsets = [0, 512], sizes = [16, 256], strides = [1, 1]} : vector<16x768xf32> to vector<16x256xf32>
    %72 = vector.extract_strided_slice %50 {offsets = [0, 512], sizes = [16, 256], strides = [1, 1]} : vector<16x768xf32> to vector<16x256xf32>
    %73 = arith.mulf %62, %72 : vector<16x256xf32>
    %74 = arith.addf %71, %73 : vector<16x256xf32>
    %75 = math.tanh %74 : vector<16x256xf32>
    %cst_25 = arith.constant 1.000000e+00 : f32
    %76 = vector.broadcast %cst_25 : f32 to vector<16x256xf32>
    %77 = arith.subf %76, %70 : vector<16x256xf32>
    %78 = arith.mulf %77, %75 : vector<16x256xf32>
    %79 = arith.mulf %70, %43 : vector<16x256xf32>
    %80 = arith.addf %78, %79 : vector<16x256xf32>
    %c0_26 = arith.constant 0 : index
    %c0_27 = arith.constant 0 : index
    %81 = vector.load %arg6[%c0_26, %c0_27] : memref<16x256xf32, #tpu.memory_space<vmem>>, vector<16x256xf32>
    tpu.vector_store %arg6[%c0_26, %c0_27], %80 {strides = array<i32>} : memref<16x256xf32, #tpu.memory_space<vmem>>, vector<16x256xf32>,
    return
  }
}

module attributes {stable_mosaic.version = 11 : i64} {
  func.func @_readout_fused_kernel(%arg0: memref<16x256xf32, #tpu.memory_space<vmem>>, %arg1: memref<16x44xf32, #tpu.memory_space<vmem>>, %arg2: memref<3x128x8xf32, #tpu.memory_space<vmem>>, %arg3: memref<128x1xf32, #tpu.memory_space<vmem>>, %arg4: memref<2x16x128xf32, #tpu.memory_space<vmem>>, %arg5: memref<16x1xf32, #tpu.memory_space<vmem>>, %arg6: memref<16x75xf32, #tpu.memory_space<vmem>>, %arg7: memref<1x1xf32, #tpu.memory_space<vmem>>, %arg8: memref<2x16x64xf32, #tpu.memory_space<vmem>>, %arg9: memref<1x2xf32, #tpu.memory_space<vmem>>, %arg10: memref<2x2xf32, #tpu.memory_space<vmem>>) attributes {dimension_semantics = [], scalar_prefetch = 0 : i64, scratch_operands = 0 : i64, tpu.core_type = #tpu.core_type<tc>} {
    %c0 = arith.constant 0 : index
    %c0_0 = arith.constant 0 : index
    %0 = vector.load %arg3[%c0, %c0_0] : memref<128x1xf32, #tpu.memory_space<vmem>>, vector<128x1xf32>
    %c0_1 = arith.constant 0 : index
    %c0_2 = arith.constant 0 : index
    %1 = vector.load %arg5[%c0_1, %c0_2] : memref<16x1xf32, #tpu.memory_space<vmem>>, vector<16x1xf32>
    %c0_3 = arith.constant 0 : index
    %c0_4 = arith.constant 0 : index
    %c0_5 = arith.constant 0 : index
    %2 = vector.load %arg2[%c0_3, %c0_4, %c0_5] : memref<3x128x8xf32, #tpu.memory_space<vmem>>, vector<1x128x8xf32>
    %3 = vector.shape_cast %2 : vector<1x128x8xf32> to vector<128x8xf32>
    %c1 = arith.constant 1 : index
    %c0_6 = arith.constant 0 : index
    %c0_7 = arith.constant 0 : index
    %4 = vector.load %arg2[%c1, %c0_6, %c0_7] : memref<3x128x8xf32, #tpu.memory_space<vmem>>, vector<1x128x8xf32>
    %5 = vector.shape_cast %4 : vector<1x128x8xf32> to vector<128x8xf32>
    %c2 = arith.constant 2 : index
    %c0_8 = arith.constant 0 : index
    %c0_9 = arith.constant 0 : index
    %6 = vector.load %arg2[%c2, %c0_8, %c0_9] : memref<3x128x8xf32, #tpu.memory_space<vmem>>, vector<1x128x8xf32>
    %7 = vector.shape_cast %6 : vector<1x128x8xf32> to vector<128x8xf32>
    %c0_10 = arith.constant 0 : index
    %c0_11 = arith.constant 0 : index
    %c0_12 = arith.constant 0 : index
    %8 = vector.load %arg4[%c0_10, %c0_11, %c0_12] : memref<2x16x128xf32, #tpu.memory_space<vmem>>, vector<1x16x128xf32>
    %9 = vector.shape_cast %8 : vector<1x16x128xf32> to vector<16x128xf32>
    %c1_13 = arith.constant 1 : index
    %c0_14 = arith.constant 0 : index
    %c0_15 = arith.constant 0 : index
    %10 = vector.load %arg4[%c1_13, %c0_14, %c0_15] : memref<2x16x128xf32, #tpu.memory_space<vmem>>, vector<1x16x128xf32>
    %11 = vector.shape_cast %10 : vector<1x16x128xf32> to vector<16x128xf32>
    %c0_16 = arith.constant 0 : index
    %c0_17 = arith.constant 0 : index
    %12 = vector.load %arg6[%c0_16, %c0_17] : memref<16x75xf32, #tpu.memory_space<vmem>>, vector<16x75xf32>
    %c0_18 = arith.constant 0 : index
    %c0_19 = arith.constant 0 : index
    %c0_20 = arith.constant 0 : index
    %13 = vector.load %arg8[%c0_18, %c0_19, %c0_20] : memref<2x16x64xf32, #tpu.memory_space<vmem>>, vector<1x16x64xf32>
    %14 = vector.shape_cast %13 : vector<1x16x64xf32> to vector<16x64xf32>
    %c1_21 = arith.constant 1 : index
    %c0_22 = arith.constant 0 : index
    %c0_23 = arith.constant 0 : index
    %15 = vector.load %arg8[%c1_21, %c0_22, %c0_23] : memref<2x16x64xf32, #tpu.memory_space<vmem>>, vector<1x16x64xf32>
    %16 = vector.shape_cast %15 : vector<1x16x64xf32> to vector<16x64xf32>
    %c0_24 = arith.constant 0 : index
    %c0_25 = arith.constant 0 : index
    %17 = vector.load %arg7[%c0_24, %c0_25] : memref<1x1xf32, #tpu.memory_space<vmem>>, vector<1x1xf32>
    %c0_26 = arith.constant 0 : index
    %c0_27 = arith.constant 0 : index
    %18 = vector.load %arg9[%c0_26, %c0_27] : memref<1x2xf32, #tpu.memory_space<vmem>>, vector<1x2xf32>
    %19 = tpu.iota {dimensions = array<i32: 0>} : vector<298x149xi32>
    %20 = tpu.iota {dimensions = array<i32: 1>} : vector<298x149xi32>
    %c2_i32 = arith.constant 2 : i32
    %21 = vector.broadcast %c2_i32 : i32 to vector<298x149xi32>
    %22 = arith.muli %21, %20 : vector<298x149xi32>
    %23 = arith.cmpi eq, %19, %22 : vector<298x149xi32>
    %24 = arith.extui %23 : vector<298x149xi1> to vector<298x149xi32>
    %25 = arith.sitofp %24 : vector<298x149xi32> to vector<298x149xf32>
    %26 = tpu.iota {dimensions = array<i32: 0>} : vector<149x75xi32>
    %27 = tpu.iota {dimensions = array<i32: 1>} : vector<149x75xi32>
    %c2_i32_28 = arith.constant 2 : i32
    %28 = vector.broadcast %c2_i32_28 : i32 to vector<149x75xi32>
    %29 = arith.muli %28, %27 : vector<149x75xi32>
    %30 = arith.cmpi eq, %26, %29 : vector<149x75xi32>
    %31 = arith.extui %30 : vector<149x75xi1> to vector<149x75xi32>
    %32 = arith.sitofp %31 : vector<149x75xi32> to vector<149x75xf32>
    %33 = tpu.iota {dimensions = array<i32: 0>} : vector<254x127xi32>
    %34 = tpu.iota {dimensions = array<i32: 1>} : vector<254x127xi32>
    %c2_i32_29 = arith.constant 2 : i32
    %35 = vector.broadcast %c2_i32_29 : i32 to vector<254x127xi32>
    %36 = arith.muli %35, %34 : vector<254x127xi32>
    %37 = arith.cmpi eq, %33, %36 : vector<254x127xi32>
    %38 = arith.extui %37 : vector<254x127xi1> to vector<254x127xi32>
    %39 = arith.sitofp %38 : vector<254x127xi32> to vector<254x127xf32>
    %40 = tpu.iota {dimensions = array<i32: 0>} : vector<127x64xi32>
    %41 = tpu.iota {dimensions = array<i32: 1>} : vector<127x64xi32>
    %c2_i32_30 = arith.constant 2 : i32
    %42 = vector.broadcast %c2_i32_30 : i32 to vector<127x64xi32>
    %43 = arith.muli %42, %41 : vector<127x64xi32>
    %44 = arith.cmpi eq, %40, %43 : vector<127x64xi32>
    %45 = arith.extui %44 : vector<127x64xi1> to vector<127x64xi32>
    %46 = arith.sitofp %45 : vector<127x64xi32> to vector<127x64xf32>
    %c0_31 = arith.constant 0 : index
    %c0_32 = arith.constant 0 : index
    %47 = vector.load %arg0[%c0_31, %c0_32] : memref<16x256xf32, #tpu.memory_space<vmem>>, vector<8x256xf32>
    %c0_33 = arith.constant 0 : index
    %c0_34 = arith.constant 0 : index
    %48 = vector.load %arg1[%c0_33, %c0_34] : memref<16x44xf32, #tpu.memory_space<vmem>>, vector<8x44xf32>
    %49 = tpu.concatenate %47, %48 in 1 : vector<8x256xf32>, vector<8x44xf32> -> vector<8x300xf32>
    %cst = arith.constant 0.000000e+00 : f32
    %50 = vector.broadcast %cst : f32 to vector<8x1xf32>
    %51 = tpu.concatenate %50, %49, %50 in 1 : vector<8x1xf32>, vector<8x300xf32>, vector<8x1xf32> -> vector<8x302xf32>
    %52 = vector.extract_strided_slice %51 {offsets = [0, 0], sizes = [8, 300], strides = [1, 1]} : vector<8x302xf32> to vector<8x300xf32>
    %cst_35 = arith.constant dense<0.000000e+00> : vector<128x300xf32>
    %53 = tpu.matmul %3, %52, %cst_35 {dimension_numbers = #tpu.dot_dimension_numbers<[1], [0], [0], [1], [0, 0, 1, 1], [], []>} : vector<128x8xf32>, vector<8x300xf32>, vector<128x300xf32> -> vector<128x300xf32>
    %54 = vector.extract_strided_slice %51 {offsets = [0, 1], sizes = [8, 300], strides = [1, 1]} : vector<8x302xf32> to vector<8x300xf32>
    %cst_36 = arith.constant dense<0.000000e+00> : vector<128x300xf32>
    %55 = tpu.matmul %5, %54, %cst_36 {dimension_numbers = #tpu.dot_dimension_numbers<[1], [0], [0], [1], [0, 0, 1, 1], [], []>} : vector<128x8xf32>, vector<8x300xf32>, vector<128x300xf32> -> vector<128x300xf32>
    %56 = arith.addf %53, %55 : vector<128x300xf32>
    %57 = vector.extract_strided_slice %51 {offsets = [0, 2], sizes = [8, 300], strides = [1, 1]} : vector<8x302xf32> to vector<8x300xf32>
    %cst_37 = arith.constant dense<0.000000e+00> : vector<128x300xf32>
    %58 = tpu.matmul %7, %57, %cst_37 {dimension_numbers = #tpu.dot_dimension_numbers<[1], [0], [0], [1], [0, 0, 1, 1], [], []>} : vector<128x8xf32>, vector<8x300xf32>, vector<128x300xf32> -> vector<128x300xf32>
    %59 = arith.addf %56, %58 : vector<128x300xf32>
    %60 = vector.broadcast %0 : vector<128x1xf32> to vector<128x300xf32>
    %61 = arith.addf %59, %60 : vector<128x300xf32>
    %cst_38 = arith.constant 0.000000e+00 : f32
    %62 = vector.broadcast %cst_38 : f32 to vector<128x300xf32>
    %63 = arith.maximumf %61, %62 : vector<128x300xf32>
    %64 = vector.extract_strided_slice %63 {offsets = [0, 0], sizes = [128, 298], strides = [1, 1]} : vector<128x300xf32> to vector<128x298xf32>
    %65 = vector.extract_strided_slice %63 {offsets = [0, 1], sizes = [128, 298], strides = [1, 1]} : vector<128x300xf32> to vector<128x298xf32>
    %66 = arith.maximumf %64, %65 : vector<128x298xf32>
    %67 = vector.extract_strided_slice %63 {offsets = [0, 2], sizes = [128, 298], strides = [1, 1]} : vector<128x300xf32> to vector<128x298xf32>
    %68 = arith.maximumf %66, %67 : vector<128x298xf32>
    %cst_39 = arith.constant dense<0.000000e+00> : vector<128x149xf32>
    %69 = tpu.matmul %68, %25, %cst_39 {dimension_numbers = #tpu.dot_dimension_numbers<[1], [0], [0], [1], [0, 0, 1, 1], [], []>} : vector<128x298xf32>, vector<298x149xf32>, vector<128x149xf32> -> vector<128x149xf32>
    %cst_40 = arith.constant 0.000000e+00 : f32
    %70 = vector.broadcast %cst_40 : f32 to vector<128x1xf32>
    %71 = tpu.concatenate %70, %69, %70 in 1 : vector<128x1xf32>, vector<128x149xf32>, vector<128x1xf32> -> vector<128x151xf32>
    %72 = vector.extract_strided_slice %71 {offsets = [0, 0], sizes = [128, 150], strides = [1, 1]} : vector<128x151xf32> to vector<128x150xf32>
    %cst_41 = arith.constant dense<0.000000e+00> : vector<16x150xf32>
    %73 = tpu.matmul %9, %72, %cst_41 {dimension_numbers = #tpu.dot_dimension_numbers<[1], [0], [0], [1], [0, 0, 1, 1], [], []>} : vector<16x128xf32>, vector<128x150xf32>, vector<16x150xf32> -> vector<16x150xf32>
    %74 = vector.extract_strided_slice %71 {offsets = [0, 1], sizes = [128, 150], strides = [1, 1]} : vector<128x151xf32> to vector<128x150xf32>
    %cst_42 = arith.constant dense<0.000000e+00> : vector<16x150xf32>
    %75 = tpu.matmul %11, %74, %cst_42 {dimension_numbers = #tpu.dot_dimension_numbers<[1], [0], [0], [1], [0, 0, 1, 1], [], []>} : vector<16x128xf32>, vector<128x150xf32>, vector<16x150xf32> -> vector<16x150xf32>
    %76 = arith.addf %73, %75 : vector<16x150xf32>
    %77 = vector.broadcast %1 : vector<16x1xf32> to vector<16x150xf32>
    %78 = arith.addf %76, %77 : vector<16x150xf32>
    %cst_43 = arith.constant 0.000000e+00 : f32
    %79 = vector.broadcast %cst_43 : f32 to vector<16x150xf32>
    %80 = arith.maximumf %78, %79 : vector<16x150xf32>
    %81 = vector.extract_strided_slice %80 {offsets = [0, 0], sizes = [16, 149], strides = [1, 1]} : vector<16x150xf32> to vector<16x149xf32>
    %82 = vector.extract_strided_slice %80 {offsets = [0, 1], sizes = [16, 149], strides = [1, 1]} : vector<16x150xf32> to vector<16x149xf32>
    %83 = arith.maximumf %81, %82 : vector<16x149xf32>
    %cst_44 = arith.constant dense<0.000000e+00> : vector<16x75xf32>
    %84 = tpu.matmul %83, %32, %cst_44 {dimension_numbers = #tpu.dot_dimension_numbers<[1], [0], [0], [1], [0, 0, 1, 1], [], []>} : vector<16x149xf32>, vector<149x75xf32>, vector<16x75xf32> -> vector<16x75xf32>
    %cst_45 = arith.constant 0.000000e+00 : f32
    %85 = vector.broadcast %cst_45 : f32 to vector<8x1xf32>
    %86 = tpu.concatenate %85, %47, %85 in 1 : vector<8x1xf32>, vector<8x256xf32>, vector<8x1xf32> -> vector<8x258xf32>
    %87 = vector.extract_strided_slice %86 {offsets = [0, 0], sizes = [8, 256], strides = [1, 1]} : vector<8x258xf32> to vector<8x256xf32>
    %cst_46 = arith.constant dense<0.000000e+00> : vector<128x256xf32>
    %88 = tpu.matmul %3, %87, %cst_46 {dimension_numbers = #tpu.dot_dimension_numbers<[1], [0], [0], [1], [0, 0, 1, 1], [], []>} : vector<128x8xf32>, vector<8x256xf32>, vector<128x256xf32> -> vector<128x256xf32>
    %89 = vector.extract_strided_slice %86 {offsets = [0, 1], sizes = [8, 256], strides = [1, 1]} : vector<8x258xf32> to vector<8x256xf32>
    %cst_47 = arith.constant dense<0.000000e+00> : vector<128x256xf32>
    %90 = tpu.matmul %5, %89, %cst_47 {dimension_numbers = #tpu.dot_dimension_numbers<[1], [0], [0], [1], [0, 0, 1, 1], [], []>} : vector<128x8xf32>, vector<8x256xf32>, vector<128x256xf32> -> vector<128x256xf32>
    %91 = arith.addf %88, %90 : vector<128x256xf32>
    %92 = vector.extract_strided_slice %86 {offsets = [0, 2], sizes = [8, 256], strides = [1, 1]} : vector<8x258xf32> to vector<8x256xf32>
    %cst_48 = arith.constant dense<0.000000e+00> : vector<128x256xf32>
    %93 = tpu.matmul %7, %92, %cst_48 {dimension_numbers = #tpu.dot_dimension_numbers<[1], [0], [0], [1], [0, 0, 1, 1], [], []>} : vector<128x8xf32>, vector<8x256xf32>, vector<128x256xf32> -> vector<128x256xf32>
    %94 = arith.addf %91, %93 : vector<128x256xf32>
    %95 = vector.broadcast %0 : vector<128x1xf32> to vector<128x256xf32>
    %96 = arith.addf %94, %95 : vector<128x256xf32>
    %cst_49 = arith.constant 0.000000e+00 : f32
    %97 = vector.broadcast %cst_49 : f32 to vector<128x256xf32>
    %98 = arith.maximumf %96, %97 : vector<128x256xf32>
    %99 = vector.extract_strided_slice %98 {offsets = [0, 0], sizes = [128, 254], strides = [1, 1]} : vector<128x256xf32> to vector<128x254xf32>
    %100 = vector.extract_strided_slice %98 {offsets = [0, 1], sizes = [128, 254], strides = [1, 1]} : vector<128x256xf32> to vector<128x254xf32>
    %101 = arith.maximumf %99, %100 : vector<128x254xf32>
    %102 = vector.extract_strided_slice %98 {offsets = [0, 2], sizes = [128, 254], strides = [1, 1]} : vector<128x256xf32> to vector<128x254xf32>
    %103 = arith.maximumf %101, %102 : vector<128x254xf32>
    %cst_50 = arith.constant dense<0.000000e+00> : vector<128x127xf32>
    %104 = tpu.matmul %103, %39, %cst_50 {dimension_numbers = #tpu.dot_dimension_numbers<[1], [0], [0], [1], [0, 0, 1, 1], [], []>} : vector<128x254xf32>, vector<254x127xf32>, vector<128x127xf32> -> vector<128x127xf32>
    %cst_51 = arith.constant 0.000000e+00 : f32
    %105 = vector.broadcast %cst_51 : f32 to vector<128x1xf32>
    %106 = tpu.concatenate %105, %104, %105 in 1 : vector<128x1xf32>, vector<128x127xf32>, vector<128x1xf32> -> vector<128x129xf32>
    %107 = vector.extract_strided_slice %106 {offsets = [0, 0], sizes = [128, 128], strides = [1, 1]} : vector<128x129xf32> to vector<128x128xf32>
    %cst_52 = arith.constant dense<0.000000e+00> : vector<16x128xf32>
    %108 = tpu.matmul %9, %107, %cst_52 {dimension_numbers = #tpu.dot_dimension_numbers<[1], [0], [0], [1], [0, 0, 1, 1], [], []>} : vector<16x128xf32>, vector<128x128xf32>, vector<16x128xf32> -> vector<16x128xf32>
    %109 = vector.extract_strided_slice %106 {offsets = [0, 1], sizes = [128, 128], strides = [1, 1]} : vector<128x129xf32> to vector<128x128xf32>
    %cst_53 = arith.constant dense<0.000000e+00> : vector<16x128xf32>
    %110 = tpu.matmul %11, %109, %cst_53 {dimension_numbers = #tpu.dot_dimension_numbers<[1], [0], [0], [1], [0, 0, 1, 1], [], []>} : vector<16x128xf32>, vector<128x128xf32>, vector<16x128xf32> -> vector<16x128xf32>
    %111 = arith.addf %108, %110 : vector<16x128xf32>
    %112 = vector.broadcast %1 : vector<16x1xf32> to vector<16x128xf32>
    %113 = arith.addf %111, %112 : vector<16x128xf32>
    %cst_54 = arith.constant 0.000000e+00 : f32
    %114 = vector.broadcast %cst_54 : f32 to vector<16x128xf32>
    %115 = arith.maximumf %113, %114 : vector<16x128xf32>
    %116 = vector.extract_strided_slice %115 {offsets = [0, 0], sizes = [16, 127], strides = [1, 1]} : vector<16x128xf32> to vector<16x127xf32>
    %117 = vector.extract_strided_slice %115 {offsets = [0, 1], sizes = [16, 127], strides = [1, 1]} : vector<16x128xf32> to vector<16x127xf32>
    %118 = arith.maximumf %116, %117 : vector<16x127xf32>
    %cst_55 = arith.constant dense<0.000000e+00> : vector<16x64xf32>
    %119 = tpu.matmul %118, %46, %cst_55 {dimension_numbers = #tpu.dot_dimension_numbers<[1], [0], [0], [1], [0, 0, 1, 1], [], []>} : vector<16x127xf32>, vector<127x64xf32>, vector<16x64xf32> -> vector<16x64xf32>
    %120 = arith.mulf %84, %12 : vector<16x75xf32>
    %cst_56 = arith.constant dense<0.000000e+00> : vector<16xf32>
    %121 = vector.multi_reduction <add>, %120, %cst_56 [1] : vector<16x75xf32> to vector<16xf32>
    %122 = vector.shape_cast %121 : vector<16xf32> to vector<16x1xf32>
    %cst_57 = arith.constant dense<0.000000e+00> : vector<1xf32>
    %123 = vector.multi_reduction <add>, %122, %cst_57 [0] : vector<16x1xf32> to vector<1xf32>
    %124 = vector.shape_cast %123 : vector<1xf32> to vector<1x1xf32>
    %125 = arith.addf %124, %17 : vector<1x1xf32>
    %126 = arith.mulf %119, %14 : vector<16x64xf32>
    %cst_58 = arith.constant dense<0.000000e+00> : vector<16xf32>
    %127 = vector.multi_reduction <add>, %126, %cst_58 [1] : vector<16x64xf32> to vector<16xf32>
    %128 = vector.shape_cast %127 : vector<16xf32> to vector<16x1xf32>
    %cst_59 = arith.constant dense<0.000000e+00> : vector<1xf32>
    %129 = vector.multi_reduction <add>, %128, %cst_59 [0] : vector<16x1xf32> to vector<1xf32>
    %130 = vector.shape_cast %129 : vector<1xf32> to vector<1x1xf32>
    %131 = arith.mulf %119, %16 : vector<16x64xf32>
    %cst_60 = arith.constant dense<0.000000e+00> : vector<16xf32>
    %132 = vector.multi_reduction <add>, %131, %cst_60 [1] : vector<16x64xf32> to vector<16xf32>
    %133 = vector.shape_cast %132 : vector<16xf32> to vector<16x1xf32>
    %cst_61 = arith.constant dense<0.000000e+00> : vector<1xf32>
    %134 = vector.multi_reduction <add>, %133, %cst_61 [0] : vector<16x1xf32> to vector<1xf32>
    %135 = vector.shape_cast %134 : vector<1xf32> to vector<1x1xf32>
    %136 = tpu.concatenate %130, %135 in 1 : vector<1x1xf32>, vector<1x1xf32> -> vector<1x2xf32>
    %137 = arith.addf %136, %18 : vector<1x2xf32>
    %138 = vector.broadcast %125 : vector<1x1xf32> to vector<1x2xf32>
    %139 = arith.mulf %138, %137 : vector<1x2xf32>
    %c8 = arith.constant 8 : index
    %c0_62 = arith.constant 0 : index
    %140 = vector.load %arg0[%c8, %c0_62] : memref<16x256xf32, #tpu.memory_space<vmem>>, vector<8x256xf32>
    %c8_63 = arith.constant 8 : index
    %c0_64 = arith.constant 0 : index
    %141 = vector.load %arg1[%c8_63, %c0_64] : memref<16x44xf32, #tpu.memory_space<vmem>>, vector<8x44xf32>
    %142 = tpu.concatenate %140, %141 in 1 : vector<8x256xf32>, vector<8x44xf32> -> vector<8x300xf32>
    %cst_65 = arith.constant 0.000000e+00 : f32
    %143 = vector.broadcast %cst_65 : f32 to vector<8x1xf32>
    %144 = tpu.concatenate %143, %142, %143 in 1 : vector<8x1xf32>, vector<8x300xf32>, vector<8x1xf32> -> vector<8x302xf32>
    %145 = vector.extract_strided_slice %144 {offsets = [0, 0], sizes = [8, 300], strides = [1, 1]} : vector<8x302xf32> to vector<8x300xf32>
    %cst_66 = arith.constant dense<0.000000e+00> : vector<128x300xf32>
    %146 = tpu.matmul %3, %145, %cst_66 {dimension_numbers = #tpu.dot_dimension_numbers<[1], [0], [0], [1], [0, 0, 1, 1], [], []>} : vector<128x8xf32>, vector<8x300xf32>, vector<128x300xf32> -> vector<128x300xf32>
    %147 = vector.extract_strided_slice %144 {offsets = [0, 1], sizes = [8, 300], strides = [1, 1]} : vector<8x302xf32> to vector<8x300xf32>
    %cst_67 = arith.constant dense<0.000000e+00> : vector<128x300xf32>
    %148 = tpu.matmul %5, %147, %cst_67 {dimension_numbers = #tpu.dot_dimension_numbers<[1], [0], [0], [1], [0, 0, 1, 1], [], []>} : vector<128x8xf32>, vector<8x300xf32>, vector<128x300xf32> -> vector<128x300xf32>
    %149 = arith.addf %146, %148 : vector<128x300xf32>
    %150 = vector.extract_strided_slice %144 {offsets = [0, 2], sizes = [8, 300], strides = [1, 1]} : vector<8x302xf32> to vector<8x300xf32>
    %cst_68 = arith.constant dense<0.000000e+00> : vector<128x300xf32>
    %151 = tpu.matmul %7, %150, %cst_68 {dimension_numbers = #tpu.dot_dimension_numbers<[1], [0], [0], [1], [0, 0, 1, 1], [], []>} : vector<128x8xf32>, vector<8x300xf32>, vector<128x300xf32> -> vector<128x300xf32>
    %152 = arith.addf %149, %151 : vector<128x300xf32>
    %153 = vector.broadcast %0 : vector<128x1xf32> to vector<128x300xf32>
    %154 = arith.addf %152, %153 : vector<128x300xf32>
    %cst_69 = arith.constant 0.000000e+00 : f32
    %155 = vector.broadcast %cst_69 : f32 to vector<128x300xf32>
    %156 = arith.maximumf %154, %155 : vector<128x300xf32>
    %157 = vector.extract_strided_slice %156 {offsets = [0, 0], sizes = [128, 298], strides = [1, 1]} : vector<128x300xf32> to vector<128x298xf32>
    %158 = vector.extract_strided_slice %156 {offsets = [0, 1], sizes = [128, 298], strides = [1, 1]} : vector<128x300xf32> to vector<128x298xf32>
    %159 = arith.maximumf %157, %158 : vector<128x298xf32>
    %160 = vector.extract_strided_slice %156 {offsets = [0, 2], sizes = [128, 298], strides = [1, 1]} : vector<128x300xf32> to vector<128x298xf32>
    %161 = arith.maximumf %159, %160 : vector<128x298xf32>
    %cst_70 = arith.constant dense<0.000000e+00> : vector<128x149xf32>
    %162 = tpu.matmul %161, %25, %cst_70 {dimension_numbers = #tpu.dot_dimension_numbers<[1], [0], [0], [1], [0, 0, 1, 1], [], []>} : vector<128x298xf32>, vector<298x149xf32>, vector<128x149xf32> -> vector<128x149xf32>
    %cst_71 = arith.constant 0.000000e+00 : f32
    %163 = vector.broadcast %cst_71 : f32 to vector<128x1xf32>
    %164 = tpu.concatenate %163, %162, %163 in 1 : vector<128x1xf32>, vector<128x149xf32>, vector<128x1xf32> -> vector<128x151xf32>
    %165 = vector.extract_strided_slice %164 {offsets = [0, 0], sizes = [128, 150], strides = [1, 1]} : vector<128x151xf32> to vector<128x150xf32>
    %cst_72 = arith.constant dense<0.000000e+00> : vector<16x150xf32>
    %166 = tpu.matmul %9, %165, %cst_72 {dimension_numbers = #tpu.dot_dimension_numbers<[1], [0], [0], [1], [0, 0, 1, 1], [], []>} : vector<16x128xf32>, vector<128x150xf32>, vector<16x150xf32> -> vector<16x150xf32>
    %167 = vector.extract_strided_slice %164 {offsets = [0, 1], sizes = [128, 150], strides = [1, 1]} : vector<128x151xf32> to vector<128x150xf32>
    %cst_73 = arith.constant dense<0.000000e+00> : vector<16x150xf32>
    %168 = tpu.matmul %11, %167, %cst_73 {dimension_numbers = #tpu.dot_dimension_numbers<[1], [0], [0], [1], [0, 0, 1, 1], [], []>} : vector<16x128xf32>, vector<128x150xf32>, vector<16x150xf32> -> vector<16x150xf32>
    %169 = arith.addf %166, %168 : vector<16x150xf32>
    %170 = vector.broadcast %1 : vector<16x1xf32> to vector<16x150xf32>
    %171 = arith.addf %169, %170 : vector<16x150xf32>
    %cst_74 = arith.constant 0.000000e+00 : f32
    %172 = vector.broadcast %cst_74 : f32 to vector<16x150xf32>
    %173 = arith.maximumf %171, %172 : vector<16x150xf32>
    %174 = vector.extract_strided_slice %173 {offsets = [0, 0], sizes = [16, 149], strides = [1, 1]} : vector<16x150xf32> to vector<16x149xf32>
    %175 = vector.extract_strided_slice %173 {offsets = [0, 1], sizes = [16, 149], strides = [1, 1]} : vector<16x150xf32> to vector<16x149xf32>
    %176 = arith.maximumf %174, %175 : vector<16x149xf32>
    %cst_75 = arith.constant dense<0.000000e+00> : vector<16x75xf32>
    %177 = tpu.matmul %176, %32, %cst_75 {dimension_numbers = #tpu.dot_dimension_numbers<[1], [0], [0], [1], [0, 0, 1, 1], [], []>} : vector<16x149xf32>, vector<149x75xf32>, vector<16x75xf32> -> vector<16x75xf32>
    %cst_76 = arith.constant 0.000000e+00 : f32
    %178 = vector.broadcast %cst_76 : f32 to vector<8x1xf32>
    %179 = tpu.concatenate %178, %140, %178 in 1 : vector<8x1xf32>, vector<8x256xf32>, vector<8x1xf32> -> vector<8x258xf32>
    %180 = vector.extract_strided_slice %179 {offsets = [0, 0], sizes = [8, 256], strides = [1, 1]} : vector<8x258xf32> to vector<8x256xf32>
    %cst_77 = arith.constant dense<0.000000e+00> : vector<128x256xf32>
    %181 = tpu.matmul %3, %180, %cst_77 {dimension_numbers = #tpu.dot_dimension_numbers<[1], [0], [0], [1], [0, 0, 1, 1], [], []>} : vector<128x8xf32>, vector<8x256xf32>, vector<128x256xf32> -> vector<128x256xf32>
    %182 = vector.extract_strided_slice %179 {offsets = [0, 1], sizes = [8, 256], strides = [1, 1]} : vector<8x258xf32> to vector<8x256xf32>
    %cst_78 = arith.constant dense<0.000000e+00> : vector<128x256xf32>
    %183 = tpu.matmul %5, %182, %cst_78 {dimension_numbers = #tpu.dot_dimension_numbers<[1], [0], [0], [1], [0, 0, 1, 1], [], []>} : vector<128x8xf32>, vector<8x256xf32>, vector<128x256xf32> -> vector<128x256xf32>
    %184 = arith.addf %181, %183 : vector<128x256xf32>
    %185 = vector.extract_strided_slice %179 {offsets = [0, 2], sizes = [8, 256], strides = [1, 1]} : vector<8x258xf32> to vector<8x256xf32>
    %cst_79 = arith.constant dense<0.000000e+00> : vector<128x256xf32>
    %186 = tpu.matmul %7, %185, %cst_79 {dimension_numbers = #tpu.dot_dimension_numbers<[1], [0], [0], [1], [0, 0, 1, 1], [], []>} : vector<128x8xf32>, vector<8x256xf32>, vector<128x256xf32> -> vector<128x256xf32>
    %187 = arith.addf %184, %186 : vector<128x256xf32>
    %188 = vector.broadcast %0 : vector<128x1xf32> to vector<128x256xf32>
    %189 = arith.addf %187, %188 : vector<128x256xf32>
    %cst_80 = arith.constant 0.000000e+00 : f32
    %190 = vector.broadcast %cst_80 : f32 to vector<128x256xf32>
    %191 = arith.maximumf %189, %190 : vector<128x256xf32>
    %192 = vector.extract_strided_slice %191 {offsets = [0, 0], sizes = [128, 254], strides = [1, 1]} : vector<128x256xf32> to vector<128x254xf32>
    %193 = vector.extract_strided_slice %191 {offsets = [0, 1], sizes = [128, 254], strides = [1, 1]} : vector<128x256xf32> to vector<128x254xf32>
    %194 = arith.maximumf %192, %193 : vector<128x254xf32>
    %195 = vector.extract_strided_slice %191 {offsets = [0, 2], sizes = [128, 254], strides = [1, 1]} : vector<128x256xf32> to vector<128x254xf32>
    %196 = arith.maximumf %194, %195 : vector<128x254xf32>
    %cst_81 = arith.constant dense<0.000000e+00> : vector<128x127xf32>
    %197 = tpu.matmul %196, %39, %cst_81 {dimension_numbers = #tpu.dot_dimension_numbers<[1], [0], [0], [1], [0, 0, 1, 1], [], []>} : vector<128x254xf32>, vector<254x127xf32>, vector<128x127xf32> -> vector<128x127xf32>
    %cst_82 = arith.constant 0.000000e+00 : f32
    %198 = vector.broadcast %cst_82 : f32 to vector<128x1xf32>
    %199 = tpu.concatenate %198, %197, %198 in 1 : vector<128x1xf32>, vector<128x127xf32>, vector<128x1xf32> -> vector<128x129xf32>
    %200 = vector.extract_strided_slice %199 {offsets = [0, 0], sizes = [128, 128], strides = [1, 1]} : vector<128x129xf32> to vector<128x128xf32>
    %cst_83 = arith.constant dense<0.000000e+00> : vector<16x128xf32>
    %201 = tpu.matmul %9, %200, %cst_83 {dimension_numbers = #tpu.dot_dimension_numbers<[1], [0], [0], [1], [0, 0, 1, 1], [], []>} : vector<16x128xf32>, vector<128x128xf32>, vector<16x128xf32> -> vector<16x128xf32>
    %202 = vector.extract_strided_slice %199 {offsets = [0, 1], sizes = [128, 128], strides = [1, 1]} : vector<128x129xf32> to vector<128x128xf32>
    %cst_84 = arith.constant dense<0.000000e+00> : vector<16x128xf32>
    %203 = tpu.matmul %11, %202, %cst_84 {dimension_numbers = #tpu.dot_dimension_numbers<[1], [0], [0], [1], [0, 0, 1, 1], [], []>} : vector<16x128xf32>, vector<128x128xf32>, vector<16x128xf32> -> vector<16x128xf32>
    %204 = arith.addf %201, %203 : vector<16x128xf32>
    %205 = vector.broadcast %1 : vector<16x1xf32> to vector<16x128xf32>
    %206 = arith.addf %204, %205 : vector<16x128xf32>
    %cst_85 = arith.constant 0.000000e+00 : f32
    %207 = vector.broadcast %cst_85 : f32 to vector<16x128xf32>
    %208 = arith.maximumf %206, %207 : vector<16x128xf32>
    %209 = vector.extract_strided_slice %208 {offsets = [0, 0], sizes = [16, 127], strides = [1, 1]} : vector<16x128xf32> to vector<16x127xf32>
    %210 = vector.extract_strided_slice %208 {offsets = [0, 1], sizes = [16, 127], strides = [1, 1]} : vector<16x128xf32> to vector<16x127xf32>
    %211 = arith.maximumf %209, %210 : vector<16x127xf32>
    %cst_86 = arith.constant dense<0.000000e+00> : vector<16x64xf32>
    %212 = tpu.matmul %211, %46, %cst_86 {dimension_numbers = #tpu.dot_dimension_numbers<[1], [0], [0], [1], [0, 0, 1, 1], [], []>} : vector<16x127xf32>, vector<127x64xf32>, vector<16x64xf32> -> vector<16x64xf32>
    %213 = arith.mulf %177, %12 : vector<16x75xf32>
    %cst_87 = arith.constant dense<0.000000e+00> : vector<16xf32>
    %214 = vector.multi_reduction <add>, %213, %cst_87 [1] : vector<16x75xf32> to vector<16xf32>
    %215 = vector.shape_cast %214 : vector<16xf32> to vector<16x1xf32>
    %cst_88 = arith.constant dense<0.000000e+00> : vector<1xf32>
    %216 = vector.multi_reduction <add>, %215, %cst_88 [0] : vector<16x1xf32> to vector<1xf32>
    %217 = vector.shape_cast %216 : vector<1xf32> to vector<1x1xf32>
    %218 = arith.addf %217, %17 : vector<1x1xf32>
    %219 = arith.mulf %212, %14 : vector<16x64xf32>
    %cst_89 = arith.constant dense<0.000000e+00> : vector<16xf32>
    %220 = vector.multi_reduction <add>, %219, %cst_89 [1] : vector<16x64xf32> to vector<16xf32>
    %221 = vector.shape_cast %220 : vector<16xf32> to vector<16x1xf32>
    %cst_90 = arith.constant dense<0.000000e+00> : vector<1xf32>
    %222 = vector.multi_reduction <add>, %221, %cst_90 [0] : vector<16x1xf32> to vector<1xf32>
    %223 = vector.shape_cast %222 : vector<1xf32> to vector<1x1xf32>
    %224 = arith.mulf %212, %16 : vector<16x64xf32>
    %cst_91 = arith.constant dense<0.000000e+00> : vector<16xf32>
    %225 = vector.multi_reduction <add>, %224, %cst_91 [1] : vector<16x64xf32> to vector<16xf32>
    %226 = vector.shape_cast %225 : vector<16xf32> to vector<16x1xf32>
    %cst_92 = arith.constant dense<0.000000e+00> : vector<1xf32>
    %227 = vector.multi_reduction <add>, %226, %cst_92 [0] : vector<16x1xf32> to vector<1xf32>
    %228 = vector.shape_cast %227 : vector<1xf32> to vector<1x1xf32>
    %229 = tpu.concatenate %223, %228 in 1 : vector<1x1xf32>, vector<1x1xf32> -> vector<1x2xf32>
    %230 = arith.addf %229, %18 : vector<1x2xf32>
    %231 = vector.broadcast %218 : vector<1x1xf32> to vector<1x2xf32>
    %232 = arith.mulf %231, %230 : vector<1x2xf32>
    %233 = tpu.concatenate %139, %232 in 0 : vector<1x2xf32>, vector<1x2xf32> -> vector<2x2xf32>
    %c0_93 = arith.constant 0 : index
    %c0_94 = arith.constant 0 : index
    %234 = vector.load %arg10[%c0_93, %c0_94] : memref<2x2xf32, #tpu.memory_space<vmem>>, vector<2x2xf32>
    tpu.vector_store %arg10[%c0_93, %c0_94], %233 {strides = array<i32>} : memref<2x2xf32, #tpu.memory_space<vmem>>, vector<2x2xf32>,
    return
  }
}

</mosaic_0001>

<llo_original>
// kernel: net_forward.2
$region0: #{net_forward.2}
  #allocation0 [shape = 'u32[]', space=smem, size = 0x4, offset = 0x4, fixed_abs, tag = 'smem constant byte address 0x4 - core index']
  #allocation1 [shape = 'u32[144,128]{1,0:T(1,128)}', space=vmem, size = 0x12000, scoped, tag = 'internal scratch']
  %s0 = inlined_call_operand.vmem [shape: f32[16,16], index: 0, kind: input, shape index: {}]
  %s1 = inlined_call_operand.hbm [shape: f32[16,44], index: 1, kind: input, shape index: {}]
  %s2 = inlined_call_operand.hbm [shape: f32[2,256,1024], index: 2, kind: input, shape index: {}]
  %s3 = inlined_call_operand.hbm [shape: f32[256,768], index: 3, kind: input, shape index: {}]
  %s4 = inlined_call_operand.hbm [shape: f32[1,768], index: 4, kind: input, shape index: {}]
  %s5 = inlined_call_operand.hbm [shape: f32[1,768], index: 5, kind: input, shape index: {}]
  %s6 = inlined_call_operand.vmem [shape: f32[16,256], index: 6, kind: output, shape index: {}]
  %s7 = sld [smem:[#allocation0]]
  $region54: #{net_forward.2} parent=0
    _
  %s9 = ssub.s32 1, %s7
  %s10 = scalar_select 0, %s9, %s7
  $region1: #{net_forward.2} parent=0
    #allocation2 [shape = 'u8[8192]{0}', space=vmem, size = 0x2000, scoped, tag = 'input window, operand 1, single buffered']
    #allocation3 [shape = 's32[1]{0}', space=sflag, size = 0x4, scoped, tag = 'scoped memory for net_forward.2']
    #allocation4 [shape = 'u8[2097152]{0}', space=vmem, size = 0x200000, scoped, tag = 'input window, operand 2, single buffered']
    #allocation5 [shape = 's32[1]{0}', space=sflag, size = 0x4, scoped, tag = 'scoped memory for net_forward.2']
    #allocation6 [shape = 'u8[786432]{0}', space=vmem, size = 0xc0000, scoped, tag = 'input window, operand 3, single buffered']
    #allocation7 [shape = 'u8[3072]{0}', space=vmem, size = 0xc00, scoped, tag = 'input window, operand 4, single buffered']
    #allocation8 [shape = 's32[1]{0}', space=sflag, size = 0x4, scoped, tag = 'scoped memory for net_forward.2']
    #allocation9 [shape = 'u8[3072]{0}', space=vmem, size = 0xc00, scoped, tag = 'input window, operand 5, single buffered']
    %11 = vsyncpa [#allocation3], 0
    %12 = vsyncpa [#allocation5], 0
    %13 = vsyncpa [#allocation8], 0
    // Predicated region
    $region2: #{net_forward.2} parent=1 // pred_check
      _
    $region3: #{net_forward.2} parent=1 // pred_check_branch
      %15 = sbr.rel (0) target = $region5
    $region4: #{net_forward.2} parent=1 // pred_region
      _
    $region5: #{net_forward.2} parent=1 // pred_fallthru
      _
    // Predicated region
    $region6: #{net_forward.2} parent=1 // pred_check
      _
    $region7: #{net_forward.2} parent=1 // pred_check_branch
      %17 = sbr.rel (0) target = $region9
    $region8: #{net_forward.2} parent=1 // pred_region
      %s19 = ssub.s32 256, 256
      %20 = vsyncadd [#allocation3], %s19
      %s21 = sshll.u32 [#allocation2], 4
      %s22 = int_to_ptr.vmem [resolvable:$true] %s21
      %27 = dma.hbm_to_vmem [thread:$0]  %s1, 256, %s22, [#allocation3], 128, 128, 8
    $region9: #{net_forward.2} parent=1 // pred_fallthru
      _
    // Predicated region
    $region10: #{net_forward.2} parent=1 // pred_check
      _
    $region11: #{net_forward.2} parent=1 // pred_check_branch
      %29 = sbr.rel (0) target = $region13
    $region12: #{net_forward.2} parent=1 // pred_region
      %s31 = ssub.s32 65536, 65536
      %32 = vsyncadd [#allocation5], %s31
      %s33 = sshll.u32 [#allocation4], 4
      %s34 = int_to_ptr.vmem [resolvable:$true] %s33
      %39 = dma.hbm_to_vmem [thread:$0]  %s2, 65536, %s34, [#allocation5], 1024, 1024, 64
    $region13: #{net_forward.2} parent=1 // pred_fallthru
      _
    // Predicated region
    $region14: #{net_forward.2} parent=1 // pred_check
      _
    $region15: #{net_forward.2} parent=1 // pred_check_branch
      %41 = sbr.rel (0) target = $region17
    $region16: #{net_forward.2} parent=1 // pred_region
      %s43 = ssub.s32 24576, 24576
      %44 = vsyncadd [#allocation5], %s43
      %s45 = sshll.u32 [#allocation6], 4
      %s46 = int_to_ptr.vmem [resolvable:$true] %s45
      %51 = dma.hbm_to_vmem [thread:$0]  %s3, 24576, %s46, [#allocation5], 768, 768, 48
    $region17: #{net_forward.2} parent=1 // pred_fallthru
      _
    // Predicated region
    $region18: #{net_forward.2} parent=1 // pred_check
      _
    $region19: #{net_forward.2} parent=1 // pred_check_branch
      %53 = sbr.rel (0) target = $region21
    $region20: #{net_forward.2} parent=1 // pred_region
      %s55 = ssub.s32 96, 96
      %56 = vsyncadd [#allocation8], %s55
      %s58 = sshll.u32 [#allocation7], 4
      %s59 = int_to_ptr.vmem [resolvable:$true] %s58
      %61 = dma.hbm_to_vmem [thread:$0]  %s4, 96, %s59, [#allocation8]
    $region21: #{net_forward.2} parent=1 // pred_fallthru
      _
    // Predicated region
    $region22: #{net_forward.2} parent=1 // pred_check
      _
    $region23: #{net_forward.2} parent=1 // pred_check_branch
      %63 = sbr.rel (0) target = $region25
    $region24: #{net_forward.2} parent=1 // pred_region
      %s65 = ssub.s32 96, 96
      %66 = vsyncadd [#allocation8], %s65
      %s68 = sshll.u32 [#allocation9], 4
      %s69 = int_to_ptr.vmem [resolvable:$true] %s68
      %71 = dma.hbm_to_vmem [thread:$0]  %s5, 96, %s69, [#allocation8]
    $region25: #{net_forward.2} parent=1 // pred_fallthru
      _
    // Predicated region
    $region26: #{net_forward.2} parent=1 // pred_check
      _
    $region27: #{net_forward.2} parent=1 // pred_check_branch
      %73 = sbr.rel (0) target = $region29
    $region28: #{net_forward.2} parent=1 // pred_region
      %74 = dma.done [#allocation3], 256
    $region29: #{net_forward.2} parent=1 // pred_fallthru
      _
    // Predicated region
    $region30: #{net_forward.2} parent=1 // pred_check
      _
    $region31: #{net_forward.2} parent=1 // pred_check_branch
      %76 = sbr.rel (0) target = $region33
    $region32: #{net_forward.2} parent=1 // pred_region
      %77 = dma.done [#allocation5], 65536
    $region33: #{net_forward.2} parent=1 // pred_fallthru
      _
    // Predicated region
    $region34: #{net_forward.2} parent=1 // pred_check
      _
    $region35: #{net_forward.2} parent=1 // pred_check_branch
      %79 = sbr.rel (0) target = $region37
    $region36: #{net_forward.2} parent=1 // pred_region
      %80 = dma.done [#allocation5], 24576
    $region37: #{net_forward.2} parent=1 // pred_fallthru
      _
    // Predicated region
    $region38: #{net_forward.2} parent=1 // pred_check
      _
    $region39: #{net_forward.2} parent=1 // pred_check_branch
      %82 = sbr.rel (0) target = $region41
    $region40: #{net_forward.2} parent=1 // pred_region
      %83 = dma.done [#allocation8], 96
    $region41: #{net_forward.2} parent=1 // pred_fallthru
      _
    // Predicated region
    $region42: #{net_forward.2} parent=1 // pred_check
      _
    $region43: #{net_forward.2} parent=1 // pred_check_branch
      %85 = sbr.rel (0) target = $region45
    $region44: #{net_forward.2} parent=1 // pred_region
      %86 = dma.done [#allocation8], 96
    $region45: #{net_forward.2} parent=1 // pred_fallthru
      _
    %v87 = vld [vmem:[%s0] sm:$0xff]
    %v88 = vld [vmem:[%s0 + $0x8] sm:$0xff]
    %v89 = vld [vmem:[#allocation6] sm:$0xff]
    %v90 = vld [vmem:[#allocation6 + $0x8] sm:$0xff]
    %v91 = vld [vmem:[#allocation6 + $0x10] sm:$0xff]
    %v92 = vld [vmem:[#allocation6 + $0x18] sm:$0xff]
    %v93 = vld [vmem:[#allocation6 + $0x20] sm:$0xff]
    %v94 = vld [vmem:[#allocation6 + $0x28] sm:$0xff]
    %v95 = vld [vmem:[#allocation6 + $0x30] sm:$0xff]
    %v96 = vld [vmem:[#allocation6 + $0x38] sm:$0xff]
    %v97 = vld [vmem:[#allocation6 + $0x40] sm:$0xff]
    %v98 = vld [vmem:[#allocation6 + $0x48] sm:$0xff]
    %v99 = vld [vmem:[#allocation6 + $0x50] sm:$0xff]
    %v100 = vld [vmem:[#allocation6 + $0x58] sm:$0xff]
    %v101 = vld [vmem:[#allocation6 + $0x60] sm:$0xff]
    %v102 = vld [vmem:[#allocation6 + $0x68] sm:$0xff]
    %v103 = vld [vmem:[#allocation6 + $0x70] sm:$0xff]
    %v104 = vld [vmem:[#allocation6 + $0x78] sm:$0xff]
    %v105 = vld [vmem:[#allocation6 + $0x80] sm:$0xff]
    %v106 = vld [vmem:[#allocation6 + $0x88] sm:$0xff]
    %v107 = vld [vmem:[#allocation6 + $0x90] sm:$0xff]
    %v108 = vld [vmem:[#allocation6 + $0x98] sm:$0xff]
    %v109 = vld [vmem:[#allocation6 + $0xa0] sm:$0xff]
    %v110 = vld [vmem:[#allocation6 + $0xa8] sm:$0xff]
    %v111 = vld [vmem:[#allocation6 + $0xb0] sm:$0xff]
    %v112 = vld [vmem:[#allocation6 + $0xb8] sm:$0xff]
    %v113 = vld [vmem:[#allocation6 + $0xc0] sm:$0xff]
    %v114 = vld [vmem:[#allocation6 + $0xc8] sm:$0xff]
    %v115 = vld [vmem:[#allocation6 + $0xd0] sm:$0xff]
    %v116 = vld [vmem:[#allocation6 + $0xd8] sm:$0xff]
    %v117 = vld [vmem:[#allocation6 + $0xe0] sm:$0xff]
    %v118 = vld [vmem:[#allocation6 + $0xe8] sm:$0xff]
    %v119 = vld [vmem:[#allocation6 + $0xf0] sm:$0xff]
    %v120 = vld [vmem:[#allocation6 + $0xf8] sm:$0xff]
    %v121 = vld [vmem:[#allocation6 + $0x100] sm:$0xff]
    %v122 = vld [vmem:[#allocation6 + $0x108] sm:$0xff]
    %v123 = vld [vmem:[#allocation6 + $0x110] sm:$0xff]
    %v124 = vld [vmem:[#allocation6 + $0x118] sm:$0xff]
    %v125 = vld [vmem:[#allocation6 + $0x120] sm:$0xff]
    %v126 = vld [vmem:[#allocation6 + $0x128] sm:$0xff]
    %v127 = vld [vmem:[#allocation6 + $0x130] sm:$0xff]
    %v128 = vld [vmem:[#allocation6 + $0x138] sm:$0xff]
    %v129 = vld [vmem:[#allocation6 + $0x140] sm:$0xff]
    %v130 = vld [vmem:[#allocation6 + $0x148] sm:$0xff]
    %v131 = vld [vmem:[#allocation6 + $0x150] sm:$0xff]
    %v132 = vld [vmem:[#allocation6 + $0x158] sm:$0xff]
    %v133 = vld [vmem:[#allocation6 + $0x160] sm:$0xff]
    %v134 = vld [vmem:[#allocation6 + $0x168] sm:$0xff]
    %v135 = vld [vmem:[#allocation6 + $0x170] sm:$0xff]
    %v136 = vld [vmem:[#allocation6 + $0x178] sm:$0xff]
    %v137 = vld [vmem:[#allocation6 + $0x180] sm:$0xff]
    %v138 = vld [vmem:[#allocation6 + $0x188] sm:$0xff]
    %v139 = vld [vmem:[#allocation6 + $0x190] sm:$0xff]
    %v140 = vld [vmem:[#allocation6 + $0x198] sm:$0xff]
    %v141 = vld [vmem:[#allocation6 + $0x1a0] sm:$0xff]
    %v142 = vld [vmem:[#allocation6 + $0x1a8] sm:$0xff]
    %v143 = vld [vmem:[#allocation6 + $0x1b0] sm:$0xff]
    %v144 = vld [vmem:[#allocation6 + $0x1b8] sm:$0xff]
    %v145 = vld [vmem:[#allocation6 + $0x1c0] sm:$0xff]
    %v146 = vld [vmem:[#allocation6 + $0x1c8] sm:$0xff]
    %v147 = vld [vmem:[#allocation6 + $0x1d0] sm:$0xff]
    %v148 = vld [vmem:[#allocation6 + $0x1d8] sm:$0xff]
    %v149 = vld [vmem:[#allocation6 + $0x1e0] sm:$0xff]
    %v150 = vld [vmem:[#allocation6 + $0x1e8] sm:$0xff]
    %v151 = vld [vmem:[#allocation6 + $0x1f0] sm:$0xff]
    %v152 = vld [vmem:[#allocation6 + $0x1f8] sm:$0xff]
    %v153 = vld [vmem:[#allocation6 + $0x200] sm:$0xff]
    %v154 = vld [vmem:[#allocation6 + $0x208] sm:$0xff]
    %v155 = vld [vmem:[#allocation6 + $0x210] sm:$0xff]
    %v156 = vld [vmem:[#allocation6 + $0x218] sm:$0xff]
    %v157 = vld [vmem:[#allocation6 + $0x220] sm:$0xff]
    %v158 = vld [vmem:[#allocation6 + $0x228] sm:$0xff]
    %v159 = vld [vmem:[#allocation6 + $0x230] sm:$0xff]
    %v160 = vld [vmem:[#allocation6 + $0x238] sm:$0xff]
    %v161 = vld [vmem:[#allocation6 + $0x240] sm:$0xff]
    %v162 = vld [vmem:[#allocation6 + $0x248] sm:$0xff]
    %v163 = vld [vmem:[#allocation6 + $0x250] sm:$0xff]
    %v164 = vld [vmem:[#allocation6 + $0x258] sm:$0xff]
    %v165 = vld [vmem:[#allocation6 + $0x260] sm:$0xff]
    %v166 = vld [vmem:[#allocation6 + $0x268] sm:$0xff]
    %v167 = vld [vmem:[#allocation6 + $0x270] sm:$0xff]
    %v168 = vld [vmem:[#allocation6 + $0x278] sm:$0xff]
    %v169 = vld [vmem:[#allocation6 + $0x280] sm:$0xff]
    %v170 = vld [vmem:[#allocation6 + $0x288] sm:$0xff]
    %v171 = vld [vmem:[#allocation6 + $0x290] sm:$0xff]
    %v172 = vld [vmem:[#allocation6 + $0x298] sm:$0xff]
    %v173 = vld [vmem:[#allocation6 + $0x2a0] sm:$0xff]
    %v174 = vld [vmem:[#allocation6 + $0x2a8] sm:$0xff]
    %v175 = vld [vmem:[#allocation6 + $0x2b0] sm:$0xff]
    %v176 = vld [vmem:[#allocation6 + $0x2b8] sm:$0xff]
    %v177 = vld [vmem:[#allocation6 + $0x2c0] sm:$0xff]
    %v178 = vld [vmem:[#allocation6 + $0x2c8] sm:$0xff]
    %v179 = vld [vmem:[#allocation6 + $0x2d0] sm:$0xff]
    %v180 = vld [vmem:[#allocation6 + $0x2d8] sm:$0xff]
    %v181 = vld [vmem:[#allocation6 + $0x2e0] sm:$0xff]
    %v182 = vld [vmem:[#allocation6 + $0x2e8] sm:$0xff]
    %v183 = vld [vmem:[#allocation6 + $0x2f0] sm:$0xff]
    %v184 = vld [vmem:[#allocation6 + $0x2f8] sm:$0xff]
    %v185 = vld [vmem:[#allocation6 + $0x300] sm:$0xff]
    %v186 = vld [vmem:[#allocation6 + $0x308] sm:$0xff]
    %v187 = vld [vmem:[#allocation6 + $0x310] sm:$0xff]
    %v188 = vld [vmem:[#allocation6 + $0x318] sm:$0xff]
    %v189 = vld [vmem:[#allocation6 + $0x320] sm:$0xff]
    %v190 = vld [vmem:[#allocation6 + $0x328] sm:$0xff]
    %v191 = vld [vmem:[#allocation6 + $0x330] sm:$0xff]
    %v192 = vld [vmem:[#allocation6 + $0x338] sm:$0xff]
    %v193 = vld [vmem:[#allocation6 + $0x340] sm:$0xff]
    %v194 = vld [vmem:[#allocation6 + $0x348] sm:$0xff]
    %v195 = vld [vmem:[#allocation6 + $0x350] sm:$0xff]
    %v196 = vld [vmem:[#allocation6 + $0x358] sm:$0xff]
    %v197 = vld [vmem:[#allocation6 + $0x360] sm:$0xff]
    %v198 = vld [vmem:[#allocation6 + $0x368] sm:$0xff]
    %v199 = vld [vmem:[#allocation6 + $0x370] sm:$0xff]
    %v200 = vld [vmem:[#allocation6 + $0x378] sm:$0xff]
    %v201 = vld [vmem:[#allocation6 + $0x380] sm:$0xff]
    %v202 = vld [vmem:[#allocation6 + $0x388] sm:$0xff]
    %v203 = vld [vmem:[#allocation6 + $0x390] sm:$0xff]
    %v204 = vld [vmem:[#allocation6 + $0x398] sm:$0xff]
    %v205 = vld [vmem:[#allocation6 + $0x3a0] sm:$0xff]
    %v206 = vld [vmem:[#allocation6 + $0x3a8] sm:$0xff]
    %v207 = vld [vmem:[#allocation6 + $0x3b0] sm:$0xff]
    %v208 = vld [vmem:[#allocation6 + $0x3b8] sm:$0xff]
    %v209 = vld [vmem:[#allocation6 + $0x3c0] sm:$0xff]
    %v210 = vld [vmem:[#allocation6 + $0x3c8] sm:$0xff]
    %v211 = vld [vmem:[#allocation6 + $0x3d0] sm:$0xff]
    %v212 = vld [vmem:[#allocation6 + $0x3d8] sm:$0xff]
    %v213 = vld [vmem:[#allocation6 + $0x3e0] sm:$0xff]
    %v214 = vld [vmem:[#allocation6 + $0x3e8] sm:$0xff]
    %v215 = vld [vmem:[#allocation6 + $0x3f0] sm:$0xff]
    %v216 = vld [vmem:[#allocation6 + $0x3f8] sm:$0xff]
    %v217 = vld [vmem:[#allocation6 + $0x400] sm:$0xff]
    %v218 = vld [vmem:[#allocation6 + $0x408] sm:$0xff]
    %v219 = vld [vmem:[#allocation6 + $0x410] sm:$0xff]
    %v220 = vld [vmem:[#allocation6 + $0x418] sm:$0xff]
    %v221 = vld [vmem:[#allocation6 + $0x420] sm:$0xff]
    %v222 = vld [vmem:[#allocation6 + $0x428] sm:$0xff]
    %v223 = vld [vmem:[#allocation6 + $0x430] sm:$0xff]
    %v224 = vld [vmem:[#allocation6 + $0x438] sm:$0xff]
    %v225 = vld [vmem:[#allocation6 + $0x440] sm:$0xff]
    %v226 = vld [vmem:[#allocation6 + $0x448] sm:$0xff]
    %v227 = vld [vmem:[#allocation6 + $0x450] sm:$0xff]
    %v228 = vld [vmem:[#allocation6 + $0x458] sm:$0xff]
    %v229 = vld [vmem:[#allocation6 + $0x460] sm:$0xff]
    %v230 = vld [vmem:[#allocation6 + $0x468] sm:$0xff]
    %v231 = vld [vmem:[#allocation6 + $0x470] sm:$0xff]
    %v232 = vld [vmem:[#allocation6 + $0x478] sm:$0xff]
    %v233 = vld [vmem:[#allocation6 + $0x480] sm:$0xff]
    %v234 = vld [vmem:[#allocation6 + $0x488] sm:$0xff]
    %v235 = vld [vmem:[#allocation6 + $0x490] sm:$0xff]
    %v236 = vld [vmem:[#allocation6 + $0x498] sm:$0xff]
    %v237 = vld [vmem:[#allocation6 + $0x4a0] sm:$0xff]
    %v238 = vld [vmem:[#allocation6 + $0x4a8] sm:$0xff]
    %v239 = vld [vmem:[#allocation6 + $0x4b0] sm:$0xff]
    %v240 = vld [vmem:[#allocation6 + $0x4b8] sm:$0xff]
    %v241 = vld [vmem:[#allocation6 + $0x4c0] sm:$0xff]
    %v242 = vld [vmem:[#allocation6 + $0x4c8] sm:$0xff]
    %v243 = vld [vmem:[#allocation6 + $0x4d0] sm:$0xff]
    %v244 = vld [vmem:[#allocation6 + $0x4d8] sm:$0xff]
    %v245 = vld [vmem:[#allocation6 + $0x4e0] sm:$0xff]
    %v246 = vld [vmem:[#allocation6 + $0x4e8] sm:$0xff]
    %v247 = vld [vmem:[#allocation6 + $0x4f0] sm:$0xff]
    %v248 = vld [vmem:[#allocation6 + $0x4f8] sm:$0xff]
    %v249 = vld [vmem:[#allocation6 + $0x500] sm:$0xff]
    %v250 = vld [vmem:[#allocation6 + $0x508] sm:$0xff]
    %v251 = vld [vmem:[#allocation6 + $0x510] sm:$0xff]
    %v252 = vld [vmem:[#allocation6 + $0x518] sm:$0xff]
    %v253 = vld [vmem:[#allocation6 + $0x520] sm:$0xff]
    %v254 = vld [vmem:[#allocation6 + $0x528] sm:$0xff]
    %v255 = vld [vmem:[#allocation6 + $0x530] sm:$0xff]
    %v256 = vld [vmem:[#allocation6 + $0x538] sm:$0xff]
    %v257 = vld [vmem:[#allocation6 + $0x540] sm:$0xff]
    %v258 = vld [vmem:[#allocation6 + $0x548] sm:$0xff]
    %v259 = vld [vmem:[#allocation6 + $0x550] sm:$0xff]
    %v260 = vld [vmem:[#allocation6 + $0x558] sm:$0xff]
    %v261 = vld [vmem:[#allocation6 + $0x560] sm:$0xff]
    %v262 = vld [vmem:[#allocation6 + $0x568] sm:$0xff]
    %v263 = vld [vmem:[#allocation6 + $0x570] sm:$0xff]
    %v264 = vld [vmem:[#allocation6 + $0x578] sm:$0xff]
    %v265 = vld [vmem:[#allocation6 + $0x580] sm:$0xff]
    %v266 = vld [vmem:[#allocation6 + $0x588] sm:$0xff]
    %v267 = vld [vmem:[#allocation6 + $0x590] sm:$0xff]
    %v268 = vld [vmem:[#allocation6 + $0x598] sm:$0xff]
    %v269 = vld [vmem:[#allocation6 + $0x5a0] sm:$0xff]
    %v270 = vld [vmem:[#allocation6 + $0x5a8] sm:$0xff]
    %v271 = vld [vmem:[#allocation6 + $0x5b0] sm:$0xff]
    %v272 = vld [vmem:[#allocation6 + $0x5b8] sm:$0xff]
    %v273 = vld [vmem:[#allocation6 + $0x5c0] sm:$0xff]
    %v274 = vld [vmem:[#allocation6 + $0x5c8] sm:$0xff]
    %v275 = vld [vmem:[#allocation6 + $0x5d0] sm:$0xff]
    %v276 = vld [vmem:[#allocation6 + $0x5d8] sm:$0xff]
    %v277 = vld [vmem:[#allocation6 + $0x5e0] sm:$0xff]
    %v278 = vld [vmem:[#allocation6 + $0x5e8] sm:$0xff]
    %v279 = vld [vmem:[#allocation6 + $0x5f0] sm:$0xff]
    %v280 = vld [vmem:[#allocation6 + $0x5f8] sm:$0xff]
    %v281 = vld [vmem:[#allocation7] sm:$0x3f]
    %v282 = vld [vmem:[#allocation9] sm:$0x3f]
    %v283 = vld [vmem:[#allocation2] sm:$0xff]
    %v284 = vld [vmem:[#allocation2 + $0x8] sm:$0xff]
    %vm285 = vcmask 359424
    %v286 = vsel %vm285, %v283, 0.0
    %v287 = vsel %vm285, %v284, 0.0
    %v288 = vld [vmem:[#allocation4] sm:$0xff]
    %v289 = vld [vmem:[#allocation4 + $0x8] sm:$0xff]
    %v290 = vld [vmem:[#allocation4 + $0x10] sm:$0xff]
    %v291 = vld [vmem:[#allocation4 + $0x18] sm:$0xff]
    %v292 = vld [vmem:[#allocation4 + $0x20] sm:$0xff]
    %v293 = vld [vmem:[#allocation4 + $0x28] sm:$0xff]
    %v294 = vld [vmem:[#allocation4 + $0x30] sm:$0xff]
    %v295 = vld [vmem:[#allocation4 + $0x38] sm:$0xff]
    %v296 = vld [vmem:[#allocation4 + $0x40] sm:$0xff]
    %v297 = vld [vmem:[#allocation4 + $0x48] sm:$0xff]
    %v298 = vld [vmem:[#allocation4 + $0x50] sm:$0xff]
    %v299 = vld [vmem:[#allocation4 + $0x58] sm:$0xff]
    %v300 = vld [vmem:[#allocation4 + $0x60] sm:$0xff]
    %v301 = vld [vmem:[#allocation4 + $0x68] sm:$0xff]
    %v302 = vld [vmem:[#allocation4 + $0x70] sm:$0xff]
    %v303 = vld [vmem:[#allocation4 + $0x78] sm:$0xff]
    %v304 = vld [vmem:[#allocation4 + $0x80] sm:$0xff]
    %v305 = vld [vmem:[#allocation4 + $0x88] sm:$0xff]
    %v306 = vld [vmem:[#allocation4 + $0x90] sm:$0xff]
    %v307 = vld [vmem:[#allocation4 + $0x98] sm:$0xff]
    %v308 = vld [vmem:[#allocation4 + $0xa0] sm:$0xff]
    %v309 = vld [vmem:[#allocation4 + $0xa8] sm:$0xff]
    %v310 = vld [vmem:[#allocation4 + $0xb0] sm:$0xff]
    %v311 = vld [vmem:[#allocation4 + $0xb8] sm:$0xff]
    %v312 = vld [vmem:[#allocation4 + $0xc0] sm:$0xff]
    %v313 = vld [vmem:[#allocation4 + $0xc8] sm:$0xff]
    %v314 = vld [vmem:[#allocation4 + $0xd0] sm:$0xff]
    %v315 = vld [vmem:[#allocation4 + $0xd8] sm:$0xff]
    %v316 = vld [vmem:[#allocation4 + $0xe0] sm:$0xff]
    %v317 = vld [vmem:[#allocation4 + $0xe8] sm:$0xff]
    %v318 = vld [vmem:[#allocation4 + $0xf0] sm:$0xff]
    %v319 = vld [vmem:[#allocation4 + $0xf8] sm:$0xff]
    %v320 = vld [vmem:[#allocation4 + $0x100] sm:$0xff]
    %v321 = vld [vmem:[#allocation4 + $0x108] sm:$0xff]
    %v322 = vld [vmem:[#allocation4 + $0x110] sm:$0xff]
    %v323 = vld [vmem:[#allocation4 + $0x118] sm:$0xff]
    %v324 = vld [vmem:[#allocation4 + $0x120] sm:$0xff]
    %v325 = vld [vmem:[#allocation4 + $0x128] sm:$0xff]
    %v326 = vld [vmem:[#allocation4 + $0x130] sm:$0xff]
    %v327 = vld [vmem:[#allocation4 + $0x138] sm:$0xff]
    %v328 = vld [vmem:[#allocation4 + $0x140] sm:$0xff]
    %v329 = vld [vmem:[#allocation4 + $0x148] sm:$0xff]
    %v330 = vld [vmem:[#allocation4 + $0x150] sm:$0xff]
    %v331 = vld [vmem:[#allocation4 + $0x158] sm:$0xff]
    %v332 = vld [vmem:[#allocation4 + $0x160] sm:$0xff]
    %v333 = vld [vmem:[#allocation4 + $0x168] sm:$0xff]
    %v334 = vld [vmem:[#allocation4 + $0x170] sm:$0xff]
    %v335 = vld [vmem:[#allocation4 + $0x178] sm:$0xff]
    %v336 = vld [vmem:[#allocation4 + $0x180] sm:$0xff]
    %v337 = vld [vmem:[#allocation4 + $0x188] sm:$0xff]
    %v338 = vld [vmem:[#allocation4 + $0x190] sm:$0xff]
    %v339 = vld [vmem:[#allocation4 + $0x198] sm:$0xff]
    %v340 = vld [vmem:[#allocation4 + $0x1a0] sm:$0xff]
    %v341 = vld [vmem:[#allocation4 + $0x1a8] sm:$0xff]
    %v342 = vld [vmem:[#allocation4 + $0x1b0] sm:$0xff]
    %v343 = vld [vmem:[#allocation4 + $0x1b8] sm:$0xff]
    %v344 = vld [vmem:[#allocation4 + $0x1c0] sm:$0xff]
    %v345 = vld [vmem:[#allocation4 + $0x1c8] sm:$0xff]
    %v346 = vld [vmem:[#allocation4 + $0x1d0] sm:$0xff]
    %v347 = vld [vmem:[#allocation4 + $0x1d8] sm:$0xff]
    %v348 = vld [vmem:[#allocation4 + $0x1e0] sm:$0xff]
    %v349 = vld [vmem:[#allocation4 + $0x1e8] sm:$0xff]
    %v350 = vld [vmem:[#allocation4 + $0x1f0] sm:$0xff]
    %v351 = vld [vmem:[#allocation4 + $0x1f8] sm:$0xff]
    %v352 = vld [vmem:[#allocation4 + $0x200] sm:$0xff]
    %v353 = vld [vmem:[#allocation4 + $0x208] sm:$0xff]
    %v354 = vld [vmem:[#allocation4 + $0x210] sm:$0xff]
    %v355 = vld [vmem:[#allocation4 + $0x218] sm:$0xff]
    %v356 = vld [vmem:[#allocation4 + $0x220] sm:$0xff]
    %v357 = vld [vmem:[#allocation4 + $0x228] sm:$0xff]
    %v358 = vld [vmem:[#allocation4 + $0x230] sm:$0xff]
    %v359 = vld [vmem:[#allocation4 + $0x238] sm:$0xff]
    %v360 = vld [vmem:[#allocation4 + $0x240] sm:$0xff]
    %v361 = vld [vmem:[#allocation4 + $0x248] sm:$0xff]
    %v362 = vld [vmem:[#allocation4 + $0x250] sm:$0xff]
    %v363 = vld [vmem:[#allocation4 + $0x258] sm:$0xff]
    %v364 = vld [vmem:[#allocation4 + $0x260] sm:$0xff]
    %v365 = vld [vmem:[#allocation4 + $0x268] sm:$0xff]
    %v366 = vld [vmem:[#allocation4 + $0x270] sm:$0xff]
    %v367 = vld [vmem:[#allocation4 + $0x278] sm:$0xff]
    %v368 = vld [vmem:[#allocation4 + $0x280] sm:$0xff]
    %v369 = vld [vmem:[#allocation4 + $0x288] sm:$0xff]
    %v370 = vld [vmem:[#allocation4 + $0x290] sm:$0xff]
    %v371 = vld [vmem:[#allocation4 + $0x298] sm:$0xff]
    %v372 = vld [vmem:[#allocation4 + $0x2a0] sm:$0xff]
    %v373 = vld [vmem:[#allocation4 + $0x2a8] sm:$0xff]
    %v374 = vld [vmem:[#allocation4 + $0x2b0] sm:$0xff]
    %v375 = vld [vmem:[#allocation4 + $0x2b8] sm:$0xff]
    %v376 = vld [vmem:[#allocation4 + $0x2c0] sm:$0xff]
    %v377 = vld [vmem:[#allocation4 + $0x2c8] sm:$0xff]
    %v378 = vld [vmem:[#allocation4 + $0x2d0] sm:$0xff]
    %v379 = vld [vmem:[#allocation4 + $0x2d8] sm:$0xff]
    %v380 = vld [vmem:[#allocation4 + $0x2e0] sm:$0xff]
    %v381 = vld [vmem:[#allocation4 + $0x2e8] sm:$0xff]
    %v382 = vld [vmem:[#allocation4 + $0x2f0] sm:$0xff]
    %v383 = vld [vmem:[#allocation4 + $0x2f8] sm:$0xff]
    %v384 = vld [vmem:[#allocation4 + $0x300] sm:$0xff]
    %v385 = vld [vmem:[#allocation4 + $0x308] sm:$0xff]
    %v386 = vld [vmem:[#allocation4 + $0x310] sm:$0xff]
    %v387 = vld [vmem:[#allocation4 + $0x318] sm:$0xff]
    %v388 = vld [vmem:[#allocation4 + $0x320] sm:$0xff]
    %v389 = vld [vmem:[#allocation4 + $0x328] sm:$0xff]
    %v390 = vld [vmem:[#allocation4 + $0x330] sm:$0xff]
    %v391 = vld [vmem:[#allocation4 + $0x338] sm:$0xff]
    %v392 = vld [vmem:[#allocation4 + $0x340] sm:$0xff]
    %v393 = vld [vmem:[#allocation4 + $0x348] sm:$0xff]
    %v394 = vld [vmem:[#allocation4 + $0x350] sm:$0xff]
    %v395 = vld [vmem:[#allocation4 + $0x358] sm:$0xff]
    %v396 = vld [vmem:[#allocation4 + $0x360] sm:$0xff]
    %v397 = vld [vmem:[#allocation4 + $0x368] sm:$0xff]
    %v398 = vld [vmem:[#allocation4 + $0x370] sm:$0xff]
    %v399 = vld [vmem:[#allocation4 + $0x378] sm:$0xff]
    %v400 = vld [vmem:[#allocation4 + $0x380] sm:$0xff]
    %v401 = vld [vmem:[#allocation4 + $0x388] sm:$0xff]
    %v402 = vld [vmem:[#allocation4 + $0x390] sm:$0xff]
    %v403 = vld [vmem:[#allocation4 + $0x398] sm:$0xff]
    %v404 = vld [vmem:[#allocation4 + $0x3a0] sm:$0xff]
    %v405 = vld [vmem:[#allocation4 + $0x3a8] sm:$0xff]
    %v406 = vld [vmem:[#allocation4 + $0x3b0] sm:$0xff]
    %v407 = vld [vmem:[#allocation4 + $0x3b8] sm:$0xff]
    %v408 = vld [vmem:[#allocation4 + $0x3c0] sm:$0xff]
    %v409 = vld [vmem:[#allocation4 + $0x3c8] sm:$0xff]
    %v410 = vld [vmem:[#allocation4 + $0x3d0] sm:$0xff]
    %v411 = vld [vmem:[#allocation4 + $0x3d8] sm:$0xff]
    %v412 = vld [vmem:[#allocation4 + $0x3e0] sm:$0xff]
    %v413 = vld [vmem:[#allocation4 + $0x3e8] sm:$0xff]
    %v414 = vld [vmem:[#allocation4 + $0x3f0] sm:$0xff]
    %v415 = vld [vmem:[#allocation4 + $0x3f8] sm:$0xff]
    %v416 = vld [vmem:[#allocation4 + $0x400] sm:$0xff]
    %v417 = vld [vmem:[#allocation4 + $0x408] sm:$0xff]
    %v418 = vld [vmem:[#allocation4 + $0x410] sm:$0xff]
    %v419 = vld [vmem:[#allocation4 + $0x418] sm:$0xff]
    %v420 = vld [vmem:[#allocation4 + $0x420] sm:$0xff]
    %v421 = vld [vmem:[#allocation4 + $0x428] sm:$0xff]
    %v422 = vld [vmem:[#allocation4 + $0x430] sm:$0xff]
    %v423 = vld [vmem:[#allocation4 + $0x438] sm:$0xff]
    %v424 = vld [vmem:[#allocation4 + $0x440] sm:$0xff]
    %v425 = vld [vmem:[#allocation4 + $0x448] sm:$0xff]
    %v426 = vld [vmem:[#allocation4 + $0x450] sm:$0xff]
    %v427 = vld [vmem:[#allocation4 + $0x458] sm:$0xff]
    %v428 = vld [vmem:[#allocation4 + $0x460] sm:$0xff]
    %v429 = vld [vmem:[#allocation4 + $0x468] sm:$0xff]
    %v430 = vld [vmem:[#allocation4 + $0x470] sm:$0xff]
    %v431 = vld [vmem:[#allocation4 + $0x478] sm:$0xff]
    %v432 = vld [vmem:[#allocation4 + $0x480] sm:$0xff]
    %v433 = vld [vmem:[#allocation4 + $0x488] sm:$0xff]
    %v434 = vld [vmem:[#allocation4 + $0x490] sm:$0xff]
    %v435 = vld [vmem:[#allocation4 + $0x498] sm:$0xff]
    %v436 = vld [vmem:[#allocation4 + $0x4a0] sm:$0xff]
    %v437 = vld [vmem:[#allocation4 + $0x4a8] sm:$0xff]
    %v438 = vld [vmem:[#allocation4 + $0x4b0] sm:$0xff]
    %v439 = vld [vmem:[#allocation4 + $0x4b8] sm:$0xff]
    %v440 = vld [vmem:[#allocation4 + $0x4c0] sm:$0xff]
    %v441 = vld [vmem:[#allocation4 + $0x4c8] sm:$0xff]
    %v442 = vld [vmem:[#allocation4 + $0x4d0] sm:$0xff]
    %v443 = vld [vmem:[#allocation4 + $0x4d8] sm:$0xff]
    %v444 = vld [vmem:[#allocation4 + $0x4e0] sm:$0xff]
    %v445 = vld [vmem:[#allocation4 + $0x4e8] sm:$0xff]
    %v446 = vld [vmem:[#allocation4 + $0x4f0] sm:$0xff]
    %v447 = vld [vmem:[#allocation4 + $0x4f8] sm:$0xff]
    %v448 = vld [vmem:[#allocation4 + $0x500] sm:$0xff]
    %v449 = vld [vmem:[#allocation4 + $0x508] sm:$0xff]
    %v450 = vld [vmem:[#allocation4 + $0x510] sm:$0xff]
    %v451 = vld [vmem:[#allocation4 + $0x518] sm:$0xff]
    %v452 = vld [vmem:[#allocation4 + $0x520] sm:$0xff]
    %v453 = vld [vmem:[#allocation4 + $0x528] sm:$0xff]
    %v454 = vld [vmem:[#allocation4 + $0x530] sm:$0xff]
    %v455 = vld [vmem:[#allocation4 + $0x538] sm:$0xff]
    %v456 = vld [vmem:[#allocation4 + $0x540] sm:$0xff]
    %v457 = vld [vmem:[#allocation4 + $0x548] sm:$0xff]
    %v458 = vld [vmem:[#allocation4 + $0x550] sm:$0xff]
    %v459 = vld [vmem:[#allocation4 + $0x558] sm:$0xff]
    %v460 = vld [vmem:[#allocation4 + $0x560] sm:$0xff]
    %v461 = vld [vmem:[#allocation4 + $0x568] sm:$0xff]
    %v462 = vld [vmem:[#allocation4 + $0x570] sm:$0xff]
    %v463 = vld [vmem:[#allocation4 + $0x578] sm:$0xff]
    %v464 = vld [vmem:[#allocation4 + $0x580] sm:$0xff]
    %v465 = vld [vmem:[#allocation4 + $0x588] sm:$0xff]
    %v466 = vld [vmem:[#allocation4 + $0x590] sm:$0xff]
    %v467 = vld [vmem:[#allocation4 + $0x598] sm:$0xff]
    %v468 = vld [vmem:[#allocation4 + $0x5a0] sm:$0xff]
    %v469 = vld [vmem:[#allocation4 + $0x5a8] sm:$0xff]
    %v470 = vld [vmem:[#allocation4 + $0x5b0] sm:$0xff]
    %v471 = vld [vmem:[#allocation4 + $0x5b8] sm:$0xff]
    %v472 = vld [vmem:[#allocation4 + $0x5c0] sm:$0xff]
    %v473 = vld [vmem:[#allocation4 + $0x5c8] sm:$0xff]
    %v474 = vld [vmem:[#allocation4 + $0x5d0] sm:$0xff]
    %v475 = vld [vmem:[#allocation4 + $0x5d8] sm:$0xff]
    %v476 = vld [vmem:[#allocation4 + $0x5e0] sm:$0xff]
    %v477 = vld [vmem:[#allocation4 + $0x5e8] sm:$0xff]
    %v478 = vld [vmem:[#allocation4 + $0x5f0] sm:$0xff]
    %v479 = vld [vmem:[#allocation4 + $0x5f8] sm:$0xff]
    %v480 = vld [vmem:[#allocation4 + $0x600] sm:$0xff]
    %v481 = vld [vmem:[#allocation4 + $0x608] sm:$0xff]
    %v482 = vld [vmem:[#allocation4 + $0x610] sm:$0xff]
    %v483 = vld [vmem:[#allocation4 + $0x618] sm:$0xff]
    %v484 = vld [vmem:[#allocation4 + $0x620] sm:$0xff]
    %v485 = vld [vmem:[#allocation4 + $0x628] sm:$0xff]
    %v486 = vld [vmem:[#allocation4 + $0x630] sm:$0xff]
    %v487 = vld [vmem:[#allocation4 + $0x638] sm:$0xff]
    %v488 = vld [vmem:[#allocation4 + $0x640] sm:$0xff]
    %v489 = vld [vmem:[#allocation4 + $0x648] sm:$0xff]
    %v490 = vld [vmem:[#allocation4 + $0x650] sm:$0xff]
    %v491 = vld [vmem:[#allocation4 + $0x658] sm:$0xff]
    %v492 = vld [vmem:[#allocation4 + $0x660] sm:$0xff]
    %v493 = vld [vmem:[#allocation4 + $0x668] sm:$0xff]
    %v494 = vld [vmem:[#allocation4 + $0x670] sm:$0xff]
    %v495 = vld [vmem:[#allocation4 + $0x678] sm:$0xff]
    %v496 = vld [vmem:[#allocation4 + $0x680] sm:$0xff]
    %v497 = vld [vmem:[#allocation4 + $0x688] sm:$0xff]
    %v498 = vld [vmem:[#allocation4 + $0x690] sm:$0xff]
    %v499 = vld [vmem:[#allocation4 + $0x698] sm:$0xff]
    %v500 = vld [vmem:[#allocation4 + $0x6a0] sm:$0xff]
    %v501 = vld [vmem:[#allocation4 + $0x6a8] sm:$0xff]
    %v502 = vld [vmem:[#allocation4 + $0x6b0] sm:$0xff]
    %v503 = vld [vmem:[#allocation4 + $0x6b8] sm:$0xff]
    %v504 = vld [vmem:[#allocation4 + $0x6c0] sm:$0xff]
    %v505 = vld [vmem:[#allocation4 + $0x6c8] sm:$0xff]
    %v506 = vld [vmem:[#allocation4 + $0x6d0] sm:$0xff]
    %v507 = vld [vmem:[#allocation4 + $0x6d8] sm:$0xff]
    %v508 = vld [vmem:[#allocation4 + $0x6e0] sm:$0xff]
    %v509 = vld [vmem:[#allocation4 + $0x6e8] sm:$0xff]
    %v510 = vld [vmem:[#allocation4 + $0x6f0] sm:$0xff]
    %v511 = vld [vmem:[#allocation4 + $0x6f8] sm:$0xff]
    %v512 = vld [vmem:[#allocation4 + $0x700] sm:$0xff]
    %v513 = vld [vmem:[#allocation4 + $0x708] sm:$0xff]
    %v514 = vld [vmem:[#allocation4 + $0x710] sm:$0xff]
    %v515 = vld [vmem:[#allocation4 + $0x718] sm:$0xff]
    %v516 = vld [vmem:[#allocation4 + $0x720] sm:$0xff]
    %v517 = vld [vmem:[#allocation4 + $0x728] sm:$0xff]
    %v518 = vld [vmem:[#allocation4 + $0x730] sm:$0xff]
    %v519 = vld [vmem:[#allocation4 + $0x738] sm:$0xff]
    %v520 = vld [vmem:[#allocation4 + $0x740] sm:$0xff]
    %v521 = vld [vmem:[#allocation4 + $0x748] sm:$0xff]
    %v522 = vld [vmem:[#allocation4 + $0x750] sm:$0xff]
    %v523 = vld [vmem:[#allocation4 + $0x758] sm:$0xff]
    %v524 = vld [vmem:[#allocation4 + $0x760] sm:$0xff]
    %v525 = vld [vmem:[#allocation4 + $0x768] sm:$0xff]
    %v526 = vld [vmem:[#allocation4 + $0x770] sm:$0xff]
    %v527 = vld [vmem:[#allocation4 + $0x778] sm:$0xff]
    %v528 = vld [vmem:[#allocation4 + $0x780] sm:$0xff]
    %v529 = vld [vmem:[#allocation4 + $0x788] sm:$0xff]
    %v530 = vld [vmem:[#allocation4 + $0x790] sm:$0xff]
    %v531 = vld [vmem:[#allocation4 + $0x798] sm:$0xff]
    %v532 = vld [vmem:[#allocation4 + $0x7a0] sm:$0xff]
    %v533 = vld [vmem:[#allocation4 + $0x7a8] sm:$0xff]
    %v534 = vld [vmem:[#allocation4 + $0x7b0] sm:$0xff]
    %v535 = vld [vmem:[#allocation4 + $0x7b8] sm:$0xff]
    %v536 = vld [vmem:[#allocation4 + $0x7c0] sm:$0xff]
    %v537 = vld [vmem:[#allocation4 + $0x7c8] sm:$0xff]
    %v538 = vld [vmem:[#allocation4 + $0x7d0] sm:$0xff]
    %v539 = vld [vmem:[#allocation4 + $0x7d8] sm:$0xff]
    %v540 = vld [vmem:[#allocation4 + $0x7e0] sm:$0xff]
    %v541 = vld [vmem:[#allocation4 + $0x7e8] sm:$0xff]
    %v542 = vld [vmem:[#allocation4 + $0x7f0] sm:$0xff]
    %v543 = vld [vmem:[#allocation4 + $0x7f8] sm:$0xff]
    %544 = vmatprep.subr.mxu0 %v289
    %545 = vmatpush1.msra.mxu0 %v288
    %546 = vmatprep.subr.mxu0 %v297
    %547 = vmatpush1.msra.mxu0 %v296
    %548 = vmatprep.subr.mxu0 %v305
    %549 = vmatpush1.msra.mxu0 %v304
    %550 = vmatprep.subr.mxu0 %v313
    %551 = vmatpush1.msra.mxu0 %v312
    %552 = vmatprep.subr.mxu0 %v321
    %553 = vmatpush1.msra.mxu0 %v320
    %554 = vmatprep.subr.mxu0 %v329
    %555 = vmatpush1.msra.mxu0 %v328
    %556 = vmatprep.subr.mxu0 %v337
    %557 = vmatpush1.msra.mxu0 %v336
    %558 = vmatprep.subr.mxu0 %v345
    %559 = vmatpush1.msra.mxu0 %v344
    %560 = vmatprep.subr.mxu0 %v353
    %561 = vmatpush1.msra.mxu0 %v352
    %562 = vmatprep.subr.mxu0 %v361
    %563 = vmatpush1.msra.mxu0 %v360
    %564 = vmatprep.subr.mxu0 %v369
    %565 = vmatpush1.msra.mxu0 %v368
    %566 = vmatprep.subr.mxu0 %v377
    %567 = vmatpush1.msra.mxu0 %v376
    %568 = vmatprep.subr.mxu0 %v385
    %569 = vmatpush1.msra.mxu0 %v384
    %570 = vmatprep.subr.mxu0 %v393
    %571 = vmatpush1.msra.mxu0 %v392
    %572 = vmatprep.subr.mxu0 %v401
    %573 = vmatpush1.msra.mxu0 %v400
    %574 = vmatprep.subr.mxu0 %v409
    %575 = vmatpush1.msra.mxu0 %v408
    %576 = vmatprep.subr.mxu0 %v417
    %577 = vmatpush1.msra.mxu0 %v416
    %578 = vmatprep.subr.mxu0 %v425
    %579 = vmatpush1.msra.mxu0 %v424
    %580 = vmatprep.subr.mxu0 %v433
    %581 = vmatpush1.msra.mxu0 %v432
    %582 = vmatprep.subr.mxu0 %v441
    %583 = vmatpush1.msra.mxu0 %v440
    %584 = vmatprep.subr.mxu0 %v449
    %585 = vmatpush1.msra.mxu0 %v448
    %586 = vmatprep.subr.mxu0 %v457
    %587 = vmatpush1.msra.mxu0 %v456
    %588 = vmatprep.subr.mxu0 %v465
    %589 = vmatpush1.msra.mxu0 %v464
    %590 = vmatprep.subr.mxu0 %v473
    %591 = vmatpush1.msra.mxu0 %v472
    %592 = vmatprep.subr.mxu0 %v481
    %593 = vmatpush1.msra.mxu0 %v480
    %594 = vmatprep.subr.mxu0 %v489
    %595 = vmatpush1.msra.mxu0 %v488
    %596 = vmatprep.subr.mxu0 %v497
    %597 = vmatpush1.msra.mxu0 %v496
    %598 = vmatprep.subr.mxu0 %v505
    %599 = vmatpush1.msra.mxu0 %v504
    %600 = vmatprep.subr.mxu0 %v513
    %601 = vmatpush1.msra.mxu0 %v512
    %602 = vmatprep.subr.mxu0 %v521
    %603 = vmatpush1.msra.mxu0 %v520
    %604 = vmatprep.subr.mxu0 %v529
    %605 = vmatpush1.msra.mxu0 %v528
    %606 = vmatprep.subr.mxu0 %v537
    %607 = vmatpush1.msra.mxu0 %v536
    %608 = vmatprep.mubr.f32.mxu0 0.0
    %609 = vmatmul.mubr.f32.gmra.mrb[0].mxu0 %v286
    %v610 = vpop.f32.mrb[0].mxu0
    %v611 = vadd.f32 0.0, %v610
    %v612 = vpop.f32.mrb[0].mxu0
    %v613 = vadd.f32 0.0, %v612
    %614 = vmatprep.mubr.f32.mxu0 0.0
    %615 = vmatmul.mubr.f32.gmra.mrb[0].mxu0 %v287
    %v616 = vpop.f32.mrb[0].mxu0
    %v617 = vadd.f32 0.0, %v616
    %v618 = vpop.f32.mrb[0].mxu0
    %v619 = vadd.f32 0.0, %v618
    %620 = vdwg.mxu0
    %621 = vmatprep.subr.mxu0 %v291
    %622 = vmatpush1.msra.mxu0 %v290
    %623 = vmatprep.subr.mxu0 %v299
    %624 = vmatpush1.msra.mxu0 %v298
    %625 = vmatprep.subr.mxu0 %v307
    %626 = vmatpush1.msra.mxu0 %v306
    %627 = vmatprep.subr.mxu0 %v315
    %628 = vmatpush1.msra.mxu0 %v314
    %629 = vmatprep.subr.mxu0 %v323
    %630 = vmatpush1.msra.mxu0 %v322
    %631 = vmatprep.subr.mxu0 %v331
    %632 = vmatpush1.msra.mxu0 %v330
    %633 = vmatprep.subr.mxu0 %v339
    %634 = vmatpush1.msra.mxu0 %v338
    %635 = vmatprep.subr.mxu0 %v347
    %636 = vmatpush1.msra.mxu0 %v346
    %637 = vmatprep.subr.mxu0 %v355
    %638 = vmatpush1.msra.mxu0 %v354
    %639 = vmatprep.subr.mxu0 %v363
    %640 = vmatpush1.msra.mxu0 %v362
    %641 = vmatprep.subr.mxu0 %v371
    %642 = vmatpush1.msra.mxu0 %v370
    %643 = vmatprep.subr.mxu0 %v379
    %644 = vmatpush1.msra.mxu0 %v378
    %645 = vmatprep.subr.mxu0 %v387
    %646 = vmatpush1.msra.mxu0 %v386
    %647 = vmatprep.subr.mxu0 %v395
    %648 = vmatpush1.msra.mxu0 %v394
    %649 = vmatprep.subr.mxu0 %v403
    %650 = vmatpush1.msra.mxu0 %v402
    %651 = vmatprep.subr.mxu0 %v411
    %652 = vmatpush1.msra.mxu0 %v410
    %653 = vmatprep.subr.mxu0 %v419
    %654 = vmatpush1.msra.mxu0 %v418
    %655 = vmatprep.subr.mxu0 %v427
    %656 = vmatpush1.msra.mxu0 %v426
    %657 = vmatprep.subr.mxu0 %v435
    %658 = vmatpush1.msra.mxu0 %v434
    %659 = vmatprep.subr.mxu0 %v443
    %660 = vmatpush1.msra.mxu0 %v442
    %661 = vmatprep.subr.mxu0 %v451
    %662 = vmatpush1.msra.mxu0 %v450
    %663 = vmatprep.subr.mxu0 %v459
    %664 = vmatpush1.msra.mxu0 %v458
    %665 = vmatprep.subr.mxu0 %v467
    %666 = vmatpush1.msra.mxu0 %v466
    %667 = vmatprep.subr.mxu0 %v475
    %668 = vmatpush1.msra.mxu0 %v474
    %669 = vmatprep.subr.mxu0 %v483
    %670 = vmatpush1.msra.mxu0 %v482
    %671 = vmatprep.subr.mxu0 %v491
    %672 = vmatpush1.msra.mxu0 %v490
    %673 = vmatprep.subr.mxu0 %v499
    %674 = vmatpush1.msra.mxu0 %v498
    %675 = vmatprep.subr.mxu0 %v507
    %676 = vmatpush1.msra.mxu0 %v506
    %677 = vmatprep.subr.mxu0 %v515
    %678 = vmatpush1.msra.mxu0 %v514
    %679 = vmatprep.subr.mxu0 %v523
    %680 = vmatpush1.msra.mxu0 %v522
    %681 = vmatprep.subr.mxu0 %v531
    %682 = vmatpush1.msra.mxu0 %v530
    %683 = vmatprep.subr.mxu0 %v539
    %684 = vmatpush1.msra.mxu0 %v538
    %685 = vmatprep.mubr.f32.mxu0 0.0
    %686 = vmatmul.mubr.f32.gmra.mrb[0].mxu0 %v286
    %v687 = vpop.f32.mrb[0].mxu0
    %v688 = vadd.f32 0.0, %v687
    %v689 = vpop.f32.mrb[0].mxu0
    %v690 = vadd.f32 0.0, %v689
    %691 = vmatprep.mubr.f32.mxu0 0.0
    %692 = vmatmul.mubr.f32.gmra.mrb[0].mxu0 %v287
    %v693 = vpop.f32.mrb[0].mxu0
    %v694 = vadd.f32 0.0, %v693
    %v695 = vpop.f32.mrb[0].mxu0
    %v696 = vadd.f32 0.0, %v695
    %697 = vdwg.mxu0
    %698 = vmatprep.subr.mxu0 %v293
    %699 = vmatpush1.msra.mxu0 %v292
    %700 = vmatprep.subr.mxu0 %v301
    %701 = vmatpush1.msra.mxu0 %v300
    %702 = vmatprep.subr.mxu0 %v309
    %703 = vmatpush1.msra.mxu0 %v308
    %704 = vmatprep.subr.mxu0 %v317
    %705 = vmatpush1.msra.mxu0 %v316
    %706 = vmatprep.subr.mxu0 %v325
    %707 = vmatpush1.msra.mxu0 %v324
    %708 = vmatprep.subr.mxu0 %v333
    %709 = vmatpush1.msra.mxu0 %v332
    %710 = vmatprep.subr.mxu0 %v341
    %711 = vmatpush1.msra.mxu0 %v340
    %712 = vmatprep.subr.mxu0 %v349
    %713 = vmatpush1.msra.mxu0 %v348
    %714 = vmatprep.subr.mxu0 %v357
    %715 = vmatpush1.msra.mxu0 %v356
    %716 = vmatprep.subr.mxu0 %v365
    %717 = vmatpush1.msra.mxu0 %v364
    %718 = vmatprep.subr.mxu0 %v373
    %719 = vmatpush1.msra.mxu0 %v372
    %720 = vmatprep.subr.mxu0 %v381
    %721 = vmatpush1.msra.mxu0 %v380
    %722 = vmatprep.subr.mxu0 %v389
    %723 = vmatpush1.msra.mxu0 %v388
    %724 = vmatprep.subr.mxu0 %v397
    %725 = vmatpush1.msra.mxu0 %v396
    %726 = vmatprep.subr.mxu0 %v405
    %727 = vmatpush1.msra.mxu0 %v404
    %728 = vmatprep.subr.mxu0 %v413
    %729 = vmatpush1.msra.mxu0 %v412
    %730 = vmatprep.subr.mxu0 %v421
    %731 = vmatpush1.msra.mxu0 %v420
    %732 = vmatprep.subr.mxu0 %v429
    %733 = vmatpush1.msra.mxu0 %v428
    %734 = vmatprep.subr.mxu0 %v437
    %735 = vmatpush1.msra.mxu0 %v436
    %736 = vmatprep.subr.mxu0 %v445
    %737 = vmatpush1.msra.mxu0 %v444
    %738 = vmatprep.subr.mxu0 %v453
    %739 = vmatpush1.msra.mxu0 %v452
    %740 = vmatprep.subr.mxu0 %v461
    %741 = vmatpush1.msra.mxu0 %v460
    %742 = vmatprep.subr.mxu0 %v469
    %743 = vmatpush1.msra.mxu0 %v468
    %744 = vmatprep.subr.mxu0 %v477
    %745 = vmatpush1.msra.mxu0 %v476
    %746 = vmatprep.subr.mxu0 %v485
    %747 = vmatpush1.msra.mxu0 %v484
    %748 = vmatprep.subr.mxu0 %v493
    %749 = vmatpush1.msra.mxu0 %v492
    %750 = vmatprep.subr.mxu0 %v501
    %751 = vmatpush1.msra.mxu0 %v500
    %752 = vmatprep.subr.mxu0 %v509
    %753 = vmatpush1.msra.mxu0 %v508
    %754 = vmatprep.subr.mxu0 %v517
    %755 = vmatpush1.msra.mxu0 %v516
    %756 = vmatprep.subr.mxu0 %v525
    %757 = vmatpush1.msra.mxu0 %v524
    %758 = vmatprep.subr.mxu0 %v533
    %759 = vmatpush1.msra.mxu0 %v532
    %760 = vmatprep.subr.mxu0 %v541
    %761 = vmatpush1.msra.mxu0 %v540
    %762 = vmatprep.mubr.f32.mxu0 0.0
    %763 = vmatmul.mubr.f32.gmra.mrb[0].mxu0 %v286
    %v764 = vpop.f32.mrb[0].mxu0
    %v765 = vadd.f32 0.0, %v764
    %v766 = vpop.f32.mrb[0].mxu0
    %v767 = vadd.f32 0.0, %v766
    %768 = vmatprep.mubr.f32.mxu0 0.0
    %769 = vmatmul.mubr.f32.gmra.mrb[0].mxu0 %v287
    %v770 = vpop.f32.mrb[0].mxu0
    %v771 = vadd.f32 0.0, %v770
    %v772 = vpop.f32.mrb[0].mxu0
    %v773 = vadd.f32 0.0, %v772
    %774 = vdwg.mxu0
    %775 = vmatprep.subr.mxu0 %v295
    %776 = vmatpush1.msra.mxu0 %v294
    %777 = vmatprep.subr.mxu0 %v303
    %778 = vmatpush1.msra.mxu0 %v302
    %779 = vmatprep.subr.mxu0 %v311
    %780 = vmatpush1.msra.mxu0 %v310
    %781 = vmatprep.subr.mxu0 %v319
    %782 = vmatpush1.msra.mxu0 %v318
    %783 = vmatprep.subr.mxu0 %v327
    %784 = vmatpush1.msra.mxu0 %v326
    %785 = vmatprep.subr.mxu0 %v335
    %786 = vmatpush1.msra.mxu0 %v334
    %787 = vmatprep.subr.mxu0 %v343
    %788 = vmatpush1.msra.mxu0 %v342
    %789 = vmatprep.subr.mxu0 %v351
    %790 = vmatpush1.msra.mxu0 %v350
    %791 = vmatprep.subr.mxu0 %v359
    %792 = vmatpush1.msra.mxu0 %v358
    %793 = vmatprep.subr.mxu0 %v367
    %794 = vmatpush1.msra.mxu0 %v366
    %795 = vmatprep.subr.mxu0 %v375
    %796 = vmatpush1.msra.mxu0 %v374
    %797 = vmatprep.subr.mxu0 %v383
    %798 = vmatpush1.msra.mxu0 %v382
    %799 = vmatprep.subr.mxu0 %v391
    %800 = vmatpush1.msra.mxu0 %v390
    %801 = vmatprep.subr.mxu0 %v399
    %802 = vmatpush1.msra.mxu0 %v398
    %803 = vmatprep.subr.mxu0 %v407
    %804 = vmatpush1.msra.mxu0 %v406
    %805 = vmatprep.subr.mxu0 %v415
    %806 = vmatpush1.msra.mxu0 %v414
    %807 = vmatprep.subr.mxu0 %v423
    %808 = vmatpush1.msra.mxu0 %v422
    %809 = vmatprep.subr.mxu0 %v431
    %810 = vmatpush1.msra.mxu0 %v430
    %811 = vmatprep.subr.mxu0 %v439
    %812 = vmatpush1.msra.mxu0 %v438
    %813 = vmatprep.subr.mxu0 %v447
    %814 = vmatpush1.msra.mxu0 %v446
    %815 = vmatprep.subr.mxu0 %v455
    %816 = vmatpush1.msra.mxu0 %v454
    %817 = vmatprep.subr.mxu0 %v463
    %818 = vmatpush1.msra.mxu0 %v462
    %819 = vmatprep.subr.mxu0 %v471
    %820 = vmatpush1.msra.mxu0 %v470
    %821 = vmatprep.subr.mxu0 %v479
    %822 = vmatpush1.msra.mxu0 %v478
    %823 = vmatprep.subr.mxu0 %v487
    %824 = vmatpush1.msra.mxu0 %v486
    %825 = vmatprep.subr.mxu0 %v495
    %826 = vmatpush1.msra.mxu0 %v494
    %827 = vmatprep.subr.mxu0 %v503
    %828 = vmatpush1.msra.mxu0 %v502
    %829 = vmatprep.subr.mxu0 %v511
    %830 = vmatpush1.msra.mxu0 %v510
    %831 = vmatprep.subr.mxu0 %v519
    %832 = vmatpush1.msra.mxu0 %v518
    %833 = vmatprep.subr.mxu0 %v527
    %834 = vmatpush1.msra.mxu0 %v526
    %835 = vmatprep.subr.mxu0 %v535
    %836 = vmatpush1.msra.mxu0 %v534
    %837 = vmatprep.subr.mxu0 %v543
    %838 = vmatpush1.msra.mxu0 %v542
    %839 = vmatprep.mubr.f32.mxu0 0.0
    %840 = vmatmul.mubr.f32.gmra.mrb[0].mxu0 %v286
    %v841 = vpop.f32.mrb[0].mxu0
    %v842 = vadd.f32 0.0, %v841
    %v843 = vpop.f32.mrb[0].mxu0
    %v844 = vadd.f32 0.0, %v843
    %845 = vmatprep.mubr.f32.mxu0 0.0
    %846 = vmatmul.mubr.f32.gmra.mrb[0].mxu0 %v287
    %v847 = vpop.f32.mrb[0].mxu0
    %v848 = vadd.f32 0.0, %v847
    %v849 = vpop.f32.mrb[0].mxu0
    %v850 = vadd.f32 0.0, %v849
    %851 = vdwg.mxu0
    %v853 = vlaneseq
    %v854 = vshrl.u32 %v853, 7
    %v855 = vsub.s32 0, %v854
    %v856 = vrot.slane %v282, %v855
    %v857 = vlaneseq
    %v858 = vshrl.u32 %v857, 7
    %v859 = vsub.s32 1, %v858
    %v860 = vrot.slane %v282, %v859
    %v861 = vlaneseq
    %v862 = vshrl.u32 %v861, 7
    %v863 = vsub.s32 2, %v862
    %v864 = vrot.slane %v282, %v863
    %v865 = vlaneseq
    %v866 = vshrl.u32 %v865, 7
    %v867 = vsub.s32 3, %v866
    %v868 = vrot.slane %v282, %v867
    %v869 = vlaneseq
    %v870 = vshrl.u32 %v869, 7
    %v871 = vsub.s32 4, %v870
    %v872 = vrot.slane %v282, %v871
    %v873 = vlaneseq
    %v874 = vshrl.u32 %v873, 7
    %v875 = vsub.s32 5, %v874
    %v876 = vrot.slane %v282, %v875
    %v883 = vadd.f32 %v688, %v856
    %v884 = vadd.f32 %v690, %v860
    %v885 = vadd.f32 %v765, %v864
    %v886 = vadd.f32 %v767, %v868
    %v887 = vadd.f32 %v842, %v872
    %v888 = vadd.f32 %v844, %v876
    %v889 = vadd.f32 %v694, %v856
    %v890 = vadd.f32 %v696, %v860
    %v891 = vadd.f32 %v771, %v864
    %v892 = vadd.f32 %v773, %v868
    %v893 = vadd.f32 %v848, %v872
    %v894 = vadd.f32 %v850, %v876
    %vm895 = vcmask 130048
    %v897 = vsel %vm895, %v87, 0
    %v900 = vsel %vm895, %v88, 0
    %902 = vmatprep.subr.mxu0 %v613
    %903 = vmatpush1.msra.mxu0 %v611
    %904 = vmatprep.subr.mxu0 %v619
    %905 = vmatpush1.msra.mxu0 %v617
    %906 = vmatprep.subr.mxu0 0.0
    %907 = vmatpush1.msra.mxu0 0.0
    %908 = vmatprep.subr.mxu0 0.0
    %909 = vmatpush1.msra.mxu0 0.0
    %910 = vmatprep.subr.mxu0 0.0
    %911 = vmatpush1.msra.mxu0 0.0
    %912 = vmatprep.subr.mxu0 0.0
    %913 = vmatpush1.msra.mxu0 0.0
    %914 = vmatprep.subr.mxu0 0.0
    %915 = vmatpush1.msra.mxu0 0.0
    %916 = vmatprep.subr.mxu0 0.0
    %917 = vmatpush1.msra.mxu0 0.0
    %918 = vmatprep.subr.mxu0 0.0
    %919 = vmatpush1.msra.mxu0 0.0
    %920 = vmatprep.subr.mxu0 0.0
    %921 = vmatpush1.msra.mxu0 0.0
    %922 = vmatprep.subr.mxu0 0.0
    %923 = vmatpush1.msra.mxu0 0.0
    %924 = vmatprep.subr.mxu0 0.0
    %925 = vmatpush1.msra.mxu0 0.0
    %926 = vmatprep.subr.mxu0 0.0
    %927 = vmatpush1.msra.mxu0 0.0
    %928 = vmatprep.subr.mxu0 0.0
    %929 = vmatpush1.msra.mxu0 0.0
    %930 = vmatprep.subr.mxu0 0.0
    %931 = vmatpush1.msra.mxu0 0.0
    %932 = vmatprep.subr.mxu0 0.0
    %933 = vmatpush1.msra.mxu0 0.0
    %934 = vmatprep.subr.mxu0 0.0
    %935 = vmatpush1.msra.mxu0 0.0
    %936 = vmatprep.subr.mxu0 0.0
    %937 = vmatpush1.msra.mxu0 0.0
    %938 = vmatprep.subr.mxu0 0.0
    %939 = vmatpush1.msra.mxu0 0.0
    %940 = vmatprep.subr.mxu0 0.0
    %941 = vmatpush1.msra.mxu0 0.0
    %942 = vmatprep.subr.mxu0 0.0
    %943 = vmatpush1.msra.mxu0 0.0
    %944 = vmatprep.subr.mxu0 0.0
    %945 = vmatpush1.msra.mxu0 0.0
    %946 = vmatprep.subr.mxu0 0.0
    %947 = vmatpush1.msra.mxu0 0.0
    %948 = vmatprep.subr.mxu0 0.0
    %949 = vmatpush1.msra.mxu0 0.0
    %950 = vmatprep.subr.mxu0 0.0
    %951 = vmatpush1.msra.mxu0 0.0
    %952 = vmatprep.subr.mxu0 0.0
    %953 = vmatpush1.msra.mxu0 0.0
    %954 = vmatprep.subr.mxu0 0.0
    %955 = vmatpush1.msra.mxu0 0.0
    %956 = vmatprep.subr.mxu0 0.0
    %957 = vmatpush1.msra.mxu0 0.0
    %958 = vmatprep.subr.mxu0 0.0
    %959 = vmatpush1.msra.mxu0 0.0
    %960 = vmatprep.subr.mxu0 0.0
    %961 = vmatpush1.msra.mxu0 0.0
    %962 = vmatprep.subr.mxu0 0.0
    %963 = vmatpush1.msra.mxu0 0.0
    %964 = vmatprep.subr.mxu0 0.0
    %965 = vmatpush1.msra.mxu0 0.0
    %966 = vmatprep.mubr.f32.mxu0 0.0
    %967 = vmatmul.mubr.f32.gmra.mrb[0].mxu0 %v897
    %v968 = vpop.f32.mrb[0].mxu0
    %v969 = vadd.f32 0.0, %v968
    %v970 = vpop.f32.mrb[0].mxu0
    %v971 = vadd.f32 0.0, %v970
    %972 = vmatprep.mubr.f32.mxu0 0.0
    %973 = vmatmul.mubr.f32.gmra.mrb[0].mxu0 %v900
    %v974 = vpop.f32.mrb[0].mxu0
    %v975 = vadd.f32 0.0, %v974
    %v976 = vpop.f32.mrb[0].mxu0
    %v977 = vadd.f32 0.0, %v976
    %978 = vdwg.mxu0
    %v980 = vlaneseq
    %v981 = vshrl.u32 %v980, 7
    %v982 = vsub.s32 0, %v981
    %v983 = vrot.slane %v281, %v982
    %v984 = vlaneseq
    %v985 = vshrl.u32 %v984, 7
    %v986 = vsub.s32 1, %v985
    %v987 = vrot.slane %v281, %v986
    %v988 = vlaneseq
    %v989 = vshrl.u32 %v988, 7
    %v990 = vsub.s32 2, %v989
    %v991 = vrot.slane %v281, %v990
    %v992 = vlaneseq
    %v993 = vshrl.u32 %v992, 7
    %v994 = vsub.s32 3, %v993
    %v995 = vrot.slane %v281, %v994
    %v996 = vlaneseq
    %v997 = vshrl.u32 %v996, 7
    %v998 = vsub.s32 4, %v997
    %v999 = vrot.slane %v281, %v998
    %v1000 = vlaneseq
    %v1001 = vshrl.u32 %v1000, 7
    %v1002 = vsub.s32 5, %v1001
    %v1003 = vrot.slane %v281, %v1002
    %1010 = vmatprep.subr.mxu0 %v90
    %1011 = vmatpush1.msra.mxu0 %v89
    %1012 = vmatprep.subr.mxu0 %v96
    %1013 = vmatpush1.msra.mxu0 %v95
    %1014 = vmatprep.subr.mxu0 %v102
    %1015 = vmatpush1.msra.mxu0 %v101
    %1016 = vmatprep.subr.mxu0 %v108
    %1017 = vmatpush1.msra.mxu0 %v107
    %1018 = vmatprep.subr.mxu0 %v114
    %1019 = vmatpush1.msra.mxu0 %v113
    %1020 = vmatprep.subr.mxu0 %v120
    %1021 = vmatpush1.msra.mxu0 %v119
    %1022 = vmatprep.subr.mxu0 %v126
    %1023 = vmatpush1.msra.mxu0 %v125
    %1024 = vmatprep.subr.mxu0 %v132
    %1025 = vmatpush1.msra.mxu0 %v131
    %1026 = vmatprep.subr.mxu0 %v138
    %1027 = vmatpush1.msra.mxu0 %v137
    %1028 = vmatprep.subr.mxu0 %v144
    %1029 = vmatpush1.msra.mxu0 %v143
    %1030 = vmatprep.subr.mxu0 %v150
    %1031 = vmatpush1.msra.mxu0 %v149
    %1032 = vmatprep.subr.mxu0 %v156
    %1033 = vmatpush1.msra.mxu0 %v155
    %1034 = vmatprep.subr.mxu0 %v162
    %1035 = vmatpush1.msra.mxu0 %v161
    %1036 = vmatprep.subr.mxu0 %v168
    %1037 = vmatpush1.msra.mxu0 %v167
    %1038 = vmatprep.subr.mxu0 %v174
    %1039 = vmatpush1.msra.mxu0 %v173
    %1040 = vmatprep.subr.mxu0 %v180
    %1041 = vmatpush1.msra.mxu0 %v179
    %1042 = vmatprep.subr.mxu0 %v186
    %1043 = vmatpush1.msra.mxu0 %v185
    %1044 = vmatprep.subr.mxu0 %v192
    %1045 = vmatpush1.msra.mxu0 %v191
    %1046 = vmatprep.subr.mxu0 %v198
    %1047 = vmatpush1.msra.mxu0 %v197
    %1048 = vmatprep.subr.mxu0 %v204
    %1049 = vmatpush1.msra.mxu0 %v203
    %1050 = vmatprep.subr.mxu0 %v210
    %1051 = vmatpush1.msra.mxu0 %v209
    %1052 = vmatprep.subr.mxu0 %v216
    %1053 = vmatpush1.msra.mxu0 %v215
    %1054 = vmatprep.subr.mxu0 %v222
    %1055 = vmatpush1.msra.mxu0 %v221
    %1056 = vmatprep.subr.mxu0 %v228
    %1057 = vmatpush1.msra.mxu0 %v227
    %1058 = vmatprep.subr.mxu0 %v234
    %1059 = vmatpush1.msra.mxu0 %v233
    %1060 = vmatprep.subr.mxu0 %v240
    %1061 = vmatpush1.msra.mxu0 %v239
    %1062 = vmatprep.subr.mxu0 %v246
    %1063 = vmatpush1.msra.mxu0 %v245
    %1064 = vmatprep.subr.mxu0 %v252
    %1065 = vmatpush1.msra.mxu0 %v251
    %1066 = vmatprep.subr.mxu0 %v258
    %1067 = vmatpush1.msra.mxu0 %v257
    %1068 = vmatprep.subr.mxu0 %v264
    %1069 = vmatpush1.msra.mxu0 %v263
    %1070 = vmatprep.subr.mxu0 %v270
    %1071 = vmatpush1.msra.mxu0 %v269
    %1072 = vmatprep.subr.mxu0 %v276
    %1073 = vmatpush1.msra.mxu0 %v275
    %1074 = vmatprep.mubr.f32.mxu0 %v971
    %1075 = vmatmul.mubr.f32.gmra.mrb[0].mxu0 %v969
    %v1076 = vpop.f32.mrb[0].mxu0
    %v1077 = vadd.f32 %v983, %v1076
    %v1078 = vpop.f32.mrb[0].mxu0
    %v1079 = vadd.f32 %v987, %v1078
    %1080 = vmatprep.mubr.f32.mxu0 %v977
    %1081 = vmatmul.mubr.f32.gmra.mrb[0].mxu0 %v975
    %v1082 = vpop.f32.mrb[0].mxu0
    %v1083 = vadd.f32 %v983, %v1082
    %v1084 = vpop.f32.mrb[0].mxu0
    %v1085 = vadd.f32 %v987, %v1084
    %1086 = vdwg.mxu0
    %1087 = vmatprep.subr.mxu0 %v92
    %1088 = vmatpush1.msra.mxu0 %v91
    %1089 = vmatprep.subr.mxu0 %v98
    %1090 = vmatpush1.msra.mxu0 %v97
    %1091 = vmatprep.subr.mxu0 %v104
    %1092 = vmatpush1.msra.mxu0 %v103
    %1093 = vmatprep.subr.mxu0 %v110
    %1094 = vmatpush1.msra.mxu0 %v109
    %1095 = vmatprep.subr.mxu0 %v116
    %1096 = vmatpush1.msra.mxu0 %v115
    %1097 = vmatprep.subr.mxu0 %v122
    %1098 = vmatpush1.msra.mxu0 %v121
    %1099 = vmatprep.subr.mxu0 %v128
    %1100 = vmatpush1.msra.mxu0 %v127
    %1101 = vmatprep.subr.mxu0 %v134
    %1102 = vmatpush1.msra.mxu0 %v133
    %1103 = vmatprep.subr.mxu0 %v140
    %1104 = vmatpush1.msra.mxu0 %v139
    %1105 = vmatprep.subr.mxu0 %v146
    %1106 = vmatpush1.msra.mxu0 %v145
    %1107 = vmatprep.subr.mxu0 %v152
    %1108 = vmatpush1.msra.mxu0 %v151
    %1109 = vmatprep.subr.mxu0 %v158
    %1110 = vmatpush1.msra.mxu0 %v157
    %1111 = vmatprep.subr.mxu0 %v164
    %1112 = vmatpush1.msra.mxu0 %v163
    %1113 = vmatprep.subr.mxu0 %v170
    %1114 = vmatpush1.msra.mxu0 %v169
    %1115 = vmatprep.subr.mxu0 %v176
    %1116 = vmatpush1.msra.mxu0 %v175
    %1117 = vmatprep.subr.mxu0 %v182
    %1118 = vmatpush1.msra.mxu0 %v181
    %1119 = vmatprep.subr.mxu0 %v188
    %1120 = vmatpush1.msra.mxu0 %v187
    %1121 = vmatprep.subr.mxu0 %v194
    %1122 = vmatpush1.msra.mxu0 %v193
    %1123 = vmatprep.subr.mxu0 %v200
    %1124 = vmatpush1.msra.mxu0 %v199
    %1125 = vmatprep.subr.mxu0 %v206
    %1126 = vmatpush1.msra.mxu0 %v205
    %1127 = vmatprep.subr.mxu0 %v212
    %1128 = vmatpush1.msra.mxu0 %v211
    %1129 = vmatprep.subr.mxu0 %v218
    %1130 = vmatpush1.msra.mxu0 %v217
    %1131 = vmatprep.subr.mxu0 %v224
    %1132 = vmatpush1.msra.mxu0 %v223
    %1133 = vmatprep.subr.mxu0 %v230
    %1134 = vmatpush1.msra.mxu0 %v229
    %1135 = vmatprep.subr.mxu0 %v236
    %1136 = vmatpush1.msra.mxu0 %v235
    %1137 = vmatprep.subr.mxu0 %v242
    %1138 = vmatpush1.msra.mxu0 %v241
    %1139 = vmatprep.subr.mxu0 %v248
    %1140 = vmatpush1.msra.mxu0 %v247
    %1141 = vmatprep.subr.mxu0 %v254
    %1142 = vmatpush1.msra.mxu0 %v253
    %1143 = vmatprep.subr.mxu0 %v260
    %1144 = vmatpush1.msra.mxu0 %v259
    %1145 = vmatprep.subr.mxu0 %v266
    %1146 = vmatpush1.msra.mxu0 %v265
    %1147 = vmatprep.subr.mxu0 %v272
    %1148 = vmatpush1.msra.mxu0 %v271
    %1149 = vmatprep.subr.mxu0 %v278
    %1150 = vmatpush1.msra.mxu0 %v277
    %1151 = vmatprep.mubr.f32.mxu0 %v971
    %1152 = vmatmul.mubr.f32.gmra.mrb[0].mxu0 %v969
    %v1153 = vpop.f32.mrb[0].mxu0
    %v1154 = vadd.f32 %v991, %v1153
    %v1155 = vpop.f32.mrb[0].mxu0
    %v1156 = vadd.f32 %v995, %v1155
    %1157 = vmatprep.mubr.f32.mxu0 %v977
    %1158 = vmatmul.mubr.f32.gmra.mrb[0].mxu0 %v975
    %v1159 = vpop.f32.mrb[0].mxu0
    %v1160 = vadd.f32 %v991, %v1159
    %v1161 = vpop.f32.mrb[0].mxu0
    %v1162 = vadd.f32 %v995, %v1161
    %1163 = vdwg.mxu0
    %1164 = vmatprep.subr.mxu0 %v94
    %1165 = vmatpush1.msra.mxu0 %v93
    %1166 = vmatprep.subr.mxu0 %v100
    %1167 = vmatpush1.msra.mxu0 %v99
    %1168 = vmatprep.subr.mxu0 %v106
    %1169 = vmatpush1.msra.mxu0 %v105
    %1170 = vmatprep.subr.mxu0 %v112
    %1171 = vmatpush1.msra.mxu0 %v111
    %1172 = vmatprep.subr.mxu0 %v118
    %1173 = vmatpush1.msra.mxu0 %v117
    %1174 = vmatprep.subr.mxu0 %v124
    %1175 = vmatpush1.msra.mxu0 %v123
    %1176 = vmatprep.subr.mxu0 %v130
    %1177 = vmatpush1.msra.mxu0 %v129
    %1178 = vmatprep.subr.mxu0 %v136
    %1179 = vmatpush1.msra.mxu0 %v135
    %1180 = vmatprep.subr.mxu0 %v142
    %1181 = vmatpush1.msra.mxu0 %v141
    %1182 = vmatprep.subr.mxu0 %v148
    %1183 = vmatpush1.msra.mxu0 %v147
    %1184 = vmatprep.subr.mxu0 %v154
    %1185 = vmatpush1.msra.mxu0 %v153
    %1186 = vmatprep.subr.mxu0 %v160
    %1187 = vmatpush1.msra.mxu0 %v159
    %1188 = vmatprep.subr.mxu0 %v166
    %1189 = vmatpush1.msra.mxu0 %v165
    %1190 = vmatprep.subr.mxu0 %v172
    %1191 = vmatpush1.msra.mxu0 %v171
    %1192 = vmatprep.subr.mxu0 %v178
    %1193 = vmatpush1.msra.mxu0 %v177
    %1194 = vmatprep.subr.mxu0 %v184
    %1195 = vmatpush1.msra.mxu0 %v183
    %1196 = vmatprep.subr.mxu0 %v190
    %1197 = vmatpush1.msra.mxu0 %v189
    %1198 = vmatprep.subr.mxu0 %v196
    %1199 = vmatpush1.msra.mxu0 %v195
    %1200 = vmatprep.subr.mxu0 %v202
    %1201 = vmatpush1.msra.mxu0 %v201
    %1202 = vmatprep.subr.mxu0 %v208
    %1203 = vmatpush1.msra.mxu0 %v207
    %1204 = vmatprep.subr.mxu0 %v214
    %1205 = vmatpush1.msra.mxu0 %v213
    %1206 = vmatprep.subr.mxu0 %v220
    %1207 = vmatpush1.msra.mxu0 %v219
    %1208 = vmatprep.subr.mxu0 %v226
    %1209 = vmatpush1.msra.mxu0 %v225
    %1210 = vmatprep.subr.mxu0 %v232
    %1211 = vmatpush1.msra.mxu0 %v231
    %1212 = vmatprep.subr.mxu0 %v238
    %1213 = vmatpush1.msra.mxu0 %v237
    %1214 = vmatprep.subr.mxu0 %v244
    %1215 = vmatpush1.msra.mxu0 %v243
    %1216 = vmatprep.subr.mxu0 %v250
    %1217 = vmatpush1.msra.mxu0 %v249
    %1218 = vmatprep.subr.mxu0 %v256
    %1219 = vmatpush1.msra.mxu0 %v255
    %1220 = vmatprep.subr.mxu0 %v262
    %1221 = vmatpush1.msra.mxu0 %v261
    %1222 = vmatprep.subr.mxu0 %v268
    %1223 = vmatpush1.msra.mxu0 %v267
    %1224 = vmatprep.subr.mxu0 %v274
    %1225 = vmatpush1.msra.mxu0 %v273
    %1226 = vmatprep.subr.mxu0 %v280
    %1227 = vmatpush1.msra.mxu0 %v279
    %1228 = vmatprep.mubr.f32.mxu0 %v971
    %1229 = vmatmul.mubr.f32.gmra.mrb[0].mxu0 %v969
    %v1230 = vpop.f32.mrb[0].mxu0
    %v1231 = vadd.f32 %v999, %v1230
    %v1232 = vpop.f32.mrb[0].mxu0
    %v1233 = vadd.f32 %v1003, %v1232
    %1234 = vmatprep.mubr.f32.mxu0 %v977
    %1235 = vmatmul.mubr.f32.gmra.mrb[0].mxu0 %v975
    %v1236 = vpop.f32.mrb[0].mxu0
    %v1237 = vadd.f32 %v999, %v1236
    %v1238 = vpop.f32.mrb[0].mxu0
    %v1239 = vadd.f32 %v1003, %v1238
    %1240 = vdwg.mxu0
    %v1241 = vadd.f32 %v1077, %v883
    %v1242 = vadd.f32 %v1079, %v884
    %v1243 = vadd.f32 %v1083, %v889
    %v1244 = vadd.f32 %v1085, %v890
    %v1245 = vxor.u32 %v1241, 2147483648
    %v1246 = vxor.u32 %v1242, 2147483648
    %v1247 = vxor.u32 %v1243, 2147483648
    %v1248 = vxor.u32 %v1244, 2147483648
    %v1249 = vmul.f32 %v1245, 1.442695
    %v1250 = vpow.pop %v1249
    %v1251 = vmul.f32 %v1246, 1.442695
    %v1252 = vpow.pop %v1251
    %v1253 = vmul.f32 %v1247, 1.442695
    %v1254 = vpow.pop %v1253
    %v1255 = vmul.f32 %v1248, 1.442695
    %v1256 = vpow.pop %v1255
    %v1257 = vadd.f32 %v1250, 1.0
    %v1258 = vadd.f32 %v1252, 1.0
    %v1259 = vadd.f32 %v1254, 1.0
    %v1260 = vadd.f32 %v1256, 1.0
    %v1261 = vrcp.pop %v1257
    %v1262 = vmul.f32 1.0, %v1261
    %v1263 = vrcp.pop %v1258
    %v1264 = vmul.f32 1.0, %v1263
    %v1265 = vrcp.pop %v1259
    %v1266 = vmul.f32 1.0, %v1265
    %v1267 = vrcp.pop %v1260
    %v1268 = vmul.f32 1.0, %v1267
    %v1269 = vadd.f32 %v1154, %v885
    %v1270 = vadd.f32 %v1156, %v886
    %v1271 = vadd.f32 %v1160, %v891
    %v1272 = vadd.f32 %v1162, %v892
    %v1273 = vxor.u32 %v1269, 2147483648
    %v1274 = vxor.u32 %v1270, 2147483648
    %v1275 = vxor.u32 %v1271, 2147483648
    %v1276 = vxor.u32 %v1272, 2147483648
    %v1277 = vmul.f32 %v1273, 1.442695
    %v1278 = vpow.pop %v1277
    %v1279 = vmul.f32 %v1274, 1.442695
    %v1280 = vpow.pop %v1279
    %v1281 = vmul.f32 %v1275, 1.442695
    %v1282 = vpow.pop %v1281
    %v1283 = vmul.f32 %v1276, 1.442695
    %v1284 = vpow.pop %v1283
    %v1285 = vadd.f32 %v1278, 1.0
    %v1286 = vadd.f32 %v1280, 1.0
    %v1287 = vadd.f32 %v1282, 1.0
    %v1288 = vadd.f32 %v1284, 1.0
    %v1289 = vrcp.pop %v1285
    %v1290 = vmul.f32 1.0, %v1289
    %v1291 = vrcp.pop %v1286
    %v1292 = vmul.f32 1.0, %v1291
    %v1293 = vrcp.pop %v1287
    %v1294 = vmul.f32 1.0, %v1293
    %v1295 = vrcp.pop %v1288
    %v1296 = vmul.f32 1.0, %v1295
    %v1297 = vmul.f32 %v1262, %v887
    %v1298 = vmul.f32 %v1264, %v888
    %v1299 = vmul.f32 %v1266, %v893
    %v1300 = vmul.f32 %v1268, %v894
    %v1301 = vadd.f32 %v1231, %v1297
    %v1302 = vadd.f32 %v1233, %v1298
    %v1303 = vadd.f32 %v1237, %v1299
    %v1304 = vadd.f32 %v1239, %v1300
    %v1305 = vtanh.pop %v1301
    %v1306 = vtanh.pop %v1302
    %v1307 = vtanh.pop %v1303
    %v1308 = vtanh.pop %v1304
    %v1309 = vsub.f32 1.0, %v1290
    %v1310 = vsub.f32 1.0, %v1292
    %v1311 = vsub.f32 1.0, %v1294
    %v1312 = vsub.f32 1.0, %v1296
    %v1313 = vmul.f32 %v1309, %v1305
    %v1314 = vmul.f32 %v1310, %v1306
    %v1315 = vmul.f32 %v1311, %v1307
    %v1316 = vmul.f32 %v1312, %v1308
    %v1317 = vmul.f32 %v1290, %v286
    %v1318 = vmul.f32 %v1292, 0.0
    %v1319 = vmul.f32 %v1294, %v287
    %v1320 = vmul.f32 %v1296, 0.0
    %v1321 = vadd.f32 %v1313, %v1317
    %v1322 = vadd.f32 %v1314, %v1318
    %v1323 = vadd.f32 %v1315, %v1319
    %v1324 = vadd.f32 %v1316, %v1320
    %s1325 = scalar_lea.vmem [#allocation4], 2048
    %v1326 = vld [vmem:[%s1325] sm:$0xff]
    %v1327 = vld [vmem:[%s1325 + $0x8] sm:$0xff]
    %v1328 = vld [vmem:[%s1325 + $0x10] sm:$0xff]
    %v1329 = vld [vmem:[%s1325 + $0x18] sm:$0xff]
    %v1330 = vld [vmem:[%s1325 + $0x20] sm:$0xff]
    %v1331 = vld [vmem:[%s1325 + $0x28] sm:$0xff]
    %v1332 = vld [vmem:[%s1325 + $0x30] sm:$0xff]
    %v1333 = vld [vmem:[%s1325 + $0x38] sm:$0xff]
    %v1334 = vld [vmem:[%s1325 + $0x40] sm:$0xff]
    %v1335 = vld [vmem:[%s1325 + $0x48] sm:$0xff]
    %v1336 = vld [vmem:[%s1325 + $0x50] sm:$0xff]
    %v1337 = vld [vmem:[%s1325 + $0x58] sm:$0xff]
    %v1338 = vld [vmem:[%s1325 + $0x60] sm:$0xff]
    %v1339 = vld [vmem:[%s1325 + $0x68] sm:$0xff]
    %v1340 = vld [vmem:[%s1325 + $0x70] sm:$0xff]
    %v1341 = vld [vmem:[%s1325 + $0x78] sm:$0xff]
    %v1342 = vld [vmem:[%s1325 + $0x80] sm:$0xff]
    %v1343 = vld [vmem:[%s1325 + $0x88] sm:$0xff]
    %v1344 = vld [vmem:[%s1325 + $0x90] sm:$0xff]
    %v1345 = vld [vmem:[%s1325 + $0x98] sm:$0xff]
    %v1346 = vld [vmem:[%s1325 + $0xa0] sm:$0xff]
    %v1347 = vld [vmem:[%s1325 + $0xa8] sm:$0xff]
    %v1348 = vld [vmem:[%s1325 + $0xb0] sm:$0xff]
    %v1349 = vld [vmem:[%s1325 + $0xb8] sm:$0xff]
    %v1350 = vld [vmem:[%s1325 + $0xc0] sm:$0xff]
    %v1351 = vld [vmem:[%s1325 + $0xc8] sm:$0xff]
    %v1352 = vld [vmem:[%s1325 + $0xd0] sm:$0xff]
    %v1353 = vld [vmem:[%s1325 + $0xd8] sm:$0xff]
    %v1354 = vld [vmem:[%s1325 + $0xe0] sm:$0xff]
    %v1355 = vld [vmem:[%s1325 + $0xe8] sm:$0xff]
    %v1356 = vld [vmem:[%s1325 + $0xf0] sm:$0xff]
    %v1357 = vld [vmem:[%s1325 + $0xf8] sm:$0xff]
    %v1358 = vld [vmem:[%s1325 + $0x100] sm:$0xff]
    %v1359 = vld [vmem:[%s1325 + $0x108] sm:$0xff]
    %v1360 = vld [vmem:[%s1325 + $0x110] sm:$0xff]
    %v1361 = vld [vmem:[%s1325 + $0x118] sm:$0xff]
    %v1362 = vld [vmem:[%s1325 + $0x120] sm:$0xff]
    %v1363 = vld [vmem:[%s1325 + $0x128] sm:$0xff]
    %v1364 = vld [vmem:[%s1325 + $0x130] sm:$0xff]
    %v1365 = vld [vmem:[%s1325 + $0x138] sm:$0xff]
    %v1366 = vld [vmem:[%s1325 + $0x140] sm:$0xff]
    %v1367 = vld [vmem:[%s1325 + $0x148] sm:$0xff]
    %v1368 = vld [vmem:[%s1325 + $0x150] sm:$0xff]
    %v1369 = vld [vmem:[%s1325 + $0x158] sm:$0xff]
    %v1370 = vld [vmem:[%s1325 + $0x160] sm:$0xff]
    %v1371 = vld [vmem:[%s1325 + $0x168] sm:$0xff]
    %v1372 = vld [vmem:[%s1325 + $0x170] sm:$0xff]
    %v1373 = vld [vmem:[%s1325 + $0x178] sm:$0xff]
    %v1374 = vld [vmem:[%s1325 + $0x180] sm:$0xff]
    %v1375 = vld [vmem:[%s1325 + $0x188] sm:$0xff]
    %v1376 = vld [vmem:[%s1325 + $0x190] sm:$0xff]
    %v1377 = vld [vmem:[%s1325 + $0x198] sm:$0xff]
    %v1378 = vld [vmem:[%s1325 + $0x1a0] sm:$0xff]
    %v1379 = vld [vmem:[%s1325 + $0x1a8] sm:$0xff]
    %v1380 = vld [vmem:[%s1325 + $0x1b0] sm:$0xff]
    %v1381 = vld [vmem:[%s1325 + $0x1b8] sm:$0xff]
    %v1382 = vld [vmem:[%s1325 + $0x1c0] sm:$0xff]
    %v1383 = vld [vmem:[%s1325 + $0x1c8] sm:$0xff]
    %v1384 = vld [vmem:[%s1325 + $0x1d0] sm:$0xff]
    %v1385 = vld [vmem:[%s1325 + $0x1d8] sm:$0xff]
    %v1386 = vld [vmem:[%s1325 + $0x1e0] sm:$0xff]
    %v1387 = vld [vmem:[%s1325 + $0x1e8] sm:$0xff]
    %v1388 = vld [vmem:[%s1325 + $0x1f0] sm:$0xff]
    %v1389 = vld [vmem:[%s1325 + $0x1f8] sm:$0xff]
    %v1390 = vld [vmem:[%s1325 + $0x200] sm:$0xff]
    %v1391 = vld [vmem:[%s1325 + $0x208] sm:$0xff]
    %v1392 = vld [vmem:[%s1325 + $0x210] sm:$0xff]
    %v1393 = vld [vmem:[%s1325 + $0x218] sm:$0xff]
    %v1394 = vld [vmem:[%s1325 + $0x220] sm:$0xff]
    %v1395 = vld [vmem:[%s1325 + $0x228] sm:$0xff]
    %v1396 = vld [vmem:[%s1325 + $0x230] sm:$0xff]
    %v1397 = vld [vmem:[%s1325 + $0x238] sm:$0xff]
    %v1398 = vld [vmem:[%s1325 + $0x240] sm:$0xff]
    %v1399 = vld [vmem:[%s1325 + $0x248] sm:$0xff]
    %v1400 = vld [vmem:[%s1325 + $0x250] sm:$0xff]
    %v1401 = vld [vmem:[%s1325 + $0x258] sm:$0xff]
    %v1402 = vld [vmem:[%s1325 + $0x260] sm:$0xff]
    %v1403 = vld [vmem:[%s1325 + $0x268] sm:$0xff]
    %v1404 = vld [vmem:[%s1325 + $0x270] sm:$0xff]
    %v1405 = vld [vmem:[%s1325 + $0x278] sm:$0xff]
    %v1406 = vld [vmem:[%s1325 + $0x280] sm:$0xff]
    %v1407 = vld [vmem:[%s1325 + $0x288] sm:$0xff]
    %v1408 = vld [vmem:[%s1325 + $0x290] sm:$0xff]
    %v1409 = vld [vmem:[%s1325 + $0x298] sm:$0xff]
    %v1410 = vld [vmem:[%s1325 + $0x2a0] sm:$0xff]
    %v1411 = vld [vmem:[%s1325 + $0x2a8] sm:$0xff]
    %v1412 = vld [vmem:[%s1325 + $0x2b0] sm:$0xff]
    %v1413 = vld [vmem:[%s1325 + $0x2b8] sm:$0xff]
    %v1414 = vld [vmem:[%s1325 + $0x2c0] sm:$0xff]
    %v1415 = vld [vmem:[%s1325 + $0x2c8] sm:$0xff]
    %v1416 = vld [vmem:[%s1325 + $0x2d0] sm:$0xff]
    %v1417 = vld [vmem:[%s1325 + $0x2d8] sm:$0xff]
    %v1418 = vld [vmem:[%s1325 + $0x2e0] sm:$0xff]
    %v1419 = vld [vmem:[%s1325 + $0x2e8] sm:$0xff]
    %v1420 = vld [vmem:[%s1325 + $0x2f0] sm:$0xff]
    %v1421 = vld [vmem:[%s1325 + $0x2f8] sm:$0xff]
    %v1422 = vld [vmem:[%s1325 + $0x300] sm:$0xff]
    %v1423 = vld [vmem:[%s1325 + $0x308] sm:$0xff]
    %v1424 = vld [vmem:[%s1325 + $0x310] sm:$0xff]
    %v1425 = vld [vmem:[%s1325 + $0x318] sm:$0xff]
    %v1426 = vld [vmem:[%s1325 + $0x320] sm:$0xff]
    %v1427 = vld [vmem:[%s1325 + $0x328] sm:$0xff]
    %v1428 = vld [vmem:[%s1325 + $0x330] sm:$0xff]
    %v1429 = vld [vmem:[%s1325 + $0x338] sm:$0xff]
    %v1430 = vld [vmem:[%s1325 + $0x340] sm:$0xff]
    %v1431 = vld [vmem:[%s1325 + $0x348] sm:$0xff]
    %v1432 = vld [vmem:[%s1325 + $0x350] sm:$0xff]
    %v1433 = vld [vmem:[%s1325 + $0x358] sm:$0xff]
    %v1434 = vld [vmem:[%s1325 + $0x360] sm:$0xff]
    %v1435 = vld [vmem:[%s1325 + $0x368] sm:$0xff]
    %v1436 = vld [vmem:[%s1325 + $0x370] sm:$0xff]
    %v1437 = vld [vmem:[%s1325 + $0x378] sm:$0xff]
    %v1438 = vld [vmem:[%s1325 + $0x380] sm:$0xff]
    %v1439 = vld [vmem:[%s1325 + $0x388] sm:$0xff]
    %v1440 = vld [vmem:[%s1325 + $0x390] sm:$0xff]
    %v1441 = vld [vmem:[%s1325 + $0x398] sm:$0xff]
    %v1442 = vld [vmem:[%s1325 + $0x3a0] sm:$0xff]
    %v1443 = vld [vmem:[%s1325 + $0x3a8] sm:$0xff]
    %v1444 = vld [vmem:[%s1325 + $0x3b0] sm:$0xff]
    %v1445 = vld [vmem:[%s1325 + $0x3b8] sm:$0xff]
    %v1446 = vld [vmem:[%s1325 + $0x3c0] sm:$0xff]
    %v1447 = vld [vmem:[%s1325 + $0x3c8] sm:$0xff]
    %v1448 = vld [vmem:[%s1325 + $0x3d0] sm:$0xff]
    %v1449 = vld [vmem:[%s1325 + $0x3d8] sm:$0xff]
    %v1450 = vld [vmem:[%s1325 + $0x3e0] sm:$0xff]
    %v1451 = vld [vmem:[%s1325 + $0x3e8] sm:$0xff]
    %v1452 = vld [vmem:[%s1325 + $0x3f0] sm:$0xff]
    %v1453 = vld [vmem:[%s1325 + $0x3f8] sm:$0xff]
    %v1454 = vld [vmem:[%s1325 + $0x400] sm:$0xff]
    %v1455 = vld [vmem:[%s1325 + $0x408] sm:$0xff]
    %v1456 = vld [vmem:[%s1325 + $0x410] sm:$0xff]
    %v1457 = vld [vmem:[%s1325 + $0x418] sm:$0xff]
    %v1458 = vld [vmem:[%s1325 + $0x420] sm:$0xff]
    %v1459 = vld [vmem:[%s1325 + $0x428] sm:$0xff]
    %v1460 = vld [vmem:[%s1325 + $0x430] sm:$0xff]
    %v1461 = vld [vmem:[%s1325 + $0x438] sm:$0xff]
    %v1462 = vld [vmem:[%s1325 + $0x440] sm:$0xff]
    %v1463 = vld [vmem:[%s1325 + $0x448] sm:$0xff]
    %v1464 = vld [vmem:[%s1325 + $0x450] sm:$0xff]
    %v1465 = vld [vmem:[%s1325 + $0x458] sm:$0xff]
    %v1466 = vld [vmem:[%s1325 + $0x460] sm:$0xff]
    %v1467 = vld [vmem:[%s1325 + $0x468] sm:$0xff]
    %v1468 = vld [vmem:[%s1325 + $0x470] sm:$0xff]
    %v1469 = vld [vmem:[%s1325 + $0x478] sm:$0xff]
    %v1470 = vld [vmem:[%s1325 + $0x480] sm:$0xff]
    %v1471 = vld [vmem:[%s1325 + $0x488] sm:$0xff]
    %v1472 = vld [vmem:[%s1325 + $0x490] sm:$0xff]
    %v1473 = vld [vmem:[%s1325 + $0x498] sm:$0xff]
    %v1474 = vld [vmem:[%s1325 + $0x4a0] sm:$0xff]
    %v1475 = vld [vmem:[%s1325 + $0x4a8] sm:$0xff]
    %v1476 = vld [vmem:[%s1325 + $0x4b0] sm:$0xff]
    %v1477 = vld [vmem:[%s1325 + $0x4b8] sm:$0xff]
    %v1478 = vld [vmem:[%s1325 + $0x4c0] sm:$0xff]
    %v1479 = vld [vmem:[%s1325 + $0x4c8] sm:$0xff]
    %v1480 = vld [vmem:[%s1325 + $0x4d0] sm:$0xff]
    %v1481 = vld [vmem:[%s1325 + $0x4d8] sm:$0xff]
    %v1482 = vld [vmem:[%s1325 + $0x4e0] sm:$0xff]
    %v1483 = vld [vmem:[%s1325 + $0x4e8] sm:$0xff]
    %v1484 = vld [vmem:[%s1325 + $0x4f0] sm:$0xff]
    %v1485 = vld [vmem:[%s1325 + $0x4f8] sm:$0xff]
    %v1486 = vld [vmem:[%s1325 + $0x500] sm:$0xff]
    %v1487 = vld [vmem:[%s1325 + $0x508] sm:$0xff]
    %v1488 = vld [vmem:[%s1325 + $0x510] sm:$0xff]
    %v1489 = vld [vmem:[%s1325 + $0x518] sm:$0xff]
    %v1490 = vld [vmem:[%s1325 + $0x520] sm:$0xff]
    %v1491 = vld [vmem:[%s1325 + $0x528] sm:$0xff]
    %v1492 = vld [vmem:[%s1325 + $0x530] sm:$0xff]
    %v1493 = vld [vmem:[%s1325 + $0x538] sm:$0xff]
    %v1494 = vld [vmem:[%s1325 + $0x540] sm:$0xff]
    %v1495 = vld [vmem:[%s1325 + $0x548] sm:$0xff]
    %v1496 = vld [vmem:[%s1325 + $0x550] sm:$0xff]
    %v1497 = vld [vmem:[%s1325 + $0x558] sm:$0xff]
    %v1498 = vld [vmem:[%s1325 + $0x560] sm:$0xff]
    %v1499 = vld [vmem:[%s1325 + $0x568] sm:$0xff]
    %v1500 = vld [vmem:[%s1325 + $0x570] sm:$0xff]
    %v1501 = vld [vmem:[%s1325 + $0x578] sm:$0xff]
    %v1502 = vld [vmem:[%s1325 + $0x580] sm:$0xff]
    %v1503 = vld [vmem:[%s1325 + $0x588] sm:$0xff]
    %v1504 = vld [vmem:[%s1325 + $0x590] sm:$0xff]
    %v1505 = vld [vmem:[%s1325 + $0x598] sm:$0xff]
    %v1506 = vld [vmem:[%s1325 + $0x5a0] sm:$0xff]
    %v1507 = vld [vmem:[%s1325 + $0x5a8] sm:$0xff]
    %v1508 = vld [vmem:[%s1325 + $0x5b0] sm:$0xff]
    %v1509 = vld [vmem:[%s1325 + $0x5b8] sm:$0xff]
    %v1510 = vld [vmem:[%s1325 + $0x5c0] sm:$0xff]
    %v1511 = vld [vmem:[%s1325 + $0x5c8] sm:$0xff]
    %v1512 = vld [vmem:[%s1325 + $0x5d0] sm:$0xff]
    %v1513 = vld [vmem:[%s1325 + $0x5d8] sm:$0xff]
    %v1514 = vld [vmem:[%s1325 + $0x5e0] sm:$0xff]
    %v1515 = vld [vmem:[%s1325 + $0x5e8] sm:$0xff]
    %v1516 = vld [vmem:[%s1325 + $0x5f0] sm:$0xff]
    %v1517 = vld [vmem:[%s1325 + $0x5f8] sm:$0xff]
    %v1518 = vld [vmem:[%s1325 + $0x600] sm:$0xff]
    %v1519 = vld [vmem:[%s1325 + $0x608] sm:$0xff]
    %v1520 = vld [vmem:[%s1325 + $0x610] sm:$0xff]
    %v1521 = vld [vmem:[%s1325 + $0x618] sm:$0xff]
    %v1522 = vld [vmem:[%s1325 + $0x620] sm:$0xff]
    %v1523 = vld [vmem:[%s1325 + $0x628] sm:$0xff]
    %v1524 = vld [vmem:[%s1325 + $0x630] sm:$0xff]
    %v1525 = vld [vmem:[%s1325 + $0x638] sm:$0xff]
    %v1526 = vld [vmem:[%s1325 + $0x640] sm:$0xff]
    %v1527 = vld [vmem:[%s1325 + $0x648] sm:$0xff]
    %v1528 = vld [vmem:[%s1325 + $0x650] sm:$0xff]
    %v1529 = vld [vmem:[%s1325 + $0x658] sm:$0xff]
    %v1530 = vld [vmem:[%s1325 + $0x660] sm:$0xff]
    %v1531 = vld [vmem:[%s1325 + $0x668] sm:$0xff]
    %v1532 = vld [vmem:[%s1325 + $0x670] sm:$0xff]
    %v1533 = vld [vmem:[%s1325 + $0x678] sm:$0xff]
    %v1534 = vld [vmem:[%s1325 + $0x680] sm:$0xff]
    %v1535 = vld [vmem:[%s1325 + $0x688] sm:$0xff]
    %v1536 = vld [vmem:[%s1325 + $0x690] sm:$0xff]
    %v1537 = vld [vmem:[%s1325 + $0x698] sm:$0xff]
    %v1538 = vld [vmem:[%s1325 + $0x6a0] sm:$0xff]
    %v1539 = vld [vmem:[%s1325 + $0x6a8] sm:$0xff]
    %v1540 = vld [vmem:[%s1325 + $0x6b0] sm:$0xff]
    %v1541 = vld [vmem:[%s1325 + $0x6b8] sm:$0xff]
    %v1542 = vld [vmem:[%s1325 + $0x6c0] sm:$0xff]
    %v1543 = vld [vmem:[%s1325 + $0x6c8] sm:$0xff]
    %v1544 = vld [vmem:[%s1325 + $0x6d0] sm:$0xff]
    %v1545 = vld [vmem:[%s1325 + $0x6d8] sm:$0xff]
    %v1546 = vld [vmem:[%s1325 + $0x6e0] sm:$0xff]
    %v1547 = vld [vmem:[%s1325 + $0x6e8] sm:$0xff]
    %v1548 = vld [vmem:[%s1325 + $0x6f0] sm:$0xff]
    %v1549 = vld [vmem:[%s1325 + $0x6f8] sm:$0xff]
    %v1550 = vld [vmem:[%s1325 + $0x700] sm:$0xff]
    %v1551 = vld [vmem:[%s1325 + $0x708] sm:$0xff]
    %v1552 = vld [vmem:[%s1325 + $0x710] sm:$0xff]
    %v1553 = vld [vmem:[%s1325 + $0x718] sm:$0xff]
    %v1554 = vld [vmem:[%s1325 + $0x720] sm:$0xff]
    %v1555 = vld [vmem:[%s1325 + $0x728] sm:$0xff]
    %v1556 = vld [vmem:[%s1325 + $0x730] sm:$0xff]
    %v1557 = vld [vmem:[%s1325 + $0x738] sm:$0xff]
    %v1558 = vld [vmem:[%s1325 + $0x740] sm:$0xff]
    %v1559 = vld [vmem:[%s1325 + $0x748] sm:$0xff]
    %v1560 = vld [vmem:[%s1325 + $0x750] sm:$0xff]
    %v1561 = vld [vmem:[%s1325 + $0x758] sm:$0xff]
    %v1562 = vld [vmem:[%s1325 + $0x760] sm:$0xff]
    %v1563 = vld [vmem:[%s1325 + $0x768] sm:$0xff]
    %v1564 = vld [vmem:[%s1325 + $0x770] sm:$0xff]
    %v1565 = vld [vmem:[%s1325 + $0x778] sm:$0xff]
    %v1566 = vld [vmem:[%s1325 + $0x780] sm:$0xff]
    %v1567 = vld [vmem:[%s1325 + $0x788] sm:$0xff]
    %v1568 = vld [vmem:[%s1325 + $0x790] sm:$0xff]
    %v1569 = vld [vmem:[%s1325 + $0x798] sm:$0xff]
    %v1570 = vld [vmem:[%s1325 + $0x7a0] sm:$0xff]
    %v1571 = vld [vmem:[%s1325 + $0x7a8] sm:$0xff]
    %v1572 = vld [vmem:[%s1325 + $0x7b0] sm:$0xff]
    %v1573 = vld [vmem:[%s1325 + $0x7b8] sm:$0xff]
    %v1574 = vld [vmem:[%s1325 + $0x7c0] sm:$0xff]
    %v1575 = vld [vmem:[%s1325 + $0x7c8] sm:$0xff]
    %v1576 = vld [vmem:[%s1325 + $0x7d0] sm:$0xff]
    %v1577 = vld [vmem:[%s1325 + $0x7d8] sm:$0xff]
    %v1578 = vld [vmem:[%s1325 + $0x7e0] sm:$0xff]
    %v1579 = vld [vmem:[%s1325 + $0x7e8] sm:$0xff]
    %v1580 = vld [vmem:[%s1325 + $0x7f0] sm:$0xff]
    %v1581 = vld [vmem:[%s1325 + $0x7f8] sm:$0xff]
    %1582 = vmatprep.subr.mxu0 %v1327
    %1583 = vmatpush1.msra.mxu0 %v1326
    %1584 = vmatprep.subr.mxu0 %v1335
    %1585 = vmatpush1.msra.mxu0 %v1334
    %1586 = vmatprep.subr.mxu0 %v1343
    %1587 = vmatpush1.msra.mxu0 %v1342
    %1588 = vmatprep.subr.mxu0 %v1351
    %1589 = vmatpush1.msra.mxu0 %v1350
    %1590 = vmatprep.subr.mxu0 %v1359
    %1591 = vmatpush1.msra.mxu0 %v1358
    %1592 = vmatprep.subr.mxu0 %v1367
    %1593 = vmatpush1.msra.mxu0 %v1366
    %1594 = vmatprep.subr.mxu0 %v1375
    %1595 = vmatpush1.msra.mxu0 %v1374
    %1596 = vmatprep.subr.mxu0 %v1383
    %1597 = vmatpush1.msra.mxu0 %v1382
    %1598 = vmatprep.subr.mxu0 %v1391
    %1599 = vmatpush1.msra.mxu0 %v1390
    %1600 = vmatprep.subr.mxu0 %v1399
    %1601 = vmatpush1.msra.mxu0 %v1398
    %1602 = vmatprep.subr.mxu0 %v1407
    %1603 = vmatpush1.msra.mxu0 %v1406
    %1604 = vmatprep.subr.mxu0 %v1415
    %1605 = vmatpush1.msra.mxu0 %v1414
    %1606 = vmatprep.subr.mxu0 %v1423
    %1607 = vmatpush1.msra.mxu0 %v1422
    %1608 = vmatprep.subr.mxu0 %v1431
    %1609 = vmatpush1.msra.mxu0 %v1430
    %1610 = vmatprep.subr.mxu0 %v1439
    %1611 = vmatpush1.msra.mxu0 %v1438
    %1612 = vmatprep.subr.mxu0 %v1447
    %1613 = vmatpush1.msra.mxu0 %v1446
    %1614 = vmatprep.subr.mxu0 %v1455
    %1615 = vmatpush1.msra.mxu0 %v1454
    %1616 = vmatprep.subr.mxu0 %v1463
    %1617 = vmatpush1.msra.mxu0 %v1462
    %1618 = vmatprep.subr.mxu0 %v1471
    %1619 = vmatpush1.msra.mxu0 %v1470
    %1620 = vmatprep.subr.mxu0 %v1479
    %1621 = vmatpush1.msra.mxu0 %v1478
    %1622 = vmatprep.subr.mxu0 %v1487
    %1623 = vmatpush1.msra.mxu0 %v1486
    %1624 = vmatprep.subr.mxu0 %v1495
    %1625 = vmatpush1.msra.mxu0 %v1494
    %1626 = vmatprep.subr.mxu0 %v1503
    %1627 = vmatpush1.msra.mxu0 %v1502
    %1628 = vmatprep.subr.mxu0 %v1511
    %1629 = vmatpush1.msra.mxu0 %v1510
    %1630 = vmatprep.subr.mxu0 %v1519
    %1631 = vmatpush1.msra.mxu0 %v1518
    %1632 = vmatprep.subr.mxu0 %v1527
    %1633 = vmatpush1.msra.mxu0 %v1526
    %1634 = vmatprep.subr.mxu0 %v1535
    %1635 = vmatpush1.msra.mxu0 %v1534
    %1636 = vmatprep.subr.mxu0 %v1543
    %1637 = vmatpush1.msra.mxu0 %v1542
    %1638 = vmatprep.subr.mxu0 %v1551
    %1639 = vmatpush1.msra.mxu0 %v1550
    %1640 = vmatprep.subr.mxu0 %v1559
    %1641 = vmatpush1.msra.mxu0 %v1558
    %1642 = vmatprep.subr.mxu0 %v1567
    %1643 = vmatpush1.msra.mxu0 %v1566
    %1644 = vmatprep.subr.mxu0 %v1575
    %1645 = vmatpush1.msra.mxu0 %v1574
    %1646 = vmatprep.mubr.f32.mxu0 %v1322
    %1647 = vmatmul.mubr.f32.gmra.mrb[0].mxu0 %v1321
    %v1648 = vpop.f32.mrb[0].mxu0
    %v1649 = vadd.f32 0.0, %v1648
    %v1650 = vpop.f32.mrb[0].mxu0
    %v1651 = vadd.f32 0.0, %v1650
    %1652 = vmatprep.mubr.f32.mxu0 %v1324
    %1653 = vmatmul.mubr.f32.gmra.mrb[0].mxu0 %v1323
    %v1654 = vpop.f32.mrb[0].mxu0
    %v1655 = vadd.f32 0.0, %v1654
    %v1656 = vpop.f32.mrb[0].mxu0
    %v1657 = vadd.f32 0.0, %v1656
    %1658 = vdwg.mxu0
    %1659 = vmatprep.subr.mxu0 %v1329
    %1660 = vmatpush1.msra.mxu0 %v1328
    %1661 = vmatprep.subr.mxu0 %v1337
    %1662 = vmatpush1.msra.mxu0 %v1336
    %1663 = vmatprep.subr.mxu0 %v1345
    %1664 = vmatpush1.msra.mxu0 %v1344
    %1665 = vmatprep.subr.mxu0 %v1353
    %1666 = vmatpush1.msra.mxu0 %v1352
    %1667 = vmatprep.subr.mxu0 %v1361
    %1668 = vmatpush1.msra.mxu0 %v1360
    %1669 = vmatprep.subr.mxu0 %v1369
    %1670 = vmatpush1.msra.mxu0 %v1368
    %1671 = vmatprep.subr.mxu0 %v1377
    %1672 = vmatpush1.msra.mxu0 %v1376
    %1673 = vmatprep.subr.mxu0 %v1385
    %1674 = vmatpush1.msra.mxu0 %v1384
    %1675 = vmatprep.subr.mxu0 %v1393
    %1676 = vmatpush1.msra.mxu0 %v1392
    %1677 = vmatprep.subr.mxu0 %v1401
    %1678 = vmatpush1.msra.mxu0 %v1400
    %1679 = vmatprep.subr.mxu0 %v1409
    %1680 = vmatpush1.msra.mxu0 %v1408
    %1681 = vmatprep.subr.mxu0 %v1417
    %1682 = vmatpush1.msra.mxu0 %v1416
    %1683 = vmatprep.subr.mxu0 %v1425
    %1684 = vmatpush1.msra.mxu0 %v1424
    %1685 = vmatprep.subr.mxu0 %v1433
    %1686 = vmatpush1.msra.mxu0 %v1432
    %1687 = vmatprep.subr.mxu0 %v1441
    %1688 = vmatpush1.msra.mxu0 %v1440
    %1689 = vmatprep.subr.mxu0 %v1449
    %1690 = vmatpush1.msra.mxu0 %v1448
    %1691 = vmatprep.subr.mxu0 %v1457
    %1692 = vmatpush1.msra.mxu0 %v1456
    %1693 = vmatprep.subr.mxu0 %v1465
    %1694 = vmatpush1.msra.mxu0 %v1464
    %1695 = vmatprep.subr.mxu0 %v1473
    %1696 = vmatpush1.msra.mxu0 %v1472
    %1697 = vmatprep.subr.mxu0 %v1481
    %1698 = vmatpush1.msra.mxu0 %v1480
    %1699 = vmatprep.subr.mxu0 %v1489
    %1700 = vmatpush1.msra.mxu0 %v1488
    %1701 = vmatprep.subr.mxu0 %v1497
    %1702 = vmatpush1.msra.mxu0 %v1496
    %1703 = vmatprep.subr.mxu0 %v1505
    %1704 = vmatpush1.msra.mxu0 %v1504
    %1705 = vmatprep.subr.mxu0 %v1513
    %1706 = vmatpush1.msra.mxu0 %v1512
    %1707 = vmatprep.subr.mxu0 %v1521
    %1708 = vmatpush1.msra.mxu0 %v1520
    %1709 = vmatprep.subr.mxu0 %v1529
    %1710 = vmatpush1.msra.mxu0 %v1528
    %1711 = vmatprep.subr.mxu0 %v1537
    %1712 = vmatpush1.msra.mxu0 %v1536
    %1713 = vmatprep.subr.mxu0 %v1545
    %1714 = vmatpush1.msra.mxu0 %v1544
    %1715 = vmatprep.subr.mxu0 %v1553
    %1716 = vmatpush1.msra.mxu0 %v1552
    %1717 = vmatprep.subr.mxu0 %v1561
    %1718 = vmatpush1.msra.mxu0 %v1560
    %1719 = vmatprep.subr.mxu0 %v1569
    %1720 = vmatpush1.msra.mxu0 %v1568
    %1721 = vmatprep.subr.mxu0 %v1577
    %1722 = vmatpush1.msra.mxu0 %v1576
    %1723 = vmatprep.mubr.f32.mxu0 %v1322
    %1724 = vmatmul.mubr.f32.gmra.mrb[0].mxu0 %v1321
    %v1725 = vpop.f32.mrb[0].mxu0
    %v1726 = vadd.f32 0.0, %v1725
    %v1727 = vpop.f32.mrb[0].mxu0
    %v1728 = vadd.f32 0.0, %v1727
    %1729 = vmatprep.mubr.f32.mxu0 %v1324
    %1730 = vmatmul.mubr.f32.gmra.mrb[0].mxu0 %v1323
    %v1731 = vpop.f32.mrb[0].mxu0
    %v1732 = vadd.f32 0.0, %v1731
    %v1733 = vpop.f32.mrb[0].mxu0
    %v1734 = vadd.f32 0.0, %v1733
    %1735 = vdwg.mxu0
    %1736 = vmatprep.subr.mxu0 %v1331
    %1737 = vmatpush1.msra.mxu0 %v1330
    %1738 = vmatprep.subr.mxu0 %v1339
    %1739 = vmatpush1.msra.mxu0 %v1338
    %1740 = vmatprep.subr.mxu0 %v1347
    %1741 = vmatpush1.msra.mxu0 %v1346
    %1742 = vmatprep.subr.mxu0 %v1355
    %1743 = vmatpush1.msra.mxu0 %v1354
    %1744 = vmatprep.subr.mxu0 %v1363
    %1745 = vmatpush1.msra.mxu0 %v1362
    %1746 = vmatprep.subr.mxu0 %v1371
    %1747 = vmatpush1.msra.mxu0 %v1370
    %1748 = vmatprep.subr.mxu0 %v1379
    %1749 = vmatpush1.msra.mxu0 %v1378
    %1750 = vmatprep.subr.mxu0 %v1387
    %1751 = vmatpush1.msra.mxu0 %v1386
    %1752 = vmatprep.subr.mxu0 %v1395
    %1753 = vmatpush1.msra.mxu0 %v1394
    %1754 = vmatprep.subr.mxu0 %v1403
    %1755 = vmatpush1.msra.mxu0 %v1402
    %1756 = vmatprep.subr.mxu0 %v1411
    %1757 = vmatpush1.msra.mxu0 %v1410
    %1758 = vmatprep.subr.mxu0 %v1419
    %1759 = vmatpush1.msra.mxu0 %v1418
    %1760 = vmatprep.subr.mxu0 %v1427
    %1761 = vmatpush1.msra.mxu0 %v1426
    %1762 = vmatprep.subr.mxu0 %v1435
    %1763 = vmatpush1.msra.mxu0 %v1434
    %1764 = vmatprep.subr.mxu0 %v1443
    %1765 = vmatpush1.msra.mxu0 %v1442
    %1766 = vmatprep.subr.mxu0 %v1451
    %1767 = vmatpush1.msra.mxu0 %v1450
    %1768 = vmatprep.subr.mxu0 %v1459
    %1769 = vmatpush1.msra.mxu0 %v1458
    %1770 = vmatprep.subr.mxu0 %v1467
    %1771 = vmatpush1.msra.mxu0 %v1466
    %1772 = vmatprep.subr.mxu0 %v1475
    %1773 = vmatpush1.msra.mxu0 %v1474
    %1774 = vmatprep.subr.mxu0 %v1483
    %1775 = vmatpush1.msra.mxu0 %v1482
    %1776 = vmatprep.subr.mxu0 %v1491
    %1777 = vmatpush1.msra.mxu0 %v1490
    %1778 = vmatprep.subr.mxu0 %v1499
    %1779 = vmatpush1.msra.mxu0 %v1498
    %1780 = vmatprep.subr.mxu0 %v1507
    %1781 = vmatpush1.msra.mxu0 %v1506
    %1782 = vmatprep.subr.mxu0 %v1515
    %1783 = vmatpush1.msra.mxu0 %v1514
    %1784 = vmatprep.subr.mxu0 %v1523
    %1785 = vmatpush1.msra.mxu0 %v1522
    %1786 = vmatprep.subr.mxu0 %v1531
    %1787 = vmatpush1.msra.mxu0 %v1530
    %1788 = vmatprep.subr.mxu0 %v1539
    %1789 = vmatpush1.msra.mxu0 %v1538
    %1790 = vmatprep.subr.mxu0 %v1547
    %1791 = vmatpush1.msra.mxu0 %v1546
    %1792 = vmatprep.subr.mxu0 %v1555
    %1793 = vmatpush1.msra.mxu0 %v1554
    %1794 = vmatprep.subr.mxu0 %v1563
    %1795 = vmatpush1.msra.mxu0 %v1562
    %1796 = vmatprep.subr.mxu0 %v1571
    %1797 = vmatpush1.msra.mxu0 %v1570
    %1798 = vmatprep.subr.mxu0 %v1579
    %1799 = vmatpush1.msra.mxu0 %v1578
    %1800 = vmatprep.mubr.f32.mxu0 %v1322
    %1801 = vmatmul.mubr.f32.gmra.mrb[0].mxu0 %v1321
    %v1802 = vpop.f32.mrb[0].mxu0
    %v1803 = vadd.f32 0.0, %v1802
    %v1804 = vpop.f32.mrb[0].mxu0
    %v1805 = vadd.f32 0.0, %v1804
    %1806 = vmatprep.mubr.f32.mxu0 %v1324
    %1807 = vmatmul.mubr.f32.gmra.mrb[0].mxu0 %v1323
    %v1808 = vpop.f32.mrb[0].mxu0
    %v1809 = vadd.f32 0.0, %v1808
    %v1810 = vpop.f32.mrb[0].mxu0
    %v1811 = vadd.f32 0.0, %v1810
    %1812 = vdwg.mxu0
    %1813 = vmatprep.subr.mxu0 %v1333
    %1814 = vmatpush1.msra.mxu0 %v1332
    %1815 = vmatprep.subr.mxu0 %v1341
    %1816 = vmatpush1.msra.mxu0 %v1340
    %1817 = vmatprep.subr.mxu0 %v1349
    %1818 = vmatpush1.msra.mxu0 %v1348
    %1819 = vmatprep.subr.mxu0 %v1357
    %1820 = vmatpush1.msra.mxu0 %v1356
    %1821 = vmatprep.subr.mxu0 %v1365
    %1822 = vmatpush1.msra.mxu0 %v1364
    %1823 = vmatprep.subr.mxu0 %v1373
    %1824 = vmatpush1.msra.mxu0 %v1372
    %1825 = vmatprep.subr.mxu0 %v1381
    %1826 = vmatpush1.msra.mxu0 %v1380
    %1827 = vmatprep.subr.mxu0 %v1389
    %1828 = vmatpush1.msra.mxu0 %v1388
    %1829 = vmatprep.subr.mxu0 %v1397
    %1830 = vmatpush1.msra.mxu0 %v1396
    %1831 = vmatprep.subr.mxu0 %v1405
    %1832 = vmatpush1.msra.mxu0 %v1404
    %1833 = vmatprep.subr.mxu0 %v1413
    %1834 = vmatpush1.msra.mxu0 %v1412
    %1835 = vmatprep.subr.mxu0 %v1421
    %1836 = vmatpush1.msra.mxu0 %v1420
    %1837 = vmatprep.subr.mxu0 %v1429
    %1838 = vmatpush1.msra.mxu0 %v1428
    %1839 = vmatprep.subr.mxu0 %v1437
    %1840 = vmatpush1.msra.mxu0 %v1436
    %1841 = vmatprep.subr.mxu0 %v1445
    %1842 = vmatpush1.msra.mxu0 %v1444
    %1843 = vmatprep.subr.mxu0 %v1453
    %1844 = vmatpush1.msra.mxu0 %v1452
    %1845 = vmatprep.subr.mxu0 %v1461
    %1846 = vmatpush1.msra.mxu0 %v1460
    %1847 = vmatprep.subr.mxu0 %v1469
    %1848 = vmatpush1.msra.mxu0 %v1468
    %1849 = vmatprep.subr.mxu0 %v1477
    %1850 = vmatpush1.msra.mxu0 %v1476
    %1851 = vmatprep.subr.mxu0 %v1485
    %1852 = vmatpush1.msra.mxu0 %v1484
    %1853 = vmatprep.subr.mxu0 %v1493
    %1854 = vmatpush1.msra.mxu0 %v1492
    %1855 = vmatprep.subr.mxu0 %v1501
    %1856 = vmatpush1.msra.mxu0 %v1500
    %1857 = vmatprep.subr.mxu0 %v1509
    %1858 = vmatpush1.msra.mxu0 %v1508
    %1859 = vmatprep.subr.mxu0 %v1517
    %1860 = vmatpush1.msra.mxu0 %v1516
    %1861 = vmatprep.subr.mxu0 %v1525
    %1862 = vmatpush1.msra.mxu0 %v1524
    %1863 = vmatprep.subr.mxu0 %v1533
    %1864 = vmatpush1.msra.mxu0 %v1532
    %1865 = vmatprep.subr.mxu0 %v1541
    %1866 = vmatpush1.msra.mxu0 %v1540
    %1867 = vmatprep.subr.mxu0 %v1549
    %1868 = vmatpush1.msra.mxu0 %v1548
    %1869 = vmatprep.subr.mxu0 %v1557
    %1870 = vmatpush1.msra.mxu0 %v1556
    %1871 = vmatprep.subr.mxu0 %v1565
    %1872 = vmatpush1.msra.mxu0 %v1564
    %1873 = vmatprep.subr.mxu0 %v1573
    %1874 = vmatpush1.msra.mxu0 %v1572
    %1875 = vmatprep.subr.mxu0 %v1581
    %1876 = vmatpush1.msra.mxu0 %v1580
    %1877 = vmatprep.mubr.f32.mxu0 %v1322
    %1878 = vmatmul.mubr.f32.gmra.mrb[0].mxu0 %v1321
    %v1879 = vpop.f32.mrb[0].mxu0
    %v1880 = vadd.f32 0.0, %v1879
    %v1881 = vpop.f32.mrb[0].mxu0
    %v1882 = vadd.f32 0.0, %v1881
    %1883 = vmatprep.mubr.f32.mxu0 %v1324
    %1884 = vmatmul.mubr.f32.gmra.mrb[0].mxu0 %v1323
    %v1885 = vpop.f32.mrb[0].mxu0
    %v1886 = vadd.f32 0.0, %v1885
    %v1887 = vpop.f32.mrb[0].mxu0
    %v1888 = vadd.f32 0.0, %v1887
    %1889 = vdwg.mxu0
    %v1890 = vadd.f32 %v1726, %v856
    %v1891 = vadd.f32 %v1728, %v860
    %v1892 = vadd.f32 %v1803, %v864
    %v1893 = vadd.f32 %v1805, %v868
    %v1894 = vadd.f32 %v1880, %v872
    %v1895 = vadd.f32 %v1882, %v876
    %v1896 = vadd.f32 %v1732, %v856
    %v1897 = vadd.f32 %v1734, %v860
    %v1898 = vadd.f32 %v1809, %v864
    %v1899 = vadd.f32 %v1811, %v868
    %v1900 = vadd.f32 %v1886, %v872
    %v1901 = vadd.f32 %v1888, %v876
    %1902 = vmatprep.subr.mxu0 %v1651
    %1903 = vmatpush1.msra.mxu0 %v1649
    %1904 = vmatprep.subr.mxu0 %v1657
    %1905 = vmatpush1.msra.mxu0 %v1655
    %1906 = vmatprep.subr.mxu0 0.0
    %1907 = vmatpush1.msra.mxu0 0.0
    %1908 = vmatprep.subr.mxu0 0.0
    %1909 = vmatpush1.msra.mxu0 0.0
    %1910 = vmatprep.subr.mxu0 0.0
    %1911 = vmatpush1.msra.mxu0 0.0
    %1912 = vmatprep.subr.mxu0 0.0
    %1913 = vmatpush1.msra.mxu0 0.0
    %1914 = vmatprep.subr.mxu0 0.0
    %1915 = vmatpush1.msra.mxu0 0.0
    %1916 = vmatprep.subr.mxu0 0.0
    %1917 = vmatpush1.msra.mxu0 0.0
    %1918 = vmatprep.subr.mxu0 0.0
    %1919 = vmatpush1.msra.mxu0 0.0
    %1920 = vmatprep.subr.mxu0 0.0
    %1921 = vmatpush1.msra.mxu0 0.0
    %1922 = vmatprep.subr.mxu0 0.0
    %1923 = vmatpush1.msra.mxu0 0.0
    %1924 = vmatprep.subr.mxu0 0.0
    %1925 = vmatpush1.msra.mxu0 0.0
    %1926 = vmatprep.subr.mxu0 0.0
    %1927 = vmatpush1.msra.mxu0 0.0
    %1928 = vmatprep.subr.mxu0 0.0
    %1929 = vmatpush1.msra.mxu0 0.0
    %1930 = vmatprep.subr.mxu0 0.0
    %1931 = vmatpush1.msra.mxu0 0.0
    %1932 = vmatprep.subr.mxu0 0.0
    %1933 = vmatpush1.msra.mxu0 0.0
    %1934 = vmatprep.subr.mxu0 0.0
    %1935 = vmatpush1.msra.mxu0 0.0
    %1936 = vmatprep.subr.mxu0 0.0
    %1937 = vmatpush1.msra.mxu0 0.0
    %1938 = vmatprep.subr.mxu0 0.0
    %1939 = vmatpush1.msra.mxu0 0.0
    %1940 = vmatprep.subr.mxu0 0.0
    %1941 = vmatpush1.msra.mxu0 0.0
    %1942 = vmatprep.subr.mxu0 0.0
    %1943 = vmatpush1.msra.mxu0 0.0
    %1944 = vmatprep.subr.mxu0 0.0
    %1945 = vmatpush1.msra.mxu0 0.0
    %1946 = vmatprep.subr.mxu0 0.0
    %1947 = vmatpush1.msra.mxu0 0.0
    %1948 = vmatprep.subr.mxu0 0.0
    %1949 = vmatpush1.msra.mxu0 0.0
    %1950 = vmatprep.subr.mxu0 0.0
    %1951 = vmatpush1.msra.mxu0 0.0
    %1952 = vmatprep.subr.mxu0 0.0
    %1953 = vmatpush1.msra.mxu0 0.0
    %1954 = vmatprep.subr.mxu0 0.0
    %1955 = vmatpush1.msra.mxu0 0.0
    %1956 = vmatprep.subr.mxu0 0.0
    %1957 = vmatpush1.msra.mxu0 0.0
    %1958 = vmatprep.subr.mxu0 0.0
    %1959 = vmatpush1.msra.mxu0 0.0
    %1960 = vmatprep.subr.mxu0 0.0
    %1961 = vmatpush1.msra.mxu0 0.0
    %1962 = vmatprep.subr.mxu0 0.0
    %1963 = vmatpush1.msra.mxu0 0.0
    %1964 = vmatprep.subr.mxu0 0.0
    %1965 = vmatpush1.msra.mxu0 0.0
    %1966 = vmatprep.mubr.f32.mxu0 0.0
    %1967 = vmatmul.mubr.f32.gmra.mrb[0].mxu0 %v897
    %v1968 = vpop.f32.mrb[0].mxu0
    %v1969 = vadd.f32 0.0, %v1968
    %v1970 = vpop.f32.mrb[0].mxu0
    %v1971 = vadd.f32 0.0, %v1970
    %1972 = vmatprep.mubr.f32.mxu0 0.0
    %1973 = vmatmul.mubr.f32.gmra.mrb[0].mxu0 %v900
    %v1974 = vpop.f32.mrb[0].mxu0
    %v1975 = vadd.f32 0.0, %v1974
    %v1976 = vpop.f32.mrb[0].mxu0
    %v1977 = vadd.f32 0.0, %v1976
    %1978 = vdwg.mxu0
    %1979 = vmatprep.subr.mxu0 %v90
    %1980 = vmatpush1.msra.mxu0 %v89
    %1981 = vmatprep.subr.mxu0 %v96
    %1982 = vmatpush1.msra.mxu0 %v95
    %1983 = vmatprep.subr.mxu0 %v102
    %1984 = vmatpush1.msra.mxu0 %v101
    %1985 = vmatprep.subr.mxu0 %v108
    %1986 = vmatpush1.msra.mxu0 %v107
    %1987 = vmatprep.subr.mxu0 %v114
    %1988 = vmatpush1.msra.mxu0 %v113
    %1989 = vmatprep.subr.mxu0 %v120
    %1990 = vmatpush1.msra.mxu0 %v119
    %1991 = vmatprep.subr.mxu0 %v126
    %1992 = vmatpush1.msra.mxu0 %v125
    %1993 = vmatprep.subr.mxu0 %v132
    %1994 = vmatpush1.msra.mxu0 %v131
    %1995 = vmatprep.subr.mxu0 %v138
    %1996 = vmatpush1.msra.mxu0 %v137
    %1997 = vmatprep.subr.mxu0 %v144
    %1998 = vmatpush1.msra.mxu0 %v143
    %1999 = vmatprep.subr.mxu0 %v150
    %2000 = vmatpush1.msra.mxu0 %v149
    %2001 = vmatprep.subr.mxu0 %v156
    %2002 = vmatpush1.msra.mxu0 %v155
    %2003 = vmatprep.subr.mxu0 %v162
    %2004 = vmatpush1.msra.mxu0 %v161
    %2005 = vmatprep.subr.mxu0 %v168
    %2006 = vmatpush1.msra.mxu0 %v167
    %2007 = vmatprep.subr.mxu0 %v174
    %2008 = vmatpush1.msra.mxu0 %v173
    %2009 = vmatprep.subr.mxu0 %v180
    %2010 = vmatpush1.msra.mxu0 %v179
    %2011 = vmatprep.subr.mxu0 %v186
    %2012 = vmatpush1.msra.mxu0 %v185
    %2013 = vmatprep.subr.mxu0 %v192
    %2014 = vmatpush1.msra.mxu0 %v191
    %2015 = vmatprep.subr.mxu0 %v198
    %2016 = vmatpush1.msra.mxu0 %v197
    %2017 = vmatprep.subr.mxu0 %v204
    %2018 = vmatpush1.msra.mxu0 %v203
    %2019 = vmatprep.subr.mxu0 %v210
    %2020 = vmatpush1.msra.mxu0 %v209
    %2021 = vmatprep.subr.mxu0 %v216
    %2022 = vmatpush1.msra.mxu0 %v215
    %2023 = vmatprep.subr.mxu0 %v222
    %2024 = vmatpush1.msra.mxu0 %v221
    %2025 = vmatprep.subr.mxu0 %v228
    %2026 = vmatpush1.msra.mxu0 %v227
    %2027 = vmatprep.subr.mxu0 %v234
    %2028 = vmatpush1.msra.mxu0 %v233
    %2029 = vmatprep.subr.mxu0 %v240
    %2030 = vmatpush1.msra.mxu0 %v239
    %2031 = vmatprep.subr.mxu0 %v246
    %2032 = vmatpush1.msra.mxu0 %v245
    %2033 = vmatprep.subr.mxu0 %v252
    %2034 = vmatpush1.msra.mxu0 %v251
    %2035 = vmatprep.subr.mxu0 %v258
    %2036 = vmatpush1.msra.mxu0 %v257
    %2037 = vmatprep.subr.mxu0 %v264
    %2038 = vmatpush1.msra.mxu0 %v263
    %2039 = vmatprep.subr.mxu0 %v270
    %2040 = vmatpush1.msra.mxu0 %v269
    %2041 = vmatprep.subr.mxu0 %v276
    %2042 = vmatpush1.msra.mxu0 %v275
    %2043 = vmatprep.mubr.f32.mxu0 %v1971
    %2044 = vmatmul.mubr.f32.gmra.mrb[0].mxu0 %v1969
    %v2045 = vpop.f32.mrb[0].mxu0
    %v2046 = vadd.f32 %v983, %v2045
    %v2047 = vpop.f32.mrb[0].mxu0
    %v2048 = vadd.f32 %v987, %v2047
    %2049 = vmatprep.mubr.f32.mxu0 %v1977
    %2050 = vmatmul.mubr.f32.gmra.mrb[0].mxu0 %v1975
    %v2051 = vpop.f32.mrb[0].mxu0
    %v2052 = vadd.f32 %v983, %v2051
    %v2053 = vpop.f32.mrb[0].mxu0
    %v2054 = vadd.f32 %v987, %v2053
    %2055 = vdwg.mxu0
    %2056 = vmatprep.subr.mxu0 %v92
    %2057 = vmatpush1.msra.mxu0 %v91
    %2058 = vmatprep.subr.mxu0 %v98
    %2059 = vmatpush1.msra.mxu0 %v97
    %2060 = vmatprep.subr.mxu0 %v104
    %2061 = vmatpush1.msra.mxu0 %v103
    %2062 = vmatprep.subr.mxu0 %v110
    %2063 = vmatpush1.msra.mxu0 %v109
    %2064 = vmatprep.subr.mxu0 %v116
    %2065 = vmatpush1.msra.mxu0 %v115
    %2066 = vmatprep.subr.mxu0 %v122
    %2067 = vmatpush1.msra.mxu0 %v121
    %2068 = vmatprep.subr.mxu0 %v128
    %2069 = vmatpush1.msra.mxu0 %v127
    %2070 = vmatprep.subr.mxu0 %v134
    %2071 = vmatpush1.msra.mxu0 %v133
    %2072 = vmatprep.subr.mxu0 %v140
    %2073 = vmatpush1.msra.mxu0 %v139
    %2074 = vmatprep.subr.mxu0 %v146
    %2075 = vmatpush1.msra.mxu0 %v145
    %2076 = vmatprep.subr.mxu0 %v152
    %2077 = vmatpush1.msra.mxu0 %v151
    %2078 = vmatprep.subr.mxu0 %v158
    %2079 = vmatpush1.msra.mxu0 %v157
    %2080 = vmatprep.subr.mxu0 %v164
    %2081 = vmatpush1.msra.mxu0 %v163
    %2082 = vmatprep.subr.mxu0 %v170
    %2083 = vmatpush1.msra.mxu0 %v169
    %2084 = vmatprep.subr.mxu0 %v176
    %2085 = vmatpush1.msra.mxu0 %v175
    %2086 = vmatprep.subr.mxu0 %v182
    %2087 = vmatpush1.msra.mxu0 %v181
    %2088 = vmatprep.subr.mxu0 %v188
    %2089 = vmatpush1.msra.mxu0 %v187
    %2090 = vmatprep.subr.mxu0 %v194
    %2091 = vmatpush1.msra.mxu0 %v193
    %2092 = vmatprep.subr.mxu0 %v200
    %2093 = vmatpush1.msra.mxu0 %v199
    %2094 = vmatprep.subr.mxu0 %v206
    %2095 = vmatpush1.msra.mxu0 %v205
    %2096 = vmatprep.subr.mxu0 %v212
    %2097 = vmatpush1.msra.mxu0 %v211
    %2098 = vmatprep.subr.mxu0 %v218
    %2099 = vmatpush1.msra.mxu0 %v217
    %2100 = vmatprep.subr.mxu0 %v224
    %2101 = vmatpush1.msra.mxu0 %v223
    %2102 = vmatprep.subr.mxu0 %v230
    %2103 = vmatpush1.msra.mxu0 %v229
    %2104 = vmatprep.subr.mxu0 %v236
    %2105 = vmatpush1.msra.mxu0 %v235
    %2106 = vmatprep.subr.mxu0 %v242
    %2107 = vmatpush1.msra.mxu0 %v241
    %2108 = vmatprep.subr.mxu0 %v248
    %2109 = vmatpush1.msra.mxu0 %v247
    %2110 = vmatprep.subr.mxu0 %v254
    %2111 = vmatpush1.msra.mxu0 %v253
    %2112 = vmatprep.subr.mxu0 %v260
    %2113 = vmatpush1.msra.mxu0 %v259
    %2114 = vmatprep.subr.mxu0 %v266
    %2115 = vmatpush1.msra.mxu0 %v265
    %2116 = vmatprep.subr.mxu0 %v272
    %2117 = vmatpush1.msra.mxu0 %v271
    %2118 = vmatprep.subr.mxu0 %v278
    %2119 = vmatpush1.msra.mxu0 %v277
    %2120 = vmatprep.mubr.f32.mxu0 %v1971
    %2121 = vmatmul.mubr.f32.gmra.mrb[0].mxu0 %v1969
    %v2122 = vpop.f32.mrb[0].mxu0
    %v2123 = vadd.f32 %v991, %v2122
    %v2124 = vpop.f32.mrb[0].mxu0
    %v2125 = vadd.f32 %v995, %v2124
    %2126 = vmatprep.mubr.f32.mxu0 %v1977
    %2127 = vmatmul.mubr.f32.gmra.mrb[0].mxu0 %v1975
    %v2128 = vpop.f32.mrb[0].mxu0
    %v2129 = vadd.f32 %v991, %v2128
    %v2130 = vpop.f32.mrb[0].mxu0
    %v2131 = vadd.f32 %v995, %v2130
    %2132 = vdwg.mxu0
    %2133 = vmatprep.subr.mxu0 %v94
    %2134 = vmatpush1.msra.mxu0 %v93
    %2135 = vmatprep.subr.mxu0 %v100
    %2136 = vmatpush1.msra.mxu0 %v99
    %2137 = vmatprep.subr.mxu0 %v106
    %2138 = vmatpush1.msra.mxu0 %v105
    %2139 = vmatprep.subr.mxu0 %v112
    %2140 = vmatpush1.msra.mxu0 %v111
    %2141 = vmatprep.subr.mxu0 %v118
    %2142 = vmatpush1.msra.mxu0 %v117
    %2143 = vmatprep.subr.mxu0 %v124
    %2144 = vmatpush1.msra.mxu0 %v123
    %2145 = vmatprep.subr.mxu0 %v130
    %2146 = vmatpush1.msra.mxu0 %v129
    %2147 = vmatprep.subr.mxu0 %v136
    %2148 = vmatpush1.msra.mxu0 %v135
    %2149 = vmatprep.subr.mxu0 %v142
    %2150 = vmatpush1.msra.mxu0 %v141
    %2151 = vmatprep.subr.mxu0 %v148
    %2152 = vmatpush1.msra.mxu0 %v147
    %2153 = vmatprep.subr.mxu0 %v154
    %2154 = vmatpush1.msra.mxu0 %v153
    %2155 = vmatprep.subr.mxu0 %v160
    %2156 = vmatpush1.msra.mxu0 %v159
    %2157 = vmatprep.subr.mxu0 %v166
    %2158 = vmatpush1.msra.mxu0 %v165
    %2159 = vmatprep.subr.mxu0 %v172
    %2160 = vmatpush1.msra.mxu0 %v171
    %2161 = vmatprep.subr.mxu0 %v178
    %2162 = vmatpush1.msra.mxu0 %v177
    %2163 = vmatprep.subr.mxu0 %v184
    %2164 = vmatpush1.msra.mxu0 %v183
    %2165 = vmatprep.subr.mxu0 %v190
    %2166 = vmatpush1.msra.mxu0 %v189
    %2167 = vmatprep.subr.mxu0 %v196
    %2168 = vmatpush1.msra.mxu0 %v195
    %2169 = vmatprep.subr.mxu0 %v202
    %2170 = vmatpush1.msra.mxu0 %v201
    %2171 = vmatprep.subr.mxu0 %v208
    %2172 = vmatpush1.msra.mxu0 %v207
    %2173 = vmatprep.subr.mxu0 %v214
    %2174 = vmatpush1.msra.mxu0 %v213
    %2175 = vmatprep.subr.mxu0 %v220
    %2176 = vmatpush1.msra.mxu0 %v219
    %2177 = vmatprep.subr.mxu0 %v226
    %2178 = vmatpush1.msra.mxu0 %v225
    %2179 = vmatprep.subr.mxu0 %v232
    %2180 = vmatpush1.msra.mxu0 %v231
    %2181 = vmatprep.subr.mxu0 %v238
    %2182 = vmatpush1.msra.mxu0 %v237
    %2183 = vmatprep.subr.mxu0 %v244
    %2184 = vmatpush1.msra.mxu0 %v243
    %2185 = vmatprep.subr.mxu0 %v250
    %2186 = vmatpush1.msra.mxu0 %v249
    %2187 = vmatprep.subr.mxu0 %v256
    %2188 = vmatpush1.msra.mxu0 %v255
    %2189 = vmatprep.subr.mxu0 %v262
    %2190 = vmatpush1.msra.mxu0 %v261
    %2191 = vmatprep.subr.mxu0 %v268
    %2192 = vmatpush1.msra.mxu0 %v267
    %2193 = vmatprep.subr.mxu0 %v274
    %2194 = vmatpush1.msra.mxu0 %v273
    %2195 = vmatprep.subr.mxu0 %v280
    %2196 = vmatpush1.msra.mxu0 %v279
    %2197 = vmatprep.mubr.f32.mxu0 %v1971
    %2198 = vmatmul.mubr.f32.gmra.mrb[0].mxu0 %v1969
    %v2199 = vpop.f32.mrb[0].mxu0
    %v2200 = vadd.f32 %v999, %v2199
    %v2201 = vpop.f32.mrb[0].mxu0
    %v2202 = vadd.f32 %v1003, %v2201
    %2203 = vmatprep.mubr.f32.mxu0 %v1977
    %2204 = vmatmul.mubr.f32.gmra.mrb[0].mxu0 %v1975
    %v2205 = vpop.f32.mrb[0].mxu0
    %v2206 = vadd.f32 %v999, %v2205
    %v2207 = vpop.f32.mrb[0].mxu0
    %v2208 = vadd.f32 %v1003, %v2207
    %2209 = vdwg.mxu0
    %v2210 = vadd.f32 %v2046, %v1890
    %v2211 = vadd.f32 %v2048, %v1891
    %v2212 = vadd.f32 %v2052, %v1896
    %v2213 = vadd.f32 %v2054, %v1897
    %v2214 = vxor.u32 %v2210, 2147483648
    %v2215 = vxor.u32 %v2211, 2147483648
    %v2216 = vxor.u32 %v2212, 2147483648
    %v2217 = vxor.u32 %v2213, 2147483648
    %v2218 = vmul.f32 %v2214, 1.442695
    %v2219 = vpow.pop %v2218
    %v2220 = vmul.f32 %v2215, 1.442695
    %v2221 = vpow.pop %v2220
    %v2222 = vmul.f32 %v2216, 1.442695
    %v2223 = vpow.pop %v2222
    %v2224 = vmul.f32 %v2217, 1.442695
    %v2225 = vpow.pop %v2224
    %v2226 = vadd.f32 %v2219, 1.0
    %v2227 = vadd.f32 %v2221, 1.0
    %v2228 = vadd.f32 %v2223, 1.0
    %v2229 = vadd.f32 %v2225, 1.0
    %v2230 = vrcp.pop %v2226
    %v2231 = vmul.f32 1.0, %v2230
    %v2232 = vrcp.pop %v2227
    %v2233 = vmul.f32 1.0, %v2232
    %v2234 = vrcp.pop %v2228
    %v2235 = vmul.f32 1.0, %v2234
    %v2236 = vrcp.pop %v2229
    %v2237 = vmul.f32 1.0, %v2236
    %v2238 = vadd.f32 %v2123, %v1892
    %v2239 = vadd.f32 %v2125, %v1893
    %v2240 = vadd.f32 %v2129, %v1898
    %v2241 = vadd.f32 %v2131, %v1899
    %v2242 = vxor.u32 %v2238, 2147483648
    %v2243 = vxor.u32 %v2239, 2147483648
    %v2244 = vxor.u32 %v2240, 2147483648
    %v2245 = vxor.u32 %v2241, 2147483648
    %v2246 = vmul.f32 %v2242, 1.442695
    %v2247 = vpow.pop %v2246
    %v2248 = vmul.f32 %v2243, 1.442695
    %v2249 = vpow.pop %v2248
    %v2250 = vmul.f32 %v2244, 1.442695
    %v2251 = vpow.pop %v2250
    %v2252 = vmul.f32 %v2245, 1.442695
    %v2253 = vpow.pop %v2252
    %v2254 = vadd.f32 %v2247, 1.0
    %v2255 = vadd.f32 %v2249, 1.0
    %v2256 = vadd.f32 %v2251, 1.0
    %v2257 = vadd.f32 %v2253, 1.0
    %v2258 = vrcp.pop %v2254
    %v2259 = vmul.f32 1.0, %v2258
    %v2260 = vrcp.pop %v2255
    %v2261 = vmul.f32 1.0, %v2260
    %v2262 = vrcp.pop %v2256
    %v2263 = vmul.f32 1.0, %v2262
    %v2264 = vrcp.pop %v2257
    %v2265 = vmul.f32 1.0, %v2264
    %v2266 = vmul.f32 %v2231, %v1894
    %v2267 = vmul.f32 %v2233, %v1895
    %v2268 = vmul.f32 %v2235, %v1900
    %v2269 = vmul.f32 %v2237, %v1901
    %v2270 = vadd.f32 %v2200, %v2266
    %v2271 = vadd.f32 %v2202, %v2267
    %v2272 = vadd.f32 %v2206, %v2268
    %v2273 = vadd.f32 %v2208, %v2269
    %v2274 = vtanh.pop %v2270
    %v2275 = vtanh.pop %v2271
    %v2276 = vtanh.pop %v2272
    %v2277 = vtanh.pop %v2273
    %v2278 = vsub.f32 1.0, %v2259
    %v2279 = vsub.f32 1.0, %v2261
    %v2280 = vsub.f32 1.0, %v2263
    %v2281 = vsub.f32 1.0, %v2265
    %v2282 = vmul.f32 %v2278, %v2274
    %v2283 = vmul.f32 %v2279, %v2275
    %v2284 = vmul.f32 %v2280, %v2276
    %v2285 = vmul.f32 %v2281, %v2277
    %v2286 = vmul.f32 %v2259, %v1321
    %v2287 = vmul.f32 %v2261, %v1322
    %v2288 = vmul.f32 %v2263, %v1323
    %v2289 = vmul.f32 %v2265, %v1324
    %v2290 = vadd.f32 %v2282, %v2286
    %v2291 = vadd.f32 %v2283, %v2287
    %v2292 = vadd.f32 %v2284, %v2288
    %v2293 = vadd.f32 %v2285, %v2289
    %2294 = vst [vmem:[%s6] sm:$0xff] %v2290
    %2295 = vst [vmem:[%s6 + $0x8] sm:$0xff] %v2291
    %2296 = vst [vmem:[%s6 + $0x10] sm:$0xff] %v2292
    %2297 = vst [vmem:[%s6 + $0x18] sm:$0xff] %v2293
    // Predicated region
    $region46: #{net_forward.2} parent=1 // pred_check
      _
    $region47: #{net_forward.2} parent=1 // pred_check_branch
      %2299 = sbr.rel (0) target = $region49
    $region48: #{net_forward.2} parent=1 // pred_region
      _
    $region49: #{net_forward.2} parent=1 // pred_fallthru
      _
    // Predicated region
    $region50: #{net_forward.2} parent=1 // pred_check
      _
    $region51: #{net_forward.2} parent=1 // pred_check_branch
      %2301 = sbr.rel (0) target = $region53
    $region52: #{net_forward.2} parent=1 // pred_region
      _
    $region53: #{net_forward.2} parent=1 // pred_fallthru
      _
    %2302 = vsyncpa [#allocation3], 1
    %2303 = vsyncpa [#allocation5], 1
    %2304 = vsyncpa [#allocation8], 1

// kernel: net_forward.3
$region0: #{net_forward.3}
  #allocation0 [shape = 'u32[]', space=smem, size = 0x4, offset = 0x4, fixed_abs, tag = 'smem constant byte address 0x4 - core index']
  #allocation1 [shape = 'u32[144,128]{1,0:T(1,128)}', space=vmem, size = 0x12000, scoped, tag = 'internal scratch']
  #allocation2 [shape = 'f32[1,1]{1,0:T(1,128)S(1)}', space=vmem, size = 0x200, scoped, tag = 'scoped memory for net_forward.3']
  %s0 = inlined_call_operand.vmem [shape: f32[16,256], index: 0, kind: input, shape index: {}]
  %s1 = inlined_call_operand.vmem [shape: f32[16,44], index: 1, kind: input, shape index: {}]
  %s2 = inlined_call_operand.vmem [shape: f32[3,128,8], index: 2, kind: input, shape index: {}]
  %s3 = inlined_call_operand.vmem [shape: f32[128,1], index: 3, kind: input, shape index: {}]
  %s4 = inlined_call_operand.vmem [shape: f32[2,16,128], index: 4, kind: input, shape index: {}]
  %s5 = inlined_call_operand.vmem [shape: f32[16,1], index: 5, kind: input, shape index: {}]
  %s6 = inlined_call_operand.vmem [shape: f32[16,75], index: 6, kind: input, shape index: {}]
  %s7 = inlined_call_operand.<no memory space> [shape: f32[1,1], index: 7, kind: input, shape index: {}]
  %s8 = inlined_call_operand.vmem [shape: f32[2,16,64], index: 8, kind: input, shape index: {}]
  %s9 = inlined_call_operand.vmem [shape: f32[1,2], index: 9, kind: input, shape index: {}]
  %s10 = inlined_call_operand.hbm [shape: f32[2,2], index: 10, kind: output, shape index: {}]
  %s11 = sld [smem:[#allocation0]]
  $region50: #{net_forward.3} parent=0
    _
  %s13 = ssub.s32 1, %s11
  %s14 = scalar_select 0, %s13, %s11
  %v15 = vstv %s7
  %16 = vst [vmem:[#allocation2] sm:$0x1] %v15
  $region1: #{net_forward.3} parent=0
    #allocation3 [shape = 'u8[1024]{0}', space=vmem, size = 0x400, scoped, tag = 'output window, operand 0, single buffered']
    #allocation4 [shape = 's32[1]{0}', space=sflag, size = 0x4, scoped, tag = 'scoped memory for net_forward.3']
    %17 = vsyncpa [#allocation4], 0
    // Predicated region
    $region2: #{net_forward.3} parent=1 // pred_check
      _
    $region3: #{net_forward.3} parent=1 // pred_check_branch
      %19 = sbr.rel (0) target = $region5
    $region4: #{net_forward.3} parent=1 // pred_region
      _
    $region5: #{net_forward.3} parent=1 // pred_fallthru
      _
    // Predicated region
    $region6: #{net_forward.3} parent=1 // pred_check
      _
    $region7: #{net_forward.3} parent=1 // pred_check_branch
      %21 = sbr.rel (0) target = $region9
    $region8: #{net_forward.3} parent=1 // pred_region
      _
    $region9: #{net_forward.3} parent=1 // pred_fallthru
      _
    // Predicated region
    $region10: #{net_forward.3} parent=1 // pred_check
      _
    $region11: #{net_forward.3} parent=1 // pred_check_branch
      %23 = sbr.rel (0) target = $region13
    $region12: #{net_forward.3} parent=1 // pred_region
      _
    $region13: #{net_forward.3} parent=1 // pred_fallthru
      _
    // Predicated region
    $region14: #{net_forward.3} parent=1 // pred_check
      _
    $region15: #{net_forward.3} parent=1 // pred_check_branch
      %25 = sbr.rel (0) target = $region17
    $region16: #{net_forward.3} parent=1 // pred_region
      _
    $region17: #{net_forward.3} parent=1 // pred_fallthru
      _
    // Predicated region
    $region18: #{net_forward.3} parent=1 // pred_check
      _
    $region19: #{net_forward.3} parent=1 // pred_check_branch
      %27 = sbr.rel (0) target = $region21
    $region20: #{net_forward.3} parent=1 // pred_region
      _
    $region21: #{net_forward.3} parent=1 // pred_fallthru
      _
    // Predicated region
    $region22: #{net_forward.3} parent=1 // pred_check
      _
    $region23: #{net_forward.3} parent=1 // pred_check_branch
      %29 = sbr.rel (0) target = $region25
    $region24: #{net_forward.3} parent=1 // pred_region
      _
    $region25: #{net_forward.3} parent=1 // pred_fallthru
      _
    // Predicated region
    $region26: #{net_forward.3} parent=1 // pred_check
      _
    $region27: #{net_forward.3} parent=1 // pred_check_branch
      %31 = sbr.rel (0) target = $region29
    $region28: #{net_forward.3} parent=1 // pred_region
      _
    $region29: #{net_forward.3} parent=1 // pred_fallthru
      _
    // Predicated region
    $region30: #{net_forward.3} parent=1 // pred_check
      _
    $region31: #{net_forward.3} parent=1 // pred_check_branch
      %33 = sbr.rel (0) target = $region33
    $region32: #{net_forward.3} parent=1 // pred_region
      _
    $region33: #{net_forward.3} parent=1 // pred_fallthru
      _
    // Predicated region
    $region34: #{net_forward.3} parent=1 // pred_check
      _
    $region35: #{net_forward.3} parent=1 // pred_check_branch
      %35 = sbr.rel (0) target = $region37
    $region36: #{net_forward.3} parent=1 // pred_region
      _
    $region37: #{net_forward.3} parent=1 // pred_fallthru
      _
    // Predicated region
    $region38: #{net_forward.3} parent=1 // pred_check
      _
    $region39: #{net_forward.3} parent=1 // pred_check_branch
      %37 = sbr.rel (0) target = $region41
    $region40: #{net_forward.3} parent=1 // pred_region
      _
    $region41: #{net_forward.3} parent=1 // pred_fallthru
      _
    %v38 = vld [vmem:[%s3] sm:$0xff]
    %v39 = vld [vmem:[%s3 + $0x8] sm:$0xff]
    %v40 = vld [vmem:[%s3 + $0x10] sm:$0xff]
    %v41 = vld [vmem:[%s3 + $0x18] sm:$0xff]
    %v42 = vld [vmem:[%s3 + $0x20] sm:$0xff]
    %v43 = vld [vmem:[%s3 + $0x28] sm:$0xff]
    %v44 = vld [vmem:[%s3 + $0x30] sm:$0xff]
    %v45 = vld [vmem:[%s3 + $0x38] sm:$0xff]
    %v46 = vld [vmem:[%s3 + $0x40] sm:$0xff]
    %v47 = vld [vmem:[%s3 + $0x48] sm:$0xff]
    %v48 = vld [vmem:[%s3 + $0x50] sm:$0xff]
    %v49 = vld [vmem:[%s3 + $0x58] sm:$0xff]
    %v50 = vld [vmem:[%s3 + $0x60] sm:$0xff]
    %v51 = vld [vmem:[%s3 + $0x68] sm:$0xff]
    %v52 = vld [vmem:[%s3 + $0x70] sm:$0xff]
    %v53 = vld [vmem:[%s3 + $0x78] sm:$0xff]
    %v54 = vld [vmem:[%s5] sm:$0xff]
    %v55 = vld [vmem:[%s5 + $0x8] sm:$0xff]
    %v56 = vld [vmem:[%s2] sm:$0xff]
    %v57 = vld [vmem:[%s2 + $0x8] sm:$0xff]
    %v58 = vld [vmem:[%s2 + $0x10] sm:$0xff]
    %v59 = vld [vmem:[%s2 + $0x18] sm:$0xff]
    %v60 = vld [vmem:[%s2 + $0x20] sm:$0xff]
    %v61 = vld [vmem:[%s2 + $0x28] sm:$0xff]
    %v62 = vld [vmem:[%s2 + $0x30] sm:$0xff]
    %v63 = vld [vmem:[%s2 + $0x38] sm:$0xff]
    %v64 = vld [vmem:[%s2 + $0x40] sm:$0xff]
    %v65 = vld [vmem:[%s2 + $0x48] sm:$0xff]
    %v66 = vld [vmem:[%s2 + $0x50] sm:$0xff]
    %v67 = vld [vmem:[%s2 + $0x58] sm:$0xff]
    %v68 = vld [vmem:[%s2 + $0x60] sm:$0xff]
    %v69 = vld [vmem:[%s2 + $0x68] sm:$0xff]
    %v70 = vld [vmem:[%s2 + $0x70] sm:$0xff]
    %v71 = vld [vmem:[%s2 + $0x78] sm:$0xff]
    %s72 = scalar_lea.vmem %s2, 128
    %v73 = vld [vmem:[%s72] sm:$0xff]
    %v74 = vld [vmem:[%s72 + $0x8] sm:$0xff]
    %v75 = vld [vmem:[%s72 + $0x10] sm:$0xff]
    %v76 = vld [vmem:[%s72 + $0x18] sm:$0xff]
    %v77 = vld [vmem:[%s72 + $0x20] sm:$0xff]
    %v78 = vld [vmem:[%s72 + $0x28] sm:$0xff]
    %v79 = vld [vmem:[%s72 + $0x30] sm:$0xff]
    %v80 = vld [vmem:[%s72 + $0x38] sm:$0xff]
    %v81 = vld [vmem:[%s72 + $0x40] sm:$0xff]
    %v82 = vld [vmem:[%s72 + $0x48] sm:$0xff]
    %v83 = vld [vmem:[%s72 + $0x50] sm:$0xff]
    %v84 = vld [vmem:[%s72 + $0x58] sm:$0xff]
    %v85 = vld [vmem:[%s72 + $0x60] sm:$0xff]
    %v86 = vld [vmem:[%s72 + $0x68] sm:$0xff]
    %v87 = vld [vmem:[%s72 + $0x70] sm:$0xff]
    %v88 = vld [vmem:[%s72 + $0x78] sm:$0xff]
    %s89 = scalar_lea.vmem %s2, 256
    %v90 = vld [vmem:[%s89] sm:$0xff]
    %v91 = vld [vmem:[%s89 + $0x8] sm:$0xff]
    %v92 = vld [vmem:[%s89 + $0x10] sm:$0xff]
    %v93 = vld [vmem:[%s89 + $0x18] sm:$0xff]
    %v94 = vld [vmem:[%s89 + $0x20] sm:$0xff]
    %v95 = vld [vmem:[%s89 + $0x28] sm:$0xff]
    %v96 = vld [vmem:[%s89 + $0x30] sm:$0xff]
    %v97 = vld [vmem:[%s89 + $0x38] sm:$0xff]
    %v98 = vld [vmem:[%s89 + $0x40] sm:$0xff]
    %v99 = vld [vmem:[%s89 + $0x48] sm:$0xff]
    %v100 = vld [vmem:[%s89 + $0x50] sm:$0xff]
    %v101 = vld [vmem:[%s89 + $0x58] sm:$0xff]
    %v102 = vld [vmem:[%s89 + $0x60] sm:$0xff]
    %v103 = vld [vmem:[%s89 + $0x68] sm:$0xff]
    %v104 = vld [vmem:[%s89 + $0x70] sm:$0xff]
    %v105 = vld [vmem:[%s89 + $0x78] sm:$0xff]
    %v106 = vld [vmem:[%s4] sm:$0xff]
    %v107 = vld [vmem:[%s4 + $0x8] sm:$0xff]
    %s108 = scalar_lea.vmem %s4, 16
    %v109 = vld [vmem:[%s108] sm:$0xff]
    %v110 = vld [vmem:[%s108 + $0x8] sm:$0xff]
    %v111 = vld [vmem:[%s6] sm:$0xff]
    %v112 = vld [vmem:[%s6 + $0x8] sm:$0xff]
    %v113 = vld [vmem:[%s8] sm:$0xff]
    %v114 = vld [vmem:[%s8 + $0x8] sm:$0xff]
    %s115 = scalar_lea.vmem %s8, 16
    %v116 = vld [vmem:[%s115] sm:$0xff]
    %v117 = vld [vmem:[%s115 + $0x8] sm:$0xff]
    %v118 = vld [vmem:[#allocation2] sm:$0x1]
    %v119 = vld [vmem:[%s9] sm:$0x1]
    %v120 = vlaneseq
    %v121 = vshrl.u32 %v120, 7
    %v122 = vadd.s32 %v121, 8
    %v123 = vadd.s32 %v121, 16
    %v124 = vadd.s32 %v121, 24
    %v125 = vadd.s32 %v121, 32
    %v126 = vadd.s32 %v121, 40
    %v127 = vadd.s32 %v121, 48
    %v128 = vadd.s32 %v121, 56
    %v129 = vadd.s32 %v121, 64
    %v130 = vadd.s32 %v121, 72
    %v131 = vadd.s32 %v121, 80
    %v132 = vadd.s32 %v121, 88
    %v133 = vadd.s32 %v121, 96
    %v134 = vadd.s32 %v121, 104
    %v135 = vadd.s32 %v121, 112
    %v136 = vadd.s32 %v121, 120
    %v137 = vadd.s32 %v121, 128
    %v138 = vadd.s32 %v121, 136
    %v139 = vadd.s32 %v121, 144
    %v140 = vadd.s32 %v121, 152
    %v141 = vadd.s32 %v121, 160
    %v142 = vadd.s32 %v121, 168
    %v143 = vadd.s32 %v121, 176
    %v144 = vadd.s32 %v121, 184
    %v145 = vadd.s32 %v121, 192
    %v146 = vadd.s32 %v121, 200
    %v147 = vadd.s32 %v121, 208
    %v148 = vadd.s32 %v121, 216
    %v149 = vadd.s32 %v121, 224
    %v150 = vadd.s32 %v121, 232
    %v151 = vadd.s32 %v121, 240
    %v152 = vadd.s32 %v121, 248
    %v153 = vadd.s32 %v121, 256
    %v154 = vadd.s32 %v121, 264
    %v155 = vadd.s32 %v121, 272
    %v156 = vadd.s32 %v121, 280
    %v157 = vadd.s32 %v121, 288
    %v158 = vadd.s32 %v121, 296
    %v159 = vlaneseq
    %v160 = vand.u32 %v159, 127
    %v161 = vadd.s32 %v160, 128
    %v162 = vmul.u32 %v160, 2
    %v163 = vmul.u32 %v161, 2
    %vm164 = vcmp.eq.s32.totalorder %v121, %v162
    %vm165 = vcmp.eq.s32.totalorder %v121, %v163
    %vm166 = vcmp.eq.s32.totalorder %v122, %v162
    %vm167 = vcmp.eq.s32.totalorder %v122, %v163
    %vm168 = vcmp.eq.s32.totalorder %v123, %v162
    %vm169 = vcmp.eq.s32.totalorder %v123, %v163
    %vm170 = vcmp.eq.s32.totalorder %v124, %v162
    %vm171 = vcmp.eq.s32.totalorder %v124, %v163
    %vm172 = vcmp.eq.s32.totalorder %v125, %v162
    %vm173 = vcmp.eq.s32.totalorder %v125, %v163
    %vm174 = vcmp.eq.s32.totalorder %v126, %v162
    %vm175 = vcmp.eq.s32.totalorder %v126, %v163
    %vm176 = vcmp.eq.s32.totalorder %v127, %v162
    %vm177 = vcmp.eq.s32.totalorder %v127, %v163
    %vm178 = vcmp.eq.s32.totalorder %v128, %v162
    %vm179 = vcmp.eq.s32.totalorder %v128, %v163
    %vm180 = vcmp.eq.s32.totalorder %v129, %v162
    %vm181 = vcmp.eq.s32.totalorder %v129, %v163
    %vm182 = vcmp.eq.s32.totalorder %v130, %v162
    %vm183 = vcmp.eq.s32.totalorder %v130, %v163
    %vm184 = vcmp.eq.s32.totalorder %v131, %v162
    %vm185 = vcmp.eq.s32.totalorder %v131, %v163
    %vm186 = vcmp.eq.s32.totalorder %v132, %v162
    %vm187 = vcmp.eq.s32.totalorder %v132, %v163
    %vm188 = vcmp.eq.s32.totalorder %v133, %v162
    %vm189 = vcmp.eq.s32.totalorder %v133, %v163
    %vm190 = vcmp.eq.s32.totalorder %v134, %v162
    %vm191 = vcmp.eq.s32.totalorder %v134, %v163
    %vm192 = vcmp.eq.s32.totalorder %v135, %v162
    %vm193 = vcmp.eq.s32.totalorder %v135, %v163
    %vm194 = vcmp.eq.s32.totalorder %v136, %v162
    %vm195 = vcmp.eq.s32.totalorder %v136, %v163
    %vm196 = vcmp.eq.s32.totalorder %v137, %v162
    %vm197 = vcmp.eq.s32.totalorder %v137, %v163
    %vm198 = vcmp.eq.s32.totalorder %v138, %v162
    %vm199 = vcmp.eq.s32.totalorder %v138, %v163
    %vm200 = vcmp.eq.s32.totalorder %v139, %v162
    %vm201 = vcmp.eq.s32.totalorder %v139, %v163
    %vm202 = vcmp.eq.s32.totalorder %v140, %v162
    %vm203 = vcmp.eq.s32.totalorder %v140, %v163
    %vm204 = vcmp.eq.s32.totalorder %v141, %v162
    %vm205 = vcmp.eq.s32.totalorder %v141, %v163
    %vm206 = vcmp.eq.s32.totalorder %v142, %v162
    %vm207 = vcmp.eq.s32.totalorder %v142, %v163
    %vm208 = vcmp.eq.s32.totalorder %v143, %v162
    %vm209 = vcmp.eq.s32.totalorder %v143, %v163
    %vm210 = vcmp.eq.s32.totalorder %v144, %v162
    %vm211 = vcmp.eq.s32.totalorder %v144, %v163
    %vm212 = vcmp.eq.s32.totalorder %v145, %v162
    %vm213 = vcmp.eq.s32.totalorder %v145, %v163
    %vm214 = vcmp.eq.s32.totalorder %v146, %v162
    %vm215 = vcmp.eq.s32.totalorder %v146, %v163
    %vm216 = vcmp.eq.s32.totalorder %v147, %v162
    %vm217 = vcmp.eq.s32.totalorder %v147, %v163
    %vm218 = vcmp.eq.s32.totalorder %v148, %v162
    %vm219 = vcmp.eq.s32.totalorder %v148, %v163
    %vm220 = vcmp.eq.s32.totalorder %v149, %v162
    %vm221 = vcmp.eq.s32.totalorder %v149, %v163
    %vm222 = vcmp.eq.s32.totalorder %v150, %v162
    %vm223 = vcmp.eq.s32.totalorder %v150, %v163
    %vm224 = vcmp.eq.s32.totalorder %v151, %v162
    %vm225 = vcmp.eq.s32.totalorder %v151, %v163
    %vm226 = vcmp.eq.s32.totalorder %v152, %v162
    %vm227 = vcmp.eq.s32.totalorder %v152, %v163
    %vm228 = vcmp.eq.s32.totalorder %v153, %v162
    %vm229 = vcmp.eq.s32.totalorder %v153, %v163
    %vm230 = vcmp.eq.s32.totalorder %v154, %v162
    %vm231 = vcmp.eq.s32.totalorder %v154, %v163
    %vm232 = vcmp.eq.s32.totalorder %v155, %v162
    %vm233 = vcmp.eq.s32.totalorder %v155, %v163
    %vm234 = vcmp.eq.s32.totalorder %v156, %v162
    %vm235 = vcmp.eq.s32.totalorder %v156, %v163
    %vm236 = vcmp.eq.s32.totalorder %v157, %v162
    %vm237 = vcmp.eq.s32.totalorder %v157, %v163
    %vm238 = vcmp.eq.s32.totalorder %v158, %v162
    %vm239 = vcmp.eq.s32.totalorder %v158, %v163
    %v240 = vsel %vm164, 1, 0
    %v241 = vsel %vm165, 1, 0
    %v242 = vsel %vm166, 1, 0
    %v243 = vsel %vm167, 1, 0
    %v244 = vsel %vm168, 1, 0
    %v245 = vsel %vm169, 1, 0
    %v246 = vsel %vm170, 1, 0
    %v247 = vsel %vm171, 1, 0
    %v248 = vsel %vm172, 1, 0
    %v249 = vsel %vm173, 1, 0
    %v250 = vsel %vm174, 1, 0
    %v251 = vsel %vm175, 1, 0
    %v252 = vsel %vm176, 1, 0
    %v253 = vsel %vm177, 1, 0
    %v254 = vsel %vm178, 1, 0
    %v255 = vsel %vm179, 1, 0
    %v256 = vsel %vm180, 1, 0
    %v257 = vsel %vm181, 1, 0
    %v258 = vsel %vm182, 1, 0
    %v259 = vsel %vm183, 1, 0
    %v260 = vsel %vm184, 1, 0
    %v261 = vsel %vm185, 1, 0
    %v262 = vsel %vm186, 1, 0
    %v263 = vsel %vm187, 1, 0
    %v264 = vsel %vm188, 1, 0
    %v265 = vsel %vm189, 1, 0
    %v266 = vsel %vm190, 1, 0
    %v267 = vsel %vm191, 1, 0
    %v268 = vsel %vm192, 1, 0
    %v269 = vsel %vm193, 1, 0
    %v270 = vsel %vm194, 1, 0
    %v271 = vsel %vm195, 1, 0
    %v272 = vsel %vm196, 1, 0
    %v273 = vsel %vm197, 1, 0
    %v274 = vsel %vm198, 1, 0
    %v275 = vsel %vm199, 1, 0
    %v276 = vsel %vm200, 1, 0
    %v277 = vsel %vm201, 1, 0
    %v278 = vsel %vm202, 1, 0
    %v279 = vsel %vm203, 1, 0
    %v280 = vsel %vm204, 1, 0
    %v281 = vsel %vm205, 1, 0
    %v282 = vsel %vm206, 1, 0
    %v283 = vsel %vm207, 1, 0
    %v284 = vsel %vm208, 1, 0
    %v285 = vsel %vm209, 1, 0
    %v286 = vsel %vm210, 1, 0
    %v287 = vsel %vm211, 1, 0
    %v288 = vsel %vm212, 1, 0
    %v289 = vsel %vm213, 1, 0
    %v290 = vsel %vm214, 1, 0
    %v291 = vsel %vm215, 1, 0
    %v292 = vsel %vm216, 1, 0
    %v293 = vsel %vm217, 1, 0
    %v294 = vsel %vm218, 1, 0
    %v295 = vsel %vm219, 1, 0
    %v296 = vsel %vm220, 1, 0
    %v297 = vsel %vm221, 1, 0
    %v298 = vsel %vm222, 1, 0
    %v299 = vsel %vm223, 1, 0
    %v300 = vsel %vm224, 1, 0
    %v301 = vsel %vm225, 1, 0
    %v302 = vsel %vm226, 1, 0
    %v303 = vsel %vm227, 1, 0
    %v304 = vsel %vm228, 1, 0
    %v305 = vsel %vm229, 1, 0
    %v306 = vsel %vm230, 1, 0
    %v307 = vsel %vm231, 1, 0
    %v308 = vsel %vm232, 1, 0
    %v309 = vsel %vm233, 1, 0
    %v310 = vsel %vm234, 1, 0
    %v311 = vsel %vm235, 1, 0
    %v312 = vsel %vm236, 1, 0
    %v313 = vsel %vm237, 1, 0
    %v314 = vsel %vm238, 1, 0
    %v315 = vsel %vm239, 1, 0
    %v316 = vcvt.s32.f32 %v240
    %v317 = vcvt.s32.f32 %v241
    %v318 = vcvt.s32.f32 %v242
    %v319 = vcvt.s32.f32 %v243
    %v320 = vcvt.s32.f32 %v244
    %v321 = vcvt.s32.f32 %v245
    %v322 = vcvt.s32.f32 %v246
    %v323 = vcvt.s32.f32 %v247
    %v324 = vcvt.s32.f32 %v248
    %v325 = vcvt.s32.f32 %v249
    %v326 = vcvt.s32.f32 %v250
    %v327 = vcvt.s32.f32 %v251
    %v328 = vcvt.s32.f32 %v252
    %v329 = vcvt.s32.f32 %v253
    %v330 = vcvt.s32.f32 %v254
    %v331 = vcvt.s32.f32 %v255
    %v332 = vcvt.s32.f32 %v256
    %v333 = vcvt.s32.f32 %v257
    %v334 = vcvt.s32.f32 %v258
    %v335 = vcvt.s32.f32 %v259
    %v336 = vcvt.s32.f32 %v260
    %v337 = vcvt.s32.f32 %v261
    %v338 = vcvt.s32.f32 %v262
    %v339 = vcvt.s32.f32 %v263
    %v340 = vcvt.s32.f32 %v264
    %v341 = vcvt.s32.f32 %v265
    %v342 = vcvt.s32.f32 %v266
    %v343 = vcvt.s32.f32 %v267
    %v344 = vcvt.s32.f32 %v268
    %v345 = vcvt.s32.f32 %v269
    %v346 = vcvt.s32.f32 %v270
    %v347 = vcvt.s32.f32 %v271
    %v348 = vcvt.s32.f32 %v272
    %v349 = vcvt.s32.f32 %v273
    %v350 = vcvt.s32.f32 %v274
    %v351 = vcvt.s32.f32 %v275
    %v352 = vcvt.s32.f32 %v276
    %v353 = vcvt.s32.f32 %v277
    %v354 = vcvt.s32.f32 %v278
    %v355 = vcvt.s32.f32 %v279
    %v356 = vcvt.s32.f32 %v280
    %v357 = vcvt.s32.f32 %v281
    %v358 = vcvt.s32.f32 %v282
    %v359 = vcvt.s32.f32 %v283
    %v360 = vcvt.s32.f32 %v284
    %v361 = vcvt.s32.f32 %v285
    %v362 = vcvt.s32.f32 %v286
    %v363 = vcvt.s32.f32 %v287
    %v364 = vcvt.s32.f32 %v288
    %v365 = vcvt.s32.f32 %v289
    %v366 = vcvt.s32.f32 %v290
    %v367 = vcvt.s32.f32 %v291
    %v368 = vcvt.s32.f32 %v292
    %v369 = vcvt.s32.f32 %v293
    %v370 = vcvt.s32.f32 %v294
    %v371 = vcvt.s32.f32 %v295
    %v372 = vcvt.s32.f32 %v296
    %v373 = vcvt.s32.f32 %v297
    %v374 = vcvt.s32.f32 %v298
    %v375 = vcvt.s32.f32 %v299
    %v376 = vcvt.s32.f32 %v300
    %v377 = vcvt.s32.f32 %v301
    %v378 = vcvt.s32.f32 %v302
    %v379 = vcvt.s32.f32 %v303
    %v380 = vcvt.s32.f32 %v304
    %v381 = vcvt.s32.f32 %v305
    %v382 = vcvt.s32.f32 %v306
    %v383 = vcvt.s32.f32 %v307
    %v384 = vcvt.s32.f32 %v308
    %v385 = vcvt.s32.f32 %v309
    %v386 = vcvt.s32.f32 %v310
    %v387 = vcvt.s32.f32 %v311
    %v388 = vcvt.s32.f32 %v312
    %v389 = vcvt.s32.f32 %v313
    %v390 = vcvt.s32.f32 %v314
    %v391 = vcvt.s32.f32 %v315
    %v392 = vld [vmem:[%s0] sm:$0xff]
    %v393 = vld [vmem:[%s0 + $0x8] sm:$0xff]
    %v394 = vld [vmem:[%s1] sm:$0xff]
    %398 = vrot.lane.b32.xlu0 %v392, 1
    %v399 = vpop.permute.xlu0 %398
    %400 = vrot.lane.b32.xlu0 %v393, 1
    %v401 = vpop.permute.xlu0 %400
    %402 = vrot.lane.b32.xlu0 %v394, 1
    %v403 = vpop.permute.xlu0 %402
    %vm404 = vcmask 7168
    %v405 = vsel %vm404, %v399, %v401
    %v406 = vsel %vm404, %v401, %v403
    %v410 = vsel %vm404, 0.0, %v399
    %vm411 = vcmask 367616
    %v412 = vsel %vm411, %v406, 0.0
    %415 = vrot.lane.b32.xlu0 %v410, 127
    %v416 = vpop.permute.xlu0 %415
    %417 = vrot.lane.b32.xlu0 %v405, 127
    %v418 = vpop.permute.xlu0 %417
    %419 = vrot.lane.b32.xlu0 %v412, 127
    %v420 = vpop.permute.xlu0 %419
    %vm421 = vcmask 1039360
    %v422 = vsel %vm421, %v416, %v418
    %v423 = vsel %vm421, %v418, %v420
    %vm427 = vcmask 64512
    %v429 = vsel %vm427, %v73, 0
    %v432 = vsel %vm427, %v74, 0
    %v435 = vsel %vm427, %v75, 0
    %v438 = vsel %vm427, %v76, 0
    %v441 = vsel %vm427, %v77, 0
    %v444 = vsel %vm427, %v78, 0
    %v447 = vsel %vm427, %v79, 0
    %v450 = vsel %vm427, %v80, 0
    %v453 = vsel %vm427, %v81, 0
    %v456 = vsel %vm427, %v82, 0
    %v459 = vsel %vm427, %v83, 0
    %v462 = vsel %vm427, %v84, 0
    %v465 = vsel %vm427, %v85, 0
    %v468 = vsel %vm427, %v86, 0
    %v471 = vsel %vm427, %v87, 0
    %v474 = vsel %vm427, %v88, 0
    %476 = vmatprep.subr.mxu0 %v423
    %477 = vmatpush1.msra.mxu0 %v422
    %478 = vmatprep.subr.mxu0 0.0
    %479 = vmatpush1.msra.mxu0 0.0
    %480 = vmatprep.subr.mxu0 0.0
    %481 = vmatpush1.msra.mxu0 0.0
    %482 = vmatprep.subr.mxu0 0.0
    %483 = vmatpush1.msra.mxu0 0.0
    %484 = vmatprep.subr.mxu0 0.0
    %485 = vmatpush1.msra.mxu0 0.0
    %486 = vmatprep.subr.mxu0 0.0
    %487 = vmatpush1.msra.mxu0 0.0
    %488 = vmatprep.subr.mxu0 0.0
    %489 = vmatpush1.msra.mxu0 0.0
    %490 = vmatprep.subr.mxu0 0.0
    %491 = vmatpush1.msra.mxu0 0.0
    %492 = vmatprep.subr.mxu0 0.0
    %493 = vmatpush1.msra.mxu0 0.0
    %494 = vmatprep.subr.mxu0 0.0
    %495 = vmatpush1.msra.mxu0 0.0
    %496 = vmatprep.subr.mxu0 0.0
    %497 = vmatpush1.msra.mxu0 0.0
    %498 = vmatprep.subr.mxu0 0.0
    %499 = vmatpush1.msra.mxu0 0.0
    %500 = vmatprep.subr.mxu0 0.0
    %501 = vmatpush1.msra.mxu0 0.0
    %502 = vmatprep.subr.mxu0 0.0
    %503 = vmatpush1.msra.mxu0 0.0
    %504 = vmatprep.subr.mxu0 0.0
    %505 = vmatpush1.msra.mxu0 0.0
    %506 = vmatprep.subr.mxu0 0.0
    %507 = vmatpush1.msra.mxu0 0.0
    %508 = vmatprep.subr.mxu0 0.0
    %509 = vmatpush1.msra.mxu0 0.0
    %510 = vmatprep.subr.mxu0 0.0
    %511 = vmatpush1.msra.mxu0 0.0
    %512 = vmatprep.subr.mxu0 0.0
    %513 = vmatpush1.msra.mxu0 0.0
    %514 = vmatprep.subr.mxu0 0.0
    %515 = vmatpush1.msra.mxu0 0.0
    %516 = vmatprep.subr.mxu0 0.0
    %517 = vmatpush1.msra.mxu0 0.0
    %518 = vmatprep.subr.mxu0 0.0
    %519 = vmatpush1.msra.mxu0 0.0
    %520 = vmatprep.subr.mxu0 0.0
    %521 = vmatpush1.msra.mxu0 0.0
    %522 = vmatprep.subr.mxu0 0.0
    %523 = vmatpush1.msra.mxu0 0.0
    %524 = vmatprep.subr.mxu0 0.0
    %525 = vmatpush1.msra.mxu0 0.0
    %526 = vmatprep.subr.mxu0 0.0
    %527 = vmatpush1.msra.mxu0 0.0
    %528 = vmatprep.subr.mxu0 0.0
    %529 = vmatpush1.msra.mxu0 0.0
    %530 = vmatprep.subr.mxu0 0.0
    %531 = vmatpush1.msra.mxu0 0.0
    %532 = vmatprep.subr.mxu0 0.0
    %533 = vmatpush1.msra.mxu0 0.0
    %534 = vmatprep.subr.mxu0 0.0
    %535 = vmatpush1.msra.mxu0 0.0
    %536 = vmatprep.subr.mxu0 0.0
    %537 = vmatpush1.msra.mxu0 0.0
    %538 = vmatprep.subr.mxu0 0.0
    %539 = vmatpush1.msra.mxu0 0.0
    %540 = vmatprep.mubr.f32.mxu0 0.0
    %541 = vmatmul.mubr.f32.gmra.mrb[0].mxu0 %v429
    %v542 = vpop.f32.mrb[0].mxu0
    %v543 = vadd.f32 0.0, %v542
    %v544 = vpop.f32.mrb[0].mxu0
    %v545 = vadd.f32 0.0, %v544
    %546 = vmatprep.mubr.f32.mxu0 0.0
    %547 = vmatmul.mubr.f32.gmra.mrb[0].mxu0 %v432
    %v548 = vpop.f32.mrb[0].mxu0
    %v549 = vadd.f32 0.0, %v548
    %v550 = vpop.f32.mrb[0].mxu0
    %v551 = vadd.f32 0.0, %v550
    %552 = vmatprep.mubr.f32.mxu0 0.0
    %553 = vmatmul.mubr.f32.gmra.mrb[0].mxu0 %v435
    %v554 = vpop.f32.mrb[0].mxu0
    %v555 = vadd.f32 0.0, %v554
    %v556 = vpop.f32.mrb[0].mxu0
    %v557 = vadd.f32 0.0, %v556
    %558 = vmatprep.mubr.f32.mxu0 0.0
    %559 = vmatmul.mubr.f32.gmra.mrb[0].mxu0 %v438
    %v560 = vpop.f32.mrb[0].mxu0
    %v561 = vadd.f32 0.0, %v560
    %v562 = vpop.f32.mrb[0].mxu0
    %v563 = vadd.f32 0.0, %v562
    %564 = vmatprep.mubr.f32.mxu0 0.0
    %565 = vmatmul.mubr.f32.gmra.mrb[0].mxu0 %v441
    %v566 = vpop.f32.mrb[0].mxu0
    %v567 = vadd.f32 0.0, %v566
    %v568 = vpop.f32.mrb[0].mxu0
    %v569 = vadd.f32 0.0, %v568
    %570 = vmatprep.mubr.f32.mxu0 0.0
    %571 = vmatmul.mubr.f32.gmra.mrb[0].mxu0 %v444
    %v572 = vpop.f32.mrb[0].mxu0
    %v573 = vadd.f32 0.0, %v572
    %v574 = vpop.f32.mrb[0].mxu0
    %v575 = vadd.f32 0.0, %v574
    %576 = vmatprep.mubr.f32.mxu0 0.0
    %577 = vmatmul.mubr.f32.gmra.mrb[0].mxu0 %v447
    %v578 = vpop.f32.mrb[0].mxu0
    %v579 = vadd.f32 0.0, %v578
    %v580 = vpop.f32.mrb[0].mxu0
    %v581 = vadd.f32 0.0, %v580
    %582 = vmatprep.mubr.f32.mxu0 0.0
    %583 = vmatmul.mubr.f32.gmra.mrb[0].mxu0 %v450
    %v584 = vpop.f32.mrb[0].mxu0
    %v585 = vadd.f32 0.0, %v584
    %v586 = vpop.f32.mrb[0].mxu0
    %v587 = vadd.f32 0.0, %v586
    %588 = vmatprep.mubr.f32.mxu0 0.0
    %589 = vmatmul.mubr.f32.gmra.mrb[0].mxu0 %v453
    %v590 = vpop.f32.mrb[0].mxu0
    %v591 = vadd.f32 0.0, %v590
    %v592 = vpop.f32.mrb[0].mxu0
    %v593 = vadd.f32 0.0, %v592
    %594 = vmatprep.mubr.f32.mxu0 0.0
    %595 = vmatmul.mubr.f32.gmra.mrb[0].mxu0 %v456
    %v596 = vpop.f32.mrb[0].mxu0
    %v597 = vadd.f32 0.0, %v596
    %v598 = vpop.f32.mrb[0].mxu0
    %v599 = vadd.f32 0.0, %v598
    %600 = vmatprep.mubr.f32.mxu0 0.0
    %601 = vmatmul.mubr.f32.gmra.mrb[0].mxu0 %v459
    %v602 = vpop.f32.mrb[0].mxu0
    %v603 = vadd.f32 0.0, %v602
    %v604 = vpop.f32.mrb[0].mxu0
    %v605 = vadd.f32 0.0, %v604
    %606 = vmatprep.mubr.f32.mxu0 0.0
    %607 = vmatmul.mubr.f32.gmra.mrb[0].mxu0 %v462
    %v608 = vpop.f32.mrb[0].mxu0
    %v609 = vadd.f32 0.0, %v608
    %v610 = vpop.f32.mrb[0].mxu0
    %v611 = vadd.f32 0.0, %v610
    %612 = vmatprep.mubr.f32.mxu0 0.0
    %613 = vmatmul.mubr.f32.gmra.mrb[0].mxu0 %v465
    %v614 = vpop.f32.mrb[0].mxu0
    %v615 = vadd.f32 0.0, %v614
    %v616 = vpop.f32.mrb[0].mxu0
    %v617 = vadd.f32 0.0, %v616
    %618 = vmatprep.mubr.f32.mxu0 0.0
    %619 = vmatmul.mubr.f32.gmra.mrb[0].mxu0 %v468
    %v620 = vpop.f32.mrb[0].mxu0
    %v621 = vadd.f32 0.0, %v620
    %v622 = vpop.f32.mrb[0].mxu0
    %v623 = vadd.f32 0.0, %v622
    %624 = vmatprep.mubr.f32.mxu0 0.0
    %625 = vmatmul.mubr.f32.gmra.mrb[0].mxu0 %v471
    %v626 = vpop.f32.mrb[0].mxu0
    %v627 = vadd.f32 0.0, %v626
    %v628 = vpop.f32.mrb[0].mxu0
    %v629 = vadd.f32 0.0, %v628
    %630 = vmatprep.mubr.f32.mxu0 0.0
    %631 = vmatmul.mubr.f32.gmra.mrb[0].mxu0 %v474
    %v632 = vpop.f32.mrb[0].mxu0
    %v633 = vadd.f32 0.0, %v632
    %v634 = vpop.f32.mrb[0].mxu0
    %v635 = vadd.f32 0.0, %v634
    %636 = vdwg.mxu0
    %637 = vmatprep.subr.mxu0 0.0
    %638 = vmatpush1.msra.mxu0 %v420
    %639 = vmatprep.subr.mxu0 0.0
    %640 = vmatpush1.msra.mxu0 0.0
    %641 = vmatprep.subr.mxu0 0.0
    %642 = vmatpush1.msra.mxu0 0.0
    %643 = vmatprep.subr.mxu0 0.0
    %644 = vmatpush1.msra.mxu0 0.0
    %645 = vmatprep.subr.mxu0 0.0
    %646 = vmatpush1.msra.mxu0 0.0
    %647 = vmatprep.subr.mxu0 0.0
    %648 = vmatpush1.msra.mxu0 0.0
    %649 = vmatprep.subr.mxu0 0.0
    %650 = vmatpush1.msra.mxu0 0.0
    %651 = vmatprep.subr.mxu0 0.0
    %652 = vmatpush1.msra.mxu0 0.0
    %653 = vmatprep.subr.mxu0 0.0
    %654 = vmatpush1.msra.mxu0 0.0
    %655 = vmatprep.subr.mxu0 0.0
    %656 = vmatpush1.msra.mxu0 0.0
    %657 = vmatprep.subr.mxu0 0.0
    %658 = vmatpush1.msra.mxu0 0.0
    %659 = vmatprep.subr.mxu0 0.0
    %660 = vmatpush1.msra.mxu0 0.0
    %661 = vmatprep.subr.mxu0 0.0
    %662 = vmatpush1.msra.mxu0 0.0
    %663 = vmatprep.subr.mxu0 0.0
    %664 = vmatpush1.msra.mxu0 0.0
    %665 = vmatprep.subr.mxu0 0.0
    %666 = vmatpush1.msra.mxu0 0.0
    %667 = vmatprep.subr.mxu0 0.0
    %668 = vmatpush1.msra.mxu0 0.0
    %669 = vmatprep.subr.mxu0 0.0
    %670 = vmatpush1.msra.mxu0 0.0
    %671 = vmatprep.subr.mxu0 0.0
    %672 = vmatpush1.msra.mxu0 0.0
    %673 = vmatprep.subr.mxu0 0.0
    %674 = vmatpush1.msra.mxu0 0.0
    %675 = vmatprep.subr.mxu0 0.0
    %676 = vmatpush1.msra.mxu0 0.0
    %677 = vmatprep.subr.mxu0 0.0
    %678 = vmatpush1.msra.mxu0 0.0
    %679 = vmatprep.subr.mxu0 0.0
    %680 = vmatpush1.msra.mxu0 0.0
    %681 = vmatprep.subr.mxu0 0.0
    %682 = vmatpush1.msra.mxu0 0.0
    %683 = vmatprep.subr.mxu0 0.0
    %684 = vmatpush1.msra.mxu0 0.0
    %685 = vmatprep.subr.mxu0 0.0
    %686 = vmatpush1.msra.mxu0 0.0
    %687 = vmatprep.subr.mxu0 0.0
    %688 = vmatpush1.msra.mxu0 0.0
    %689 = vmatprep.subr.mxu0 0.0
    %690 = vmatpush1.msra.mxu0 0.0
    %691 = vmatprep.subr.mxu0 0.0
    %692 = vmatpush1.msra.mxu0 0.0
    %693 = vmatprep.subr.mxu0 0.0
    %694 = vmatpush1.msra.mxu0 0.0
    %695 = vmatprep.subr.mxu0 0.0
    %696 = vmatpush1.msra.mxu0 0.0
    %697 = vmatprep.subr.mxu0 0.0
    %698 = vmatpush1.msra.mxu0 0.0
    %699 = vmatprep.subr.mxu0 0.0
    %700 = vmatpush1.msra.mxu0 0.0
    %701 = vmatprep.mubr.f32.mxu0 0.0
    %702 = vmatmul.mubr.f32.gmra.mrb[0].mxu0 %v429
    %v703 = vpop.f32.mrb[0].mxu0
    %v704 = vadd.f32 0.0, %v703
    %v705 = vpop.f32.mrb[0].mxu0
    %706 = vmatprep.mubr.f32.mxu0 0.0
    %707 = vmatmul.mubr.f32.gmra.mrb[0].mxu0 %v432
    %v708 = vpop.f32.mrb[0].mxu0
    %v709 = vadd.f32 0.0, %v708
    %v710 = vpop.f32.mrb[0].mxu0
    %711 = vmatprep.mubr.f32.mxu0 0.0
    %712 = vmatmul.mubr.f32.gmra.mrb[0].mxu0 %v435
    %v713 = vpop.f32.mrb[0].mxu0
    %v714 = vadd.f32 0.0, %v713
    %v715 = vpop.f32.mrb[0].mxu0
    %716 = vmatprep.mubr.f32.mxu0 0.0
    %717 = vmatmul.mubr.f32.gmra.mrb[0].mxu0 %v438
    %v718 = vpop.f32.mrb[0].mxu0
    %v719 = vadd.f32 0.0, %v718
    %v720 = vpop.f32.mrb[0].mxu0
    %721 = vmatprep.mubr.f32.mxu0 0.0
    %722 = vmatmul.mubr.f32.gmra.mrb[0].mxu0 %v441
    %v723 = vpop.f32.mrb[0].mxu0
    %v724 = vadd.f32 0.0, %v723
    %v725 = vpop.f32.mrb[0].mxu0
    %726 = vmatprep.mubr.f32.mxu0 0.0
    %727 = vmatmul.mubr.f32.gmra.mrb[0].mxu0 %v444
    %v728 = vpop.f32.mrb[0].mxu0
    %v729 = vadd.f32 0.0, %v728
    %v730 = vpop.f32.mrb[0].mxu0
    %731 = vmatprep.mubr.f32.mxu0 0.0
    %732 = vmatmul.mubr.f32.gmra.mrb[0].mxu0 %v447
    %v733 = vpop.f32.mrb[0].mxu0
    %v734 = vadd.f32 0.0, %v733
    %v735 = vpop.f32.mrb[0].mxu0
    %736 = vmatprep.mubr.f32.mxu0 0.0
    %737 = vmatmul.mubr.f32.gmra.mrb[0].mxu0 %v450
    %v738 = vpop.f32.mrb[0].mxu0
    %v739 = vadd.f32 0.0, %v738
    %v740 = vpop.f32.mrb[0].mxu0
    %741 = vmatprep.mubr.f32.mxu0 0.0
    %742 = vmatmul.mubr.f32.gmra.mrb[0].mxu0 %v453
    %v743 = vpop.f32.mrb[0].mxu0
    %v744 = vadd.f32 0.0, %v743
    %v745 = vpop.f32.mrb[0].mxu0
    %746 = vmatprep.mubr.f32.mxu0 0.0
    %747 = vmatmul.mubr.f32.gmra.mrb[0].mxu0 %v456
    %v748 = vpop.f32.mrb[0].mxu0
    %v749 = vadd.f32 0.0, %v748
    %v750 = vpop.f32.mrb[0].mxu0
    %751 = vmatprep.mubr.f32.mxu0 0.0
    %752 = vmatmul.mubr.f32.gmra.mrb[0].mxu0 %v459
    %v753 = vpop.f32.mrb[0].mxu0
    %v754 = vadd.f32 0.0, %v753
    %v755 = vpop.f32.mrb[0].mxu0
    %756 = vmatprep.mubr.f32.mxu0 0.0
    %757 = vmatmul.mubr.f32.gmra.mrb[0].mxu0 %v462
    %v758 = vpop.f32.mrb[0].mxu0
    %v759 = vadd.f32 0.0, %v758
    %v760 = vpop.f32.mrb[0].mxu0
    %761 = vmatprep.mubr.f32.mxu0 0.0
    %762 = vmatmul.mubr.f32.gmra.mrb[0].mxu0 %v465
    %v763 = vpop.f32.mrb[0].mxu0
    %v764 = vadd.f32 0.0, %v763
    %v765 = vpop.f32.mrb[0].mxu0
    %766 = vmatprep.mubr.f32.mxu0 0.0
    %767 = vmatmul.mubr.f32.gmra.mrb[0].mxu0 %v468
    %v768 = vpop.f32.mrb[0].mxu0
    %v769 = vadd.f32 0.0, %v768
    %v770 = vpop.f32.mrb[0].mxu0
    %771 = vmatprep.mubr.f32.mxu0 0.0
    %772 = vmatmul.mubr.f32.gmra.mrb[0].mxu0 %v471
    %v773 = vpop.f32.mrb[0].mxu0
    %v774 = vadd.f32 0.0, %v773
    %v775 = vpop.f32.mrb[0].mxu0
    %776 = vmatprep.mubr.f32.mxu0 0.0
    %777 = vmatmul.mubr.f32.gmra.mrb[0].mxu0 %v474
    %v778 = vpop.f32.mrb[0].mxu0
    %v779 = vadd.f32 0.0, %v778
    %v780 = vpop.f32.mrb[0].mxu0
    %781 = vdwg.mxu0
    %v783 = vsel %vm427, %v56, 0
    %v786 = vsel %vm427, %v57, 0
    %v789 = vsel %vm427, %v58, 0
    %v792 = vsel %vm427, %v59, 0
    %v795 = vsel %vm427, %v60, 0
    %v798 = vsel %vm427, %v61, 0
    %v801 = vsel %vm427, %v62, 0
    %v804 = vsel %vm427, %v63, 0
    %v807 = vsel %vm427, %v64, 0
    %v810 = vsel %vm427, %v65, 0
    %v813 = vsel %vm427, %v66, 0
    %v816 = vsel %vm427, %v67, 0
    %v819 = vsel %vm427, %v68, 0
    %v822 = vsel %vm427, %v69, 0
    %v825 = vsel %vm427, %v70, 0
    %v828 = vsel %vm427, %v71, 0
    %830 = vmatprep.subr.mxu0 %v405
    %831 = vmatpush1.msra.mxu0 %v410
    %832 = vmatprep.subr.mxu0 0.0
    %833 = vmatpush1.msra.mxu0 0.0
    %834 = vmatprep.subr.mxu0 0.0
    %835 = vmatpush1.msra.mxu0 0.0
    %836 = vmatprep.subr.mxu0 0.0
    %837 = vmatpush1.msra.mxu0 0.0
    %838 = vmatprep.subr.mxu0 0.0
    %839 = vmatpush1.msra.mxu0 0.0
    %840 = vmatprep.subr.mxu0 0.0
    %841 = vmatpush1.msra.mxu0 0.0
    %842 = vmatprep.subr.mxu0 0.0
    %843 = vmatpush1.msra.mxu0 0.0
    %844 = vmatprep.subr.mxu0 0.0
    %845 = vmatpush1.msra.mxu0 0.0
    %846 = vmatprep.subr.mxu0 0.0
    %847 = vmatpush1.msra.mxu0 0.0
    %848 = vmatprep.subr.mxu0 0.0
    %849 = vmatpush1.msra.mxu0 0.0
    %850 = vmatprep.subr.mxu0 0.0
    %851 = vmatpush1.msra.mxu0 0.0
    %852 = vmatprep.subr.mxu0 0.0
    %853 = vmatpush1.msra.mxu0 0.0
    %854 = vmatprep.subr.mxu0 0.0
    %855 = vmatpush1.msra.mxu0 0.0
    %856 = vmatprep.subr.mxu0 0.0
    %857 = vmatpush1.msra.mxu0 0.0
    %858 = vmatprep.subr.mxu0 0.0
    %859 = vmatpush1.msra.mxu0 0.0
    %860 = vmatprep.subr.mxu0 0.0
    %861 = vmatpush1.msra.mxu0 0.0
    %862 = vmatprep.subr.mxu0 0.0
    %863 = vmatpush1.msra.mxu0 0.0
    %864 = vmatprep.subr.mxu0 0.0
    %865 = vmatpush1.msra.mxu0 0.0
    %866 = vmatprep.subr.mxu0 0.0
    %867 = vmatpush1.msra.mxu0 0.0
    %868 = vmatprep.subr.mxu0 0.0
    %869 = vmatpush1.msra.mxu0 0.0
    %870 = vmatprep.subr.mxu0 0.0
    %871 = vmatpush1.msra.mxu0 0.0
    %872 = vmatprep.subr.mxu0 0.0
    %873 = vmatpush1.msra.mxu0 0.0
    %874 = vmatprep.subr.mxu0 0.0
    %875 = vmatpush1.msra.mxu0 0.0
    %876 = vmatprep.subr.mxu0 0.0
    %877 = vmatpush1.msra.mxu0 0.0
    %878 = vmatprep.subr.mxu0 0.0
    %879 = vmatpush1.msra.mxu0 0.0
    %880 = vmatprep.subr.mxu0 0.0
    %881 = vmatpush1.msra.mxu0 0.0
    %882 = vmatprep.subr.mxu0 0.0
    %883 = vmatpush1.msra.mxu0 0.0
    %884 = vmatprep.subr.mxu0 0.0
    %885 = vmatpush1.msra.mxu0 0.0
    %886 = vmatprep.subr.mxu0 0.0
    %887 = vmatpush1.msra.mxu0 0.0
    %888 = vmatprep.subr.mxu0 0.0
    %889 = vmatpush1.msra.mxu0 0.0
    %890 = vmatprep.subr.mxu0 0.0
    %891 = vmatpush1.msra.mxu0 0.0
    %892 = vmatprep.subr.mxu0 0.0
    %893 = vmatpush1.msra.mxu0 0.0
    %894 = vmatprep.mubr.f32.mxu0 0.0
    %895 = vmatmul.mubr.f32.gmra.mrb[0].mxu0 %v783
    %v896 = vpop.f32.mrb[0].mxu0
    %v897 = vadd.f32 %v543, %v896
    %v898 = vpop.f32.mrb[0].mxu0
    %v899 = vadd.f32 %v545, %v898
    %900 = vmatprep.mubr.f32.mxu0 0.0
    %901 = vmatmul.mubr.f32.gmra.mrb[0].mxu0 %v786
    %v902 = vpop.f32.mrb[0].mxu0
    %v903 = vadd.f32 %v549, %v902
    %v904 = vpop.f32.mrb[0].mxu0
    %v905 = vadd.f32 %v551, %v904
    %906 = vmatprep.mubr.f32.mxu0 0.0
    %907 = vmatmul.mubr.f32.gmra.mrb[0].mxu0 %v789
    %v908 = vpop.f32.mrb[0].mxu0
    %v909 = vadd.f32 %v555, %v908
    %v910 = vpop.f32.mrb[0].mxu0
    %v911 = vadd.f32 %v557, %v910
    %912 = vmatprep.mubr.f32.mxu0 0.0
    %913 = vmatmul.mubr.f32.gmra.mrb[0].mxu0 %v792
    %v914 = vpop.f32.mrb[0].mxu0
    %v915 = vadd.f32 %v561, %v914
    %v916 = vpop.f32.mrb[0].mxu0
    %v917 = vadd.f32 %v563, %v916
    %918 = vmatprep.mubr.f32.mxu0 0.0
    %919 = vmatmul.mubr.f32.gmra.mrb[0].mxu0 %v795
    %v920 = vpop.f32.mrb[0].mxu0
    %v921 = vadd.f32 %v567, %v920
    %v922 = vpop.f32.mrb[0].mxu0
    %v923 = vadd.f32 %v569, %v922
    %924 = vmatprep.mubr.f32.mxu0 0.0
    %925 = vmatmul.mubr.f32.gmra.mrb[0].mxu0 %v798
    %v926 = vpop.f32.mrb[0].mxu0
    %v927 = vadd.f32 %v573, %v926
    %v928 = vpop.f32.mrb[0].mxu0
    %v929 = vadd.f32 %v575, %v928
    %930 = vmatprep.mubr.f32.mxu0 0.0
    %931 = vmatmul.mubr.f32.gmra.mrb[0].mxu0 %v801
    %v932 = vpop.f32.mrb[0].mxu0
    %v933 = vadd.f32 %v579, %v932
    %v934 = vpop.f32.mrb[0].mxu0
    %v935 = vadd.f32 %v581, %v934
    %936 = vmatprep.mubr.f32.mxu0 0.0
    %937 = vmatmul.mubr.f32.gmra.mrb[0].mxu0 %v804
    %v938 = vpop.f32.mrb[0].mxu0
    %v939 = vadd.f32 %v585, %v938
    %v940 = vpop.f32.mrb[0].mxu0
    %v941 = vadd.f32 %v587, %v940
    %942 = vmatprep.mubr.f32.mxu0 0.0
    %943 = vmatmul.mubr.f32.gmra.mrb[0].mxu0 %v807
    %v944 = vpop.f32.mrb[0].mxu0
    %v945 = vadd.f32 %v591, %v944
    %v946 = vpop.f32.mrb[0].mxu0
    %v947 = vadd.f32 %v593, %v946
    %948 = vmatprep.mubr.f32.mxu0 0.0
    %949 = vmatmul.mubr.f32.gmra.mrb[0].mxu0 %v810
    %v950 = vpop.f32.mrb[0].mxu0
    %v951 = vadd.f32 %v597, %v950
    %v952 = vpop.f32.mrb[0].mxu0
    %v953 = vadd.f32 %v599, %v952
    %954 = vmatprep.mubr.f32.mxu0 0.0
    %955 = vmatmul.mubr.f32.gmra.mrb[0].mxu0 %v813
    %v956 = vpop.f32.mrb[0].mxu0
    %v957 = vadd.f32 %v603, %v956
    %v958 = vpop.f32.mrb[0].mxu0
    %v959 = vadd.f32 %v605, %v958
    %960 = vmatprep.mubr.f32.mxu0 0.0
    %961 = vmatmul.mubr.f32.gmra.mrb[0].mxu0 %v816
    %v962 = vpop.f32.mrb[0].mxu0
    %v963 = vadd.f32 %v609, %v962
    %v964 = vpop.f32.mrb[0].mxu0
    %v965 = vadd.f32 %v611, %v964
    %966 = vmatprep.mubr.f32.mxu0 0.0
    %967 = vmatmul.mubr.f32.gmra.mrb[0].mxu0 %v819
    %v968 = vpop.f32.mrb[0].mxu0
    %v969 = vadd.f32 %v615, %v968
    %v970 = vpop.f32.mrb[0].mxu0
    %v971 = vadd.f32 %v617, %v970
    %972 = vmatprep.mubr.f32.mxu0 0.0
    %973 = vmatmul.mubr.f32.gmra.mrb[0].mxu0 %v822
    %v974 = vpop.f32.mrb[0].mxu0
    %v975 = vadd.f32 %v621, %v974
    %v976 = vpop.f32.mrb[0].mxu0
    %v977 = vadd.f32 %v623, %v976
    %978 = vmatprep.mubr.f32.mxu0 0.0
    %979 = vmatmul.mubr.f32.gmra.mrb[0].mxu0 %v825
    %v980 = vpop.f32.mrb[0].mxu0
    %v981 = vadd.f32 %v627, %v980
    %v982 = vpop.f32.mrb[0].mxu0
    %v983 = vadd.f32 %v629, %v982
    %984 = vmatprep.mubr.f32.mxu0 0.0
    %985 = vmatmul.mubr.f32.gmra.mrb[0].mxu0 %v828
    %v986 = vpop.f32.mrb[0].mxu0
    %v987 = vadd.f32 %v633, %v986
    %v988 = vpop.f32.mrb[0].mxu0
    %v989 = vadd.f32 %v635, %v988
    %990 = vdwg.mxu0
    %991 = vmatprep.subr.mxu0 0.0
    %992 = vmatpush1.msra.mxu0 %v412
    %993 = vmatprep.subr.mxu0 0.0
    %994 = vmatpush1.msra.mxu0 0.0
    %995 = vmatprep.subr.mxu0 0.0
    %996 = vmatpush1.msra.mxu0 0.0
    %997 = vmatprep.subr.mxu0 0.0
    %998 = vmatpush1.msra.mxu0 0.0
    %999 = vmatprep.subr.mxu0 0.0
    %1000 = vmatpush1.msra.mxu0 0.0
    %1001 = vmatprep.subr.mxu0 0.0
    %1002 = vmatpush1.msra.mxu0 0.0
    %1003 = vmatprep.subr.mxu0 0.0
    %1004 = vmatpush1.msra.mxu0 0.0
    %1005 = vmatprep.subr.mxu0 0.0
    %1006 = vmatpush1.msra.mxu0 0.0
    %1007 = vmatprep.subr.mxu0 0.0
    %1008 = vmatpush1.msra.mxu0 0.0
    %1009 = vmatprep.subr.mxu0 0.0
    %1010 = vmatpush1.msra.mxu0 0.0
    %1011 = vmatprep.subr.mxu0 0.0
    %1012 = vmatpush1.msra.mxu0 0.0
    %1013 = vmatprep.subr.mxu0 0.0
    %1014 = vmatpush1.msra.mxu0 0.0
    %1015 = vmatprep.subr.mxu0 0.0
    %1016 = vmatpush1.msra.mxu0 0.0
    %1017 = vmatprep.subr.mxu0 0.0
    %1018 = vmatpush1.msra.mxu0 0.0
    %1019 = vmatprep.subr.mxu0 0.0
    %1020 = vmatpush1.msra.mxu0 0.0
    %1021 = vmatprep.subr.mxu0 0.0
    %1022 = vmatpush1.msra.mxu0 0.0
    %1023 = vmatprep.subr.mxu0 0.0
    %1024 = vmatpush1.msra.mxu0 0.0
    %1025 = vmatprep.subr.mxu0 0.0
    %1026 = vmatpush1.msra.mxu0 0.0
    %1027 = vmatprep.subr.mxu0 0.0
    %1028 = vmatpush1.msra.mxu0 0.0
    %1029 = vmatprep.subr.mxu0 0.0
    %1030 = vmatpush1.msra.mxu0 0.0
    %1031 = vmatprep.subr.mxu0 0.0
    %1032 = vmatpush1.msra.mxu0 0.0
    %1033 = vmatprep.subr.mxu0 0.0
    %1034 = vmatpush1.msra.mxu0 0.0
    %1035 = vmatprep.subr.mxu0 0.0
    %1036 = vmatpush1.msra.mxu0 0.0
    %1037 = vmatprep.subr.mxu0 0.0
    %1038 = vmatpush1.msra.mxu0 0.0
    %1039 = vmatprep.subr.mxu0 0.0
    %1040 = vmatpush1.msra.mxu0 0.0
    %1041 = vmatprep.subr.mxu0 0.0
    %1042 = vmatpush1.msra.mxu0 0.0
    %1043 = vmatprep.subr.mxu0 0.0
    %1044 = vmatpush1.msra.mxu0 0.0
    %1045 = vmatprep.subr.mxu0 0.0
    %1046 = vmatpush1.msra.mxu0 0.0
    %1047 = vmatprep.subr.mxu0 0.0
    %1048 = vmatpush1.msra.mxu0 0.0
    %1049 = vmatprep.subr.mxu0 0.0
    %1050 = vmatpush1.msra.mxu0 0.0
    %1051 = vmatprep.subr.mxu0 0.0
    %1052 = vmatpush1.msra.mxu0 0.0
    %1053 = vmatprep.subr.mxu0 0.0
    %1054 = vmatpush1.msra.mxu0 0.0
    %1055 = vmatprep.mubr.f32.mxu0 0.0
    %1056 = vmatmul.mubr.f32.gmra.mrb[0].mxu0 %v783
    %v1057 = vpop.f32.mrb[0].mxu0
    %v1058 = vadd.f32 %v704, %v1057
    %v1059 = vpop.f32.mrb[0].mxu0
    %1060 = vmatprep.mubr.f32.mxu0 0.0
    %1061 = vmatmul.mubr.f32.gmra.mrb[0].mxu0 %v786
    %v1062 = vpop.f32.mrb[0].mxu0
    %v1063 = vadd.f32 %v709, %v1062
    %v1064 = vpop.f32.mrb[0].mxu0
    %1065 = vmatprep.mubr.f32.mxu0 0.0
    %1066 = vmatmul.mubr.f32.gmra.mrb[0].mxu0 %v789
    %v1067 = vpop.f32.mrb[0].mxu0
    %v1068 = vadd.f32 %v714, %v1067
    %v1069 = vpop.f32.mrb[0].mxu0
    %1070 = vmatprep.mubr.f32.mxu0 0.0
    %1071 = vmatmul.mubr.f32.gmra.mrb[0].mxu0 %v792
    %v1072 = vpop.f32.mrb[0].mxu0
    %v1073 = vadd.f32 %v719, %v1072
    %v1074 = vpop.f32.mrb[0].mxu0
    %1075 = vmatprep.mubr.f32.mxu0 0.0
    %1076 = vmatmul.mubr.f32.gmra.mrb[0].mxu0 %v795
    %v1077 = vpop.f32.mrb[0].mxu0
    %v1078 = vadd.f32 %v724, %v1077
    %v1079 = vpop.f32.mrb[0].mxu0
    %1080 = vmatprep.mubr.f32.mxu0 0.0
    %1081 = vmatmul.mubr.f32.gmra.mrb[0].mxu0 %v798
    %v1082 = vpop.f32.mrb[0].mxu0
    %v1083 = vadd.f32 %v729, %v1082
    %v1084 = vpop.f32.mrb[0].mxu0
    %1085 = vmatprep.mubr.f32.mxu0 0.0
    %1086 = vmatmul.mubr.f32.gmra.mrb[0].mxu0 %v801
    %v1087 = vpop.f32.mrb[0].mxu0
    %v1088 = vadd.f32 %v734, %v1087
    %v1089 = vpop.f32.mrb[0].mxu0
    %1090 = vmatprep.mubr.f32.mxu0 0.0
    %1091 = vmatmul.mubr.f32.gmra.mrb[0].mxu0 %v804
    %v1092 = vpop.f32.mrb[0].mxu0
    %v1093 = vadd.f32 %v739, %v1092
    %v1094 = vpop.f32.mrb[0].mxu0
    %1095 = vmatprep.mubr.f32.mxu0 0.0
    %1096 = vmatmul.mubr.f32.gmra.mrb[0].mxu0 %v807
    %v1097 = vpop.f32.mrb[0].mxu0
    %v1098 = vadd.f32 %v744, %v1097
    %v1099 = vpop.f32.mrb[0].mxu0
    %1100 = vmatprep.mubr.f32.mxu0 0.0
    %1101 = vmatmul.mubr.f32.gmra.mrb[0].mxu0 %v810
    %v1102 = vpop.f32.mrb[0].mxu0
    %v1103 = vadd.f32 %v749, %v1102
    %v1104 = vpop.f32.mrb[0].mxu0
    %1105 = vmatprep.mubr.f32.mxu0 0.0
    %1106 = vmatmul.mubr.f32.gmra.mrb[0].mxu0 %v813
    %v1107 = vpop.f32.mrb[0].mxu0
    %v1108 = vadd.f32 %v754, %v1107
    %v1109 = vpop.f32.mrb[0].mxu0
    %1110 = vmatprep.mubr.f32.mxu0 0.0
    %1111 = vmatmul.mubr.f32.gmra.mrb[0].mxu0 %v816
    %v1112 = vpop.f32.mrb[0].mxu0
    %v1113 = vadd.f32 %v759, %v1112
    %v1114 = vpop.f32.mrb[0].mxu0
    %1115 = vmatprep.mubr.f32.mxu0 0.0
    %1116 = vmatmul.mubr.f32.gmra.mrb[0].mxu0 %v819
    %v1117 = vpop.f32.mrb[0].mxu0
    %v1118 = vadd.f32 %v764, %v1117
    %v1119 = vpop.f32.mrb[0].mxu0
    %1120 = vmatprep.mubr.f32.mxu0 0.0
    %1121 = vmatmul.mubr.f32.gmra.mrb[0].mxu0 %v822
    %v1122 = vpop.f32.mrb[0].mxu0
    %v1123 = vadd.f32 %v769, %v1122
    %v1124 = vpop.f32.mrb[0].mxu0
    %1125 = vmatprep.mubr.f32.mxu0 0.0
    %1126 = vmatmul.mubr.f32.gmra.mrb[0].mxu0 %v825
    %v1127 = vpop.f32.mrb[0].mxu0
    %v1128 = vadd.f32 %v774, %v1127
    %v1129 = vpop.f32.mrb[0].mxu0
    %1130 = vmatprep.mubr.f32.mxu0 0.0
    %1131 = vmatmul.mubr.f32.gmra.mrb[0].mxu0 %v828
    %v1132 = vpop.f32.mrb[0].mxu0
    %v1133 = vadd.f32 %v779, %v1132
    %v1134 = vpop.f32.mrb[0].mxu0
    %1135 = vdwg.mxu0
    %1136 = vrot.lane.b32.xlu0 %v410, 126
    %v1137 = vpop.permute.xlu0 %1136
    %1138 = vrot.lane.b32.xlu0 %v405, 126
    %v1139 = vpop.permute.xlu0 %1138
    %1140 = vrot.lane.b32.xlu0 %v412, 126
    %v1141 = vpop.permute.xlu0 %1140
    %vm1142 = vcmask 1031168
    %v1143 = vsel %vm1142, %v1137, %v1139
    %v1144 = vsel %vm1142, %v1139, %v1141
    %v1149 = vsel %vm427, %v90, 0
    %v1152 = vsel %vm427, %v91, 0
    %v1155 = vsel %vm427, %v92, 0
    %v1158 = vsel %vm427, %v93, 0
    %v1161 = vsel %vm427, %v94, 0
    %v1164 = vsel %vm427, %v95, 0
    %v1167 = vsel %vm427, %v96, 0
    %v1170 = vsel %vm427, %v97, 0
    %v1173 = vsel %vm427, %v98, 0
    %v1176 = vsel %vm427, %v99, 0
    %v1179 = vsel %vm427, %v100, 0
    %v1182 = vsel %vm427, %v101, 0
    %v1185 = vsel %vm427, %v102, 0
    %v1188 = vsel %vm427, %v103, 0
    %v1191 = vsel %vm427, %v104, 0
    %v1194 = vsel %vm427, %v105, 0
    %1196 = vmatprep.subr.mxu0 %v1144
    %1197 = vmatpush1.msra.mxu0 %v1143
    %1198 = vmatprep.subr.mxu0 0.0
    %1199 = vmatpush1.msra.mxu0 0.0
    %1200 = vmatprep.subr.mxu0 0.0
    %1201 = vmatpush1.msra.mxu0 0.0
    %1202 = vmatprep.subr.mxu0 0.0
    %1203 = vmatpush1.msra.mxu0 0.0
    %1204 = vmatprep.subr.mxu0 0.0
    %1205 = vmatpush1.msra.mxu0 0.0
    %1206 = vmatprep.subr.mxu0 0.0
    %1207 = vmatpush1.msra.mxu0 0.0
    %1208 = vmatprep.subr.mxu0 0.0
    %1209 = vmatpush1.msra.mxu0 0.0
    %1210 = vmatprep.subr.mxu0 0.0
    %1211 = vmatpush1.msra.mxu0 0.0
    %1212 = vmatprep.subr.mxu0 0.0
    %1213 = vmatpush1.msra.mxu0 0.0
    %1214 = vmatprep.subr.mxu0 0.0
    %1215 = vmatpush1.msra.mxu0 0.0
    %1216 = vmatprep.subr.mxu0 0.0
    %1217 = vmatpush1.msra.mxu0 0.0
    %1218 = vmatprep.subr.mxu0 0.0
    %1219 = vmatpush1.msra.mxu0 0.0
    %1220 = vmatprep.subr.mxu0 0.0
    %1221 = vmatpush1.msra.mxu0 0.0
    %1222 = vmatprep.subr.mxu0 0.0
    %1223 = vmatpush1.msra.mxu0 0.0
    %1224 = vmatprep.subr.mxu0 0.0
    %1225 = vmatpush1.msra.mxu0 0.0
    %1226 = vmatprep.subr.mxu0 0.0
    %1227 = vmatpush1.msra.mxu0 0.0
    %1228 = vmatprep.subr.mxu0 0.0
    %1229 = vmatpush1.msra.mxu0 0.0
    %1230 = vmatprep.subr.mxu0 0.0
    %1231 = vmatpush1.msra.mxu0 0.0
    %1232 = vmatprep.subr.mxu0 0.0
    %1233 = vmatpush1.msra.mxu0 0.0
    %1234 = vmatprep.subr.mxu0 0.0
    %1235 = vmatpush1.msra.mxu0 0.0
    %1236 = vmatprep.subr.mxu0 0.0
    %1237 = vmatpush1.msra.mxu0 0.0
    %1238 = vmatprep.subr.mxu0 0.0
    %1239 = vmatpush1.msra.mxu0 0.0
    %1240 = vmatprep.subr.mxu0 0.0
    %1241 = vmatpush1.msra.mxu0 0.0
    %1242 = vmatprep.subr.mxu0 0.0
    %1243 = vmatpush1.msra.mxu0 0.0
    %1244 = vmatprep.subr.mxu0 0.0
    %1245 = vmatpush1.msra.mxu0 0.0
    %1246 = vmatprep.subr.mxu0 0.0
    %1247 = vmatpush1.msra.mxu0 0.0
    %1248 = vmatprep.subr.mxu0 0.0
    %1249 = vmatpush1.msra.mxu0 0.0
    %1250 = vmatprep.subr.mxu0 0.0
    %1251 = vmatpush1.msra.mxu0 0.0
    %1252 = vmatprep.subr.mxu0 0.0
    %1253 = vmatpush1.msra.mxu0 0.0
    %1254 = vmatprep.subr.mxu0 0.0
    %1255 = vmatpush1.msra.mxu0 0.0
    %1256 = vmatprep.subr.mxu0 0.0
    %1257 = vmatpush1.msra.mxu0 0.0
    %1258 = vmatprep.subr.mxu0 0.0
    %1259 = vmatpush1.msra.mxu0 0.0
    %1260 = vmatprep.mubr.f32.mxu0 0.0
    %1261 = vmatmul.mubr.f32.gmra.mrb[0].mxu0 %v1149
    %v1262 = vpop.f32.mrb[0].mxu0
    %v1263 = vadd.f32 0.0, %v1262
    %v1264 = vpop.f32.mrb[0].mxu0
    %v1265 = vadd.f32 0.0, %v1264
    %1266 = vmatprep.mubr.f32.mxu0 0.0
    %1267 = vmatmul.mubr.f32.gmra.mrb[0].mxu0 %v1152
    %v1268 = vpop.f32.mrb[0].mxu0
    %v1269 = vadd.f32 0.0, %v1268
    %v1270 = vpop.f32.mrb[0].mxu0
    %v1271 = vadd.f32 0.0, %v1270
    %1272 = vmatprep.mubr.f32.mxu0 0.0
    %1273 = vmatmul.mubr.f32.gmra.mrb[0].mxu0 %v1155
    %v1274 = vpop.f32.mrb[0].mxu0
    %v1275 = vadd.f32 0.0, %v1274
    %v1276 = vpop.f32.mrb[0].mxu0
    %v1277 = vadd.f32 0.0, %v1276
    %1278 = vmatprep.mubr.f32.mxu0 0.0
    %1279 = vmatmul.mubr.f32.gmra.mrb[0].mxu0 %v1158
    %v1280 = vpop.f32.mrb[0].mxu0
    %v1281 = vadd.f32 0.0, %v1280
    %v1282 = vpop.f32.mrb[0].mxu0
    %v1283 = vadd.f32 0.0, %v1282
    %1284 = vmatprep.mubr.f32.mxu0 0.0
    %1285 = vmatmul.mubr.f32.gmra.mrb[0].mxu0 %v1161
    %v1286 = vpop.f32.mrb[0].mxu0
    %v1287 = vadd.f32 0.0, %v1286
    %v1288 = vpop.f32.mrb[0].mxu0
    %v1289 = vadd.f32 0.0, %v1288
    %1290 = vmatprep.mubr.f32.mxu0 0.0
    %1291 = vmatmul.mubr.f32.gmra.mrb[0].mxu0 %v1164
    %v1292 = vpop.f32.mrb[0].mxu0
    %v1293 = vadd.f32 0.0, %v1292
    %v1294 = vpop.f32.mrb[0].mxu0
    %v1295 = vadd.f32 0.0, %v1294
    %1296 = vmatprep.mubr.f32.mxu0 0.0
    %1297 = vmatmul.mubr.f32.gmra.mrb[0].mxu0 %v1167
    %v1298 = vpop.f32.mrb[0].mxu0
    %v1299 = vadd.f32 0.0, %v1298
    %v1300 = vpop.f32.mrb[0].mxu0
    %v1301 = vadd.f32 0.0, %v1300
    %1302 = vmatprep.mubr.f32.mxu0 0.0
    %1303 = vmatmul.mubr.f32.gmra.mrb[0].mxu0 %v1170
    %v1304 = vpop.f32.mrb[0].mxu0
    %v1305 = vadd.f32 0.0, %v1304
    %v1306 = vpop.f32.mrb[0].mxu0
    %v1307 = vadd.f32 0.0, %v1306
    %1308 = vmatprep.mubr.f32.mxu0 0.0
    %1309 = vmatmul.mubr.f32.gmra.mrb[0].mxu0 %v1173
    %v1310 = vpop.f32.mrb[0].mxu0
    %v1311 = vadd.f32 0.0, %v1310
    %v1312 = vpop.f32.mrb[0].mxu0
    %v1313 = vadd.f32 0.0, %v1312
    %1314 = vmatprep.mubr.f32.mxu0 0.0
    %1315 = vmatmul.mubr.f32.gmra.mrb[0].mxu0 %v1176
    %v1316 = vpop.f32.mrb[0].mxu0
    %v1317 = vadd.f32 0.0, %v1316
    %v1318 = vpop.f32.mrb[0].mxu0
    %v1319 = vadd.f32 0.0, %v1318
    %1320 = vmatprep.mubr.f32.mxu0 0.0
    %1321 = vmatmul.mubr.f32.gmra.mrb[0].mxu0 %v1179
    %v1322 = vpop.f32.mrb[0].mxu0
    %v1323 = vadd.f32 0.0, %v1322
    %v1324 = vpop.f32.mrb[0].mxu0
    %v1325 = vadd.f32 0.0, %v1324
    %1326 = vmatprep.mubr.f32.mxu0 0.0
    %1327 = vmatmul.mubr.f32.gmra.mrb[0].mxu0 %v1182
    %v1328 = vpop.f32.mrb[0].mxu0
    %v1329 = vadd.f32 0.0, %v1328
    %v1330 = vpop.f32.mrb[0].mxu0
    %v1331 = vadd.f32 0.0, %v1330
    %1332 = vmatprep.mubr.f32.mxu0 0.0
    %1333 = vmatmul.mubr.f32.gmra.mrb[0].mxu0 %v1185
    %v1334 = vpop.f32.mrb[0].mxu0
    %v1335 = vadd.f32 0.0, %v1334
    %v1336 = vpop.f32.mrb[0].mxu0
    %v1337 = vadd.f32 0.0, %v1336
    %1338 = vmatprep.mubr.f32.mxu0 0.0
    %1339 = vmatmul.mubr.f32.gmra.mrb[0].mxu0 %v1188
    %v1340 = vpop.f32.mrb[0].mxu0
    %v1341 = vadd.f32 0.0, %v1340
    %v1342 = vpop.f32.mrb[0].mxu0
    %v1343 = vadd.f32 0.0, %v1342
    %1344 = vmatprep.mubr.f32.mxu0 0.0
    %1345 = vmatmul.mubr.f32.gmra.mrb[0].mxu0 %v1191
    %v1346 = vpop.f32.mrb[0].mxu0
    %v1347 = vadd.f32 0.0, %v1346
    %v1348 = vpop.f32.mrb[0].mxu0
    %v1349 = vadd.f32 0.0, %v1348
    %1350 = vmatprep.mubr.f32.mxu0 0.0
    %1351 = vmatmul.mubr.f32.gmra.mrb[0].mxu0 %v1194
    %v1352 = vpop.f32.mrb[0].mxu0
    %v1353 = vadd.f32 0.0, %v1352
    %v1354 = vpop.f32.mrb[0].mxu0
    %v1355 = vadd.f32 0.0, %v1354
    %1356 = vdwg.mxu0
    %1357 = vmatprep.subr.mxu0 0.0
    %1358 = vmatpush1.msra.mxu0 %v1141
    %1359 = vmatprep.subr.mxu0 0.0
    %1360 = vmatpush1.msra.mxu0 0.0
    %1361 = vmatprep.subr.mxu0 0.0
    %1362 = vmatpush1.msra.mxu0 0.0
    %1363 = vmatprep.subr.mxu0 0.0
    %1364 = vmatpush1.msra.mxu0 0.0
    %1365 = vmatprep.subr.mxu0 0.0
    %1366 = vmatpush1.msra.mxu0 0.0
    %1367 = vmatprep.subr.mxu0 0.0
    %1368 = vmatpush1.msra.mxu0 0.0
    %1369 = vmatprep.subr.mxu0 0.0
    %1370 = vmatpush1.msra.mxu0 0.0
    %1371 = vmatprep.subr.mxu0 0.0
    %1372 = vmatpush1.msra.mxu0 0.0
    %1373 = vmatprep.subr.mxu0 0.0
    %1374 = vmatpush1.msra.mxu0 0.0
    %1375 = vmatprep.subr.mxu0 0.0
    %1376 = vmatpush1.msra.mxu0 0.0
    %1377 = vmatprep.subr.mxu0 0.0
    %1378 = vmatpush1.msra.mxu0 0.0
    %1379 = vmatprep.subr.mxu0 0.0
    %1380 = vmatpush1.msra.mxu0 0.0
    %1381 = vmatprep.subr.mxu0 0.0
    %1382 = vmatpush1.msra.mxu0 0.0
    %1383 = vmatprep.subr.mxu0 0.0
    %1384 = vmatpush1.msra.mxu0 0.0
    %1385 = vmatprep.subr.mxu0 0.0
    %1386 = vmatpush1.msra.mxu0 0.0
    %1387 = vmatprep.subr.mxu0 0.0
    %1388 = vmatpush1.msra.mxu0 0.0
    %1389 = vmatprep.subr.mxu0 0.0
    %1390 = vmatpush1.msra.mxu0 0.0
    %1391 = vmatprep.subr.mxu0 0.0
    %1392 = vmatpush1.msra.mxu0 0.0
    %1393 = vmatprep.subr.mxu0 0.0
    %1394 = vmatpush1.msra.mxu0 0.0
    %1395 = vmatprep.subr.mxu0 0.0
    %1396 = vmatpush1.msra.mxu0 0.0
    %1397 = vmatprep.subr.mxu0 0.0
    %1398 = vmatpush1.msra.mxu0 0.0
    %1399 = vmatprep.subr.mxu0 0.0
    %1400 = vmatpush1.msra.mxu0 0.0
    %1401 = vmatprep.subr.mxu0 0.0
    %1402 = vmatpush1.msra.mxu0 0.0
    %1403 = vmatprep.subr.mxu0 0.0
    %1404 = vmatpush1.msra.mxu0 0.0
    %1405 = vmatprep.subr.mxu0 0.0
    %1406 = vmatpush1.msra.mxu0 0.0
    %1407 = vmatprep.subr.mxu0 0.0
    %1408 = vmatpush1.msra.mxu0 0.0
    %1409 = vmatprep.subr.mxu0 0.0
    %1410 = vmatpush1.msra.mxu0 0.0
    %1411 = vmatprep.subr.mxu0 0.0
    %1412 = vmatpush1.msra.mxu0 0.0
    %1413 = vmatprep.subr.mxu0 0.0
    %1414 = vmatpush1.msra.mxu0 0.0
    %1415 = vmatprep.subr.mxu0 0.0
    %1416 = vmatpush1.msra.mxu0 0.0
    %1417 = vmatprep.subr.mxu0 0.0
    %1418 = vmatpush1.msra.mxu0 0.0
    %1419 = vmatprep.subr.mxu0 0.0
    %1420 = vmatpush1.msra.mxu0 0.0
    %1421 = vmatprep.mubr.f32.mxu0 0.0
    %1422 = vmatmul.mubr.f32.gmra.mrb[0].mxu0 %v1149
    %v1423 = vpop.f32.mrb[0].mxu0
    %v1424 = vadd.f32 0.0, %v1423
    %v1425 = vpop.f32.mrb[0].mxu0
    %1426 = vmatprep.mubr.f32.mxu0 0.0
    %1427 = vmatmul.mubr.f32.gmra.mrb[0].mxu0 %v1152
    %v1428 = vpop.f32.mrb[0].mxu0
    %v1429 = vadd.f32 0.0, %v1428
    %v1430 = vpop.f32.mrb[0].mxu0
    %1431 = vmatprep.mubr.f32.mxu0 0.0
    %1432 = vmatmul.mubr.f32.gmra.mrb[0].mxu0 %v1155
    %v1433 = vpop.f32.mrb[0].mxu0
    %v1434 = vadd.f32 0.0, %v1433
    %v1435 = vpop.f32.mrb[0].mxu0
    %1436 = vmatprep.mubr.f32.mxu0 0.0
    %1437 = vmatmul.mubr.f32.gmra.mrb[0].mxu0 %v1158
    %v1438 = vpop.f32.mrb[0].mxu0
    %v1439 = vadd.f32 0.0, %v1438
    %v1440 = vpop.f32.mrb[0].mxu0
    %1441 = vmatprep.mubr.f32.mxu0 0.0
    %1442 = vmatmul.mubr.f32.gmra.mrb[0].mxu0 %v1161
    %v1443 = vpop.f32.mrb[0].mxu0
    %v1444 = vadd.f32 0.0, %v1443
    %v1445 = vpop.f32.mrb[0].mxu0
    %1446 = vmatprep.mubr.f32.mxu0 0.0
    %1447 = vmatmul.mubr.f32.gmra.mrb[0].mxu0 %v1164
    %v1448 = vpop.f32.mrb[0].mxu0
    %v1449 = vadd.f32 0.0, %v1448
    %v1450 = vpop.f32.mrb[0].mxu0
    %1451 = vmatprep.mubr.f32.mxu0 0.0
    %1452 = vmatmul.mubr.f32.gmra.mrb[0].mxu0 %v1167
    %v1453 = vpop.f32.mrb[0].mxu0
    %v1454 = vadd.f32 0.0, %v1453
    %v1455 = vpop.f32.mrb[0].mxu0
    %1456 = vmatprep.mubr.f32.mxu0 0.0
    %1457 = vmatmul.mubr.f32.gmra.mrb[0].mxu0 %v1170
    %v1458 = vpop.f32.mrb[0].mxu0
    %v1459 = vadd.f32 0.0, %v1458
    %v1460 = vpop.f32.mrb[0].mxu0
    %1461 = vmatprep.mubr.f32.mxu0 0.0
    %1462 = vmatmul.mubr.f32.gmra.mrb[0].mxu0 %v1173
    %v1463 = vpop.f32.mrb[0].mxu0
    %v1464 = vadd.f32 0.0, %v1463
    %v1465 = vpop.f32.mrb[0].mxu0
    %1466 = vmatprep.mubr.f32.mxu0 0.0
    %1467 = vmatmul.mubr.f32.gmra.mrb[0].mxu0 %v1176
    %v1468 = vpop.f32.mrb[0].mxu0
    %v1469 = vadd.f32 0.0, %v1468
    %v1470 = vpop.f32.mrb[0].mxu0
    %1471 = vmatprep.mubr.f32.mxu0 0.0
    %1472 = vmatmul.mubr.f32.gmra.mrb[0].mxu0 %v1179
    %v1473 = vpop.f32.mrb[0].mxu0
    %v1474 = vadd.f32 0.0, %v1473
    %v1475 = vpop.f32.mrb[0].mxu0
    %1476 = vmatprep.mubr.f32.mxu0 0.0
    %1477 = vmatmul.mubr.f32.gmra.mrb[0].mxu0 %v1182
    %v1478 = vpop.f32.mrb[0].mxu0
    %v1479 = vadd.f32 0.0, %v1478
    %v1480 = vpop.f32.mrb[0].mxu0
    %1481 = vmatprep.mubr.f32.mxu0 0.0
    %1482 = vmatmul.mubr.f32.gmra.mrb[0].mxu0 %v1185
    %v1483 = vpop.f32.mrb[0].mxu0
    %v1484 = vadd.f32 0.0, %v1483
    %v1485 = vpop.f32.mrb[0].mxu0
    %1486 = vmatprep.mubr.f32.mxu0 0.0
    %1487 = vmatmul.mubr.f32.gmra.mrb[0].mxu0 %v1188
    %v1488 = vpop.f32.mrb[0].mxu0
    %v1489 = vadd.f32 0.0, %v1488
    %v1490 = vpop.f32.mrb[0].mxu0
    %1491 = vmatprep.mubr.f32.mxu0 0.0
    %1492 = vmatmul.mubr.f32.gmra.mrb[0].mxu0 %v1191
    %v1493 = vpop.f32.mrb[0].mxu0
    %v1494 = vadd.f32 0.0, %v1493
    %v1495 = vpop.f32.mrb[0].mxu0
    %1496 = vmatprep.mubr.f32.mxu0 0.0
    %1497 = vmatmul.mubr.f32.gmra.mrb[0].mxu0 %v1194
    %v1498 = vpop.f32.mrb[0].mxu0
    %v1499 = vadd.f32 0.0, %v1498
    %v1500 = vpop.f32.mrb[0].mxu0
    %1501 = vdwg.mxu0
    %v1502 = vadd.f32 %v897, %v1263
    %v1503 = vadd.f32 %v899, %v1265
    %v1504 = vadd.f32 %v1058, %v1424
    %v1505 = vadd.f32 %v903, %v1269
    %v1506 = vadd.f32 %v905, %v1271
    %v1507 = vadd.f32 %v1063, %v1429
    %v1508 = vadd.f32 %v909, %v1275
    %v1509 = vadd.f32 %v911, %v1277
    %v1510 = vadd.f32 %v1068, %v1434
    %v1511 = vadd.f32 %v915, %v1281
    %v1512 = vadd.f32 %v917, %v1283
    %v1513 = vadd.f32 %v1073, %v1439
    %v1514 = vadd.f32 %v921, %v1287
    %v1515 = vadd.f32 %v923, %v1289
    %v1516 = vadd.f32 %v1078, %v1444
    %v1517 = vadd.f32 %v927, %v1293
    %v1518 = vadd.f32 %v929, %v1295
    %v1519 = vadd.f32 %v1083, %v1449
    %v1520 = vadd.f32 %v933, %v1299
    %v1521 = vadd.f32 %v935, %v1301
    %v1522 = vadd.f32 %v1088, %v1454
    %v1523 = vadd.f32 %v939, %v1305
    %v1524 = vadd.f32 %v941, %v1307
    %v1525 = vadd.f32 %v1093, %v1459
    %v1526 = vadd.f32 %v945, %v1311
    %v1527 = vadd.f32 %v947, %v1313
    %v1528 = vadd.f32 %v1098, %v1464
    %v1529 = vadd.f32 %v951, %v1317
    %v1530 = vadd.f32 %v953, %v1319
    %v1531 = vadd.f32 %v1103, %v1469
    %v1532 = vadd.f32 %v957, %v1323
    %v1533 = vadd.f32 %v959, %v1325
    %v1534 = vadd.f32 %v1108, %v1474
    %v1535 = vadd.f32 %v963, %v1329
    %v1536 = vadd.f32 %v965, %v1331
    %v1537 = vadd.f32 %v1113, %v1479
    %v1538 = vadd.f32 %v969, %v1335
    %v1539 = vadd.f32 %v971, %v1337
    %v1540 = vadd.f32 %v1118, %v1484
    %v1541 = vadd.f32 %v975, %v1341
    %v1542 = vadd.f32 %v977, %v1343
    %v1543 = vadd.f32 %v1123, %v1489
    %v1544 = vadd.f32 %v981, %v1347
    %v1545 = vadd.f32 %v983, %v1349
    %v1546 = vadd.f32 %v1128, %v1494
    %v1547 = vadd.f32 %v987, %v1353
    %v1548 = vadd.f32 %v989, %v1355
    %v1549 = vadd.f32 %v1133, %v1499
    %1551 = vset.pattern.permute.xlu0 0
    %1552 = vperm.xlu0 %1551, %v38
    %v1553 = vpop.permute.xlu0 %1552
    %1556 = vset.pattern.permute.xlu0 0
    %1557 = vperm.xlu0 %1556, %v39
    %v1558 = vpop.permute.xlu0 %1557
    %1561 = vset.pattern.permute.xlu0 0
    %1562 = vperm.xlu0 %1561, %v40
    %v1563 = vpop.permute.xlu0 %1562
    %1566 = vset.pattern.permute.xlu0 0
    %1567 = vperm.xlu0 %1566, %v41
    %v1568 = vpop.permute.xlu0 %1567
    %1571 = vset.pattern.permute.xlu0 0
    %1572 = vperm.xlu0 %1571, %v42
    %v1573 = vpop.permute.xlu0 %1572
    %1576 = vset.pattern.permute.xlu0 0
    %1577 = vperm.xlu0 %1576, %v43
    %v1578 = vpop.permute.xlu0 %1577
    %1581 = vset.pattern.permute.xlu0 0
    %1582 = vperm.xlu0 %1581, %v44
    %v1583 = vpop.permute.xlu0 %1582
    %1586 = vset.pattern.permute.xlu0 0
    %1587 = vperm.xlu0 %1586, %v45
    %v1588 = vpop.permute.xlu0 %1587
    %1591 = vset.pattern.permute.xlu0 0
    %1592 = vperm.xlu0 %1591, %v46
    %v1593 = vpop.permute.xlu0 %1592
    %1596 = vset.pattern.permute.xlu0 0
    %1597 = vperm.xlu0 %1596, %v47
    %v1598 = vpop.permute.xlu0 %1597
    %1601 = vset.pattern.permute.xlu0 0
    %1602 = vperm.xlu0 %1601, %v48
    %v1603 = vpop.permute.xlu0 %1602
    %1606 = vset.pattern.permute.xlu0 0
    %1607 = vperm.xlu0 %1606, %v49
    %v1608 = vpop.permute.xlu0 %1607
    %1611 = vset.pattern.permute.xlu0 0
    %1612 = vperm.xlu0 %1611, %v50
    %v1613 = vpop.permute.xlu0 %1612
    %1616 = vset.pattern.permute.xlu0 0
    %1617 = vperm.xlu0 %1616, %v51
    %v1618 = vpop.permute.xlu0 %1617
    %1621 = vset.pattern.permute.xlu0 0
    %1622 = vperm.xlu0 %1621, %v52
    %v1623 = vpop.permute.xlu0 %1622
    %1626 = vset.pattern.permute.xlu0 0
    %1627 = vperm.xlu0 %1626, %v53
    %v1628 = vpop.permute.xlu0 %1627
    %v1630 = vadd.f32 %v1502, %v1553
    %v1631 = vadd.f32 %v1503, %v1553
    %v1632 = vadd.f32 %v1504, %v1553
    %v1633 = vadd.f32 %v1505, %v1558
    %v1634 = vadd.f32 %v1506, %v1558
    %v1635 = vadd.f32 %v1507, %v1558
    %v1636 = vadd.f32 %v1508, %v1563
    %v1637 = vadd.f32 %v1509, %v1563
    %v1638 = vadd.f32 %v1510, %v1563
    %v1639 = vadd.f32 %v1511, %v1568
    %v1640 = vadd.f32 %v1512, %v1568
    %v1641 = vadd.f32 %v1513, %v1568
    %v1642 = vadd.f32 %v1514, %v1573
    %v1643 = vadd.f32 %v1515, %v1573
    %v1644 = vadd.f32 %v1516, %v1573
    %v1645 = vadd.f32 %v1517, %v1578
    %v1646 = vadd.f32 %v1518, %v1578
    %v1647 = vadd.f32 %v1519, %v1578
    %v1648 = vadd.f32 %v1520, %v1583
    %v1649 = vadd.f32 %v1521, %v1583
    %v1650 = vadd.f32 %v1522, %v1583
    %v1651 = vadd.f32 %v1523, %v1588
    %v1652 = vadd.f32 %v1524, %v1588
    %v1653 = vadd.f32 %v1525, %v1588
    %v1654 = vadd.f32 %v1526, %v1593
    %v1655 = vadd.f32 %v1527, %v1593
    %v1656 = vadd.f32 %v1528, %v1593
    %v1657 = vadd.f32 %v1529, %v1598
    %v1658 = vadd.f32 %v1530, %v1598
    %v1659 = vadd.f32 %v1531, %v1598
    %v1660 = vadd.f32 %v1532, %v1603
    %v1661 = vadd.f32 %v1533, %v1603
    %v1662 = vadd.f32 %v1534, %v1603
    %v1663 = vadd.f32 %v1535, %v1608
    %v1664 = vadd.f32 %v1536, %v1608
    %v1665 = vadd.f32 %v1537, %v1608
    %v1666 = vadd.f32 %v1538, %v1613
    %v1667 = vadd.f32 %v1539, %v1613
    %v1668 = vadd.f32 %v1540, %v1613
    %v1669 = vadd.f32 %v1541, %v1618
    %v1670 = vadd.f32 %v1542, %v1618
    %v1671 = vadd.f32 %v1543, %v1618
    %v1672 = vadd.f32 %v1544, %v1623
    %v1673 = vadd.f32 %v1545, %v1623
    %v1674 = vadd.f32 %v1546, %v1623
    %v1675 = vadd.f32 %v1547, %v1628
    %v1676 = vadd.f32 %v1548, %v1628
    %v1677 = vadd.f32 %v1549, %v1628
    %v1678 = vmax.f32 %v1630, 0.0
    %v1679 = vmax.f32 %v1631, 0.0
    %v1680 = vmax.f32 %v1632, 0.0
    %v1681 = vmax.f32 %v1633, 0.0
    %v1682 = vmax.f32 %v1634, 0.0
    %v1683 = vmax.f32 %v1635, 0.0
    %v1684 = vmax.f32 %v1636, 0.0
    %v1685 = vmax.f32 %v1637, 0.0
    %v1686 = vmax.f32 %v1638, 0.0
    %v1687 = vmax.f32 %v1639, 0.0
    %v1688 = vmax.f32 %v1640, 0.0
    %v1689 = vmax.f32 %v1641, 0.0
    %v1690 = vmax.f32 %v1642, 0.0
    %v1691 = vmax.f32 %v1643, 0.0
    %v1692 = vmax.f32 %v1644, 0.0
    %v1693 = vmax.f32 %v1645, 0.0
    %v1694 = vmax.f32 %v1646, 0.0
    %v1695 = vmax.f32 %v1647, 0.0
    %v1696 = vmax.f32 %v1648, 0.0
    %v1697 = vmax.f32 %v1649, 0.0
    %v1698 = vmax.f32 %v1650, 0.0
    %v1699 = vmax.f32 %v1651, 0.0
    %v1700 = vmax.f32 %v1652, 0.0
    %v1701 = vmax.f32 %v1653, 0.0
    %v1702 = vmax.f32 %v1654, 0.0
    %v1703 = vmax.f32 %v1655, 0.0
    %v1704 = vmax.f32 %v1656, 0.0
    %v1705 = vmax.f32 %v1657, 0.0
    %v1706 = vmax.f32 %v1658, 0.0
    %v1707 = vmax.f32 %v1659, 0.0
    %v1708 = vmax.f32 %v1660, 0.0
    %v1709 = vmax.f32 %v1661, 0.0
    %v1710 = vmax.f32 %v1662, 0.0
    %v1711 = vmax.f32 %v1663, 0.0
    %v1712 = vmax.f32 %v1664, 0.0
    %v1713 = vmax.f32 %v1665, 0.0
    %v1714 = vmax.f32 %v1666, 0.0
    %v1715 = vmax.f32 %v1667, 0.0
    %v1716 = vmax.f32 %v1668, 0.0
    %v1717 = vmax.f32 %v1669, 0.0
    %v1718 = vmax.f32 %v1670, 0.0
    %v1719 = vmax.f32 %v1671, 0.0
    %v1720 = vmax.f32 %v1672, 0.0
    %v1721 = vmax.f32 %v1673, 0.0
    %v1722 = vmax.f32 %v1674, 0.0
    %v1723 = vmax.f32 %v1675, 0.0
    %v1724 = vmax.f32 %v1676, 0.0
    %v1725 = vmax.f32 %v1677, 0.0
    %1774 = vrot.lane.b32.xlu0 %v1678, 127
    %v1775 = vpop.permute.xlu0 %1774
    %1776 = vrot.lane.b32.xlu0 %v1679, 127
    %v1777 = vpop.permute.xlu0 %1776
    %1778 = vrot.lane.b32.xlu0 %v1680, 127
    %v1779 = vpop.permute.xlu0 %1778
    %1780 = vrot.lane.b32.xlu0 %v1681, 127
    %v1781 = vpop.permute.xlu0 %1780
    %1782 = vrot.lane.b32.xlu0 %v1682, 127
    %v1783 = vpop.permute.xlu0 %1782
    %1784 = vrot.lane.b32.xlu0 %v1683, 127
    %v1785 = vpop.permute.xlu0 %1784
    %1786 = vrot.lane.b32.xlu0 %v1684, 127
    %v1787 = vpop.permute.xlu0 %1786
    %1788 = vrot.lane.b32.xlu0 %v1685, 127
    %v1789 = vpop.permute.xlu0 %1788
    %1790 = vrot.lane.b32.xlu0 %v1686, 127
    %v1791 = vpop.permute.xlu0 %1790
    %1792 = vrot.lane.b32.xlu0 %v1687, 127
    %v1793 = vpop.permute.xlu0 %1792
    %1794 = vrot.lane.b32.xlu0 %v1688, 127
    %v1795 = vpop.permute.xlu0 %1794
    %1796 = vrot.lane.b32.xlu0 %v1689, 127
    %v1797 = vpop.permute.xlu0 %1796
    %1798 = vrot.lane.b32.xlu0 %v1690, 127
    %v1799 = vpop.permute.xlu0 %1798
    %1800 = vrot.lane.b32.xlu0 %v1691, 127
    %v1801 = vpop.permute.xlu0 %1800
    %1802 = vrot.lane.b32.xlu0 %v1692, 127
    %v1803 = vpop.permute.xlu0 %1802
    %1804 = vrot.lane.b32.xlu0 %v1693, 127
    %v1805 = vpop.permute.xlu0 %1804
    %1806 = vrot.lane.b32.xlu0 %v1694, 127
    %v1807 = vpop.permute.xlu0 %1806
    %1808 = vrot.lane.b32.xlu0 %v1695, 127
    %v1809 = vpop.permute.xlu0 %1808
    %1810 = vrot.lane.b32.xlu0 %v1696, 127
    %v1811 = vpop.permute.xlu0 %1810
    %1812 = vrot.lane.b32.xlu0 %v1697, 127
    %v1813 = vpop.permute.xlu0 %1812
    %1814 = vrot.lane.b32.xlu0 %v1698, 127
    %v1815 = vpop.permute.xlu0 %1814
    %1816 = vrot.lane.b32.xlu0 %v1699, 127
    %v1817 = vpop.permute.xlu0 %1816
    %1818 = vrot.lane.b32.xlu0 %v1700, 127
    %v1819 = vpop.permute.xlu0 %1818
    %1820 = vrot.lane.b32.xlu0 %v1701, 127
    %v1821 = vpop.permute.xlu0 %1820
    %1822 = vrot.lane.b32.xlu0 %v1702, 127
    %v1823 = vpop.permute.xlu0 %1822
    %1824 = vrot.lane.b32.xlu0 %v1703, 127
    %v1825 = vpop.permute.xlu0 %1824
    %1826 = vrot.lane.b32.xlu0 %v1704, 127
    %v1827 = vpop.permute.xlu0 %1826
    %1828 = vrot.lane.b32.xlu0 %v1705, 127
    %v1829 = vpop.permute.xlu0 %1828
    %1830 = vrot.lane.b32.xlu0 %v1706, 127
    %v1831 = vpop.permute.xlu0 %1830
    %1832 = vrot.lane.b32.xlu0 %v1707, 127
    %v1833 = vpop.permute.xlu0 %1832
    %1834 = vrot.lane.b32.xlu0 %v1708, 127
    %v1835 = vpop.permute.xlu0 %1834
    %1836 = vrot.lane.b32.xlu0 %v1709, 127
    %v1837 = vpop.permute.xlu0 %1836
    %1838 = vrot.lane.b32.xlu0 %v1710, 127
    %v1839 = vpop.permute.xlu0 %1838
    %1840 = vrot.lane.b32.xlu0 %v1711, 127
    %v1841 = vpop.permute.xlu0 %1840
    %1842 = vrot.lane.b32.xlu0 %v1712, 127
    %v1843 = vpop.permute.xlu0 %1842
    %1844 = vrot.lane.b32.xlu0 %v1713, 127
    %v1845 = vpop.permute.xlu0 %1844
    %1846 = vrot.lane.b32.xlu0 %v1714, 127
    %v1847 = vpop.permute.xlu0 %1846
    %1848 = vrot.lane.b32.xlu0 %v1715, 127
    %v1849 = vpop.permute.xlu0 %1848
    %1850 = vrot.lane.b32.xlu0 %v1716, 127
    %v1851 = vpop.permute.xlu0 %1850
    %1852 = vrot.lane.b32.xlu0 %v1717, 127
    %v1853 = vpop.permute.xlu0 %1852
    %1854 = vrot.lane.b32.xlu0 %v1718, 127
    %v1855 = vpop.permute.xlu0 %1854
    %1856 = vrot.lane.b32.xlu0 %v1719, 127
    %v1857 = vpop.permute.xlu0 %1856
    %1858 = vrot.lane.b32.xlu0 %v1720, 127
    %v1859 = vpop.permute.xlu0 %1858
    %1860 = vrot.lane.b32.xlu0 %v1721, 127
    %v1861 = vpop.permute.xlu0 %1860
    %1862 = vrot.lane.b32.xlu0 %v1722, 127
    %v1863 = vpop.permute.xlu0 %1862
    %1864 = vrot.lane.b32.xlu0 %v1723, 127
    %v1865 = vpop.permute.xlu0 %1864
    %1866 = vrot.lane.b32.xlu0 %v1724, 127
    %v1867 = vpop.permute.xlu0 %1866
    %1868 = vrot.lane.b32.xlu0 %v1725, 127
    %v1869 = vpop.permute.xlu0 %1868
    %v1870 = vsel %vm421, %v1775, %v1777
    %v1871 = vsel %vm421, %v1777, %v1779
    %v1872 = vsel %vm421, %v1781, %v1783
    %v1873 = vsel %vm421, %v1783, %v1785
    %v1874 = vsel %vm421, %v1787, %v1789
    %v1875 = vsel %vm421, %v1789, %v1791
    %v1876 = vsel %vm421, %v1793, %v1795
    %v1877 = vsel %vm421, %v1795, %v1797
    %v1878 = vsel %vm421, %v1799, %v1801
    %v1879 = vsel %vm421, %v1801, %v1803
    %v1880 = vsel %vm421, %v1805, %v1807
    %v1881 = vsel %vm421, %v1807, %v1809
    %v1882 = vsel %vm421, %v1811, %v1813
    %v1883 = vsel %vm421, %v1813, %v1815
    %v1884 = vsel %vm421, %v1817, %v1819
    %v1885 = vsel %vm421, %v1819, %v1821
    %v1886 = vsel %vm421, %v1823, %v1825
    %v1887 = vsel %vm421, %v1825, %v1827
    %v1888 = vsel %vm421, %v1829, %v1831
    %v1889 = vsel %vm421, %v1831, %v1833
    %v1890 = vsel %vm421, %v1835, %v1837
    %v1891 = vsel %vm421, %v1837, %v1839
    %v1892 = vsel %vm421, %v1841, %v1843
    %v1893 = vsel %vm421, %v1843, %v1845
    %v1894 = vsel %vm421, %v1847, %v1849
    %v1895 = vsel %vm421, %v1849, %v1851
    %v1896 = vsel %vm421, %v1853, %v1855
    %v1897 = vsel %vm421, %v1855, %v1857
    %v1898 = vsel %vm421, %v1859, %v1861
    %v1899 = vsel %vm421, %v1861, %v1863
    %v1900 = vsel %vm421, %v1865, %v1867
    %v1901 = vsel %vm421, %v1867, %v1869
    %v1950 = vmax.f32 %v1678, %v1870
    %v1951 = vmax.f32 %v1679, %v1871
    %v1952 = vmax.f32 %v1680, %v1779
    %v1953 = vmax.f32 %v1681, %v1872
    %v1954 = vmax.f32 %v1682, %v1873
    %v1955 = vmax.f32 %v1683, %v1785
    %v1956 = vmax.f32 %v1684, %v1874
    %v1957 = vmax.f32 %v1685, %v1875
    %v1958 = vmax.f32 %v1686, %v1791
    %v1959 = vmax.f32 %v1687, %v1876
    %v1960 = vmax.f32 %v1688, %v1877
    %v1961 = vmax.f32 %v1689, %v1797
    %v1962 = vmax.f32 %v1690, %v1878
    %v1963 = vmax.f32 %v1691, %v1879
    %v1964 = vmax.f32 %v1692, %v1803
    %v1965 = vmax.f32 %v1693, %v1880
    %v1966 = vmax.f32 %v1694, %v1881
    %v1967 = vmax.f32 %v1695, %v1809
    %v1968 = vmax.f32 %v1696, %v1882
    %v1969 = vmax.f32 %v1697, %v1883
    %v1970 = vmax.f32 %v1698, %v1815
    %v1971 = vmax.f32 %v1699, %v1884
    %v1972 = vmax.f32 %v1700, %v1885
    %v1973 = vmax.f32 %v1701, %v1821
    %v1974 = vmax.f32 %v1702, %v1886
    %v1975 = vmax.f32 %v1703, %v1887
    %v1976 = vmax.f32 %v1704, %v1827
    %v1977 = vmax.f32 %v1705, %v1888
    %v1978 = vmax.f32 %v1706, %v1889
    %v1979 = vmax.f32 %v1707, %v1833
    %v1980 = vmax.f32 %v1708, %v1890
    %v1981 = vmax.f32 %v1709, %v1891
    %v1982 = vmax.f32 %v1710, %v1839
    %v1983 = vmax.f32 %v1711, %v1892
    %v1984 = vmax.f32 %v1712, %v1893
    %v1985 = vmax.f32 %v1713, %v1845
    %v1986 = vmax.f32 %v1714, %v1894
    %v1987 = vmax.f32 %v1715, %v1895
    %v1988 = vmax.f32 %v1716, %v1851
    %v1989 = vmax.f32 %v1717, %v1896
    %v1990 = vmax.f32 %v1718, %v1897
    %v1991 = vmax.f32 %v1719, %v1857
    %v1992 = vmax.f32 %v1720, %v1898
    %v1993 = vmax.f32 %v1721, %v1899
    %v1994 = vmax.f32 %v1722, %v1863
    %v1995 = vmax.f32 %v1723, %v1900
    %v1996 = vmax.f32 %v1724, %v1901
    %v1997 = vmax.f32 %v1725, %v1869
    %1998 = vrot.lane.b32.xlu0 %v1678, 126
    %v1999 = vpop.permute.xlu0 %1998
    %2000 = vrot.lane.b32.xlu0 %v1679, 126
    %v2001 = vpop.permute.xlu0 %2000
    %2002 = vrot.lane.b32.xlu0 %v1680, 126
    %v2003 = vpop.permute.xlu0 %2002
    %2004 = vrot.lane.b32.xlu0 %v1681, 126
    %v2005 = vpop.permute.xlu0 %2004
    %2006 = vrot.lane.b32.xlu0 %v1682, 126
    %v2007 = vpop.permute.xlu0 %2006
    %2008 = vrot.lane.b32.xlu0 %v1683, 126
    %v2009 = vpop.permute.xlu0 %2008
    %2010 = vrot.lane.b32.xlu0 %v1684, 126
    %v2011 = vpop.permute.xlu0 %2010
    %2012 = vrot.lane.b32.xlu0 %v1685, 126
    %v2013 = vpop.permute.xlu0 %2012
    %2014 = vrot.lane.b32.xlu0 %v1686, 126
    %v2015 = vpop.permute.xlu0 %2014
    %2016 = vrot.lane.b32.xlu0 %v1687, 126
    %v2017 = vpop.permute.xlu0 %2016
    %2018 = vrot.lane.b32.xlu0 %v1688, 126
    %v2019 = vpop.permute.xlu0 %2018
    %2020 = vrot.lane.b32.xlu0 %v1689, 126
    %v2021 = vpop.permute.xlu0 %2020
    %2022 = vrot.lane.b32.xlu0 %v1690, 126
    %v2023 = vpop.permute.xlu0 %2022
    %2024 = vrot.lane.b32.xlu0 %v1691, 126
    %v2025 = vpop.permute.xlu0 %2024
    %2026 = vrot.lane.b32.xlu0 %v1692, 126
    %v2027 = vpop.permute.xlu0 %2026
    %2028 = vrot.lane.b32.xlu0 %v1693, 126
    %v2029 = vpop.permute.xlu0 %2028
    %2030 = vrot.lane.b32.xlu0 %v1694, 126
    %v2031 = vpop.permute.xlu0 %2030
    %2032 = vrot.lane.b32.xlu0 %v1695, 126
    %v2033 = vpop.permute.xlu0 %2032
    %2034 = vrot.lane.b32.xlu0 %v1696, 126
    %v2035 = vpop.permute.xlu0 %2034
    %2036 = vrot.lane.b32.xlu0 %v1697, 126
    %v2037 = vpop.permute.xlu0 %2036
    %2038 = vrot.lane.b32.xlu0 %v1698, 126
    %v2039 = vpop.permute.xlu0 %2038
    %2040 = vrot.lane.b32.xlu0 %v1699, 126
    %v2041 = vpop.permute.xlu0 %2040
    %2042 = vrot.lane.b32.xlu0 %v1700, 126
    %v2043 = vpop.permute.xlu0 %2042
    %2044 = vrot.lane.b32.xlu0 %v1701, 126
    %v2045 = vpop.permute.xlu0 %2044
    %2046 = vrot.lane.b32.xlu0 %v1702, 126
    %v2047 = vpop.permute.xlu0 %2046
    %2048 = vrot.lane.b32.xlu0 %v1703, 126
    %v2049 = vpop.permute.xlu0 %2048
    %2050 = vrot.lane.b32.xlu0 %v1704, 126
    %v2051 = vpop.permute.xlu0 %2050
    %2052 = vrot.lane.b32.xlu0 %v1705, 126
    %v2053 = vpop.permute.xlu0 %2052
    %2054 = vrot.lane.b32.xlu0 %v1706, 126
    %v2055 = vpop.permute.xlu0 %2054
    %2056 = vrot.lane.b32.xlu0 %v1707, 126
    %v2057 = vpop.permute.xlu0 %2056
    %2058 = vrot.lane.b32.xlu0 %v1708, 126
    %v2059 = vpop.permute.xlu0 %2058
    %2060 = vrot.lane.b32.xlu0 %v1709, 126
    %v2061 = vpop.permute.xlu0 %2060
    %2062 = vrot.lane.b32.xlu0 %v1710, 126
    %v2063 = vpop.permute.xlu0 %2062
    %2064 = vrot.lane.b32.xlu0 %v1711, 126
    %v2065 = vpop.permute.xlu0 %2064
    %2066 = vrot.lane.b32.xlu0 %v1712, 126
    %v2067 = vpop.permute.xlu0 %2066
    %2068 = vrot.lane.b32.xlu0 %v1713, 126
    %v2069 = vpop.permute.xlu0 %2068
    %2070 = vrot.lane.b32.xlu0 %v1714, 126
    %v2071 = vpop.permute.xlu0 %2070
    %2072 = vrot.lane.b32.xlu0 %v1715, 126
    %v2073 = vpop.permute.xlu0 %2072
    %2074 = vrot.lane.b32.xlu0 %v1716, 126
    %v2075 = vpop.permute.xlu0 %2074
    %2076 = vrot.lane.b32.xlu0 %v1717, 126
    %v2077 = vpop.permute.xlu0 %2076
    %2078 = vrot.lane.b32.xlu0 %v1718, 126
    %v2079 = vpop.permute.xlu0 %2078
    %2080 = vrot.lane.b32.xlu0 %v1719, 126
    %v2081 = vpop.permute.xlu0 %2080
    %2082 = vrot.lane.b32.xlu0 %v1720, 126
    %v2083 = vpop.permute.xlu0 %2082
    %2084 = vrot.lane.b32.xlu0 %v1721, 126
    %v2085 = vpop.permute.xlu0 %2084
    %2086 = vrot.lane.b32.xlu0 %v1722, 126
    %v2087 = vpop.permute.xlu0 %2086
    %2088 = vrot.lane.b32.xlu0 %v1723, 126
    %v2089 = vpop.permute.xlu0 %2088
    %2090 = vrot.lane.b32.xlu0 %v1724, 126
    %v2091 = vpop.permute.xlu0 %2090
    %2092 = vrot.lane.b32.xlu0 %v1725, 126
    %v2093 = vpop.permute.xlu0 %2092
    %v2094 = vsel %vm1142, %v1999, %v2001
    %v2095 = vsel %vm1142, %v2001, %v2003
    %v2096 = vsel %vm1142, %v2005, %v2007
    %v2097 = vsel %vm1142, %v2007, %v2009
    %v2098 = vsel %vm1142, %v2011, %v2013
    %v2099 = vsel %vm1142, %v2013, %v2015
    %v2100 = vsel %vm1142, %v2017, %v2019
    %v2101 = vsel %vm1142, %v2019, %v2021
    %v2102 = vsel %vm1142, %v2023, %v2025
    %v2103 = vsel %vm1142, %v2025, %v2027
    %v2104 = vsel %vm1142, %v2029, %v2031
    %v2105 = vsel %vm1142, %v2031, %v2033
    %v2106 = vsel %vm1142, %v2035, %v2037
    %v2107 = vsel %vm1142, %v2037, %v2039
    %v2108 = vsel %vm1142, %v2041, %v2043
    %v2109 = vsel %vm1142, %v2043, %v2045
    %v2110 = vsel %vm1142, %v2047, %v2049
    %v2111 = vsel %vm1142, %v2049, %v2051
    %v2112 = vsel %vm1142, %v2053, %v2055
    %v2113 = vsel %vm1142, %v2055, %v2057
    %v2114 = vsel %vm1142, %v2059, %v2061
    %v2115 = vsel %vm1142, %v2061, %v2063
    %v2116 = vsel %vm1142, %v2065, %v2067
    %v2117 = vsel %vm1142, %v2067, %v2069
    %v2118 = vsel %vm1142, %v2071, %v2073
    %v2119 = vsel %vm1142, %v2073, %v2075
    %v2120 = vsel %vm1142, %v2077, %v2079
    %v2121 = vsel %vm1142, %v2079, %v2081
    %v2122 = vsel %vm1142, %v2083, %v2085
    %v2123 = vsel %vm1142, %v2085, %v2087
    %v2124 = vsel %vm1142, %v2089, %v2091
    %v2125 = vsel %vm1142, %v2091, %v2093
    %v2174 = vmax.f32 %v1950, %v2094
    %v2175 = vmax.f32 %v1951, %v2095
    %v2176 = vmax.f32 %v1952, %v2003
    %v2177 = vmax.f32 %v1953, %v2096
    %v2178 = vmax.f32 %v1954, %v2097
    %v2179 = vmax.f32 %v1955, %v2009
    %v2180 = vmax.f32 %v1956, %v2098
    %v2181 = vmax.f32 %v1957, %v2099
    %v2182 = vmax.f32 %v1958, %v2015
    %v2183 = vmax.f32 %v1959, %v2100
    %v2184 = vmax.f32 %v1960, %v2101
    %v2185 = vmax.f32 %v1961, %v2021
    %v2186 = vmax.f32 %v1962, %v2102
    %v2187 = vmax.f32 %v1963, %v2103
    %v2188 = vmax.f32 %v1964, %v2027
    %v2189 = vmax.f32 %v1965, %v2104
    %v2190 = vmax.f32 %v1966, %v2105
    %v2191 = vmax.f32 %v1967, %v2033
    %v2192 = vmax.f32 %v1968, %v2106
    %v2193 = vmax.f32 %v1969, %v2107
    %v2194 = vmax.f32 %v1970, %v2039
    %v2195 = vmax.f32 %v1971, %v2108
    %v2196 = vmax.f32 %v1972, %v2109
    %v2197 = vmax.f32 %v1973, %v2045
    %v2198 = vmax.f32 %v1974, %v2110
    %v2199 = vmax.f32 %v1975, %v2111
    %v2200 = vmax.f32 %v1976, %v2051
    %v2201 = vmax.f32 %v1977, %v2112
    %v2202 = vmax.f32 %v1978, %v2113
    %v2203 = vmax.f32 %v1979, %v2057
    %v2204 = vmax.f32 %v1980, %v2114
    %v2205 = vmax.f32 %v1981, %v2115
    %v2206 = vmax.f32 %v1982, %v2063
    %v2207 = vmax.f32 %v1983, %v2116
    %v2208 = vmax.f32 %v1984, %v2117
    %v2209 = vmax.f32 %v1985, %v2069
    %v2210 = vmax.f32 %v1986, %v2118
    %v2211 = vmax.f32 %v1987, %v2119
    %v2212 = vmax.f32 %v1988, %v2075
    %v2213 = vmax.f32 %v1989, %v2120
    %v2214 = vmax.f32 %v1990, %v2121
    %v2215 = vmax.f32 %v1991, %v2081
    %v2216 = vmax.f32 %v1992, %v2122
    %v2217 = vmax.f32 %v1993, %v2123
    %v2218 = vmax.f32 %v1994, %v2087
    %v2219 = vmax.f32 %v1995, %v2124
    %v2220 = vmax.f32 %v1996, %v2125
    %v2221 = vmax.f32 %v1997, %v2093
    %vm2222 = vcmask 343040
    %v2224 = vsel %vm2222, %v2176, 0
    %v2227 = vsel %vm2222, %v2179, 0
    %v2230 = vsel %vm2222, %v2182, 0
    %v2233 = vsel %vm2222, %v2185, 0
    %v2236 = vsel %vm2222, %v2188, 0
    %v2239 = vsel %vm2222, %v2191, 0
    %v2242 = vsel %vm2222, %v2194, 0
    %v2245 = vsel %vm2222, %v2197, 0
    %v2248 = vsel %vm2222, %v2200, 0
    %v2251 = vsel %vm2222, %v2203, 0
    %v2254 = vsel %vm2222, %v2206, 0
    %v2257 = vsel %vm2222, %v2209, 0
    %v2260 = vsel %vm2222, %v2212, 0
    %v2263 = vsel %vm2222, %v2215, 0
    %v2266 = vsel %vm2222, %v2218, 0
    %v2269 = vsel %vm2222, %v2221, 0
    %vm2271 = vcmask 1041408
    %v2273 = vsel %vm2271, %v390, 0
    %v2276 = vsel %vm2271, %v391, 0
    %2278 = vmatprep.subr.mxu0 %v317
    %2279 = vmatpush1.msra.mxu0 %v316
    %2280 = vmatprep.subr.mxu0 %v319
    %2281 = vmatpush1.msra.mxu0 %v318
    %2282 = vmatprep.subr.mxu0 %v321
    %2283 = vmatpush1.msra.mxu0 %v320
    %2284 = vmatprep.subr.mxu0 %v323
    %2285 = vmatpush1.msra.mxu0 %v322
    %2286 = vmatprep.subr.mxu0 %v325
    %2287 = vmatpush1.msra.mxu0 %v324
    %2288 = vmatprep.subr.mxu0 %v327
    %2289 = vmatpush1.msra.mxu0 %v326
    %2290 = vmatprep.subr.mxu0 %v329
    %2291 = vmatpush1.msra.mxu0 %v328
    %2292 = vmatprep.subr.mxu0 %v331
    %2293 = vmatpush1.msra.mxu0 %v330
    %2294 = vmatprep.subr.mxu0 %v333
    %2295 = vmatpush1.msra.mxu0 %v332
    %2296 = vmatprep.subr.mxu0 %v335
    %2297 = vmatpush1.msra.mxu0 %v334
    %2298 = vmatprep.subr.mxu0 %v337
    %2299 = vmatpush1.msra.mxu0 %v336
    %2300 = vmatprep.subr.mxu0 %v339
    %2301 = vmatpush1.msra.mxu0 %v338
    %2302 = vmatprep.subr.mxu0 %v341
    %2303 = vmatpush1.msra.mxu0 %v340
    %2304 = vmatprep.subr.mxu0 %v343
    %2305 = vmatpush1.msra.mxu0 %v342
    %2306 = vmatprep.subr.mxu0 %v345
    %2307 = vmatpush1.msra.mxu0 %v344
    %2308 = vmatprep.subr.mxu0 %v347
    %2309 = vmatpush1.msra.mxu0 %v346
    %2310 = vmatprep.subr.mxu0 %v349
    %2311 = vmatpush1.msra.mxu0 %v348
    %2312 = vmatprep.subr.mxu0 %v351
    %2313 = vmatpush1.msra.mxu0 %v350
    %2314 = vmatprep.subr.mxu0 %v353
    %2315 = vmatpush1.msra.mxu0 %v352
    %2316 = vmatprep.subr.mxu0 %v355
    %2317 = vmatpush1.msra.mxu0 %v354
    %2318 = vmatprep.subr.mxu0 %v357
    %2319 = vmatpush1.msra.mxu0 %v356
    %2320 = vmatprep.subr.mxu0 %v359
    %2321 = vmatpush1.msra.mxu0 %v358
    %2322 = vmatprep.subr.mxu0 %v361
    %2323 = vmatpush1.msra.mxu0 %v360
    %2324 = vmatprep.subr.mxu0 %v363
    %2325 = vmatpush1.msra.mxu0 %v362
    %2326 = vmatprep.subr.mxu0 %v365
    %2327 = vmatpush1.msra.mxu0 %v364
    %2328 = vmatprep.subr.mxu0 %v367
    %2329 = vmatpush1.msra.mxu0 %v366
    %2330 = vmatprep.subr.mxu0 %v369
    %2331 = vmatpush1.msra.mxu0 %v368
    %2332 = vmatprep.subr.mxu0 %v371
    %2333 = vmatpush1.msra.mxu0 %v370
    %2334 = vmatprep.subr.mxu0 %v373
    %2335 = vmatpush1.msra.mxu0 %v372
    %2336 = vmatprep.subr.mxu0 %v375
    %2337 = vmatpush1.msra.mxu0 %v374
    %2338 = vmatprep.subr.mxu0 %v377
    %2339 = vmatpush1.msra.mxu0 %v376
    %2340 = vmatprep.subr.mxu0 %v379
    %2341 = vmatpush1.msra.mxu0 %v378
    %2342 = vmatprep.mubr.f32.mxu0 %v2175
    %2343 = vmatmul.mubr.f32.gmra.mrb[0].mxu0 %v2174
    %v2344 = vpop.f32.mrb[0].mxu0
    %v2345 = vadd.f32 0.0, %v2344
    %v2346 = vpop.f32.mrb[0].mxu0
    %v2347 = vadd.f32 0.0, %v2346
    %2348 = vmatprep.mubr.f32.mxu0 %v2178
    %2349 = vmatmul.mubr.f32.gmra.mrb[0].mxu0 %v2177
    %v2350 = vpop.f32.mrb[0].mxu0
    %v2351 = vadd.f32 0.0, %v2350
    %v2352 = vpop.f32.mrb[0].mxu0
    %v2353 = vadd.f32 0.0, %v2352
    %2354 = vmatprep.mubr.f32.mxu0 %v2181
    %2355 = vmatmul.mubr.f32.gmra.mrb[0].mxu0 %v2180
    %v2356 = vpop.f32.mrb[0].mxu0
    %v2357 = vadd.f32 0.0, %v2356
    %v2358 = vpop.f32.mrb[0].mxu0
    %v2359 = vadd.f32 0.0, %v2358
    %2360 = vmatprep.mubr.f32.mxu0 %v2184
    %2361 = vmatmul.mubr.f32.gmra.mrb[0].mxu0 %v2183
    %v2362 = vpop.f32.mrb[0].mxu0
    %v2363 = vadd.f32 0.0, %v2362
    %v2364 = vpop.f32.mrb[0].mxu0
    %v2365 = vadd.f32 0.0, %v2364
    %2366 = vmatprep.mubr.f32.mxu0 %v2187
    %2367 = vmatmul.mubr.f32.gmra.mrb[0].mxu0 %v2186
    %v2368 = vpop.f32.mrb[0].mxu0
    %v2369 = vadd.f32 0.0, %v2368
    %v2370 = vpop.f32.mrb[0].mxu0
    %v2371 = vadd.f32 0.0, %v2370
    %2372 = vmatprep.mubr.f32.mxu0 %v2190
    %2373 = vmatmul.mubr.f32.gmra.mrb[0].mxu0 %v2189
    %v2374 = vpop.f32.mrb[0].mxu0
    %v2375 = vadd.f32 0.0, %v2374
    %v2376 = vpop.f32.mrb[0].mxu0
    %v2377 = vadd.f32 0.0, %v2376
    %2378 = vmatprep.mubr.f32.mxu0 %v2193
    %2379 = vmatmul.mubr.f32.gmra.mrb[0].mxu0 %v2192
    %v2380 = vpop.f32.mrb[0].mxu0
    %v2381 = vadd.f32 0.0, %v2380
    %v2382 = vpop.f32.mrb[0].mxu0
    %v2383 = vadd.f32 0.0, %v2382
    %2384 = vmatprep.mubr.f32.mxu0 %v2196
    %2385 = vmatmul.mubr.f32.gmra.mrb[0].mxu0 %v2195
    %v2386 = vpop.f32.mrb[0].mxu0
    %v2387 = vadd.f32 0.0, %v2386
    %v2388 = vpop.f32.mrb[0].mxu0
    %v2389 = vadd.f32 0.0, %v2388
    %2390 = vmatprep.mubr.f32.mxu0 %v2199
    %2391 = vmatmul.mubr.f32.gmra.mrb[0].mxu0 %v2198
    %v2392 = vpop.f32.mrb[0].mxu0
    %v2393 = vadd.f32 0.0, %v2392
    %v2394 = vpop.f32.mrb[0].mxu0
    %v2395 = vadd.f32 0.0, %v2394
    %2396 = vmatprep.mubr.f32.mxu0 %v2202
    %2397 = vmatmul.mubr.f32.gmra.mrb[0].mxu0 %v2201
    %v2398 = vpop.f32.mrb[0].mxu0
    %v2399 = vadd.f32 0.0, %v2398
    %v2400 = vpop.f32.mrb[0].mxu0
    %v2401 = vadd.f32 0.0, %v2400
    %2402 = vmatprep.mubr.f32.mxu0 %v2205
    %2403 = vmatmul.mubr.f32.gmra.mrb[0].mxu0 %v2204
    %v2404 = vpop.f32.mrb[0].mxu0
    %v2405 = vadd.f32 0.0, %v2404
    %v2406 = vpop.f32.mrb[0].mxu0
    %v2407 = vadd.f32 0.0, %v2406
    %2408 = vmatprep.mubr.f32.mxu0 %v2208
    %2409 = vmatmul.mubr.f32.gmra.mrb[0].mxu0 %v2207
    %v2410 = vpop.f32.mrb[0].mxu0
    %v2411 = vadd.f32 0.0, %v2410
    %v2412 = vpop.f32.mrb[0].mxu0
    %v2413 = vadd.f32 0.0, %v2412
    %2414 = vmatprep.mubr.f32.mxu0 %v2211
    %2415 = vmatmul.mubr.f32.gmra.mrb[0].mxu0 %v2210
    %v2416 = vpop.f32.mrb[0].mxu0
    %v2417 = vadd.f32 0.0, %v2416
    %v2418 = vpop.f32.mrb[0].mxu0
    %v2419 = vadd.f32 0.0, %v2418
    %2420 = vmatprep.mubr.f32.mxu0 %v2214
    %2421 = vmatmul.mubr.f32.gmra.mrb[0].mxu0 %v2213
    %v2422 = vpop.f32.mrb[0].mxu0
    %v2423 = vadd.f32 0.0, %v2422
    %v2424 = vpop.f32.mrb[0].mxu0
    %v2425 = vadd.f32 0.0, %v2424
    %2426 = vmatprep.mubr.f32.mxu0 %v2217
    %2427 = vmatmul.mubr.f32.gmra.mrb[0].mxu0 %v2216
    %v2428 = vpop.f32.mrb[0].mxu0
    %v2429 = vadd.f32 0.0, %v2428
    %v2430 = vpop.f32.mrb[0].mxu0
    %v2431 = vadd.f32 0.0, %v2430
    %2432 = vmatprep.mubr.f32.mxu0 %v2220
    %2433 = vmatmul.mubr.f32.gmra.mrb[0].mxu0 %v2219
    %v2434 = vpop.f32.mrb[0].mxu0
    %v2435 = vadd.f32 0.0, %v2434
    %v2436 = vpop.f32.mrb[0].mxu0
    %v2437 = vadd.f32 0.0, %v2436
    %2438 = vdwg.mxu0
    %2439 = vmatprep.subr.mxu0 %v381
    %2440 = vmatpush1.msra.mxu0 %v380
    %2441 = vmatprep.subr.mxu0 %v383
    %2442 = vmatpush1.msra.mxu0 %v382
    %2443 = vmatprep.subr.mxu0 %v385
    %2444 = vmatpush1.msra.mxu0 %v384
    %2445 = vmatprep.subr.mxu0 %v387
    %2446 = vmatpush1.msra.mxu0 %v386
    %2447 = vmatprep.subr.mxu0 %v389
    %2448 = vmatpush1.msra.mxu0 %v388
    %2449 = vmatprep.subr.mxu0 %v2276
    %2450 = vmatpush1.msra.mxu0 %v2273
    %2451 = vmatprep.subr.mxu0 0.0
    %2452 = vmatpush1.msra.mxu0 0.0
    %2453 = vmatprep.subr.mxu0 0.0
    %2454 = vmatpush1.msra.mxu0 0.0
    %2455 = vmatprep.subr.mxu0 0.0
    %2456 = vmatpush1.msra.mxu0 0.0
    %2457 = vmatprep.subr.mxu0 0.0
    %2458 = vmatpush1.msra.mxu0 0.0
    %2459 = vmatprep.subr.mxu0 0.0
    %2460 = vmatpush1.msra.mxu0 0.0
    %2461 = vmatprep.subr.mxu0 0.0
    %2462 = vmatpush1.msra.mxu0 0.0
    %2463 = vmatprep.subr.mxu0 0.0
    %2464 = vmatpush1.msra.mxu0 0.0
    %2465 = vmatprep.subr.mxu0 0.0
    %2466 = vmatpush1.msra.mxu0 0.0
    %2467 = vmatprep.subr.mxu0 0.0
    %2468 = vmatpush1.msra.mxu0 0.0
    %2469 = vmatprep.subr.mxu0 0.0
    %2470 = vmatpush1.msra.mxu0 0.0
    %2471 = vmatprep.subr.mxu0 0.0
    %2472 = vmatpush1.msra.mxu0 0.0
    %2473 = vmatprep.subr.mxu0 0.0
    %2474 = vmatpush1.msra.mxu0 0.0
    %2475 = vmatprep.subr.mxu0 0.0
    %2476 = vmatpush1.msra.mxu0 0.0
    %2477 = vmatprep.subr.mxu0 0.0
    %2478 = vmatpush1.msra.mxu0 0.0
    %2479 = vmatprep.subr.mxu0 0.0
    %2480 = vmatpush1.msra.mxu0 0.0
    %2481 = vmatprep.subr.mxu0 0.0
    %2482 = vmatpush1.msra.mxu0 0.0
    %2483 = vmatprep.subr.mxu0 0.0
    %2484 = vmatpush1.msra.mxu0 0.0
    %2485 = vmatprep.subr.mxu0 0.0
    %2486 = vmatpush1.msra.mxu0 0.0
    %2487 = vmatprep.subr.mxu0 0.0
    %2488 = vmatpush1.msra.mxu0 0.0
    %2489 = vmatprep.subr.mxu0 0.0
    %2490 = vmatpush1.msra.mxu0 0.0
    %2491 = vmatprep.subr.mxu0 0.0
    %2492 = vmatpush1.msra.mxu0 0.0
    %2493 = vmatprep.subr.mxu0 0.0
    %2494 = vmatpush1.msra.mxu0 0.0
    %2495 = vmatprep.subr.mxu0 0.0
    %2496 = vmatpush1.msra.mxu0 0.0
    %2497 = vmatprep.subr.mxu0 0.0
    %2498 = vmatpush1.msra.mxu0 0.0
    %2499 = vmatprep.subr.mxu0 0.0
    %2500 = vmatpush1.msra.mxu0 0.0
    %2501 = vmatprep.subr.mxu0 0.0
    %2502 = vmatpush1.msra.mxu0 0.0
    %2503 = vmatprep.mubr.f32.mxu0 0.0
    %2504 = vmatmul.mubr.f32.gmra.mrb[0].mxu0 %v2224
    %v2505 = vpop.f32.mrb[0].mxu0
    %v2506 = vadd.f32 %v2345, %v2505
    %v2507 = vpop.f32.mrb[0].mxu0
    %v2508 = vadd.f32 %v2347, %v2507
    %2509 = vmatprep.mubr.f32.mxu0 0.0
    %2510 = vmatmul.mubr.f32.gmra.mrb[0].mxu0 %v2227
    %v2511 = vpop.f32.mrb[0].mxu0
    %v2512 = vadd.f32 %v2351, %v2511
    %v2513 = vpop.f32.mrb[0].mxu0
    %v2514 = vadd.f32 %v2353, %v2513
    %2515 = vmatprep.mubr.f32.mxu0 0.0
    %2516 = vmatmul.mubr.f32.gmra.mrb[0].mxu0 %v2230
    %v2517 = vpop.f32.mrb[0].mxu0
    %v2518 = vadd.f32 %v2357, %v2517
    %v2519 = vpop.f32.mrb[0].mxu0
    %v2520 = vadd.f32 %v2359, %v2519
    %2521 = vmatprep.mubr.f32.mxu0 0.0
    %2522 = vmatmul.mubr.f32.gmra.mrb[0].mxu0 %v2233
    %v2523 = vpop.f32.mrb[0].mxu0
    %v2524 = vadd.f32 %v2363, %v2523
    %v2525 = vpop.f32.mrb[0].mxu0
    %v2526 = vadd.f32 %v2365, %v2525
    %2527 = vmatprep.mubr.f32.mxu0 0.0
    %2528 = vmatmul.mubr.f32.gmra.mrb[0].mxu0 %v2236
    %v2529 = vpop.f32.mrb[0].mxu0
    %v2530 = vadd.f32 %v2369, %v2529
    %v2531 = vpop.f32.mrb[0].mxu0
    %v2532 = vadd.f32 %v2371, %v2531
    %2533 = vmatprep.mubr.f32.mxu0 0.0
    %2534 = vmatmul.mubr.f32.gmra.mrb[0].mxu0 %v2239
    %v2535 = vpop.f32.mrb[0].mxu0
    %v2536 = vadd.f32 %v2375, %v2535
    %v2537 = vpop.f32.mrb[0].mxu0
    %v2538 = vadd.f32 %v2377, %v2537
    %2539 = vmatprep.mubr.f32.mxu0 0.0
    %2540 = vmatmul.mubr.f32.gmra.mrb[0].mxu0 %v2242
    %v2541 = vpop.f32.mrb[0].mxu0
    %v2542 = vadd.f32 %v2381, %v2541
    %v2543 = vpop.f32.mrb[0].mxu0
    %v2544 = vadd.f32 %v2383, %v2543
    %2545 = vmatprep.mubr.f32.mxu0 0.0
    %2546 = vmatmul.mubr.f32.gmra.mrb[0].mxu0 %v2245
    %v2547 = vpop.f32.mrb[0].mxu0
    %v2548 = vadd.f32 %v2387, %v2547
    %v2549 = vpop.f32.mrb[0].mxu0
    %v2550 = vadd.f32 %v2389, %v2549
    %2551 = vmatprep.mubr.f32.mxu0 0.0
    %2552 = vmatmul.mubr.f32.gmra.mrb[0].mxu0 %v2248
    %v2553 = vpop.f32.mrb[0].mxu0
    %v2554 = vadd.f32 %v2393, %v2553
    %v2555 = vpop.f32.mrb[0].mxu0
    %v2556 = vadd.f32 %v2395, %v2555
    %2557 = vmatprep.mubr.f32.mxu0 0.0
    %2558 = vmatmul.mubr.f32.gmra.mrb[0].mxu0 %v2251
    %v2559 = vpop.f32.mrb[0].mxu0
    %v2560 = vadd.f32 %v2399, %v2559
    %v2561 = vpop.f32.mrb[0].mxu0
    %v2562 = vadd.f32 %v2401, %v2561
    %2563 = vmatprep.mubr.f32.mxu0 0.0
    %2564 = vmatmul.mubr.f32.gmra.mrb[0].mxu0 %v2254
    %v2565 = vpop.f32.mrb[0].mxu0
    %v2566 = vadd.f32 %v2405, %v2565
    %v2567 = vpop.f32.mrb[0].mxu0
    %v2568 = vadd.f32 %v2407, %v2567
    %2569 = vmatprep.mubr.f32.mxu0 0.0
    %2570 = vmatmul.mubr.f32.gmra.mrb[0].mxu0 %v2257
    %v2571 = vpop.f32.mrb[0].mxu0
    %v2572 = vadd.f32 %v2411, %v2571
    %v2573 = vpop.f32.mrb[0].mxu0
    %v2574 = vadd.f32 %v2413, %v2573
    %2575 = vmatprep.mubr.f32.mxu0 0.0
    %2576 = vmatmul.mubr.f32.gmra.mrb[0].mxu0 %v2260
    %v2577 = vpop.f32.mrb[0].mxu0
    %v2578 = vadd.f32 %v2417, %v2577
    %v2579 = vpop.f32.mrb[0].mxu0
    %v2580 = vadd.f32 %v2419, %v2579
    %2581 = vmatprep.mubr.f32.mxu0 0.0
    %2582 = vmatmul.mubr.f32.gmra.mrb[0].mxu0 %v2263
    %v2583 = vpop.f32.mrb[0].mxu0
    %v2584 = vadd.f32 %v2423, %v2583
    %v2585 = vpop.f32.mrb[0].mxu0
    %v2586 = vadd.f32 %v2425, %v2585
    %2587 = vmatprep.mubr.f32.mxu0 0.0
    %2588 = vmatmul.mubr.f32.gmra.mrb[0].mxu0 %v2266
    %v2589 = vpop.f32.mrb[0].mxu0
    %v2590 = vadd.f32 %v2429, %v2589
    %v2591 = vpop.f32.mrb[0].mxu0
    %v2592 = vadd.f32 %v2431, %v2591
    %2593 = vmatprep.mubr.f32.mxu0 0.0
    %2594 = vmatmul.mubr.f32.gmra.mrb[0].mxu0 %v2269
    %v2595 = vpop.f32.mrb[0].mxu0
    %v2596 = vadd.f32 %v2435, %v2595
    %v2597 = vpop.f32.mrb[0].mxu0
    %v2598 = vadd.f32 %v2437, %v2597
    %2599 = vdwg.mxu0
    %2632 = vrot.lane.b32.xlu0 %v2506, 1
    %v2633 = vpop.permute.xlu0 %2632
    %2634 = vrot.lane.b32.xlu0 %v2508, 1
    %v2635 = vpop.permute.xlu0 %2634
    %2636 = vrot.lane.b32.xlu0 %v2512, 1
    %v2637 = vpop.permute.xlu0 %2636
    %2638 = vrot.lane.b32.xlu0 %v2514, 1
    %v2639 = vpop.permute.xlu0 %2638
    %2640 = vrot.lane.b32.xlu0 %v2518, 1
    %v2641 = vpop.permute.xlu0 %2640
    %2642 = vrot.lane.b32.xlu0 %v2520, 1
    %v2643 = vpop.permute.xlu0 %2642
    %2644 = vrot.lane.b32.xlu0 %v2524, 1
    %v2645 = vpop.permute.xlu0 %2644
    %2646 = vrot.lane.b32.xlu0 %v2526, 1
    %v2647 = vpop.permute.xlu0 %2646
    %2648 = vrot.lane.b32.xlu0 %v2530, 1
    %v2649 = vpop.permute.xlu0 %2648
    %2650 = vrot.lane.b32.xlu0 %v2532, 1
    %v2651 = vpop.permute.xlu0 %2650
    %2652 = vrot.lane.b32.xlu0 %v2536, 1
    %v2653 = vpop.permute.xlu0 %2652
    %2654 = vrot.lane.b32.xlu0 %v2538, 1
    %v2655 = vpop.permute.xlu0 %2654
    %2656 = vrot.lane.b32.xlu0 %v2542, 1
    %v2657 = vpop.permute.xlu0 %2656
    %2658 = vrot.lane.b32.xlu0 %v2544, 1
    %v2659 = vpop.permute.xlu0 %2658
    %2660 = vrot.lane.b32.xlu0 %v2548, 1
    %v2661 = vpop.permute.xlu0 %2660
    %2662 = vrot.lane.b32.xlu0 %v2550, 1
    %v2663 = vpop.permute.xlu0 %2662
    %2664 = vrot.lane.b32.xlu0 %v2554, 1
    %v2665 = vpop.permute.xlu0 %2664
    %2666 = vrot.lane.b32.xlu0 %v2556, 1
    %v2667 = vpop.permute.xlu0 %2666
    %2668 = vrot.lane.b32.xlu0 %v2560, 1
    %v2669 = vpop.permute.xlu0 %2668
    %2670 = vrot.lane.b32.xlu0 %v2562, 1
    %v2671 = vpop.permute.xlu0 %2670
    %2672 = vrot.lane.b32.xlu0 %v2566, 1
    %v2673 = vpop.permute.xlu0 %2672
    %2674 = vrot.lane.b32.xlu0 %v2568, 1
    %v2675 = vpop.permute.xlu0 %2674
    %2676 = vrot.lane.b32.xlu0 %v2572, 1
    %v2677 = vpop.permute.xlu0 %2676
    %2678 = vrot.lane.b32.xlu0 %v2574, 1
    %v2679 = vpop.permute.xlu0 %2678
    %2680 = vrot.lane.b32.xlu0 %v2578, 1
    %v2681 = vpop.permute.xlu0 %2680
    %2682 = vrot.lane.b32.xlu0 %v2580, 1
    %v2683 = vpop.permute.xlu0 %2682
    %2684 = vrot.lane.b32.xlu0 %v2584, 1
    %v2685 = vpop.permute.xlu0 %2684
    %2686 = vrot.lane.b32.xlu0 %v2586, 1
    %v2687 = vpop.permute.xlu0 %2686
    %2688 = vrot.lane.b32.xlu0 %v2590, 1
    %v2689 = vpop.permute.xlu0 %2688
    %2690 = vrot.lane.b32.xlu0 %v2592, 1
    %v2691 = vpop.permute.xlu0 %2690
    %2692 = vrot.lane.b32.xlu0 %v2596, 1
    %v2693 = vpop.permute.xlu0 %2692
    %2694 = vrot.lane.b32.xlu0 %v2598, 1
    %v2695 = vpop.permute.xlu0 %2694
    %v2696 = vsel %vm404, %v2633, %v2635
    %v2697 = vsel %vm404, %v2637, %v2639
    %v2698 = vsel %vm404, %v2641, %v2643
    %v2699 = vsel %vm404, %v2645, %v2647
    %v2700 = vsel %vm404, %v2649, %v2651
    %v2701 = vsel %vm404, %v2653, %v2655
    %v2702 = vsel %vm404, %v2657, %v2659
    %v2703 = vsel %vm404, %v2661, %v2663
    %v2704 = vsel %vm404, %v2665, %v2667
    %v2705 = vsel %vm404, %v2669, %v2671
    %v2706 = vsel %vm404, %v2673, %v2675
    %v2707 = vsel %vm404, %v2677, %v2679
    %v2708 = vsel %vm404, %v2681, %v2683
    %v2709 = vsel %vm404, %v2685, %v2687
    %v2710 = vsel %vm404, %v2689, %v2691
    %v2711 = vsel %vm404, %v2693, %v2695
    %v2744 = vsel %vm404, 0.0, %v2633
    %v2745 = vsel %vm404, 0.0, %v2637
    %v2746 = vsel %vm404, 0.0, %v2641
    %v2747 = vsel %vm404, 0.0, %v2645
    %v2748 = vsel %vm404, 0.0, %v2649
    %v2749 = vsel %vm404, 0.0, %v2653
    %v2750 = vsel %vm404, 0.0, %v2657
    %v2751 = vsel %vm404, 0.0, %v2661
    %v2752 = vsel %vm404, 0.0, %v2665
    %v2753 = vsel %vm404, 0.0, %v2669
    %v2754 = vsel %vm404, 0.0, %v2673
    %v2755 = vsel %vm404, 0.0, %v2677
    %v2756 = vsel %vm404, 0.0, %v2681
    %v2757 = vsel %vm404, 0.0, %v2685
    %v2758 = vsel %vm404, 0.0, %v2689
    %v2759 = vsel %vm404, 0.0, %v2693
    %vm2760 = vcmask 179200
    %v2761 = vsel %vm2760, %v2696, 0.0
    %v2762 = vsel %vm2760, %v2697, 0.0
    %v2763 = vsel %vm2760, %v2698, 0.0
    %v2764 = vsel %vm2760, %v2699, 0.0
    %v2765 = vsel %vm2760, %v2700, 0.0
    %v2766 = vsel %vm2760, %v2701, 0.0
    %v2767 = vsel %vm2760, %v2702, 0.0
    %v2768 = vsel %vm2760, %v2703, 0.0
    %v2769 = vsel %vm2760, %v2704, 0.0
    %v2770 = vsel %vm2760, %v2705, 0.0
    %v2771 = vsel %vm2760, %v2706, 0.0
    %v2772 = vsel %vm2760, %v2707, 0.0
    %v2773 = vsel %vm2760, %v2708, 0.0
    %v2774 = vsel %vm2760, %v2709, 0.0
    %v2775 = vsel %vm2760, %v2710, 0.0
    %v2776 = vsel %vm2760, %v2711, 0.0
    %2809 = vrot.lane.b32.xlu0 %v2744, 127
    %v2810 = vpop.permute.xlu0 %2809
    %2811 = vrot.lane.b32.xlu0 %v2761, 127
    %v2812 = vpop.permute.xlu0 %2811
    %2813 = vrot.lane.b32.xlu0 %v2745, 127
    %v2814 = vpop.permute.xlu0 %2813
    %2815 = vrot.lane.b32.xlu0 %v2762, 127
    %v2816 = vpop.permute.xlu0 %2815
    %2817 = vrot.lane.b32.xlu0 %v2746, 127
    %v2818 = vpop.permute.xlu0 %2817
    %2819 = vrot.lane.b32.xlu0 %v2763, 127
    %v2820 = vpop.permute.xlu0 %2819
    %2821 = vrot.lane.b32.xlu0 %v2747, 127
    %v2822 = vpop.permute.xlu0 %2821
    %2823 = vrot.lane.b32.xlu0 %v2764, 127
    %v2824 = vpop.permute.xlu0 %2823
    %2825 = vrot.lane.b32.xlu0 %v2748, 127
    %v2826 = vpop.permute.xlu0 %2825
    %2827 = vrot.lane.b32.xlu0 %v2765, 127
    %v2828 = vpop.permute.xlu0 %2827
    %2829 = vrot.lane.b32.xlu0 %v2749, 127
    %v2830 = vpop.permute.xlu0 %2829
    %2831 = vrot.lane.b32.xlu0 %v2766, 127
    %v2832 = vpop.permute.xlu0 %2831
    %2833 = vrot.lane.b32.xlu0 %v2750, 127
    %v2834 = vpop.permute.xlu0 %2833
    %2835 = vrot.lane.b32.xlu0 %v2767, 127
    %v2836 = vpop.permute.xlu0 %2835
    %2837 = vrot.lane.b32.xlu0 %v2751, 127
    %v2838 = vpop.permute.xlu0 %2837
    %2839 = vrot.lane.b32.xlu0 %v2768, 127
    %v2840 = vpop.permute.xlu0 %2839
    %2841 = vrot.lane.b32.xlu0 %v2752, 127
    %v2842 = vpop.permute.xlu0 %2841
    %2843 = vrot.lane.b32.xlu0 %v2769, 127
    %v2844 = vpop.permute.xlu0 %2843
    %2845 = vrot.lane.b32.xlu0 %v2753, 127
    %v2846 = vpop.permute.xlu0 %2845
    %2847 = vrot.lane.b32.xlu0 %v2770, 127
    %v2848 = vpop.permute.xlu0 %2847
    %2849 = vrot.lane.b32.xlu0 %v2754, 127
    %v2850 = vpop.permute.xlu0 %2849
    %2851 = vrot.lane.b32.xlu0 %v2771, 127
    %v2852 = vpop.permute.xlu0 %2851
    %2853 = vrot.lane.b32.xlu0 %v2755, 127
    %v2854 = vpop.permute.xlu0 %2853
    %2855 = vrot.lane.b32.xlu0 %v2772, 127
    %v2856 = vpop.permute.xlu0 %2855
    %2857 = vrot.lane.b32.xlu0 %v2756, 127
    %v2858 = vpop.permute.xlu0 %2857
    %2859 = vrot.lane.b32.xlu0 %v2773, 127
    %v2860 = vpop.permute.xlu0 %2859
    %2861 = vrot.lane.b32.xlu0 %v2757, 127
    %v2862 = vpop.permute.xlu0 %2861
    %2863 = vrot.lane.b32.xlu0 %v2774, 127
    %v2864 = vpop.permute.xlu0 %2863
    %2865 = vrot.lane.b32.xlu0 %v2758, 127
    %v2866 = vpop.permute.xlu0 %2865
    %2867 = vrot.lane.b32.xlu0 %v2775, 127
    %v2868 = vpop.permute.xlu0 %2867
    %2869 = vrot.lane.b32.xlu0 %v2759, 127
    %v2870 = vpop.permute.xlu0 %2869
    %2871 = vrot.lane.b32.xlu0 %v2776, 127
    %v2872 = vpop.permute.xlu0 %2871
    %v2873 = vsel %vm421, %v2810, %v2812
    %v2874 = vsel %vm421, %v2814, %v2816
    %v2875 = vsel %vm421, %v2818, %v2820
    %v2876 = vsel %vm421, %v2822, %v2824
    %v2877 = vsel %vm421, %v2826, %v2828
    %v2878 = vsel %vm421, %v2830, %v2832
    %v2879 = vsel %vm421, %v2834, %v2836
    %v2880 = vsel %vm421, %v2838, %v2840
    %v2881 = vsel %vm421, %v2842, %v2844
    %v2882 = vsel %vm421, %v2846, %v2848
    %v2883 = vsel %vm421, %v2850, %v2852
    %v2884 = vsel %vm421, %v2854, %v2856
    %v2885 = vsel %vm421, %v2858, %v2860
    %v2886 = vsel %vm421, %v2862, %v2864
    %v2887 = vsel %vm421, %v2866, %v2868
    %v2888 = vsel %vm421, %v2870, %v2872
    %2921 = vmatprep.subr.mxu0 %v2812
    %2922 = vmatpush1.msra.mxu0 %v2873
    %2923 = vmatprep.subr.mxu0 %v2816
    %2924 = vmatpush1.msra.mxu0 %v2874
    %2925 = vmatprep.subr.mxu0 %v2820
    %2926 = vmatpush1.msra.mxu0 %v2875
    %2927 = vmatprep.subr.mxu0 %v2824
    %2928 = vmatpush1.msra.mxu0 %v2876
    %2929 = vmatprep.subr.mxu0 %v2828
    %2930 = vmatpush1.msra.mxu0 %v2877
    %2931 = vmatprep.subr.mxu0 %v2832
    %2932 = vmatpush1.msra.mxu0 %v2878
    %2933 = vmatprep.subr.mxu0 %v2836
    %2934 = vmatpush1.msra.mxu0 %v2879
    %2935 = vmatprep.subr.mxu0 %v2840
    %2936 = vmatpush1.msra.mxu0 %v2880
    %2937 = vmatprep.subr.mxu0 %v2844
    %2938 = vmatpush1.msra.mxu0 %v2881
    %2939 = vmatprep.subr.mxu0 %v2848
    %2940 = vmatpush1.msra.mxu0 %v2882
    %2941 = vmatprep.subr.mxu0 %v2852
    %2942 = vmatpush1.msra.mxu0 %v2883
    %2943 = vmatprep.subr.mxu0 %v2856
    %2944 = vmatpush1.msra.mxu0 %v2884
    %2945 = vmatprep.subr.mxu0 %v2860
    %2946 = vmatpush1.msra.mxu0 %v2885
    %2947 = vmatprep.subr.mxu0 %v2864
    %2948 = vmatpush1.msra.mxu0 %v2886
    %2949 = vmatprep.subr.mxu0 %v2868
    %2950 = vmatpush1.msra.mxu0 %v2887
    %2951 = vmatprep.subr.mxu0 %v2872
    %2952 = vmatpush1.msra.mxu0 %v2888
    %2953 = vmatprep.subr.mxu0 0.0
    %2954 = vmatpush1.msra.mxu0 0.0
    %2955 = vmatprep.subr.mxu0 0.0
    %2956 = vmatpush1.msra.mxu0 0.0
    %2957 = vmatprep.subr.mxu0 0.0
    %2958 = vmatpush1.msra.mxu0 0.0
    %2959 = vmatprep.subr.mxu0 0.0
    %2960 = vmatpush1.msra.mxu0 0.0
    %2961 = vmatprep.subr.mxu0 0.0
    %2962 = vmatpush1.msra.mxu0 0.0
    %2963 = vmatprep.subr.mxu0 0.0
    %2964 = vmatpush1.msra.mxu0 0.0
    %2965 = vmatprep.subr.mxu0 0.0
    %2966 = vmatpush1.msra.mxu0 0.0
    %2967 = vmatprep.subr.mxu0 0.0
    %2968 = vmatpush1.msra.mxu0 0.0
    %2969 = vmatprep.subr.mxu0 0.0
    %2970 = vmatpush1.msra.mxu0 0.0
    %2971 = vmatprep.subr.mxu0 0.0
    %2972 = vmatpush1.msra.mxu0 0.0
    %2973 = vmatprep.subr.mxu0 0.0
    %2974 = vmatpush1.msra.mxu0 0.0
    %2975 = vmatprep.subr.mxu0 0.0
    %2976 = vmatpush1.msra.mxu0 0.0
    %2977 = vmatprep.subr.mxu0 0.0
    %2978 = vmatpush1.msra.mxu0 0.0
    %2979 = vmatprep.subr.mxu0 0.0
    %2980 = vmatpush1.msra.mxu0 0.0
    %2981 = vmatprep.subr.mxu0 0.0
    %2982 = vmatpush1.msra.mxu0 0.0
    %2983 = vmatprep.subr.mxu0 0.0
    %2984 = vmatpush1.msra.mxu0 0.0
    %2985 = vmatprep.mubr.f32.mxu0 0.0
    %2986 = vmatmul.mubr.f32.gmra.mrb[0].mxu0 %v109
    %v2987 = vpop.f32.mrb[0].mxu0
    %v2988 = vadd.f32 0.0, %v2987
    %v2989 = vpop.f32.mrb[0].mxu0
    %v2990 = vadd.f32 0.0, %v2989
    %2991 = vmatprep.mubr.f32.mxu0 0.0
    %2992 = vmatmul.mubr.f32.gmra.mrb[0].mxu0 %v110
    %v2993 = vpop.f32.mrb[0].mxu0
    %v2994 = vadd.f32 0.0, %v2993
    %v2995 = vpop.f32.mrb[0].mxu0
    %v2996 = vadd.f32 0.0, %v2995
    %2997 = vdwg.mxu0
    %2998 = vmatprep.subr.mxu0 %v2761
    %2999 = vmatpush1.msra.mxu0 %v2744
    %3000 = vmatprep.subr.mxu0 %v2762
    %3001 = vmatpush1.msra.mxu0 %v2745
    %3002 = vmatprep.subr.mxu0 %v2763
    %3003 = vmatpush1.msra.mxu0 %v2746
    %3004 = vmatprep.subr.mxu0 %v2764
    %3005 = vmatpush1.msra.mxu0 %v2747
    %3006 = vmatprep.subr.mxu0 %v2765
    %3007 = vmatpush1.msra.mxu0 %v2748
    %3008 = vmatprep.subr.mxu0 %v2766
    %3009 = vmatpush1.msra.mxu0 %v2749
    %3010 = vmatprep.subr.mxu0 %v2767
    %3011 = vmatpush1.msra.mxu0 %v2750
    %3012 = vmatprep.subr.mxu0 %v2768
    %3013 = vmatpush1.msra.mxu0 %v2751
    %3014 = vmatprep.subr.mxu0 %v2769
    %3015 = vmatpush1.msra.mxu0 %v2752
    %3016 = vmatprep.subr.mxu0 %v2770
    %3017 = vmatpush1.msra.mxu0 %v2753
    %3018 = vmatprep.subr.mxu0 %v2771
    %3019 = vmatpush1.msra.mxu0 %v2754
    %3020 = vmatprep.subr.mxu0 %v2772
    %3021 = vmatpush1.msra.mxu0 %v2755
    %3022 = vmatprep.subr.mxu0 %v2773
    %3023 = vmatpush1.msra.mxu0 %v2756
    %3024 = vmatprep.subr.mxu0 %v2774
    %3025 = vmatpush1.msra.mxu0 %v2757
    %3026 = vmatprep.subr.mxu0 %v2775
    %3027 = vmatpush1.msra.mxu0 %v2758
    %3028 = vmatprep.subr.mxu0 %v2776
    %3029 = vmatpush1.msra.mxu0 %v2759
    %3030 = vmatprep.subr.mxu0 0.0
    %3031 = vmatpush1.msra.mxu0 0.0
    %3032 = vmatprep.subr.mxu0 0.0
    %3033 = vmatpush1.msra.mxu0 0.0
    %3034 = vmatprep.subr.mxu0 0.0
    %3035 = vmatpush1.msra.mxu0 0.0
    %3036 = vmatprep.subr.mxu0 0.0
    %3037 = vmatpush1.msra.mxu0 0.0
    %3038 = vmatprep.subr.mxu0 0.0
    %3039 = vmatpush1.msra.mxu0 0.0
    %3040 = vmatprep.subr.mxu0 0.0
    %3041 = vmatpush1.msra.mxu0 0.0
    %3042 = vmatprep.subr.mxu0 0.0
    %3043 = vmatpush1.msra.mxu0 0.0
    %3044 = vmatprep.subr.mxu0 0.0
    %3045 = vmatpush1.msra.mxu0 0.0
    %3046 = vmatprep.subr.mxu0 0.0
    %3047 = vmatpush1.msra.mxu0 0.0
    %3048 = vmatprep.subr.mxu0 0.0
    %3049 = vmatpush1.msra.mxu0 0.0
    %3050 = vmatprep.subr.mxu0 0.0
    %3051 = vmatpush1.msra.mxu0 0.0
    %3052 = vmatprep.subr.mxu0 0.0
    %3053 = vmatpush1.msra.mxu0 0.0
    %3054 = vmatprep.subr.mxu0 0.0
    %3055 = vmatpush1.msra.mxu0 0.0
    %3056 = vmatprep.subr.mxu0 0.0
    %3057 = vmatpush1.msra.mxu0 0.0
    %3058 = vmatprep.subr.mxu0 0.0
    %3059 = vmatpush1.msra.mxu0 0.0
    %3060 = vmatprep.subr.mxu0 0.0
    %3061 = vmatpush1.msra.mxu0 0.0
    %3062 = vmatprep.mubr.f32.mxu0 0.0
    %3063 = vmatmul.mubr.f32.gmra.mrb[0].mxu0 %v106
    %v3064 = vpop.f32.mrb[0].mxu0
    %v3065 = vadd.f32 %v2988, %v3064
    %v3066 = vpop.f32.mrb[0].mxu0
    %v3067 = vadd.f32 %v2990, %v3066
    %3068 = vmatprep.mubr.f32.mxu0 0.0
    %3069 = vmatmul.mubr.f32.gmra.mrb[0].mxu0 %v107
    %v3070 = vpop.f32.mrb[0].mxu0
    %v3071 = vadd.f32 %v2994, %v3070
    %v3072 = vpop.f32.mrb[0].mxu0
    %v3073 = vadd.f32 %v2996, %v3072
    %3074 = vdwg.mxu0
    %3076 = vset.pattern.permute.xlu0 0
    %3077 = vperm.xlu0 %3076, %v54
    %v3078 = vpop.permute.xlu0 %3077
    %3081 = vset.pattern.permute.xlu0 0
    %3082 = vperm.xlu0 %3081, %v55
    %v3083 = vpop.permute.xlu0 %3082
    %v3085 = vadd.f32 %v3065, %v3078
    %v3086 = vadd.f32 %v3067, %v3078
    %v3087 = vadd.f32 %v3071, %v3083
    %v3088 = vadd.f32 %v3073, %v3083
    %v3089 = vmax.f32 %v3085, 0.0
    %v3090 = vmax.f32 %v3086, 0.0
    %v3091 = vmax.f32 %v3087, 0.0
    %v3092 = vmax.f32 %v3088, 0.0
    %3097 = vrot.lane.b32.xlu0 %v3089, 127
    %v3098 = vpop.permute.xlu0 %3097
    %3099 = vrot.lane.b32.xlu0 %v3090, 127
    %v3100 = vpop.permute.xlu0 %3099
    %3101 = vrot.lane.b32.xlu0 %v3091, 127
    %v3102 = vpop.permute.xlu0 %3101
    %3103 = vrot.lane.b32.xlu0 %v3092, 127
    %v3104 = vpop.permute.xlu0 %3103
    %v3105 = vsel %vm421, %v3098, %v3100
    %v3106 = vsel %vm421, %v3102, %v3104
    %v3111 = vmax.f32 %v3089, %v3105
    %v3112 = vmax.f32 %v3090, %v3100
    %v3113 = vmax.f32 %v3091, %v3106
    %v3114 = vmax.f32 %v3092, %v3104
    %vm3115 = vcmask 171008
    %v3117 = vsel %vm3115, %v3112, 0
    %v3120 = vsel %vm3115, %v3114, 0
    %vm3122 = vcmask 1044480
    %v3124 = vsel %vm3122, %v352, 0
    %3126 = vmatprep.subr.mxu0 0.0
    %3127 = vmatpush1.msra.mxu0 %v316
    %3128 = vmatprep.subr.mxu0 0.0
    %3129 = vmatpush1.msra.mxu0 %v318
    %3130 = vmatprep.subr.mxu0 0.0
    %3131 = vmatpush1.msra.mxu0 %v320
    %3132 = vmatprep.subr.mxu0 0.0
    %3133 = vmatpush1.msra.mxu0 %v322
    %3134 = vmatprep.subr.mxu0 0.0
    %3135 = vmatpush1.msra.mxu0 %v324
    %3136 = vmatprep.subr.mxu0 0.0
    %3137 = vmatpush1.msra.mxu0 %v326
    %3138 = vmatprep.subr.mxu0 0.0
    %3139 = vmatpush1.msra.mxu0 %v328
    %3140 = vmatprep.subr.mxu0 0.0
    %3141 = vmatpush1.msra.mxu0 %v330
    %3142 = vmatprep.subr.mxu0 0.0
    %3143 = vmatpush1.msra.mxu0 %v332
    %3144 = vmatprep.subr.mxu0 0.0
    %3145 = vmatpush1.msra.mxu0 %v334
    %3146 = vmatprep.subr.mxu0 0.0
    %3147 = vmatpush1.msra.mxu0 %v336
    %3148 = vmatprep.subr.mxu0 0.0
    %3149 = vmatpush1.msra.mxu0 %v338
    %3150 = vmatprep.subr.mxu0 0.0
    %3151 = vmatpush1.msra.mxu0 %v340
    %3152 = vmatprep.subr.mxu0 0.0
    %3153 = vmatpush1.msra.mxu0 %v342
    %3154 = vmatprep.subr.mxu0 0.0
    %3155 = vmatpush1.msra.mxu0 %v344
    %3156 = vmatprep.subr.mxu0 0.0
    %3157 = vmatpush1.msra.mxu0 %v346
    %3158 = vmatprep.subr.mxu0 0.0
    %3159 = vmatpush1.msra.mxu0 %v348
    %3160 = vmatprep.subr.mxu0 0.0
    %3161 = vmatpush1.msra.mxu0 %v350
    %3162 = vmatprep.subr.mxu0 0.0
    %3163 = vmatpush1.msra.mxu0 %v3124
    %3164 = vmatprep.subr.mxu0 0.0
    %3165 = vmatpush1.msra.mxu0 0.0
    %3166 = vmatprep.subr.mxu0 0.0
    %3167 = vmatpush1.msra.mxu0 0.0
    %3168 = vmatprep.subr.mxu0 0.0
    %3169 = vmatpush1.msra.mxu0 0.0
    %3170 = vmatprep.subr.mxu0 0.0
    %3171 = vmatpush1.msra.mxu0 0.0
    %3172 = vmatprep.subr.mxu0 0.0
    %3173 = vmatpush1.msra.mxu0 0.0
    %3174 = vmatprep.subr.mxu0 0.0
    %3175 = vmatpush1.msra.mxu0 0.0
    %3176 = vmatprep.subr.mxu0 0.0
    %3177 = vmatpush1.msra.mxu0 0.0
    %3178 = vmatprep.subr.mxu0 0.0
    %3179 = vmatpush1.msra.mxu0 0.0
    %3180 = vmatprep.subr.mxu0 0.0
    %3181 = vmatpush1.msra.mxu0 0.0
    %3182 = vmatprep.subr.mxu0 0.0
    %3183 = vmatpush1.msra.mxu0 0.0
    %3184 = vmatprep.subr.mxu0 0.0
    %3185 = vmatpush1.msra.mxu0 0.0
    %3186 = vmatprep.subr.mxu0 0.0
    %3187 = vmatpush1.msra.mxu0 0.0
    %3188 = vmatprep.subr.mxu0 0.0
    %3189 = vmatpush1.msra.mxu0 0.0
    %3190 = vmatprep.mubr.f32.mxu0 %v3117
    %3191 = vmatmul.mubr.f32.gmra.mrb[0].mxu0 %v3111
    %v3192 = vpop.f32.mrb[0].mxu0
    %v3193 = vadd.f32 0.0, %v3192
    %v3194 = vpop.f32.mrb[0].mxu0
    %3195 = vmatprep.mubr.f32.mxu0 %v3120
    %3196 = vmatmul.mubr.f32.gmra.mrb[0].mxu0 %v3113
    %v3197 = vpop.f32.mrb[0].mxu0
    %v3198 = vadd.f32 0.0, %v3197
    %v3199 = vpop.f32.mrb[0].mxu0
    %3200 = vdwg.mxu0
    %v3202 = vsel %vm404, %v401, 0.0
    %3204 = vrot.lane.b32.xlu0 %v3202, 127
    %v3205 = vpop.permute.xlu0 %3204
    %v3206 = vsel %vm421, %v418, %v3205
    %3208 = vmatprep.subr.mxu0 %v3206
    %3209 = vmatpush1.msra.mxu0 %v422
    %3210 = vmatprep.subr.mxu0 0.0
    %3211 = vmatpush1.msra.mxu0 0.0
    %3212 = vmatprep.subr.mxu0 0.0
    %3213 = vmatpush1.msra.mxu0 0.0
    %3214 = vmatprep.subr.mxu0 0.0
    %3215 = vmatpush1.msra.mxu0 0.0
    %3216 = vmatprep.subr.mxu0 0.0
    %3217 = vmatpush1.msra.mxu0 0.0
    %3218 = vmatprep.subr.mxu0 0.0
    %3219 = vmatpush1.msra.mxu0 0.0
    %3220 = vmatprep.subr.mxu0 0.0
    %3221 = vmatpush1.msra.mxu0 0.0
    %3222 = vmatprep.subr.mxu0 0.0
    %3223 = vmatpush1.msra.mxu0 0.0
    %3224 = vmatprep.subr.mxu0 0.0
    %3225 = vmatpush1.msra.mxu0 0.0
    %3226 = vmatprep.subr.mxu0 0.0
    %3227 = vmatpush1.msra.mxu0 0.0
    %3228 = vmatprep.subr.mxu0 0.0
    %3229 = vmatpush1.msra.mxu0 0.0
    %3230 = vmatprep.subr.mxu0 0.0
    %3231 = vmatpush1.msra.mxu0 0.0
    %3232 = vmatprep.subr.mxu0 0.0
    %3233 = vmatpush1.msra.mxu0 0.0
    %3234 = vmatprep.subr.mxu0 0.0
    %3235 = vmatpush1.msra.mxu0 0.0
    %3236 = vmatprep.subr.mxu0 0.0
    %3237 = vmatpush1.msra.mxu0 0.0
    %3238 = vmatprep.subr.mxu0 0.0
    %3239 = vmatpush1.msra.mxu0 0.0
    %3240 = vmatprep.subr.mxu0 0.0
    %3241 = vmatpush1.msra.mxu0 0.0
    %3242 = vmatprep.subr.mxu0 0.0
    %3243 = vmatpush1.msra.mxu0 0.0
    %3244 = vmatprep.subr.mxu0 0.0
    %3245 = vmatpush1.msra.mxu0 0.0
    %3246 = vmatprep.subr.mxu0 0.0
    %3247 = vmatpush1.msra.mxu0 0.0
    %3248 = vmatprep.subr.mxu0 0.0
    %3249 = vmatpush1.msra.mxu0 0.0
    %3250 = vmatprep.subr.mxu0 0.0
    %3251 = vmatpush1.msra.mxu0 0.0
    %3252 = vmatprep.subr.mxu0 0.0
    %3253 = vmatpush1.msra.mxu0 0.0
    %3254 = vmatprep.subr.mxu0 0.0
    %3255 = vmatpush1.msra.mxu0 0.0
    %3256 = vmatprep.subr.mxu0 0.0
    %3257 = vmatpush1.msra.mxu0 0.0
    %3258 = vmatprep.subr.mxu0 0.0
    %3259 = vmatpush1.msra.mxu0 0.0
    %3260 = vmatprep.subr.mxu0 0.0
    %3261 = vmatpush1.msra.mxu0 0.0
    %3262 = vmatprep.subr.mxu0 0.0
    %3263 = vmatpush1.msra.mxu0 0.0
    %3264 = vmatprep.subr.mxu0 0.0
    %3265 = vmatpush1.msra.mxu0 0.0
    %3266 = vmatprep.subr.mxu0 0.0
    %3267 = vmatpush1.msra.mxu0 0.0
    %3268 = vmatprep.subr.mxu0 0.0
    %3269 = vmatpush1.msra.mxu0 0.0
    %3270 = vmatprep.subr.mxu0 0.0
    %3271 = vmatpush1.msra.mxu0 0.0
    %3272 = vmatprep.mubr.f32.mxu0 0.0
    %3273 = vmatmul.mubr.f32.gmra.mrb[0].mxu0 %v429
    %v3274 = vpop.f32.mrb[0].mxu0
    %v3275 = vadd.f32 0.0, %v3274
    %v3276 = vpop.f32.mrb[0].mxu0
    %v3277 = vadd.f32 0.0, %v3276
    %3278 = vmatprep.mubr.f32.mxu0 0.0
    %3279 = vmatmul.mubr.f32.gmra.mrb[0].mxu0 %v432
    %v3280 = vpop.f32.mrb[0].mxu0
    %v3281 = vadd.f32 0.0, %v3280
    %v3282 = vpop.f32.mrb[0].mxu0
    %v3283 = vadd.f32 0.0, %v3282
    %3284 = vmatprep.mubr.f32.mxu0 0.0
    %3285 = vmatmul.mubr.f32.gmra.mrb[0].mxu0 %v435
    %v3286 = vpop.f32.mrb[0].mxu0
    %v3287 = vadd.f32 0.0, %v3286
    %v3288 = vpop.f32.mrb[0].mxu0
    %v3289 = vadd.f32 0.0, %v3288
    %3290 = vmatprep.mubr.f32.mxu0 0.0
    %3291 = vmatmul.mubr.f32.gmra.mrb[0].mxu0 %v438
    %v3292 = vpop.f32.mrb[0].mxu0
    %v3293 = vadd.f32 0.0, %v3292
    %v3294 = vpop.f32.mrb[0].mxu0
    %v3295 = vadd.f32 0.0, %v3294
    %3296 = vmatprep.mubr.f32.mxu0 0.0
    %3297 = vmatmul.mubr.f32.gmra.mrb[0].mxu0 %v441
    %v3298 = vpop.f32.mrb[0].mxu0
    %v3299 = vadd.f32 0.0, %v3298
    %v3300 = vpop.f32.mrb[0].mxu0
    %v3301 = vadd.f32 0.0, %v3300
    %3302 = vmatprep.mubr.f32.mxu0 0.0
    %3303 = vmatmul.mubr.f32.gmra.mrb[0].mxu0 %v444
    %v3304 = vpop.f32.mrb[0].mxu0
    %v3305 = vadd.f32 0.0, %v3304
    %v3306 = vpop.f32.mrb[0].mxu0
    %v3307 = vadd.f32 0.0, %v3306
    %3308 = vmatprep.mubr.f32.mxu0 0.0
    %3309 = vmatmul.mubr.f32.gmra.mrb[0].mxu0 %v447
    %v3310 = vpop.f32.mrb[0].mxu0
    %v3311 = vadd.f32 0.0, %v3310
    %v3312 = vpop.f32.mrb[0].mxu0
    %v3313 = vadd.f32 0.0, %v3312
    %3314 = vmatprep.mubr.f32.mxu0 0.0
    %3315 = vmatmul.mubr.f32.gmra.mrb[0].mxu0 %v450
    %v3316 = vpop.f32.mrb[0].mxu0
    %v3317 = vadd.f32 0.0, %v3316
    %v3318 = vpop.f32.mrb[0].mxu0
    %v3319 = vadd.f32 0.0, %v3318
    %3320 = vmatprep.mubr.f32.mxu0 0.0
    %3321 = vmatmul.mubr.f32.gmra.mrb[0].mxu0 %v453
    %v3322 = vpop.f32.mrb[0].mxu0
    %v3323 = vadd.f32 0.0, %v3322
    %v3324 = vpop.f32.mrb[0].mxu0
    %v3325 = vadd.f32 0.0, %v3324
    %3326 = vmatprep.mubr.f32.mxu0 0.0
    %3327 = vmatmul.mubr.f32.gmra.mrb[0].mxu0 %v456
    %v3328 = vpop.f32.mrb[0].mxu0
    %v3329 = vadd.f32 0.0, %v3328
    %v3330 = vpop.f32.mrb[0].mxu0
    %v3331 = vadd.f32 0.0, %v3330
    %3332 = vmatprep.mubr.f32.mxu0 0.0
    %3333 = vmatmul.mubr.f32.gmra.mrb[0].mxu0 %v459
    %v3334 = vpop.f32.mrb[0].mxu0
    %v3335 = vadd.f32 0.0, %v3334
    %v3336 = vpop.f32.mrb[0].mxu0
    %v3337 = vadd.f32 0.0, %v3336
    %3338 = vmatprep.mubr.f32.mxu0 0.0
    %3339 = vmatmul.mubr.f32.gmra.mrb[0].mxu0 %v462
    %v3340 = vpop.f32.mrb[0].mxu0
    %v3341 = vadd.f32 0.0, %v3340
    %v3342 = vpop.f32.mrb[0].mxu0
    %v3343 = vadd.f32 0.0, %v3342
    %3344 = vmatprep.mubr.f32.mxu0 0.0
    %3345 = vmatmul.mubr.f32.gmra.mrb[0].mxu0 %v465
    %v3346 = vpop.f32.mrb[0].mxu0
    %v3347 = vadd.f32 0.0, %v3346
    %v3348 = vpop.f32.mrb[0].mxu0
    %v3349 = vadd.f32 0.0, %v3348
    %3350 = vmatprep.mubr.f32.mxu0 0.0
    %3351 = vmatmul.mubr.f32.gmra.mrb[0].mxu0 %v468
    %v3352 = vpop.f32.mrb[0].mxu0
    %v3353 = vadd.f32 0.0, %v3352
    %v3354 = vpop.f32.mrb[0].mxu0
    %v3355 = vadd.f32 0.0, %v3354
    %3356 = vmatprep.mubr.f32.mxu0 0.0
    %3357 = vmatmul.mubr.f32.gmra.mrb[0].mxu0 %v471
    %v3358 = vpop.f32.mrb[0].mxu0
    %v3359 = vadd.f32 0.0, %v3358
    %v3360 = vpop.f32.mrb[0].mxu0
    %v3361 = vadd.f32 0.0, %v3360
    %3362 = vmatprep.mubr.f32.mxu0 0.0
    %3363 = vmatmul.mubr.f32.gmra.mrb[0].mxu0 %v474
    %v3364 = vpop.f32.mrb[0].mxu0
    %v3365 = vadd.f32 0.0, %v3364
    %v3366 = vpop.f32.mrb[0].mxu0
    %v3367 = vadd.f32 0.0, %v3366
    %3368 = vdwg.mxu0
    %3369 = vmatprep.subr.mxu0 %v405
    %3370 = vmatpush1.msra.mxu0 %v410
    %3371 = vmatprep.subr.mxu0 0.0
    %3372 = vmatpush1.msra.mxu0 0.0
    %3373 = vmatprep.subr.mxu0 0.0
    %3374 = vmatpush1.msra.mxu0 0.0
    %3375 = vmatprep.subr.mxu0 0.0
    %3376 = vmatpush1.msra.mxu0 0.0
    %3377 = vmatprep.subr.mxu0 0.0
    %3378 = vmatpush1.msra.mxu0 0.0
    %3379 = vmatprep.subr.mxu0 0.0
    %3380 = vmatpush1.msra.mxu0 0.0
    %3381 = vmatprep.subr.mxu0 0.0
    %3382 = vmatpush1.msra.mxu0 0.0
    %3383 = vmatprep.subr.mxu0 0.0
    %3384 = vmatpush1.msra.mxu0 0.0
    %3385 = vmatprep.subr.mxu0 0.0
    %3386 = vmatpush1.msra.mxu0 0.0
    %3387 = vmatprep.subr.mxu0 0.0
    %3388 = vmatpush1.msra.mxu0 0.0
    %3389 = vmatprep.subr.mxu0 0.0
    %3390 = vmatpush1.msra.mxu0 0.0
    %3391 = vmatprep.subr.mxu0 0.0
    %3392 = vmatpush1.msra.mxu0 0.0
    %3393 = vmatprep.subr.mxu0 0.0
    %3394 = vmatpush1.msra.mxu0 0.0
    %3395 = vmatprep.subr.mxu0 0.0
    %3396 = vmatpush1.msra.mxu0 0.0
    %3397 = vmatprep.subr.mxu0 0.0
    %3398 = vmatpush1.msra.mxu0 0.0
    %3399 = vmatprep.subr.mxu0 0.0
    %3400 = vmatpush1.msra.mxu0 0.0
    %3401 = vmatprep.subr.mxu0 0.0
    %3402 = vmatpush1.msra.mxu0 0.0
    %3403 = vmatprep.subr.mxu0 0.0
    %3404 = vmatpush1.msra.mxu0 0.0
    %3405 = vmatprep.subr.mxu0 0.0
    %3406 = vmatpush1.msra.mxu0 0.0
    %3407 = vmatprep.subr.mxu0 0.0
    %3408 = vmatpush1.msra.mxu0 0.0
    %3409 = vmatprep.subr.mxu0 0.0
    %3410 = vmatpush1.msra.mxu0 0.0
    %3411 = vmatprep.subr.mxu0 0.0
    %3412 = vmatpush1.msra.mxu0 0.0
    %3413 = vmatprep.subr.mxu0 0.0
    %3414 = vmatpush1.msra.mxu0 0.0
    %3415 = vmatprep.subr.mxu0 0.0
    %3416 = vmatpush1.msra.mxu0 0.0
    %3417 = vmatprep.subr.mxu0 0.0
    %3418 = vmatpush1.msra.mxu0 0.0
    %3419 = vmatprep.subr.mxu0 0.0
    %3420 = vmatpush1.msra.mxu0 0.0
    %3421 = vmatprep.subr.mxu0 0.0
    %3422 = vmatpush1.msra.mxu0 0.0
    %3423 = vmatprep.subr.mxu0 0.0
    %3424 = vmatpush1.msra.mxu0 0.0
    %3425 = vmatprep.subr.mxu0 0.0
    %3426 = vmatpush1.msra.mxu0 0.0
    %3427 = vmatprep.subr.mxu0 0.0
    %3428 = vmatpush1.msra.mxu0 0.0
    %3429 = vmatprep.subr.mxu0 0.0
    %3430 = vmatpush1.msra.mxu0 0.0
    %3431 = vmatprep.subr.mxu0 0.0
    %3432 = vmatpush1.msra.mxu0 0.0
    %3433 = vmatprep.mubr.f32.mxu0 0.0
    %3434 = vmatmul.mubr.f32.gmra.mrb[0].mxu0 %v783
    %v3435 = vpop.f32.mrb[0].mxu0
    %v3436 = vadd.f32 %v3275, %v3435
    %v3437 = vpop.f32.mrb[0].mxu0
    %v3438 = vadd.f32 %v3277, %v3437
    %3439 = vmatprep.mubr.f32.mxu0 0.0
    %3440 = vmatmul.mubr.f32.gmra.mrb[0].mxu0 %v786
    %v3441 = vpop.f32.mrb[0].mxu0
    %v3442 = vadd.f32 %v3281, %v3441
    %v3443 = vpop.f32.mrb[0].mxu0
    %v3444 = vadd.f32 %v3283, %v3443
    %3445 = vmatprep.mubr.f32.mxu0 0.0
    %3446 = vmatmul.mubr.f32.gmra.mrb[0].mxu0 %v789
    %v3447 = vpop.f32.mrb[0].mxu0
    %v3448 = vadd.f32 %v3287, %v3447
    %v3449 = vpop.f32.mrb[0].mxu0
    %v3450 = vadd.f32 %v3289, %v3449
    %3451 = vmatprep.mubr.f32.mxu0 0.0
    %3452 = vmatmul.mubr.f32.gmra.mrb[0].mxu0 %v792
    %v3453 = vpop.f32.mrb[0].mxu0
    %v3454 = vadd.f32 %v3293, %v3453
    %v3455 = vpop.f32.mrb[0].mxu0
    %v3456 = vadd.f32 %v3295, %v3455
    %3457 = vmatprep.mubr.f32.mxu0 0.0
    %3458 = vmatmul.mubr.f32.gmra.mrb[0].mxu0 %v795
    %v3459 = vpop.f32.mrb[0].mxu0
    %v3460 = vadd.f32 %v3299, %v3459
    %v3461 = vpop.f32.mrb[0].mxu0
    %v3462 = vadd.f32 %v3301, %v3461
    %3463 = vmatprep.mubr.f32.mxu0 0.0
    %3464 = vmatmul.mubr.f32.gmra.mrb[0].mxu0 %v798
    %v3465 = vpop.f32.mrb[0].mxu0
    %v3466 = vadd.f32 %v3305, %v3465
    %v3467 = vpop.f32.mrb[0].mxu0
    %v3468 = vadd.f32 %v3307, %v3467
    %3469 = vmatprep.mubr.f32.mxu0 0.0
    %3470 = vmatmul.mubr.f32.gmra.mrb[0].mxu0 %v801
    %v3471 = vpop.f32.mrb[0].mxu0
    %v3472 = vadd.f32 %v3311, %v3471
    %v3473 = vpop.f32.mrb[0].mxu0
    %v3474 = vadd.f32 %v3313, %v3473
    %3475 = vmatprep.mubr.f32.mxu0 0.0
    %3476 = vmatmul.mubr.f32.gmra.mrb[0].mxu0 %v804
    %v3477 = vpop.f32.mrb[0].mxu0
    %v3478 = vadd.f32 %v3317, %v3477
    %v3479 = vpop.f32.mrb[0].mxu0
    %v3480 = vadd.f32 %v3319, %v3479
    %3481 = vmatprep.mubr.f32.mxu0 0.0
    %3482 = vmatmul.mubr.f32.gmra.mrb[0].mxu0 %v807
    %v3483 = vpop.f32.mrb[0].mxu0
    %v3484 = vadd.f32 %v3323, %v3483
    %v3485 = vpop.f32.mrb[0].mxu0
    %v3486 = vadd.f32 %v3325, %v3485
    %3487 = vmatprep.mubr.f32.mxu0 0.0
    %3488 = vmatmul.mubr.f32.gmra.mrb[0].mxu0 %v810
    %v3489 = vpop.f32.mrb[0].mxu0
    %v3490 = vadd.f32 %v3329, %v3489
    %v3491 = vpop.f32.mrb[0].mxu0
    %v3492 = vadd.f32 %v3331, %v3491
    %3493 = vmatprep.mubr.f32.mxu0 0.0
    %3494 = vmatmul.mubr.f32.gmra.mrb[0].mxu0 %v813
    %v3495 = vpop.f32.mrb[0].mxu0
    %v3496 = vadd.f32 %v3335, %v3495
    %v3497 = vpop.f32.mrb[0].mxu0
    %v3498 = vadd.f32 %v3337, %v3497
    %3499 = vmatprep.mubr.f32.mxu0 0.0
    %3500 = vmatmul.mubr.f32.gmra.mrb[0].mxu0 %v816
    %v3501 = vpop.f32.mrb[0].mxu0
    %v3502 = vadd.f32 %v3341, %v3501
    %v3503 = vpop.f32.mrb[0].mxu0
    %v3504 = vadd.f32 %v3343, %v3503
    %3505 = vmatprep.mubr.f32.mxu0 0.0
    %3506 = vmatmul.mubr.f32.gmra.mrb[0].mxu0 %v819
    %v3507 = vpop.f32.mrb[0].mxu0
    %v3508 = vadd.f32 %v3347, %v3507
    %v3509 = vpop.f32.mrb[0].mxu0
    %v3510 = vadd.f32 %v3349, %v3509
    %3511 = vmatprep.mubr.f32.mxu0 0.0
    %3512 = vmatmul.mubr.f32.gmra.mrb[0].mxu0 %v822
    %v3513 = vpop.f32.mrb[0].mxu0
    %v3514 = vadd.f32 %v3353, %v3513
    %v3515 = vpop.f32.mrb[0].mxu0
    %v3516 = vadd.f32 %v3355, %v3515
    %3517 = vmatprep.mubr.f32.mxu0 0.0
    %3518 = vmatmul.mubr.f32.gmra.mrb[0].mxu0 %v825
    %v3519 = vpop.f32.mrb[0].mxu0
    %v3520 = vadd.f32 %v3359, %v3519
    %v3521 = vpop.f32.mrb[0].mxu0
    %v3522 = vadd.f32 %v3361, %v3521
    %3523 = vmatprep.mubr.f32.mxu0 0.0
    %3524 = vmatmul.mubr.f32.gmra.mrb[0].mxu0 %v828
    %v3525 = vpop.f32.mrb[0].mxu0
    %v3526 = vadd.f32 %v3365, %v3525
    %v3527 = vpop.f32.mrb[0].mxu0
    %v3528 = vadd.f32 %v3367, %v3527
    %3529 = vdwg.mxu0
    %3530 = vrot.lane.b32.xlu0 %v3202, 126
    %v3531 = vpop.permute.xlu0 %3530
    %v3532 = vsel %vm1142, %v1139, %v3531
    %3534 = vmatprep.subr.mxu0 %v3532
    %3535 = vmatpush1.msra.mxu0 %v1143
    %3536 = vmatprep.subr.mxu0 0.0
    %3537 = vmatpush1.msra.mxu0 0.0
    %3538 = vmatprep.subr.mxu0 0.0
    %3539 = vmatpush1.msra.mxu0 0.0
    %3540 = vmatprep.subr.mxu0 0.0
    %3541 = vmatpush1.msra.mxu0 0.0
    %3542 = vmatprep.subr.mxu0 0.0
    %3543 = vmatpush1.msra.mxu0 0.0
    %3544 = vmatprep.subr.mxu0 0.0
    %3545 = vmatpush1.msra.mxu0 0.0
    %3546 = vmatprep.subr.mxu0 0.0
    %3547 = vmatpush1.msra.mxu0 0.0
    %3548 = vmatprep.subr.mxu0 0.0
    %3549 = vmatpush1.msra.mxu0 0.0
    %3550 = vmatprep.subr.mxu0 0.0
    %3551 = vmatpush1.msra.mxu0 0.0
    %3552 = vmatprep.subr.mxu0 0.0
    %3553 = vmatpush1.msra.mxu0 0.0
    %3554 = vmatprep.subr.mxu0 0.0
    %3555 = vmatpush1.msra.mxu0 0.0
    %3556 = vmatprep.subr.mxu0 0.0
    %3557 = vmatpush1.msra.mxu0 0.0
    %3558 = vmatprep.subr.mxu0 0.0
    %3559 = vmatpush1.msra.mxu0 0.0
    %3560 = vmatprep.subr.mxu0 0.0
    %3561 = vmatpush1.msra.mxu0 0.0
    %3562 = vmatprep.subr.mxu0 0.0
    %3563 = vmatpush1.msra.mxu0 0.0
    %3564 = vmatprep.subr.mxu0 0.0
    %3565 = vmatpush1.msra.mxu0 0.0
    %3566 = vmatprep.subr.mxu0 0.0
    %3567 = vmatpush1.msra.mxu0 0.0
    %3568 = vmatprep.subr.mxu0 0.0
    %3569 = vmatpush1.msra.mxu0 0.0
    %3570 = vmatprep.subr.mxu0 0.0
    %3571 = vmatpush1.msra.mxu0 0.0
    %3572 = vmatprep.subr.mxu0 0.0
    %3573 = vmatpush1.msra.mxu0 0.0
    %3574 = vmatprep.subr.mxu0 0.0
    %3575 = vmatpush1.msra.mxu0 0.0
    %3576 = vmatprep.subr.mxu0 0.0
    %3577 = vmatpush1.msra.mxu0 0.0
    %3578 = vmatprep.subr.mxu0 0.0
    %3579 = vmatpush1.msra.mxu0 0.0
    %3580 = vmatprep.subr.mxu0 0.0
    %3581 = vmatpush1.msra.mxu0 0.0
    %3582 = vmatprep.subr.mxu0 0.0
    %3583 = vmatpush1.msra.mxu0 0.0
    %3584 = vmatprep.subr.mxu0 0.0
    %3585 = vmatpush1.msra.mxu0 0.0
    %3586 = vmatprep.subr.mxu0 0.0
    %3587 = vmatpush1.msra.mxu0 0.0
    %3588 = vmatprep.subr.mxu0 0.0
    %3589 = vmatpush1.msra.mxu0 0.0
    %3590 = vmatprep.subr.mxu0 0.0
    %3591 = vmatpush1.msra.mxu0 0.0
    %3592 = vmatprep.subr.mxu0 0.0
    %3593 = vmatpush1.msra.mxu0 0.0
    %3594 = vmatprep.subr.mxu0 0.0
    %3595 = vmatpush1.msra.mxu0 0.0
    %3596 = vmatprep.subr.mxu0 0.0
    %3597 = vmatpush1.msra.mxu0 0.0
    %3598 = vmatprep.mubr.f32.mxu0 0.0
    %3599 = vmatmul.mubr.f32.gmra.mrb[0].mxu0 %v1149
    %v3600 = vpop.f32.mrb[0].mxu0
    %v3601 = vadd.f32 0.0, %v3600
    %v3602 = vpop.f32.mrb[0].mxu0
    %v3603 = vadd.f32 0.0, %v3602
    %3604 = vmatprep.mubr.f32.mxu0 0.0
    %3605 = vmatmul.mubr.f32.gmra.mrb[0].mxu0 %v1152
    %v3606 = vpop.f32.mrb[0].mxu0
    %v3607 = vadd.f32 0.0, %v3606
    %v3608 = vpop.f32.mrb[0].mxu0
    %v3609 = vadd.f32 0.0, %v3608
    %3610 = vmatprep.mubr.f32.mxu0 0.0
    %3611 = vmatmul.mubr.f32.gmra.mrb[0].mxu0 %v1155
    %v3612 = vpop.f32.mrb[0].mxu0
    %v3613 = vadd.f32 0.0, %v3612
    %v3614 = vpop.f32.mrb[0].mxu0
    %v3615 = vadd.f32 0.0, %v3614
    %3616 = vmatprep.mubr.f32.mxu0 0.0
    %3617 = vmatmul.mubr.f32.gmra.mrb[0].mxu0 %v1158
    %v3618 = vpop.f32.mrb[0].mxu0
    %v3619 = vadd.f32 0.0, %v3618
    %v3620 = vpop.f32.mrb[0].mxu0
    %v3621 = vadd.f32 0.0, %v3620
    %3622 = vmatprep.mubr.f32.mxu0 0.0
    %3623 = vmatmul.mubr.f32.gmra.mrb[0].mxu0 %v1161
    %v3624 = vpop.f32.mrb[0].mxu0
    %v3625 = vadd.f32 0.0, %v3624
    %v3626 = vpop.f32.mrb[0].mxu0
    %v3627 = vadd.f32 0.0, %v3626
    %3628 = vmatprep.mubr.f32.mxu0 0.0
    %3629 = vmatmul.mubr.f32.gmra.mrb[0].mxu0 %v1164
    %v3630 = vpop.f32.mrb[0].mxu0
    %v3631 = vadd.f32 0.0, %v3630
    %v3632 = vpop.f32.mrb[0].mxu0
    %v3633 = vadd.f32 0.0, %v3632
    %3634 = vmatprep.mubr.f32.mxu0 0.0
    %3635 = vmatmul.mubr.f32.gmra.mrb[0].mxu0 %v1167
    %v3636 = vpop.f32.mrb[0].mxu0
    %v3637 = vadd.f32 0.0, %v3636
    %v3638 = vpop.f32.mrb[0].mxu0
    %v3639 = vadd.f32 0.0, %v3638
    %3640 = vmatprep.mubr.f32.mxu0 0.0
    %3641 = vmatmul.mubr.f32.gmra.mrb[0].mxu0 %v1170
    %v3642 = vpop.f32.mrb[0].mxu0
    %v3643 = vadd.f32 0.0, %v3642
    %v3644 = vpop.f32.mrb[0].mxu0
    %v3645 = vadd.f32 0.0, %v3644
    %3646 = vmatprep.mubr.f32.mxu0 0.0
    %3647 = vmatmul.mubr.f32.gmra.mrb[0].mxu0 %v1173
    %v3648 = vpop.f32.mrb[0].mxu0
    %v3649 = vadd.f32 0.0, %v3648
    %v3650 = vpop.f32.mrb[0].mxu0
    %v3651 = vadd.f32 0.0, %v3650
    %3652 = vmatprep.mubr.f32.mxu0 0.0
    %3653 = vmatmul.mubr.f32.gmra.mrb[0].mxu0 %v1176
    %v3654 = vpop.f32.mrb[0].mxu0
    %v3655 = vadd.f32 0.0, %v3654
    %v3656 = vpop.f32.mrb[0].mxu0
    %v3657 = vadd.f32 0.0, %v3656
    %3658 = vmatprep.mubr.f32.mxu0 0.0
    %3659 = vmatmul.mubr.f32.gmra.mrb[0].mxu0 %v1179
    %v3660 = vpop.f32.mrb[0].mxu0
    %v3661 = vadd.f32 0.0, %v3660
    %v3662 = vpop.f32.mrb[0].mxu0
    %v3663 = vadd.f32 0.0, %v3662
    %3664 = vmatprep.mubr.f32.mxu0 0.0
    %3665 = vmatmul.mubr.f32.gmra.mrb[0].mxu0 %v1182
    %v3666 = vpop.f32.mrb[0].mxu0
    %v3667 = vadd.f32 0.0, %v3666
    %v3668 = vpop.f32.mrb[0].mxu0
    %v3669 = vadd.f32 0.0, %v3668
    %3670 = vmatprep.mubr.f32.mxu0 0.0
    %3671 = vmatmul.mubr.f32.gmra.mrb[0].mxu0 %v1185
    %v3672 = vpop.f32.mrb[0].mxu0
    %v3673 = vadd.f32 0.0, %v3672
    %v3674 = vpop.f32.mrb[0].mxu0
    %v3675 = vadd.f32 0.0, %v3674
    %3676 = vmatprep.mubr.f32.mxu0 0.0
    %3677 = vmatmul.mubr.f32.gmra.mrb[0].mxu0 %v1188
    %v3678 = vpop.f32.mrb[0].mxu0
    %v3679 = vadd.f32 0.0, %v3678
    %v3680 = vpop.f32.mrb[0].mxu0
    %v3681 = vadd.f32 0.0, %v3680
    %3682 = vmatprep.mubr.f32.mxu0 0.0
    %3683 = vmatmul.mubr.f32.gmra.mrb[0].mxu0 %v1191
    %v3684 = vpop.f32.mrb[0].mxu0
    %v3685 = vadd.f32 0.0, %v3684
    %v3686 = vpop.f32.mrb[0].mxu0
    %v3687 = vadd.f32 0.0, %v3686
    %3688 = vmatprep.mubr.f32.mxu0 0.0
    %3689 = vmatmul.mubr.f32.gmra.mrb[0].mxu0 %v1194
    %v3690 = vpop.f32.mrb[0].mxu0
    %v3691 = vadd.f32 0.0, %v3690
    %v3692 = vpop.f32.mrb[0].mxu0
    %v3693 = vadd.f32 0.0, %v3692
    %3694 = vdwg.mxu0
    %v3695 = vadd.f32 %v3436, %v3601
    %v3696 = vadd.f32 %v3438, %v3603
    %v3697 = vadd.f32 %v3442, %v3607
    %v3698 = vadd.f32 %v3444, %v3609
    %v3699 = vadd.f32 %v3448, %v3613
    %v3700 = vadd.f32 %v3450, %v3615
    %v3701 = vadd.f32 %v3454, %v3619
    %v3702 = vadd.f32 %v3456, %v3621
    %v3703 = vadd.f32 %v3460, %v3625
    %v3704 = vadd.f32 %v3462, %v3627
    %v3705 = vadd.f32 %v3466, %v3631
    %v3706 = vadd.f32 %v3468, %v3633
    %v3707 = vadd.f32 %v3472, %v3637
    %v3708 = vadd.f32 %v3474, %v3639
    %v3709 = vadd.f32 %v3478, %v3643
    %v3710 = vadd.f32 %v3480, %v3645
    %v3711 = vadd.f32 %v3484, %v3649
    %v3712 = vadd.f32 %v3486, %v3651
    %v3713 = vadd.f32 %v3490, %v3655
    %v3714 = vadd.f32 %v3492, %v3657
    %v3715 = vadd.f32 %v3496, %v3661
    %v3716 = vadd.f32 %v3498, %v3663
    %v3717 = vadd.f32 %v3502, %v3667
    %v3718 = vadd.f32 %v3504, %v3669
    %v3719 = vadd.f32 %v3508, %v3673
    %v3720 = vadd.f32 %v3510, %v3675
    %v3721 = vadd.f32 %v3514, %v3679
    %v3722 = vadd.f32 %v3516, %v3681
    %v3723 = vadd.f32 %v3520, %v3685
    %v3724 = vadd.f32 %v3522, %v3687
    %v3725 = vadd.f32 %v3526, %v3691
    %v3726 = vadd.f32 %v3528, %v3693
    %v3727 = vadd.f32 %v3695, %v1553
    %v3728 = vadd.f32 %v3696, %v1553
    %v3729 = vadd.f32 %v3697, %v1558
    %v3730 = vadd.f32 %v3698, %v1558
    %v3731 = vadd.f32 %v3699, %v1563
    %v3732 = vadd.f32 %v3700, %v1563
    %v3733 = vadd.f32 %v3701, %v1568
    %v3734 = vadd.f32 %v3702, %v1568
    %v3735 = vadd.f32 %v3703, %v1573
    %v3736 = vadd.f32 %v3704, %v1573
    %v3737 = vadd.f32 %v3705, %v1578
    %v3738 = vadd.f32 %v3706, %v1578
    %v3739 = vadd.f32 %v3707, %v1583
    %v3740 = vadd.f32 %v3708, %v1583
    %v3741 = vadd.f32 %v3709, %v1588
    %v3742 = vadd.f32 %v3710, %v1588
    %v3743 = vadd.f32 %v3711, %v1593
    %v3744 = vadd.f32 %v3712, %v1593
    %v3745 = vadd.f32 %v3713, %v1598
    %v3746 = vadd.f32 %v3714, %v1598
    %v3747 = vadd.f32 %v3715, %v1603
    %v3748 = vadd.f32 %v3716, %v1603
    %v3749 = vadd.f32 %v3717, %v1608
    %v3750 = vadd.f32 %v3718, %v1608
    %v3751 = vadd.f32 %v3719, %v1613
    %v3752 = vadd.f32 %v3720, %v1613
    %v3753 = vadd.f32 %v3721, %v1618
    %v3754 = vadd.f32 %v3722, %v1618
    %v3755 = vadd.f32 %v3723, %v1623
    %v3756 = vadd.f32 %v3724, %v1623
    %v3757 = vadd.f32 %v3725, %v1628
    %v3758 = vadd.f32 %v3726, %v1628
    %v3759 = vmax.f32 %v3727, 0.0
    %v3760 = vmax.f32 %v3728, 0.0
    %v3761 = vmax.f32 %v3729, 0.0
    %v3762 = vmax.f32 %v3730, 0.0
    %v3763 = vmax.f32 %v3731, 0.0
    %v3764 = vmax.f32 %v3732, 0.0
    %v3765 = vmax.f32 %v3733, 0.0
    %v3766 = vmax.f32 %v3734, 0.0
    %v3767 = vmax.f32 %v3735, 0.0
    %v3768 = vmax.f32 %v3736, 0.0
    %v3769 = vmax.f32 %v3737, 0.0
    %v3770 = vmax.f32 %v3738, 0.0
    %v3771 = vmax.f32 %v3739, 0.0
    %v3772 = vmax.f32 %v3740, 0.0
    %v3773 = vmax.f32 %v3741, 0.0
    %v3774 = vmax.f32 %v3742, 0.0
    %v3775 = vmax.f32 %v3743, 0.0
    %v3776 = vmax.f32 %v3744, 0.0
    %v3777 = vmax.f32 %v3745, 0.0
    %v3778 = vmax.f32 %v3746, 0.0
    %v3779 = vmax.f32 %v3747, 0.0
    %v3780 = vmax.f32 %v3748, 0.0
    %v3781 = vmax.f32 %v3749, 0.0
    %v3782 = vmax.f32 %v3750, 0.0
    %v3783 = vmax.f32 %v3751, 0.0
    %v3784 = vmax.f32 %v3752, 0.0
    %v3785 = vmax.f32 %v3753, 0.0
    %v3786 = vmax.f32 %v3754, 0.0
    %v3787 = vmax.f32 %v3755, 0.0
    %v3788 = vmax.f32 %v3756, 0.0
    %v3789 = vmax.f32 %v3757, 0.0
    %v3790 = vmax.f32 %v3758, 0.0
    %3823 = vrot.lane.b32.xlu0 %v3759, 127
    %v3824 = vpop.permute.xlu0 %3823
    %3825 = vrot.lane.b32.xlu0 %v3760, 127
    %v3826 = vpop.permute.xlu0 %3825
    %3827 = vrot.lane.b32.xlu0 %v3761, 127
    %v3828 = vpop.permute.xlu0 %3827
    %3829 = vrot.lane.b32.xlu0 %v3762, 127
    %v3830 = vpop.permute.xlu0 %3829
    %3831 = vrot.lane.b32.xlu0 %v3763, 127
    %v3832 = vpop.permute.xlu0 %3831
    %3833 = vrot.lane.b32.xlu0 %v3764, 127
    %v3834 = vpop.permute.xlu0 %3833
    %3835 = vrot.lane.b32.xlu0 %v3765, 127
    %v3836 = vpop.permute.xlu0 %3835
    %3837 = vrot.lane.b32.xlu0 %v3766, 127
    %v3838 = vpop.permute.xlu0 %3837
    %3839 = vrot.lane.b32.xlu0 %v3767, 127
    %v3840 = vpop.permute.xlu0 %3839
    %3841 = vrot.lane.b32.xlu0 %v3768, 127
    %v3842 = vpop.permute.xlu0 %3841
    %3843 = vrot.lane.b32.xlu0 %v3769, 127
    %v3844 = vpop.permute.xlu0 %3843
    %3845 = vrot.lane.b32.xlu0 %v3770, 127
    %v3846 = vpop.permute.xlu0 %3845
    %3847 = vrot.lane.b32.xlu0 %v3771, 127
    %v3848 = vpop.permute.xlu0 %3847
    %3849 = vrot.lane.b32.xlu0 %v3772, 127
    %v3850 = vpop.permute.xlu0 %3849
    %3851 = vrot.lane.b32.xlu0 %v3773, 127
    %v3852 = vpop.permute.xlu0 %3851
    %3853 = vrot.lane.b32.xlu0 %v3774, 127
    %v3854 = vpop.permute.xlu0 %3853
    %3855 = vrot.lane.b32.xlu0 %v3775, 127
    %v3856 = vpop.permute.xlu0 %3855
    %3857 = vrot.lane.b32.xlu0 %v3776, 127
    %v3858 = vpop.permute.xlu0 %3857
    %3859 = vrot.lane.b32.xlu0 %v3777, 127
    %v3860 = vpop.permute.xlu0 %3859
    %3861 = vrot.lane.b32.xlu0 %v3778, 127
    %v3862 = vpop.permute.xlu0 %3861
    %3863 = vrot.lane.b32.xlu0 %v3779, 127
    %v3864 = vpop.permute.xlu0 %3863
    %3865 = vrot.lane.b32.xlu0 %v3780, 127
    %v3866 = vpop.permute.xlu0 %3865
    %3867 = vrot.lane.b32.xlu0 %v3781, 127
    %v3868 = vpop.permute.xlu0 %3867
    %3869 = vrot.lane.b32.xlu0 %v3782, 127
    %v3870 = vpop.permute.xlu0 %3869
    %3871 = vrot.lane.b32.xlu0 %v3783, 127
    %v3872 = vpop.permute.xlu0 %3871
    %3873 = vrot.lane.b32.xlu0 %v3784, 127
    %v3874 = vpop.permute.xlu0 %3873
    %3875 = vrot.lane.b32.xlu0 %v3785, 127
    %v3876 = vpop.permute.xlu0 %3875
    %3877 = vrot.lane.b32.xlu0 %v3786, 127
    %v3878 = vpop.permute.xlu0 %3877
    %3879 = vrot.lane.b32.xlu0 %v3787, 127
    %v3880 = vpop.permute.xlu0 %3879
    %3881 = vrot.lane.b32.xlu0 %v3788, 127
    %v3882 = vpop.permute.xlu0 %3881
    %3883 = vrot.lane.b32.xlu0 %v3789, 127
    %v3884 = vpop.permute.xlu0 %3883
    %3885 = vrot.lane.b32.xlu0 %v3790, 127
    %v3886 = vpop.permute.xlu0 %3885
    %v3887 = vsel %vm421, %v3824, %v3826
    %v3888 = vsel %vm421, %v3828, %v3830
    %v3889 = vsel %vm421, %v3832, %v3834
    %v3890 = vsel %vm421, %v3836, %v3838
    %v3891 = vsel %vm421, %v3840, %v3842
    %v3892 = vsel %vm421, %v3844, %v3846
    %v3893 = vsel %vm421, %v3848, %v3850
    %v3894 = vsel %vm421, %v3852, %v3854
    %v3895 = vsel %vm421, %v3856, %v3858
    %v3896 = vsel %vm421, %v3860, %v3862
    %v3897 = vsel %vm421, %v3864, %v3866
    %v3898 = vsel %vm421, %v3868, %v3870
    %v3899 = vsel %vm421, %v3872, %v3874
    %v3900 = vsel %vm421, %v3876, %v3878
    %v3901 = vsel %vm421, %v3880, %v3882
    %v3902 = vsel %vm421, %v3884, %v3886
    %v3935 = vmax.f32 %v3759, %v3887
    %v3936 = vmax.f32 %v3760, %v3826
    %v3937 = vmax.f32 %v3761, %v3888
    %v3938 = vmax.f32 %v3762, %v3830
    %v3939 = vmax.f32 %v3763, %v3889
    %v3940 = vmax.f32 %v3764, %v3834
    %v3941 = vmax.f32 %v3765, %v3890
    %v3942 = vmax.f32 %v3766, %v3838
    %v3943 = vmax.f32 %v3767, %v3891
    %v3944 = vmax.f32 %v3768, %v3842
    %v3945 = vmax.f32 %v3769, %v3892
    %v3946 = vmax.f32 %v3770, %v3846
    %v3947 = vmax.f32 %v3771, %v3893
    %v3948 = vmax.f32 %v3772, %v3850
    %v3949 = vmax.f32 %v3773, %v3894
    %v3950 = vmax.f32 %v3774, %v3854
    %v3951 = vmax.f32 %v3775, %v3895
    %v3952 = vmax.f32 %v3776, %v3858
    %v3953 = vmax.f32 %v3777, %v3896
    %v3954 = vmax.f32 %v3778, %v3862
    %v3955 = vmax.f32 %v3779, %v3897
    %v3956 = vmax.f32 %v3780, %v3866
    %v3957 = vmax.f32 %v3781, %v3898
    %v3958 = vmax.f32 %v3782, %v3870
    %v3959 = vmax.f32 %v3783, %v3899
    %v3960 = vmax.f32 %v3784, %v3874
    %v3961 = vmax.f32 %v3785, %v3900
    %v3962 = vmax.f32 %v3786, %v3878
    %v3963 = vmax.f32 %v3787, %v3901
    %v3964 = vmax.f32 %v3788, %v3882
    %v3965 = vmax.f32 %v3789, %v3902
    %v3966 = vmax.f32 %v3790, %v3886
    %3967 = vrot.lane.b32.xlu0 %v3759, 126
    %v3968 = vpop.permute.xlu0 %3967
    %3969 = vrot.lane.b32.xlu0 %v3760, 126
    %v3970 = vpop.permute.xlu0 %3969
    %3971 = vrot.lane.b32.xlu0 %v3761, 126
    %v3972 = vpop.permute.xlu0 %3971
    %3973 = vrot.lane.b32.xlu0 %v3762, 126
    %v3974 = vpop.permute.xlu0 %3973
    %3975 = vrot.lane.b32.xlu0 %v3763, 126
    %v3976 = vpop.permute.xlu0 %3975
    %3977 = vrot.lane.b32.xlu0 %v3764, 126
    %v3978 = vpop.permute.xlu0 %3977
    %3979 = vrot.lane.b32.xlu0 %v3765, 126
    %v3980 = vpop.permute.xlu0 %3979
    %3981 = vrot.lane.b32.xlu0 %v3766, 126
    %v3982 = vpop.permute.xlu0 %3981
    %3983 = vrot.lane.b32.xlu0 %v3767, 126
    %v3984 = vpop.permute.xlu0 %3983
    %3985 = vrot.lane.b32.xlu0 %v3768, 126
    %v3986 = vpop.permute.xlu0 %3985
    %3987 = vrot.lane.b32.xlu0 %v3769, 126
    %v3988 = vpop.permute.xlu0 %3987
    %3989 = vrot.lane.b32.xlu0 %v3770, 126
    %v3990 = vpop.permute.xlu0 %3989
    %3991 = vrot.lane.b32.xlu0 %v3771, 126
    %v3992 = vpop.permute.xlu0 %3991
    %3993 = vrot.lane.b32.xlu0 %v3772, 126
    %v3994 = vpop.permute.xlu0 %3993
    %3995 = vrot.lane.b32.xlu0 %v3773, 126
    %v3996 = vpop.permute.xlu0 %3995
    %3997 = vrot.lane.b32.xlu0 %v3774, 126
    %v3998 = vpop.permute.xlu0 %3997
    %3999 = vrot.lane.b32.xlu0 %v3775, 126
    %v4000 = vpop.permute.xlu0 %3999
    %4001 = vrot.lane.b32.xlu0 %v3776, 126
    %v4002 = vpop.permute.xlu0 %4001
    %4003 = vrot.lane.b32.xlu0 %v3777, 126
    %v4004 = vpop.permute.xlu0 %4003
    %4005 = vrot.lane.b32.xlu0 %v3778, 126
    %v4006 = vpop.permute.xlu0 %4005
    %4007 = vrot.lane.b32.xlu0 %v3779, 126
    %v4008 = vpop.permute.xlu0 %4007
    %4009 = vrot.lane.b32.xlu0 %v3780, 126
    %v4010 = vpop.permute.xlu0 %4009
    %4011 = vrot.lane.b32.xlu0 %v3781, 126
    %v4012 = vpop.permute.xlu0 %4011
    %4013 = vrot.lane.b32.xlu0 %v3782, 126
    %v4014 = vpop.permute.xlu0 %4013
    %4015 = vrot.lane.b32.xlu0 %v3783, 126
    %v4016 = vpop.permute.xlu0 %4015
    %4017 = vrot.lane.b32.xlu0 %v3784, 126
    %v4018 = vpop.permute.xlu0 %4017
    %4019 = vrot.lane.b32.xlu0 %v3785, 126
    %v4020 = vpop.permute.xlu0 %4019
    %4021 = vrot.lane.b32.xlu0 %v3786, 126
    %v4022 = vpop.permute.xlu0 %4021
    %4023 = vrot.lane.b32.xlu0 %v3787, 126
    %v4024 = vpop.permute.xlu0 %4023
    %4025 = vrot.lane.b32.xlu0 %v3788, 126
    %v4026 = vpop.permute.xlu0 %4025
    %4027 = vrot.lane.b32.xlu0 %v3789, 126
    %v4028 = vpop.permute.xlu0 %4027
    %4029 = vrot.lane.b32.xlu0 %v3790, 126
    %v4030 = vpop.permute.xlu0 %4029
    %v4031 = vsel %vm1142, %v3968, %v3970
    %v4032 = vsel %vm1142, %v3972, %v3974
    %v4033 = vsel %vm1142, %v3976, %v3978
    %v4034 = vsel %vm1142, %v3980, %v3982
    %v4035 = vsel %vm1142, %v3984, %v3986
    %v4036 = vsel %vm1142, %v3988, %v3990
    %v4037 = vsel %vm1142, %v3992, %v3994
    %v4038 = vsel %vm1142, %v3996, %v3998
    %v4039 = vsel %vm1142, %v4000, %v4002
    %v4040 = vsel %vm1142, %v4004, %v4006
    %v4041 = vsel %vm1142, %v4008, %v4010
    %v4042 = vsel %vm1142, %v4012, %v4014
    %v4043 = vsel %vm1142, %v4016, %v4018
    %v4044 = vsel %vm1142, %v4020, %v4022
    %v4045 = vsel %vm1142, %v4024, %v4026
    %v4046 = vsel %vm1142, %v4028, %v4030
    %v4079 = vmax.f32 %v3935, %v4031
    %v4080 = vmax.f32 %v3936, %v3970
    %v4081 = vmax.f32 %v3937, %v4032
    %v4082 = vmax.f32 %v3938, %v3974
    %v4083 = vmax.f32 %v3939, %v4033
    %v4084 = vmax.f32 %v3940, %v3978
    %v4085 = vmax.f32 %v3941, %v4034
    %v4086 = vmax.f32 %v3942, %v3982
    %v4087 = vmax.f32 %v3943, %v4035
    %v4088 = vmax.f32 %v3944, %v3986
    %v4089 = vmax.f32 %v3945, %v4036
    %v4090 = vmax.f32 %v3946, %v3990
    %v4091 = vmax.f32 %v3947, %v4037
    %v4092 = vmax.f32 %v3948, %v3994
    %v4093 = vmax.f32 %v3949, %v4038
    %v4094 = vmax.f32 %v3950, %v3998
    %v4095 = vmax.f32 %v3951, %v4039
    %v4096 = vmax.f32 %v3952, %v4002
    %v4097 = vmax.f32 %v3953, %v4040
    %v4098 = vmax.f32 %v3954, %v4006
    %v4099 = vmax.f32 %v3955, %v4041
    %v4100 = vmax.f32 %v3956, %v4010
    %v4101 = vmax.f32 %v3957, %v4042
    %v4102 = vmax.f32 %v3958, %v4014
    %v4103 = vmax.f32 %v3959, %v4043
    %v4104 = vmax.f32 %v3960, %v4018
    %v4105 = vmax.f32 %v3961, %v4044
    %v4106 = vmax.f32 %v3962, %v4022
    %v4107 = vmax.f32 %v3963, %v4045
    %v4108 = vmax.f32 %v3964, %v4026
    %v4109 = vmax.f32 %v3965, %v4046
    %v4110 = vmax.f32 %v3966, %v4030
    %v4112 = vsel %vm1142, %v4080, 0
    %v4115 = vsel %vm1142, %v4082, 0
    %v4118 = vsel %vm1142, %v4084, 0
    %v4121 = vsel %vm1142, %v4086, 0
    %v4124 = vsel %vm1142, %v4088, 0
    %v4127 = vsel %vm1142, %v4090, 0
    %v4130 = vsel %vm1142, %v4092, 0
    %v4133 = vsel %vm1142, %v4094, 0
    %v4136 = vsel %vm1142, %v4096, 0
    %v4139 = vsel %vm1142, %v4098, 0
    %v4142 = vsel %vm1142, %v4100, 0
    %v4145 = vsel %vm1142, %v4102, 0
    %v4148 = vsel %vm1142, %v4104, 0
    %v4151 = vsel %vm1142, %v4106, 0
    %v4154 = vsel %vm1142, %v4108, 0
    %v4157 = vsel %vm1142, %v4110, 0
    %vm4159 = vcmask 1045504
    %v4161 = vsel %vm4159, %v378, 0
    %4163 = vmatprep.subr.mxu0 0.0
    %4164 = vmatpush1.msra.mxu0 %v316
    %4165 = vmatprep.subr.mxu0 0.0
    %4166 = vmatpush1.msra.mxu0 %v318
    %4167 = vmatprep.subr.mxu0 0.0
    %4168 = vmatpush1.msra.mxu0 %v320
    %4169 = vmatprep.subr.mxu0 0.0
    %4170 = vmatpush1.msra.mxu0 %v322
    %4171 = vmatprep.subr.mxu0 0.0
    %4172 = vmatpush1.msra.mxu0 %v324
    %4173 = vmatprep.subr.mxu0 0.0
    %4174 = vmatpush1.msra.mxu0 %v326
    %4175 = vmatprep.subr.mxu0 0.0
    %4176 = vmatpush1.msra.mxu0 %v328
    %4177 = vmatprep.subr.mxu0 0.0
    %4178 = vmatpush1.msra.mxu0 %v330
    %4179 = vmatprep.subr.mxu0 0.0
    %4180 = vmatpush1.msra.mxu0 %v332
    %4181 = vmatprep.subr.mxu0 0.0
    %4182 = vmatpush1.msra.mxu0 %v334
    %4183 = vmatprep.subr.mxu0 0.0
    %4184 = vmatpush1.msra.mxu0 %v336
    %4185 = vmatprep.subr.mxu0 0.0
    %4186 = vmatpush1.msra.mxu0 %v338
    %4187 = vmatprep.subr.mxu0 0.0
    %4188 = vmatpush1.msra.mxu0 %v340
    %4189 = vmatprep.subr.mxu0 0.0
    %4190 = vmatpush1.msra.mxu0 %v342
    %4191 = vmatprep.subr.mxu0 0.0
    %4192 = vmatpush1.msra.mxu0 %v344
    %4193 = vmatprep.subr.mxu0 0.0
    %4194 = vmatpush1.msra.mxu0 %v346
    %4195 = vmatprep.subr.mxu0 0.0
    %4196 = vmatpush1.msra.mxu0 %v348
    %4197 = vmatprep.subr.mxu0 0.0
    %4198 = vmatpush1.msra.mxu0 %v350
    %4199 = vmatprep.subr.mxu0 0.0
    %4200 = vmatpush1.msra.mxu0 %v352
    %4201 = vmatprep.subr.mxu0 0.0
    %4202 = vmatpush1.msra.mxu0 %v354
    %4203 = vmatprep.subr.mxu0 0.0
    %4204 = vmatpush1.msra.mxu0 %v356
    %4205 = vmatprep.subr.mxu0 0.0
    %4206 = vmatpush1.msra.mxu0 %v358
    %4207 = vmatprep.subr.mxu0 0.0
    %4208 = vmatpush1.msra.mxu0 %v360
    %4209 = vmatprep.subr.mxu0 0.0
    %4210 = vmatpush1.msra.mxu0 %v362
    %4211 = vmatprep.subr.mxu0 0.0
    %4212 = vmatpush1.msra.mxu0 %v364
    %4213 = vmatprep.subr.mxu0 0.0
    %4214 = vmatpush1.msra.mxu0 %v366
    %4215 = vmatprep.subr.mxu0 0.0
    %4216 = vmatpush1.msra.mxu0 %v368
    %4217 = vmatprep.subr.mxu0 0.0
    %4218 = vmatpush1.msra.mxu0 %v370
    %4219 = vmatprep.subr.mxu0 0.0
    %4220 = vmatpush1.msra.mxu0 %v372
    %4221 = vmatprep.subr.mxu0 0.0
    %4222 = vmatpush1.msra.mxu0 %v374
    %4223 = vmatprep.subr.mxu0 0.0
    %4224 = vmatpush1.msra.mxu0 %v376
    %4225 = vmatprep.subr.mxu0 0.0
    %4226 = vmatpush1.msra.mxu0 %v4161
    %4227 = vmatprep.mubr.f32.mxu0 %v4112
    %4228 = vmatmul.mubr.f32.gmra.mrb[0].mxu0 %v4079
    %v4229 = vpop.f32.mrb[0].mxu0
    %v4230 = vadd.f32 0.0, %v4229
    %v4231 = vpop.f32.mrb[0].mxu0
    %4232 = vmatprep.mubr.f32.mxu0 %v4115
    %4233 = vmatmul.mubr.f32.gmra.mrb[0].mxu0 %v4081
    %v4234 = vpop.f32.mrb[0].mxu0
    %v4235 = vadd.f32 0.0, %v4234
    %v4236 = vpop.f32.mrb[0].mxu0
    %4237 = vmatprep.mubr.f32.mxu0 %v4118
    %4238 = vmatmul.mubr.f32.gmra.mrb[0].mxu0 %v4083
    %v4239 = vpop.f32.mrb[0].mxu0
    %v4240 = vadd.f32 0.0, %v4239
    %v4241 = vpop.f32.mrb[0].mxu0
    %4242 = vmatprep.mubr.f32.mxu0 %v4121
    %4243 = vmatmul.mubr.f32.gmra.mrb[0].mxu0 %v4085
    %v4244 = vpop.f32.mrb[0].mxu0
    %v4245 = vadd.f32 0.0, %v4244
    %v4246 = vpop.f32.mrb[0].mxu0
    %4247 = vmatprep.mubr.f32.mxu0 %v4124
    %4248 = vmatmul.mubr.f32.gmra.mrb[0].mxu0 %v4087
    %v4249 = vpop.f32.mrb[0].mxu0
    %v4250 = vadd.f32 0.0, %v4249
    %v4251 = vpop.f32.mrb[0].mxu0
    %4252 = vmatprep.mubr.f32.mxu0 %v4127
    %4253 = vmatmul.mubr.f32.gmra.mrb[0].mxu0 %v4089
    %v4254 = vpop.f32.mrb[0].mxu0
    %v4255 = vadd.f32 0.0, %v4254
    %v4256 = vpop.f32.mrb[0].mxu0
    %4257 = vmatprep.mubr.f32.mxu0 %v4130
    %4258 = vmatmul.mubr.f32.gmra.mrb[0].mxu0 %v4091
    %v4259 = vpop.f32.mrb[0].mxu0
    %v4260 = vadd.f32 0.0, %v4259
    %v4261 = vpop.f32.mrb[0].mxu0
    %4262 = vmatprep.mubr.f32.mxu0 %v4133
    %4263 = vmatmul.mubr.f32.gmra.mrb[0].mxu0 %v4093
    %v4264 = vpop.f32.mrb[0].mxu0
    %v4265 = vadd.f32 0.0, %v4264
    %v4266 = vpop.f32.mrb[0].mxu0
    %4267 = vmatprep.mubr.f32.mxu0 %v4136
    %4268 = vmatmul.mubr.f32.gmra.mrb[0].mxu0 %v4095
    %v4269 = vpop.f32.mrb[0].mxu0
    %v4270 = vadd.f32 0.0, %v4269
    %v4271 = vpop.f32.mrb[0].mxu0
    %4272 = vmatprep.mubr.f32.mxu0 %v4139
    %4273 = vmatmul.mubr.f32.gmra.mrb[0].mxu0 %v4097
    %v4274 = vpop.f32.mrb[0].mxu0
    %v4275 = vadd.f32 0.0, %v4274
    %v4276 = vpop.f32.mrb[0].mxu0
    %4277 = vmatprep.mubr.f32.mxu0 %v4142
    %4278 = vmatmul.mubr.f32.gmra.mrb[0].mxu0 %v4099
    %v4279 = vpop.f32.mrb[0].mxu0
    %v4280 = vadd.f32 0.0, %v4279
    %v4281 = vpop.f32.mrb[0].mxu0
    %4282 = vmatprep.mubr.f32.mxu0 %v4145
    %4283 = vmatmul.mubr.f32.gmra.mrb[0].mxu0 %v4101
    %v4284 = vpop.f32.mrb[0].mxu0
    %v4285 = vadd.f32 0.0, %v4284
    %v4286 = vpop.f32.mrb[0].mxu0
    %4287 = vmatprep.mubr.f32.mxu0 %v4148
    %4288 = vmatmul.mubr.f32.gmra.mrb[0].mxu0 %v4103
    %v4289 = vpop.f32.mrb[0].mxu0
    %v4290 = vadd.f32 0.0, %v4289
    %v4291 = vpop.f32.mrb[0].mxu0
    %4292 = vmatprep.mubr.f32.mxu0 %v4151
    %4293 = vmatmul.mubr.f32.gmra.mrb[0].mxu0 %v4105
    %v4294 = vpop.f32.mrb[0].mxu0
    %v4295 = vadd.f32 0.0, %v4294
    %v4296 = vpop.f32.mrb[0].mxu0
    %4297 = vmatprep.mubr.f32.mxu0 %v4154
    %4298 = vmatmul.mubr.f32.gmra.mrb[0].mxu0 %v4107
    %v4299 = vpop.f32.mrb[0].mxu0
    %v4300 = vadd.f32 0.0, %v4299
    %v4301 = vpop.f32.mrb[0].mxu0
    %4302 = vmatprep.mubr.f32.mxu0 %v4157
    %4303 = vmatmul.mubr.f32.gmra.mrb[0].mxu0 %v4109
    %v4304 = vpop.f32.mrb[0].mxu0
    %v4305 = vadd.f32 0.0, %v4304
    %v4306 = vpop.f32.mrb[0].mxu0
    %4307 = vdwg.mxu0
    %4324 = vrot.lane.b32.xlu0 %v4230, 1
    %v4325 = vpop.permute.xlu0 %4324
    %4326 = vrot.lane.b32.xlu0 %v4235, 1
    %v4327 = vpop.permute.xlu0 %4326
    %4328 = vrot.lane.b32.xlu0 %v4240, 1
    %v4329 = vpop.permute.xlu0 %4328
    %4330 = vrot.lane.b32.xlu0 %v4245, 1
    %v4331 = vpop.permute.xlu0 %4330
    %4332 = vrot.lane.b32.xlu0 %v4250, 1
    %v4333 = vpop.permute.xlu0 %4332
    %4334 = vrot.lane.b32.xlu0 %v4255, 1
    %v4335 = vpop.permute.xlu0 %4334
    %4336 = vrot.lane.b32.xlu0 %v4260, 1
    %v4337 = vpop.permute.xlu0 %4336
    %4338 = vrot.lane.b32.xlu0 %v4265, 1
    %v4339 = vpop.permute.xlu0 %4338
    %4340 = vrot.lane.b32.xlu0 %v4270, 1
    %v4341 = vpop.permute.xlu0 %4340
    %4342 = vrot.lane.b32.xlu0 %v4275, 1
    %v4343 = vpop.permute.xlu0 %4342
    %4344 = vrot.lane.b32.xlu0 %v4280, 1
    %v4345 = vpop.permute.xlu0 %4344
    %4346 = vrot.lane.b32.xlu0 %v4285, 1
    %v4347 = vpop.permute.xlu0 %4346
    %4348 = vrot.lane.b32.xlu0 %v4290, 1
    %v4349 = vpop.permute.xlu0 %4348
    %4350 = vrot.lane.b32.xlu0 %v4295, 1
    %v4351 = vpop.permute.xlu0 %4350
    %4352 = vrot.lane.b32.xlu0 %v4300, 1
    %v4353 = vpop.permute.xlu0 %4352
    %4354 = vrot.lane.b32.xlu0 %v4305, 1
    %v4355 = vpop.permute.xlu0 %4354
    %v4372 = vsel %vm404, 0.0, %v4325
    %v4373 = vsel %vm404, 0.0, %v4327
    %v4374 = vsel %vm404, 0.0, %v4329
    %v4375 = vsel %vm404, 0.0, %v4331
    %v4376 = vsel %vm404, 0.0, %v4333
    %v4377 = vsel %vm404, 0.0, %v4335
    %v4378 = vsel %vm404, 0.0, %v4337
    %v4379 = vsel %vm404, 0.0, %v4339
    %v4380 = vsel %vm404, 0.0, %v4341
    %v4381 = vsel %vm404, 0.0, %v4343
    %v4382 = vsel %vm404, 0.0, %v4345
    %v4383 = vsel %vm404, 0.0, %v4347
    %v4384 = vsel %vm404, 0.0, %v4349
    %v4385 = vsel %vm404, 0.0, %v4351
    %v4386 = vsel %vm404, 0.0, %v4353
    %v4387 = vsel %vm404, 0.0, %v4355
    %4405 = vrot.lane.b32.xlu0 %v4372, 127
    %v4406 = vpop.permute.xlu0 %4405
    %4407 = vrot.lane.b32.xlu0 0.0, 127
    %v4408 = vpop.permute.xlu0 %4407
    %4409 = vrot.lane.b32.xlu0 %v4373, 127
    %v4410 = vpop.permute.xlu0 %4409
    %4411 = vrot.lane.b32.xlu0 %v4374, 127
    %v4412 = vpop.permute.xlu0 %4411
    %4413 = vrot.lane.b32.xlu0 %v4375, 127
    %v4414 = vpop.permute.xlu0 %4413
    %4415 = vrot.lane.b32.xlu0 %v4376, 127
    %v4416 = vpop.permute.xlu0 %4415
    %4417 = vrot.lane.b32.xlu0 %v4377, 127
    %v4418 = vpop.permute.xlu0 %4417
    %4419 = vrot.lane.b32.xlu0 %v4378, 127
    %v4420 = vpop.permute.xlu0 %4419
    %4421 = vrot.lane.b32.xlu0 %v4379, 127
    %v4422 = vpop.permute.xlu0 %4421
    %4423 = vrot.lane.b32.xlu0 %v4380, 127
    %v4424 = vpop.permute.xlu0 %4423
    %4425 = vrot.lane.b32.xlu0 %v4381, 127
    %v4426 = vpop.permute.xlu0 %4425
    %4427 = vrot.lane.b32.xlu0 %v4382, 127
    %v4428 = vpop.permute.xlu0 %4427
    %4429 = vrot.lane.b32.xlu0 %v4383, 127
    %v4430 = vpop.permute.xlu0 %4429
    %4431 = vrot.lane.b32.xlu0 %v4384, 127
    %v4432 = vpop.permute.xlu0 %4431
    %4433 = vrot.lane.b32.xlu0 %v4385, 127
    %v4434 = vpop.permute.xlu0 %4433
    %4435 = vrot.lane.b32.xlu0 %v4386, 127
    %v4436 = vpop.permute.xlu0 %4435
    %4437 = vrot.lane.b32.xlu0 %v4387, 127
    %v4438 = vpop.permute.xlu0 %4437
    %v4439 = vsel %vm421, %v4406, %v4408
    %v4440 = vsel %vm421, %v4410, %v4408
    %v4441 = vsel %vm421, %v4412, %v4408
    %v4442 = vsel %vm421, %v4414, %v4408
    %v4443 = vsel %vm421, %v4416, %v4408
    %v4444 = vsel %vm421, %v4418, %v4408
    %v4445 = vsel %vm421, %v4420, %v4408
    %v4446 = vsel %vm421, %v4422, %v4408
    %v4447 = vsel %vm421, %v4424, %v4408
    %v4448 = vsel %vm421, %v4426, %v4408
    %v4449 = vsel %vm421, %v4428, %v4408
    %v4450 = vsel %vm421, %v4430, %v4408
    %v4451 = vsel %vm421, %v4432, %v4408
    %v4452 = vsel %vm421, %v4434, %v4408
    %v4453 = vsel %vm421, %v4436, %v4408
    %v4454 = vsel %vm421, %v4438, %v4408
    %4471 = vmatprep.subr.mxu0 0.0
    %4472 = vmatpush1.msra.mxu0 %v4439
    %4473 = vmatprep.subr.mxu0 0.0
    %4474 = vmatpush1.msra.mxu0 %v4440
    %4475 = vmatprep.subr.mxu0 0.0
    %4476 = vmatpush1.msra.mxu0 %v4441
    %4477 = vmatprep.subr.mxu0 0.0
    %4478 = vmatpush1.msra.mxu0 %v4442
    %4479 = vmatprep.subr.mxu0 0.0
    %4480 = vmatpush1.msra.mxu0 %v4443
    %4481 = vmatprep.subr.mxu0 0.0
    %4482 = vmatpush1.msra.mxu0 %v4444
    %4483 = vmatprep.subr.mxu0 0.0
    %4484 = vmatpush1.msra.mxu0 %v4445
    %4485 = vmatprep.subr.mxu0 0.0
    %4486 = vmatpush1.msra.mxu0 %v4446
    %4487 = vmatprep.subr.mxu0 0.0
    %4488 = vmatpush1.msra.mxu0 %v4447
    %4489 = vmatprep.subr.mxu0 0.0
    %4490 = vmatpush1.msra.mxu0 %v4448
    %4491 = vmatprep.subr.mxu0 0.0
    %4492 = vmatpush1.msra.mxu0 %v4449
    %4493 = vmatprep.subr.mxu0 0.0
    %4494 = vmatpush1.msra.mxu0 %v4450
    %4495 = vmatprep.subr.mxu0 0.0
    %4496 = vmatpush1.msra.mxu0 %v4451
    %4497 = vmatprep.subr.mxu0 0.0
    %4498 = vmatpush1.msra.mxu0 %v4452
    %4499 = vmatprep.subr.mxu0 0.0
    %4500 = vmatpush1.msra.mxu0 %v4453
    %4501 = vmatprep.subr.mxu0 0.0
    %4502 = vmatpush1.msra.mxu0 %v4454
    %4503 = vmatprep.subr.mxu0 0.0
    %4504 = vmatpush1.msra.mxu0 0.0
    %4505 = vmatprep.subr.mxu0 0.0
    %4506 = vmatpush1.msra.mxu0 0.0
    %4507 = vmatprep.subr.mxu0 0.0
    %4508 = vmatpush1.msra.mxu0 0.0
    %4509 = vmatprep.subr.mxu0 0.0
    %4510 = vmatpush1.msra.mxu0 0.0
    %4511 = vmatprep.subr.mxu0 0.0
    %4512 = vmatpush1.msra.mxu0 0.0
    %4513 = vmatprep.subr.mxu0 0.0
    %4514 = vmatpush1.msra.mxu0 0.0
    %4515 = vmatprep.subr.mxu0 0.0
    %4516 = vmatpush1.msra.mxu0 0.0
    %4517 = vmatprep.subr.mxu0 0.0
    %4518 = vmatpush1.msra.mxu0 0.0
    %4519 = vmatprep.subr.mxu0 0.0
    %4520 = vmatpush1.msra.mxu0 0.0
    %4521 = vmatprep.subr.mxu0 0.0
    %4522 = vmatpush1.msra.mxu0 0.0
    %4523 = vmatprep.subr.mxu0 0.0
    %4524 = vmatpush1.msra.mxu0 0.0
    %4525 = vmatprep.subr.mxu0 0.0
    %4526 = vmatpush1.msra.mxu0 0.0
    %4527 = vmatprep.subr.mxu0 0.0
    %4528 = vmatpush1.msra.mxu0 0.0
    %4529 = vmatprep.subr.mxu0 0.0
    %4530 = vmatpush1.msra.mxu0 0.0
    %4531 = vmatprep.subr.mxu0 0.0
    %4532 = vmatpush1.msra.mxu0 0.0
    %4533 = vmatprep.subr.mxu0 0.0
    %4534 = vmatpush1.msra.mxu0 0.0
    %4535 = vmatprep.mubr.f32.mxu0 0.0
    %4536 = vmatmul.mubr.f32.gmra.mrb[0].mxu0 %v109
    %v4537 = vpop.f32.mrb[0].mxu0
    %v4538 = vadd.f32 0.0, %v4537
    %v4539 = vpop.f32.mrb[0].mxu0
    %4540 = vmatprep.mubr.f32.mxu0 0.0
    %4541 = vmatmul.mubr.f32.gmra.mrb[0].mxu0 %v110
    %v4542 = vpop.f32.mrb[0].mxu0
    %v4543 = vadd.f32 0.0, %v4542
    %v4544 = vpop.f32.mrb[0].mxu0
    %4545 = vdwg.mxu0
    %4546 = vmatprep.subr.mxu0 0.0
    %4547 = vmatpush1.msra.mxu0 %v4372
    %4548 = vmatprep.subr.mxu0 0.0
    %4549 = vmatpush1.msra.mxu0 %v4373
    %4550 = vmatprep.subr.mxu0 0.0
    %4551 = vmatpush1.msra.mxu0 %v4374
    %4552 = vmatprep.subr.mxu0 0.0
    %4553 = vmatpush1.msra.mxu0 %v4375
    %4554 = vmatprep.subr.mxu0 0.0
    %4555 = vmatpush1.msra.mxu0 %v4376
    %4556 = vmatprep.subr.mxu0 0.0
    %4557 = vmatpush1.msra.mxu0 %v4377
    %4558 = vmatprep.subr.mxu0 0.0
    %4559 = vmatpush1.msra.mxu0 %v4378
    %4560 = vmatprep.subr.mxu0 0.0
    %4561 = vmatpush1.msra.mxu0 %v4379
    %4562 = vmatprep.subr.mxu0 0.0
    %4563 = vmatpush1.msra.mxu0 %v4380
    %4564 = vmatprep.subr.mxu0 0.0
    %4565 = vmatpush1.msra.mxu0 %v4381
    %4566 = vmatprep.subr.mxu0 0.0
    %4567 = vmatpush1.msra.mxu0 %v4382
    %4568 = vmatprep.subr.mxu0 0.0
    %4569 = vmatpush1.msra.mxu0 %v4383
    %4570 = vmatprep.subr.mxu0 0.0
    %4571 = vmatpush1.msra.mxu0 %v4384
    %4572 = vmatprep.subr.mxu0 0.0
    %4573 = vmatpush1.msra.mxu0 %v4385
    %4574 = vmatprep.subr.mxu0 0.0
    %4575 = vmatpush1.msra.mxu0 %v4386
    %4576 = vmatprep.subr.mxu0 0.0
    %4577 = vmatpush1.msra.mxu0 %v4387
    %4578 = vmatprep.subr.mxu0 0.0
    %4579 = vmatpush1.msra.mxu0 0.0
    %4580 = vmatprep.subr.mxu0 0.0
    %4581 = vmatpush1.msra.mxu0 0.0
    %4582 = vmatprep.subr.mxu0 0.0
    %4583 = vmatpush1.msra.mxu0 0.0
    %4584 = vmatprep.subr.mxu0 0.0
    %4585 = vmatpush1.msra.mxu0 0.0
    %4586 = vmatprep.subr.mxu0 0.0
    %4587 = vmatpush1.msra.mxu0 0.0
    %4588 = vmatprep.subr.mxu0 0.0
    %4589 = vmatpush1.msra.mxu0 0.0
    %4590 = vmatprep.subr.mxu0 0.0
    %4591 = vmatpush1.msra.mxu0 0.0
    %4592 = vmatprep.subr.mxu0 0.0
    %4593 = vmatpush1.msra.mxu0 0.0
    %4594 = vmatprep.subr.mxu0 0.0
    %4595 = vmatpush1.msra.mxu0 0.0
    %4596 = vmatprep.subr.mxu0 0.0
    %4597 = vmatpush1.msra.mxu0 0.0
    %4598 = vmatprep.subr.mxu0 0.0
    %4599 = vmatpush1.msra.mxu0 0.0
    %4600 = vmatprep.subr.mxu0 0.0
    %4601 = vmatpush1.msra.mxu0 0.0
    %4602 = vmatprep.subr.mxu0 0.0
    %4603 = vmatpush1.msra.mxu0 0.0
    %4604 = vmatprep.subr.mxu0 0.0
    %4605 = vmatpush1.msra.mxu0 0.0
    %4606 = vmatprep.subr.mxu0 0.0
    %4607 = vmatpush1.msra.mxu0 0.0
    %4608 = vmatprep.subr.mxu0 0.0
    %4609 = vmatpush1.msra.mxu0 0.0
    %4610 = vmatprep.mubr.f32.mxu0 0.0
    %4611 = vmatmul.mubr.f32.gmra.mrb[0].mxu0 %v106
    %v4612 = vpop.f32.mrb[0].mxu0
    %v4613 = vadd.f32 %v4538, %v4612
    %v4614 = vpop.f32.mrb[0].mxu0
    %4615 = vmatprep.mubr.f32.mxu0 0.0
    %4616 = vmatmul.mubr.f32.gmra.mrb[0].mxu0 %v107
    %v4617 = vpop.f32.mrb[0].mxu0
    %v4618 = vadd.f32 %v4543, %v4617
    %v4619 = vpop.f32.mrb[0].mxu0
    %4620 = vdwg.mxu0
    %v4621 = vadd.f32 %v4613, %v3078
    %v4622 = vadd.f32 %v4618, %v3083
    %v4623 = vmax.f32 %v4621, 0.0
    %v4624 = vmax.f32 %v4622, 0.0
    %4627 = vrot.lane.b32.xlu0 %v4623, 127
    %v4628 = vpop.permute.xlu0 %4627
    %4629 = vrot.lane.b32.xlu0 %v4624, 127
    %v4630 = vpop.permute.xlu0 %4629
    %v4633 = vmax.f32 %v4623, %v4628
    %v4634 = vmax.f32 %v4624, %v4630
    %v4636 = vsel %vm421, %v4633, 0
    %v4639 = vsel %vm421, %v4634, 0
    %vm4641 = vcmask 1046528
    %v4643 = vsel %vm4641, %v346, 0
    %4645 = vmatprep.subr.mxu0 0.0
    %4646 = vmatpush1.msra.mxu0 %v316
    %4647 = vmatprep.subr.mxu0 0.0
    %4648 = vmatpush1.msra.mxu0 %v318
    %4649 = vmatprep.subr.mxu0 0.0
    %4650 = vmatpush1.msra.mxu0 %v320
    %4651 = vmatprep.subr.mxu0 0.0
    %4652 = vmatpush1.msra.mxu0 %v322
    %4653 = vmatprep.subr.mxu0 0.0
    %4654 = vmatpush1.msra.mxu0 %v324
    %4655 = vmatprep.subr.mxu0 0.0
    %4656 = vmatpush1.msra.mxu0 %v326
    %4657 = vmatprep.subr.mxu0 0.0
    %4658 = vmatpush1.msra.mxu0 %v328
    %4659 = vmatprep.subr.mxu0 0.0
    %4660 = vmatpush1.msra.mxu0 %v330
    %4661 = vmatprep.subr.mxu0 0.0
    %4662 = vmatpush1.msra.mxu0 %v332
    %4663 = vmatprep.subr.mxu0 0.0
    %4664 = vmatpush1.msra.mxu0 %v334
    %4665 = vmatprep.subr.mxu0 0.0
    %4666 = vmatpush1.msra.mxu0 %v336
    %4667 = vmatprep.subr.mxu0 0.0
    %4668 = vmatpush1.msra.mxu0 %v338
    %4669 = vmatprep.subr.mxu0 0.0
    %4670 = vmatpush1.msra.mxu0 %v340
    %4671 = vmatprep.subr.mxu0 0.0
    %4672 = vmatpush1.msra.mxu0 %v342
    %4673 = vmatprep.subr.mxu0 0.0
    %4674 = vmatpush1.msra.mxu0 %v344
    %4675 = vmatprep.subr.mxu0 0.0
    %4676 = vmatpush1.msra.mxu0 %v4643
    %4677 = vmatprep.subr.mxu0 0.0
    %4678 = vmatpush1.msra.mxu0 0.0
    %4679 = vmatprep.subr.mxu0 0.0
    %4680 = vmatpush1.msra.mxu0 0.0
    %4681 = vmatprep.subr.mxu0 0.0
    %4682 = vmatpush1.msra.mxu0 0.0
    %4683 = vmatprep.subr.mxu0 0.0
    %4684 = vmatpush1.msra.mxu0 0.0
    %4685 = vmatprep.subr.mxu0 0.0
    %4686 = vmatpush1.msra.mxu0 0.0
    %4687 = vmatprep.subr.mxu0 0.0
    %4688 = vmatpush1.msra.mxu0 0.0
    %4689 = vmatprep.subr.mxu0 0.0
    %4690 = vmatpush1.msra.mxu0 0.0
    %4691 = vmatprep.subr.mxu0 0.0
    %4692 = vmatpush1.msra.mxu0 0.0
    %4693 = vmatprep.subr.mxu0 0.0
    %4694 = vmatpush1.msra.mxu0 0.0
    %4695 = vmatprep.subr.mxu0 0.0
    %4696 = vmatpush1.msra.mxu0 0.0
    %4697 = vmatprep.subr.mxu0 0.0
    %4698 = vmatpush1.msra.mxu0 0.0
    %4699 = vmatprep.subr.mxu0 0.0
    %4700 = vmatpush1.msra.mxu0 0.0
    %4701 = vmatprep.subr.mxu0 0.0
    %4702 = vmatpush1.msra.mxu0 0.0
    %4703 = vmatprep.subr.mxu0 0.0
    %4704 = vmatpush1.msra.mxu0 0.0
    %4705 = vmatprep.subr.mxu0 0.0
    %4706 = vmatpush1.msra.mxu0 0.0
    %4707 = vmatprep.subr.mxu0 0.0
    %4708 = vmatpush1.msra.mxu0 0.0
    %4709 = vmatprep.mubr.f32.mxu0 0.0
    %4710 = vmatmul.mubr.f32.gmra.mrb[0].mxu0 %v4636
    %v4711 = vpop.f32.mrb[0].mxu0
    %v4712 = vadd.f32 0.0, %v4711
    %v4713 = vpop.f32.mrb[0].mxu0
    %4714 = vmatprep.mubr.f32.mxu0 0.0
    %4715 = vmatmul.mubr.f32.gmra.mrb[0].mxu0 %v4639
    %v4716 = vpop.f32.mrb[0].mxu0
    %v4717 = vadd.f32 0.0, %v4716
    %v4718 = vpop.f32.mrb[0].mxu0
    %4719 = vdwg.mxu0
    %v4720 = vmul.f32 %v3193, %v111
    %v4721 = vmul.f32 %v3198, %v112
    %vm4722 = vcmask 613376
    %v4723 = vsel %vm4722, %v4720, 0.0
    %4724 = vadd.xlane.f32.xlu0 %v4723
    %v4725 = vpop.xlane.xlu0 %4724
    %v4726 = vsel %vm4722, %v4721, 0.0
    %4727 = vadd.xlane.f32.xlu0 %v4726
    %v4728 = vpop.xlane.xlu0 %4727
    %v4729 = vadd.f32 %v4725, %v4728
    %v4730 = vrot.slane %v4729, 4
    %v4731 = vadd.f32 %v4729, %v4730
    %v4732 = vrot.slane %v4731, 2
    %v4733 = vadd.f32 %v4731, %v4732
    %v4734 = vrot.slane %v4733, 1
    %v4735 = vadd.f32 %v4733, %v4734
    %v4736 = vadd.f32 %v4735, %v118
    %v4737 = vmul.f32 %v4712, %v113
    %v4738 = vmul.f32 %v4717, %v114
    %vm4739 = vcmask 523264
    %v4740 = vsel %vm4739, %v4737, 0.0
    %4741 = vadd.xlane.f32.xlu0 %v4740
    %v4742 = vpop.xlane.xlu0 %4741
    %v4743 = vsel %vm4739, %v4738, 0.0
    %4744 = vadd.xlane.f32.xlu0 %v4743
    %v4745 = vpop.xlane.xlu0 %4744
    %v4746 = vadd.f32 %v4742, %v4745
    %v4747 = vrot.slane %v4746, 4
    %v4748 = vadd.f32 %v4746, %v4747
    %v4749 = vrot.slane %v4748, 2
    %v4750 = vadd.f32 %v4748, %v4749
    %v4751 = vrot.slane %v4750, 1
    %v4752 = vadd.f32 %v4750, %v4751
    %v4753 = vmul.f32 %v4712, %v116
    %v4754 = vmul.f32 %v4717, %v117
    %v4755 = vsel %vm4739, %v4753, 0.0
    %4756 = vadd.xlane.f32.xlu0 %v4755
    %v4757 = vpop.xlane.xlu0 %4756
    %v4758 = vsel %vm4739, %v4754, 0.0
    %4759 = vadd.xlane.f32.xlu0 %v4758
    %v4760 = vpop.xlane.xlu0 %4759
    %v4761 = vadd.f32 %v4757, %v4760
    %v4762 = vrot.slane %v4761, 4
    %v4763 = vadd.f32 %v4761, %v4762
    %v4764 = vrot.slane %v4763, 2
    %v4765 = vadd.f32 %v4763, %v4764
    %v4766 = vrot.slane %v4765, 1
    %v4767 = vadd.f32 %v4765, %v4766
    %v4768 = vsel %vm404, %v4752, %v4767
    %v4769 = vadd.f32 %v4768, %v119
    %4771 = vset.pattern.permute.xlu0 0
    %4772 = vperm.xlu0 %4771, %v4736
    %v4773 = vpop.permute.xlu0 %4772
    %v4775 = vlaneseq
    %v4776 = vshrl.u32 %v4775, 7
    %v4777 = vsub.s32 0, %v4776
    %v4778 = vrot.slane %v4773, %v4777
    %v4779 = vmul.f32 %v4778, %v4769
    %v4780 = vld [vmem:[%s0 + $0x10] sm:$0xff]
    %v4781 = vld [vmem:[%s0 + $0x18] sm:$0xff]
    %v4782 = vld [vmem:[%s1 + $0x8] sm:$0xff]
    %4786 = vrot.lane.b32.xlu0 %v4780, 1
    %v4787 = vpop.permute.xlu0 %4786
    %4788 = vrot.lane.b32.xlu0 %v4781, 1
    %v4789 = vpop.permute.xlu0 %4788
    %4790 = vrot.lane.b32.xlu0 %v4782, 1
    %v4791 = vpop.permute.xlu0 %4790
    %v4792 = vsel %vm404, %v4787, %v4789
    %v4793 = vsel %vm404, %v4789, %v4791
    %v4797 = vsel %vm404, 0.0, %v4787
    %v4798 = vsel %vm411, %v4793, 0.0
    %4801 = vrot.lane.b32.xlu0 %v4797, 127
    %v4802 = vpop.permute.xlu0 %4801
    %4803 = vrot.lane.b32.xlu0 %v4792, 127
    %v4804 = vpop.permute.xlu0 %4803
    %4805 = vrot.lane.b32.xlu0 %v4798, 127
    %v4806 = vpop.permute.xlu0 %4805
    %v4807 = vsel %vm421, %v4802, %v4804
    %v4808 = vsel %vm421, %v4804, %v4806
    %4812 = vmatprep.subr.mxu0 %v4808
    %4813 = vmatpush1.msra.mxu0 %v4807
    %4814 = vmatprep.subr.mxu0 0.0
    %4815 = vmatpush1.msra.mxu0 0.0
    %4816 = vmatprep.subr.mxu0 0.0
    %4817 = vmatpush1.msra.mxu0 0.0
    %4818 = vmatprep.subr.mxu0 0.0
    %4819 = vmatpush1.msra.mxu0 0.0
    %4820 = vmatprep.subr.mxu0 0.0
    %4821 = vmatpush1.msra.mxu0 0.0
    %4822 = vmatprep.subr.mxu0 0.0
    %4823 = vmatpush1.msra.mxu0 0.0
    %4824 = vmatprep.subr.mxu0 0.0
    %4825 = vmatpush1.msra.mxu0 0.0
    %4826 = vmatprep.subr.mxu0 0.0
    %4827 = vmatpush1.msra.mxu0 0.0
    %4828 = vmatprep.subr.mxu0 0.0
    %4829 = vmatpush1.msra.mxu0 0.0
    %4830 = vmatprep.subr.mxu0 0.0
    %4831 = vmatpush1.msra.mxu0 0.0
    %4832 = vmatprep.subr.mxu0 0.0
    %4833 = vmatpush1.msra.mxu0 0.0
    %4834 = vmatprep.subr.mxu0 0.0
    %4835 = vmatpush1.msra.mxu0 0.0
    %4836 = vmatprep.subr.mxu0 0.0
    %4837 = vmatpush1.msra.mxu0 0.0
    %4838 = vmatprep.subr.mxu0 0.0
    %4839 = vmatpush1.msra.mxu0 0.0
    %4840 = vmatprep.subr.mxu0 0.0
    %4841 = vmatpush1.msra.mxu0 0.0
    %4842 = vmatprep.subr.mxu0 0.0
    %4843 = vmatpush1.msra.mxu0 0.0
    %4844 = vmatprep.subr.mxu0 0.0
    %4845 = vmatpush1.msra.mxu0 0.0
    %4846 = vmatprep.subr.mxu0 0.0
    %4847 = vmatpush1.msra.mxu0 0.0
    %4848 = vmatprep.subr.mxu0 0.0
    %4849 = vmatpush1.msra.mxu0 0.0
    %4850 = vmatprep.subr.mxu0 0.0
    %4851 = vmatpush1.msra.mxu0 0.0
    %4852 = vmatprep.subr.mxu0 0.0
    %4853 = vmatpush1.msra.mxu0 0.0
    %4854 = vmatprep.subr.mxu0 0.0
    %4855 = vmatpush1.msra.mxu0 0.0
    %4856 = vmatprep.subr.mxu0 0.0
    %4857 = vmatpush1.msra.mxu0 0.0
    %4858 = vmatprep.subr.mxu0 0.0
    %4859 = vmatpush1.msra.mxu0 0.0
    %4860 = vmatprep.subr.mxu0 0.0
    %4861 = vmatpush1.msra.mxu0 0.0
    %4862 = vmatprep.subr.mxu0 0.0
    %4863 = vmatpush1.msra.mxu0 0.0
    %4864 = vmatprep.subr.mxu0 0.0
    %4865 = vmatpush1.msra.mxu0 0.0
    %4866 = vmatprep.subr.mxu0 0.0
    %4867 = vmatpush1.msra.mxu0 0.0
    %4868 = vmatprep.subr.mxu0 0.0
    %4869 = vmatpush1.msra.mxu0 0.0
    %4870 = vmatprep.subr.mxu0 0.0
    %4871 = vmatpush1.msra.mxu0 0.0
    %4872 = vmatprep.subr.mxu0 0.0
    %4873 = vmatpush1.msra.mxu0 0.0
    %4874 = vmatprep.subr.mxu0 0.0
    %4875 = vmatpush1.msra.mxu0 0.0
    %4876 = vmatprep.mubr.f32.mxu0 0.0
    %4877 = vmatmul.mubr.f32.gmra.mrb[0].mxu0 %v429
    %v4878 = vpop.f32.mrb[0].mxu0
    %v4879 = vadd.f32 0.0, %v4878
    %v4880 = vpop.f32.mrb[0].mxu0
    %v4881 = vadd.f32 0.0, %v4880
    %4882 = vmatprep.mubr.f32.mxu0 0.0
    %4883 = vmatmul.mubr.f32.gmra.mrb[0].mxu0 %v432
    %v4884 = vpop.f32.mrb[0].mxu0
    %v4885 = vadd.f32 0.0, %v4884
    %v4886 = vpop.f32.mrb[0].mxu0
    %v4887 = vadd.f32 0.0, %v4886
    %4888 = vmatprep.mubr.f32.mxu0 0.0
    %4889 = vmatmul.mubr.f32.gmra.mrb[0].mxu0 %v435
    %v4890 = vpop.f32.mrb[0].mxu0
    %v4891 = vadd.f32 0.0, %v4890
    %v4892 = vpop.f32.mrb[0].mxu0
    %v4893 = vadd.f32 0.0, %v4892
    %4894 = vmatprep.mubr.f32.mxu0 0.0
    %4895 = vmatmul.mubr.f32.gmra.mrb[0].mxu0 %v438
    %v4896 = vpop.f32.mrb[0].mxu0
    %v4897 = vadd.f32 0.0, %v4896
    %v4898 = vpop.f32.mrb[0].mxu0
    %v4899 = vadd.f32 0.0, %v4898
    %4900 = vmatprep.mubr.f32.mxu0 0.0
    %4901 = vmatmul.mubr.f32.gmra.mrb[0].mxu0 %v441
    %v4902 = vpop.f32.mrb[0].mxu0
    %v4903 = vadd.f32 0.0, %v4902
    %v4904 = vpop.f32.mrb[0].mxu0
    %v4905 = vadd.f32 0.0, %v4904
    %4906 = vmatprep.mubr.f32.mxu0 0.0
    %4907 = vmatmul.mubr.f32.gmra.mrb[0].mxu0 %v444
    %v4908 = vpop.f32.mrb[0].mxu0
    %v4909 = vadd.f32 0.0, %v4908
    %v4910 = vpop.f32.mrb[0].mxu0
    %v4911 = vadd.f32 0.0, %v4910
    %4912 = vmatprep.mubr.f32.mxu0 0.0
    %4913 = vmatmul.mubr.f32.gmra.mrb[0].mxu0 %v447
    %v4914 = vpop.f32.mrb[0].mxu0
    %v4915 = vadd.f32 0.0, %v4914
    %v4916 = vpop.f32.mrb[0].mxu0
    %v4917 = vadd.f32 0.0, %v4916
    %4918 = vmatprep.mubr.f32.mxu0 0.0
    %4919 = vmatmul.mubr.f32.gmra.mrb[0].mxu0 %v450
    %v4920 = vpop.f32.mrb[0].mxu0
    %v4921 = vadd.f32 0.0, %v4920
    %v4922 = vpop.f32.mrb[0].mxu0
    %v4923 = vadd.f32 0.0, %v4922
    %4924 = vmatprep.mubr.f32.mxu0 0.0
    %4925 = vmatmul.mubr.f32.gmra.mrb[0].mxu0 %v453
    %v4926 = vpop.f32.mrb[0].mxu0
    %v4927 = vadd.f32 0.0, %v4926
    %v4928 = vpop.f32.mrb[0].mxu0
    %v4929 = vadd.f32 0.0, %v4928
    %4930 = vmatprep.mubr.f32.mxu0 0.0
    %4931 = vmatmul.mubr.f32.gmra.mrb[0].mxu0 %v456
    %v4932 = vpop.f32.mrb[0].mxu0
    %v4933 = vadd.f32 0.0, %v4932
    %v4934 = vpop.f32.mrb[0].mxu0
    %v4935 = vadd.f32 0.0, %v4934
    %4936 = vmatprep.mubr.f32.mxu0 0.0
    %4937 = vmatmul.mubr.f32.gmra.mrb[0].mxu0 %v459
    %v4938 = vpop.f32.mrb[0].mxu0
    %v4939 = vadd.f32 0.0, %v4938
    %v4940 = vpop.f32.mrb[0].mxu0
    %v4941 = vadd.f32 0.0, %v4940
    %4942 = vmatprep.mubr.f32.mxu0 0.0
    %4943 = vmatmul.mubr.f32.gmra.mrb[0].mxu0 %v462
    %v4944 = vpop.f32.mrb[0].mxu0
    %v4945 = vadd.f32 0.0, %v4944
    %v4946 = vpop.f32.mrb[0].mxu0
    %v4947 = vadd.f32 0.0, %v4946
    %4948 = vmatprep.mubr.f32.mxu0 0.0
    %4949 = vmatmul.mubr.f32.gmra.mrb[0].mxu0 %v465
    %v4950 = vpop.f32.mrb[0].mxu0
    %v4951 = vadd.f32 0.0, %v4950
    %v4952 = vpop.f32.mrb[0].mxu0
    %v4953 = vadd.f32 0.0, %v4952
    %4954 = vmatprep.mubr.f32.mxu0 0.0
    %4955 = vmatmul.mubr.f32.gmra.mrb[0].mxu0 %v468
    %v4956 = vpop.f32.mrb[0].mxu0
    %v4957 = vadd.f32 0.0, %v4956
    %v4958 = vpop.f32.mrb[0].mxu0
    %v4959 = vadd.f32 0.0, %v4958
    %4960 = vmatprep.mubr.f32.mxu0 0.0
    %4961 = vmatmul.mubr.f32.gmra.mrb[0].mxu0 %v471
    %v4962 = vpop.f32.mrb[0].mxu0
    %v4963 = vadd.f32 0.0, %v4962
    %v4964 = vpop.f32.mrb[0].mxu0
    %v4965 = vadd.f32 0.0, %v4964
    %4966 = vmatprep.mubr.f32.mxu0 0.0
    %4967 = vmatmul.mubr.f32.gmra.mrb[0].mxu0 %v474
    %v4968 = vpop.f32.mrb[0].mxu0
    %v4969 = vadd.f32 0.0, %v4968
    %v4970 = vpop.f32.mrb[0].mxu0
    %v4971 = vadd.f32 0.0, %v4970
    %4972 = vdwg.mxu0
    %4973 = vmatprep.subr.mxu0 0.0
    %4974 = vmatpush1.msra.mxu0 %v4806
    %4975 = vmatprep.subr.mxu0 0.0
    %4976 = vmatpush1.msra.mxu0 0.0
    %4977 = vmatprep.subr.mxu0 0.0
    %4978 = vmatpush1.msra.mxu0 0.0
    %4979 = vmatprep.subr.mxu0 0.0
    %4980 = vmatpush1.msra.mxu0 0.0
    %4981 = vmatprep.subr.mxu0 0.0
    %4982 = vmatpush1.msra.mxu0 0.0
    %4983 = vmatprep.subr.mxu0 0.0
    %4984 = vmatpush1.msra.mxu0 0.0
    %4985 = vmatprep.subr.mxu0 0.0
    %4986 = vmatpush1.msra.mxu0 0.0
    %4987 = vmatprep.subr.mxu0 0.0
    %4988 = vmatpush1.msra.mxu0 0.0
    %4989 = vmatprep.subr.mxu0 0.0
    %4990 = vmatpush1.msra.mxu0 0.0
    %4991 = vmatprep.subr.mxu0 0.0
    %4992 = vmatpush1.msra.mxu0 0.0
    %4993 = vmatprep.subr.mxu0 0.0
    %4994 = vmatpush1.msra.mxu0 0.0
    %4995 = vmatprep.subr.mxu0 0.0
    %4996 = vmatpush1.msra.mxu0 0.0
    %4997 = vmatprep.subr.mxu0 0.0
    %4998 = vmatpush1.msra.mxu0 0.0
    %4999 = vmatprep.subr.mxu0 0.0
    %5000 = vmatpush1.msra.mxu0 0.0
    %5001 = vmatprep.subr.mxu0 0.0
    %5002 = vmatpush1.msra.mxu0 0.0
    %5003 = vmatprep.subr.mxu0 0.0
    %5004 = vmatpush1.msra.mxu0 0.0
    %5005 = vmatprep.subr.mxu0 0.0
    %5006 = vmatpush1.msra.mxu0 0.0
    %5007 = vmatprep.subr.mxu0 0.0
    %5008 = vmatpush1.msra.mxu0 0.0
    %5009 = vmatprep.subr.mxu0 0.0
    %5010 = vmatpush1.msra.mxu0 0.0
    %5011 = vmatprep.subr.mxu0 0.0
    %5012 = vmatpush1.msra.mxu0 0.0
    %5013 = vmatprep.subr.mxu0 0.0
    %5014 = vmatpush1.msra.mxu0 0.0
    %5015 = vmatprep.subr.mxu0 0.0
    %5016 = vmatpush1.msra.mxu0 0.0
    %5017 = vmatprep.subr.mxu0 0.0
    %5018 = vmatpush1.msra.mxu0 0.0
    %5019 = vmatprep.subr.mxu0 0.0
    %5020 = vmatpush1.msra.mxu0 0.0
    %5021 = vmatprep.subr.mxu0 0.0
    %5022 = vmatpush1.msra.mxu0 0.0
    %5023 = vmatprep.subr.mxu0 0.0
    %5024 = vmatpush1.msra.mxu0 0.0
    %5025 = vmatprep.subr.mxu0 0.0
    %5026 = vmatpush1.msra.mxu0 0.0
    %5027 = vmatprep.subr.mxu0 0.0
    %5028 = vmatpush1.msra.mxu0 0.0
    %5029 = vmatprep.subr.mxu0 0.0
    %5030 = vmatpush1.msra.mxu0 0.0
    %5031 = vmatprep.subr.mxu0 0.0
    %5032 = vmatpush1.msra.mxu0 0.0
    %5033 = vmatprep.subr.mxu0 0.0
    %5034 = vmatpush1.msra.mxu0 0.0
    %5035 = vmatprep.subr.mxu0 0.0
    %5036 = vmatpush1.msra.mxu0 0.0
    %5037 = vmatprep.mubr.f32.mxu0 0.0
    %5038 = vmatmul.mubr.f32.gmra.mrb[0].mxu0 %v429
    %v5039 = vpop.f32.mrb[0].mxu0
    %v5040 = vadd.f32 0.0, %v5039
    %v5041 = vpop.f32.mrb[0].mxu0
    %5042 = vmatprep.mubr.f32.mxu0 0.0
    %5043 = vmatmul.mubr.f32.gmra.mrb[0].mxu0 %v432
    %v5044 = vpop.f32.mrb[0].mxu0
    %v5045 = vadd.f32 0.0, %v5044
    %v5046 = vpop.f32.mrb[0].mxu0
    %5047 = vmatprep.mubr.f32.mxu0 0.0
    %5048 = vmatmul.mubr.f32.gmra.mrb[0].mxu0 %v435
    %v5049 = vpop.f32.mrb[0].mxu0
    %v5050 = vadd.f32 0.0, %v5049
    %v5051 = vpop.f32.mrb[0].mxu0
    %5052 = vmatprep.mubr.f32.mxu0 0.0
    %5053 = vmatmul.mubr.f32.gmra.mrb[0].mxu0 %v438
    %v5054 = vpop.f32.mrb[0].mxu0
    %v5055 = vadd.f32 0.0, %v5054
    %v5056 = vpop.f32.mrb[0].mxu0
    %5057 = vmatprep.mubr.f32.mxu0 0.0
    %5058 = vmatmul.mubr.f32.gmra.mrb[0].mxu0 %v441
    %v5059 = vpop.f32.mrb[0].mxu0
    %v5060 = vadd.f32 0.0, %v5059
    %v5061 = vpop.f32.mrb[0].mxu0
    %5062 = vmatprep.mubr.f32.mxu0 0.0
    %5063 = vmatmul.mubr.f32.gmra.mrb[0].mxu0 %v444
    %v5064 = vpop.f32.mrb[0].mxu0
    %v5065 = vadd.f32 0.0, %v5064
    %v5066 = vpop.f32.mrb[0].mxu0
    %5067 = vmatprep.mubr.f32.mxu0 0.0
    %5068 = vmatmul.mubr.f32.gmra.mrb[0].mxu0 %v447
    %v5069 = vpop.f32.mrb[0].mxu0
    %v5070 = vadd.f32 0.0, %v5069
    %v5071 = vpop.f32.mrb[0].mxu0
    %5072 = vmatprep.mubr.f32.mxu0 0.0
    %5073 = vmatmul.mubr.f32.gmra.mrb[0].mxu0 %v450
    %v5074 = vpop.f32.mrb[0].mxu0
    %v5075 = vadd.f32 0.0, %v5074
    %v5076 = vpop.f32.mrb[0].mxu0
    %5077 = vmatprep.mubr.f32.mxu0 0.0
    %5078 = vmatmul.mubr.f32.gmra.mrb[0].mxu0 %v453
    %v5079 = vpop.f32.mrb[0].mxu0
    %v5080 = vadd.f32 0.0, %v5079
    %v5081 = vpop.f32.mrb[0].mxu0
    %5082 = vmatprep.mubr.f32.mxu0 0.0
    %5083 = vmatmul.mubr.f32.gmra.mrb[0].mxu0 %v456
    %v5084 = vpop.f32.mrb[0].mxu0
    %v5085 = vadd.f32 0.0, %v5084
    %v5086 = vpop.f32.mrb[0].mxu0
    %5087 = vmatprep.mubr.f32.mxu0 0.0
    %5088 = vmatmul.mubr.f32.gmra.mrb[0].mxu0 %v459
    %v5089 = vpop.f32.mrb[0].mxu0
    %v5090 = vadd.f32 0.0, %v5089
    %v5091 = vpop.f32.mrb[0].mxu0
    %5092 = vmatprep.mubr.f32.mxu0 0.0
    %5093 = vmatmul.mubr.f32.gmra.mrb[0].mxu0 %v462
    %v5094 = vpop.f32.mrb[0].mxu0
    %v5095 = vadd.f32 0.0, %v5094
    %v5096 = vpop.f32.mrb[0].mxu0
    %5097 = vmatprep.mubr.f32.mxu0 0.0
    %5098 = vmatmul.mubr.f32.gmra.mrb[0].mxu0 %v465
    %v5099 = vpop.f32.mrb[0].mxu0
    %v5100 = vadd.f32 0.0, %v5099
    %v5101 = vpop.f32.mrb[0].mxu0
    %5102 = vmatprep.mubr.f32.mxu0 0.0
    %5103 = vmatmul.mubr.f32.gmra.mrb[0].mxu0 %v468
    %v5104 = vpop.f32.mrb[0].mxu0
    %v5105 = vadd.f32 0.0, %v5104
    %v5106 = vpop.f32.mrb[0].mxu0
    %5107 = vmatprep.mubr.f32.mxu0 0.0
    %5108 = vmatmul.mubr.f32.gmra.mrb[0].mxu0 %v471
    %v5109 = vpop.f32.mrb[0].mxu0
    %v5110 = vadd.f32 0.0, %v5109
    %v5111 = vpop.f32.mrb[0].mxu0
    %5112 = vmatprep.mubr.f32.mxu0 0.0
    %5113 = vmatmul.mubr.f32.gmra.mrb[0].mxu0 %v474
    %v5114 = vpop.f32.mrb[0].mxu0
    %v5115 = vadd.f32 0.0, %v5114
    %v5116 = vpop.f32.mrb[0].mxu0
    %5117 = vdwg.mxu0
    %5118 = vmatprep.subr.mxu0 %v4792
    %5119 = vmatpush1.msra.mxu0 %v4797
    %5120 = vmatprep.subr.mxu0 0.0
    %5121 = vmatpush1.msra.mxu0 0.0
    %5122 = vmatprep.subr.mxu0 0.0
    %5123 = vmatpush1.msra.mxu0 0.0
    %5124 = vmatprep.subr.mxu0 0.0
    %5125 = vmatpush1.msra.mxu0 0.0
    %5126 = vmatprep.subr.mxu0 0.0
    %5127 = vmatpush1.msra.mxu0 0.0
    %5128 = vmatprep.subr.mxu0 0.0
    %5129 = vmatpush1.msra.mxu0 0.0
    %5130 = vmatprep.subr.mxu0 0.0
    %5131 = vmatpush1.msra.mxu0 0.0
    %5132 = vmatprep.subr.mxu0 0.0
    %5133 = vmatpush1.msra.mxu0 0.0
    %5134 = vmatprep.subr.mxu0 0.0
    %5135 = vmatpush1.msra.mxu0 0.0
    %5136 = vmatprep.subr.mxu0 0.0
    %5137 = vmatpush1.msra.mxu0 0.0
    %5138 = vmatprep.subr.mxu0 0.0
    %5139 = vmatpush1.msra.mxu0 0.0
    %5140 = vmatprep.subr.mxu0 0.0
    %5141 = vmatpush1.msra.mxu0 0.0
    %5142 = vmatprep.subr.mxu0 0.0
    %5143 = vmatpush1.msra.mxu0 0.0
    %5144 = vmatprep.subr.mxu0 0.0
    %5145 = vmatpush1.msra.mxu0 0.0
    %5146 = vmatprep.subr.mxu0 0.0
    %5147 = vmatpush1.msra.mxu0 0.0
    %5148 = vmatprep.subr.mxu0 0.0
    %5149 = vmatpush1.msra.mxu0 0.0
    %5150 = vmatprep.subr.mxu0 0.0
    %5151 = vmatpush1.msra.mxu0 0.0
    %5152 = vmatprep.subr.mxu0 0.0
    %5153 = vmatpush1.msra.mxu0 0.0
    %5154 = vmatprep.subr.mxu0 0.0
    %5155 = vmatpush1.msra.mxu0 0.0
    %5156 = vmatprep.subr.mxu0 0.0
    %5157 = vmatpush1.msra.mxu0 0.0
    %5158 = vmatprep.subr.mxu0 0.0
    %5159 = vmatpush1.msra.mxu0 0.0
    %5160 = vmatprep.subr.mxu0 0.0
    %5161 = vmatpush1.msra.mxu0 0.0
    %5162 = vmatprep.subr.mxu0 0.0
    %5163 = vmatpush1.msra.mxu0 0.0
    %5164 = vmatprep.subr.mxu0 0.0
    %5165 = vmatpush1.msra.mxu0 0.0
    %5166 = vmatprep.subr.mxu0 0.0
    %5167 = vmatpush1.msra.mxu0 0.0
    %5168 = vmatprep.subr.mxu0 0.0
    %5169 = vmatpush1.msra.mxu0 0.0
    %5170 = vmatprep.subr.mxu0 0.0
    %5171 = vmatpush1.msra.mxu0 0.0
    %5172 = vmatprep.subr.mxu0 0.0
    %5173 = vmatpush1.msra.mxu0 0.0
    %5174 = vmatprep.subr.mxu0 0.0
    %5175 = vmatpush1.msra.mxu0 0.0
    %5176 = vmatprep.subr.mxu0 0.0
    %5177 = vmatpush1.msra.mxu0 0.0
    %5178 = vmatprep.subr.mxu0 0.0
    %5179 = vmatpush1.msra.mxu0 0.0
    %5180 = vmatprep.subr.mxu0 0.0
    %5181 = vmatpush1.msra.mxu0 0.0
    %5182 = vmatprep.mubr.f32.mxu0 0.0
    %5183 = vmatmul.mubr.f32.gmra.mrb[0].mxu0 %v783
    %v5184 = vpop.f32.mrb[0].mxu0
    %v5185 = vadd.f32 %v4879, %v5184
    %v5186 = vpop.f32.mrb[0].mxu0
    %v5187 = vadd.f32 %v4881, %v5186
    %5188 = vmatprep.mubr.f32.mxu0 0.0
    %5189 = vmatmul.mubr.f32.gmra.mrb[0].mxu0 %v786
    %v5190 = vpop.f32.mrb[0].mxu0
    %v5191 = vadd.f32 %v4885, %v5190
    %v5192 = vpop.f32.mrb[0].mxu0
    %v5193 = vadd.f32 %v4887, %v5192
    %5194 = vmatprep.mubr.f32.mxu0 0.0
    %5195 = vmatmul.mubr.f32.gmra.mrb[0].mxu0 %v789
    %v5196 = vpop.f32.mrb[0].mxu0
    %v5197 = vadd.f32 %v4891, %v5196
    %v5198 = vpop.f32.mrb[0].mxu0
    %v5199 = vadd.f32 %v4893, %v5198
    %5200 = vmatprep.mubr.f32.mxu0 0.0
    %5201 = vmatmul.mubr.f32.gmra.mrb[0].mxu0 %v792
    %v5202 = vpop.f32.mrb[0].mxu0
    %v5203 = vadd.f32 %v4897, %v5202
    %v5204 = vpop.f32.mrb[0].mxu0
    %v5205 = vadd.f32 %v4899, %v5204
    %5206 = vmatprep.mubr.f32.mxu0 0.0
    %5207 = vmatmul.mubr.f32.gmra.mrb[0].mxu0 %v795
    %v5208 = vpop.f32.mrb[0].mxu0
    %v5209 = vadd.f32 %v4903, %v5208
    %v5210 = vpop.f32.mrb[0].mxu0
    %v5211 = vadd.f32 %v4905, %v5210
    %5212 = vmatprep.mubr.f32.mxu0 0.0
    %5213 = vmatmul.mubr.f32.gmra.mrb[0].mxu0 %v798
    %v5214 = vpop.f32.mrb[0].mxu0
    %v5215 = vadd.f32 %v4909, %v5214
    %v5216 = vpop.f32.mrb[0].mxu0
    %v5217 = vadd.f32 %v4911, %v5216
    %5218 = vmatprep.mubr.f32.mxu0 0.0
    %5219 = vmatmul.mubr.f32.gmra.mrb[0].mxu0 %v801
    %v5220 = vpop.f32.mrb[0].mxu0
    %v5221 = vadd.f32 %v4915, %v5220
    %v5222 = vpop.f32.mrb[0].mxu0
    %v5223 = vadd.f32 %v4917, %v5222
    %5224 = vmatprep.mubr.f32.mxu0 0.0
    %5225 = vmatmul.mubr.f32.gmra.mrb[0].mxu0 %v804
    %v5226 = vpop.f32.mrb[0].mxu0
    %v5227 = vadd.f32 %v4921, %v5226
    %v5228 = vpop.f32.mrb[0].mxu0
    %v5229 = vadd.f32 %v4923, %v5228
    %5230 = vmatprep.mubr.f32.mxu0 0.0
    %5231 = vmatmul.mubr.f32.gmra.mrb[0].mxu0 %v807
    %v5232 = vpop.f32.mrb[0].mxu0
    %v5233 = vadd.f32 %v4927, %v5232
    %v5234 = vpop.f32.mrb[0].mxu0
    %v5235 = vadd.f32 %v4929, %v5234
    %5236 = vmatprep.mubr.f32.mxu0 0.0
    %5237 = vmatmul.mubr.f32.gmra.mrb[0].mxu0 %v810
    %v5238 = vpop.f32.mrb[0].mxu0
    %v5239 = vadd.f32 %v4933, %v5238
    %v5240 = vpop.f32.mrb[0].mxu0
    %v5241 = vadd.f32 %v4935, %v5240
    %5242 = vmatprep.mubr.f32.mxu0 0.0
    %5243 = vmatmul.mubr.f32.gmra.mrb[0].mxu0 %v813
    %v5244 = vpop.f32.mrb[0].mxu0
    %v5245 = vadd.f32 %v4939, %v5244
    %v5246 = vpop.f32.mrb[0].mxu0
    %v5247 = vadd.f32 %v4941, %v5246
    %5248 = vmatprep.mubr.f32.mxu0 0.0
    %5249 = vmatmul.mubr.f32.gmra.mrb[0].mxu0 %v816
    %v5250 = vpop.f32.mrb[0].mxu0
    %v5251 = vadd.f32 %v4945, %v5250
    %v5252 = vpop.f32.mrb[0].mxu0
    %v5253 = vadd.f32 %v4947, %v5252
    %5254 = vmatprep.mubr.f32.mxu0 0.0
    %5255 = vmatmul.mubr.f32.gmra.mrb[0].mxu0 %v819
    %v5256 = vpop.f32.mrb[0].mxu0
    %v5257 = vadd.f32 %v4951, %v5256
    %v5258 = vpop.f32.mrb[0].mxu0
    %v5259 = vadd.f32 %v4953, %v5258
    %5260 = vmatprep.mubr.f32.mxu0 0.0
    %5261 = vmatmul.mubr.f32.gmra.mrb[0].mxu0 %v822
    %v5262 = vpop.f32.mrb[0].mxu0
    %v5263 = vadd.f32 %v4957, %v5262
    %v5264 = vpop.f32.mrb[0].mxu0
    %v5265 = vadd.f32 %v4959, %v5264
    %5266 = vmatprep.mubr.f32.mxu0 0.0
    %5267 = vmatmul.mubr.f32.gmra.mrb[0].mxu0 %v825
    %v5268 = vpop.f32.mrb[0].mxu0
    %v5269 = vadd.f32 %v4963, %v5268
    %v5270 = vpop.f32.mrb[0].mxu0
    %v5271 = vadd.f32 %v4965, %v5270
    %5272 = vmatprep.mubr.f32.mxu0 0.0
    %5273 = vmatmul.mubr.f32.gmra.mrb[0].mxu0 %v828
    %v5274 = vpop.f32.mrb[0].mxu0
    %v5275 = vadd.f32 %v4969, %v5274
    %v5276 = vpop.f32.mrb[0].mxu0
    %v5277 = vadd.f32 %v4971, %v5276
    %5278 = vdwg.mxu0
    %5279 = vmatprep.subr.mxu0 0.0
    %5280 = vmatpush1.msra.mxu0 %v4798
    %5281 = vmatprep.subr.mxu0 0.0
    %5282 = vmatpush1.msra.mxu0 0.0
    %5283 = vmatprep.subr.mxu0 0.0
    %5284 = vmatpush1.msra.mxu0 0.0
    %5285 = vmatprep.subr.mxu0 0.0
    %5286 = vmatpush1.msra.mxu0 0.0
    %5287 = vmatprep.subr.mxu0 0.0
    %5288 = vmatpush1.msra.mxu0 0.0
    %5289 = vmatprep.subr.mxu0 0.0
    %5290 = vmatpush1.msra.mxu0 0.0
    %5291 = vmatprep.subr.mxu0 0.0
    %5292 = vmatpush1.msra.mxu0 0.0
    %5293 = vmatprep.subr.mxu0 0.0
    %5294 = vmatpush1.msra.mxu0 0.0
    %5295 = vmatprep.subr.mxu0 0.0
    %5296 = vmatpush1.msra.mxu0 0.0
    %5297 = vmatprep.subr.mxu0 0.0
    %5298 = vmatpush1.msra.mxu0 0.0
    %5299 = vmatprep.subr.mxu0 0.0
    %5300 = vmatpush1.msra.mxu0 0.0
    %5301 = vmatprep.subr.mxu0 0.0
    %5302 = vmatpush1.msra.mxu0 0.0
    %5303 = vmatprep.subr.mxu0 0.0
    %5304 = vmatpush1.msra.mxu0 0.0
    %5305 = vmatprep.subr.mxu0 0.0
    %5306 = vmatpush1.msra.mxu0 0.0
    %5307 = vmatprep.subr.mxu0 0.0
    %5308 = vmatpush1.msra.mxu0 0.0
    %5309 = vmatprep.subr.mxu0 0.0
    %5310 = vmatpush1.msra.mxu0 0.0
    %5311 = vmatprep.subr.mxu0 0.0
    %5312 = vmatpush1.msra.mxu0 0.0
    %5313 = vmatprep.subr.mxu0 0.0
    %5314 = vmatpush1.msra.mxu0 0.0
    %5315 = vmatprep.subr.mxu0 0.0
    %5316 = vmatpush1.msra.mxu0 0.0
    %5317 = vmatprep.subr.mxu0 0.0
    %5318 = vmatpush1.msra.mxu0 0.0
    %5319 = vmatprep.subr.mxu0 0.0
    %5320 = vmatpush1.msra.mxu0 0.0
    %5321 = vmatprep.subr.mxu0 0.0
    %5322 = vmatpush1.msra.mxu0 0.0
    %5323 = vmatprep.subr.mxu0 0.0
    %5324 = vmatpush1.msra.mxu0 0.0
    %5325 = vmatprep.subr.mxu0 0.0
    %5326 = vmatpush1.msra.mxu0 0.0
    %5327 = vmatprep.subr.mxu0 0.0
    %5328 = vmatpush1.msra.mxu0 0.0
    %5329 = vmatprep.subr.mxu0 0.0
    %5330 = vmatpush1.msra.mxu0 0.0
    %5331 = vmatprep.subr.mxu0 0.0
    %5332 = vmatpush1.msra.mxu0 0.0
    %5333 = vmatprep.subr.mxu0 0.0
    %5334 = vmatpush1.msra.mxu0 0.0
    %5335 = vmatprep.subr.mxu0 0.0
    %5336 = vmatpush1.msra.mxu0 0.0
    %5337 = vmatprep.subr.mxu0 0.0
    %5338 = vmatpush1.msra.mxu0 0.0
    %5339 = vmatprep.subr.mxu0 0.0
    %5340 = vmatpush1.msra.mxu0 0.0
    %5341 = vmatprep.subr.mxu0 0.0
    %5342 = vmatpush1.msra.mxu0 0.0
    %5343 = vmatprep.mubr.f32.mxu0 0.0
    %5344 = vmatmul.mubr.f32.gmra.mrb[0].mxu0 %v783
    %v5345 = vpop.f32.mrb[0].mxu0
    %v5346 = vadd.f32 %v5040, %v5345
    %v5347 = vpop.f32.mrb[0].mxu0
    %5348 = vmatprep.mubr.f32.mxu0 0.0
    %5349 = vmatmul.mubr.f32.gmra.mrb[0].mxu0 %v786
    %v5350 = vpop.f32.mrb[0].mxu0
    %v5351 = vadd.f32 %v5045, %v5350
    %v5352 = vpop.f32.mrb[0].mxu0
    %5353 = vmatprep.mubr.f32.mxu0 0.0
    %5354 = vmatmul.mubr.f32.gmra.mrb[0].mxu0 %v789
    %v5355 = vpop.f32.mrb[0].mxu0
    %v5356 = vadd.f32 %v5050, %v5355
    %v5357 = vpop.f32.mrb[0].mxu0
    %5358 = vmatprep.mubr.f32.mxu0 0.0
    %5359 = vmatmul.mubr.f32.gmra.mrb[0].mxu0 %v792
    %v5360 = vpop.f32.mrb[0].mxu0
    %v5361 = vadd.f32 %v5055, %v5360
    %v5362 = vpop.f32.mrb[0].mxu0
    %5363 = vmatprep.mubr.f32.mxu0 0.0
    %5364 = vmatmul.mubr.f32.gmra.mrb[0].mxu0 %v795
    %v5365 = vpop.f32.mrb[0].mxu0
    %v5366 = vadd.f32 %v5060, %v5365
    %v5367 = vpop.f32.mrb[0].mxu0
    %5368 = vmatprep.mubr.f32.mxu0 0.0
    %5369 = vmatmul.mubr.f32.gmra.mrb[0].mxu0 %v798
    %v5370 = vpop.f32.mrb[0].mxu0
    %v5371 = vadd.f32 %v5065, %v5370
    %v5372 = vpop.f32.mrb[0].mxu0
    %5373 = vmatprep.mubr.f32.mxu0 0.0
    %5374 = vmatmul.mubr.f32.gmra.mrb[0].mxu0 %v801
    %v5375 = vpop.f32.mrb[0].mxu0
    %v5376 = vadd.f32 %v5070, %v5375
    %v5377 = vpop.f32.mrb[0].mxu0
    %5378 = vmatprep.mubr.f32.mxu0 0.0
    %5379 = vmatmul.mubr.f32.gmra.mrb[0].mxu0 %v804
    %v5380 = vpop.f32.mrb[0].mxu0
    %v5381 = vadd.f32 %v5075, %v5380
    %v5382 = vpop.f32.mrb[0].mxu0
    %5383 = vmatprep.mubr.f32.mxu0 0.0
    %5384 = vmatmul.mubr.f32.gmra.mrb[0].mxu0 %v807
    %v5385 = vpop.f32.mrb[0].mxu0
    %v5386 = vadd.f32 %v5080, %v5385
    %v5387 = vpop.f32.mrb[0].mxu0
    %5388 = vmatprep.mubr.f32.mxu0 0.0
    %5389 = vmatmul.mubr.f32.gmra.mrb[0].mxu0 %v810
    %v5390 = vpop.f32.mrb[0].mxu0
    %v5391 = vadd.f32 %v5085, %v5390
    %v5392 = vpop.f32.mrb[0].mxu0
    %5393 = vmatprep.mubr.f32.mxu0 0.0
    %5394 = vmatmul.mubr.f32.gmra.mrb[0].mxu0 %v813
    %v5395 = vpop.f32.mrb[0].mxu0
    %v5396 = vadd.f32 %v5090, %v5395
    %v5397 = vpop.f32.mrb[0].mxu0
    %5398 = vmatprep.mubr.f32.mxu0 0.0
    %5399 = vmatmul.mubr.f32.gmra.mrb[0].mxu0 %v816
    %v5400 = vpop.f32.mrb[0].mxu0
    %v5401 = vadd.f32 %v5095, %v5400
    %v5402 = vpop.f32.mrb[0].mxu0
    %5403 = vmatprep.mubr.f32.mxu0 0.0
    %5404 = vmatmul.mubr.f32.gmra.mrb[0].mxu0 %v819
    %v5405 = vpop.f32.mrb[0].mxu0
    %v5406 = vadd.f32 %v5100, %v5405
    %v5407 = vpop.f32.mrb[0].mxu0
    %5408 = vmatprep.mubr.f32.mxu0 0.0
    %5409 = vmatmul.mubr.f32.gmra.mrb[0].mxu0 %v822
    %v5410 = vpop.f32.mrb[0].mxu0
    %v5411 = vadd.f32 %v5105, %v5410
    %v5412 = vpop.f32.mrb[0].mxu0
    %5413 = vmatprep.mubr.f32.mxu0 0.0
    %5414 = vmatmul.mubr.f32.gmra.mrb[0].mxu0 %v825
    %v5415 = vpop.f32.mrb[0].mxu0
    %v5416 = vadd.f32 %v5110, %v5415
    %v5417 = vpop.f32.mrb[0].mxu0
    %5418 = vmatprep.mubr.f32.mxu0 0.0
    %5419 = vmatmul.mubr.f32.gmra.mrb[0].mxu0 %v828
    %v5420 = vpop.f32.mrb[0].mxu0
    %v5421 = vadd.f32 %v5115, %v5420
    %v5422 = vpop.f32.mrb[0].mxu0
    %5423 = vdwg.mxu0
    %5424 = vrot.lane.b32.xlu0 %v4797, 126
    %v5425 = vpop.permute.xlu0 %5424
    %5426 = vrot.lane.b32.xlu0 %v4792, 126
    %v5427 = vpop.permute.xlu0 %5426
    %5428 = vrot.lane.b32.xlu0 %v4798, 126
    %v5429 = vpop.permute.xlu0 %5428
    %v5430 = vsel %vm1142, %v5425, %v5427
    %v5431 = vsel %vm1142, %v5427, %v5429
    %5435 = vmatprep.subr.mxu0 %v5431
    %5436 = vmatpush1.msra.mxu0 %v5430
    %5437 = vmatprep.subr.mxu0 0.0
    %5438 = vmatpush1.msra.mxu0 0.0
    %5439 = vmatprep.subr.mxu0 0.0
    %5440 = vmatpush1.msra.mxu0 0.0
    %5441 = vmatprep.subr.mxu0 0.0
    %5442 = vmatpush1.msra.mxu0 0.0
    %5443 = vmatprep.subr.mxu0 0.0
    %5444 = vmatpush1.msra.mxu0 0.0
    %5445 = vmatprep.subr.mxu0 0.0
    %5446 = vmatpush1.msra.mxu0 0.0
    %5447 = vmatprep.subr.mxu0 0.0
    %5448 = vmatpush1.msra.mxu0 0.0
    %5449 = vmatprep.subr.mxu0 0.0
    %5450 = vmatpush1.msra.mxu0 0.0
    %5451 = vmatprep.subr.mxu0 0.0
    %5452 = vmatpush1.msra.mxu0 0.0
    %5453 = vmatprep.subr.mxu0 0.0
    %5454 = vmatpush1.msra.mxu0 0.0
    %5455 = vmatprep.subr.mxu0 0.0
    %5456 = vmatpush1.msra.mxu0 0.0
    %5457 = vmatprep.subr.mxu0 0.0
    %5458 = vmatpush1.msra.mxu0 0.0
    %5459 = vmatprep.subr.mxu0 0.0
    %5460 = vmatpush1.msra.mxu0 0.0
    %5461 = vmatprep.subr.mxu0 0.0
    %5462 = vmatpush1.msra.mxu0 0.0
    %5463 = vmatprep.subr.mxu0 0.0
    %5464 = vmatpush1.msra.mxu0 0.0
    %5465 = vmatprep.subr.mxu0 0.0
    %5466 = vmatpush1.msra.mxu0 0.0
    %5467 = vmatprep.subr.mxu0 0.0
    %5468 = vmatpush1.msra.mxu0 0.0
    %5469 = vmatprep.subr.mxu0 0.0
    %5470 = vmatpush1.msra.mxu0 0.0
    %5471 = vmatprep.subr.mxu0 0.0
    %5472 = vmatpush1.msra.mxu0 0.0
    %5473 = vmatprep.subr.mxu0 0.0
    %5474 = vmatpush1.msra.mxu0 0.0
    %5475 = vmatprep.subr.mxu0 0.0
    %5476 = vmatpush1.msra.mxu0 0.0
    %5477 = vmatprep.subr.mxu0 0.0
    %5478 = vmatpush1.msra.mxu0 0.0
    %5479 = vmatprep.subr.mxu0 0.0
    %5480 = vmatpush1.msra.mxu0 0.0
    %5481 = vmatprep.subr.mxu0 0.0
    %5482 = vmatpush1.msra.mxu0 0.0
    %5483 = vmatprep.subr.mxu0 0.0
    %5484 = vmatpush1.msra.mxu0 0.0
    %5485 = vmatprep.subr.mxu0 0.0
    %5486 = vmatpush1.msra.mxu0 0.0
    %5487 = vmatprep.subr.mxu0 0.0
    %5488 = vmatpush1.msra.mxu0 0.0
    %5489 = vmatprep.subr.mxu0 0.0
    %5490 = vmatpush1.msra.mxu0 0.0
    %5491 = vmatprep.subr.mxu0 0.0
    %5492 = vmatpush1.msra.mxu0 0.0
    %5493 = vmatprep.subr.mxu0 0.0
    %5494 = vmatpush1.msra.mxu0 0.0
    %5495 = vmatprep.subr.mxu0 0.0
    %5496 = vmatpush1.msra.mxu0 0.0
    %5497 = vmatprep.subr.mxu0 0.0
    %5498 = vmatpush1.msra.mxu0 0.0
    %5499 = vmatprep.mubr.f32.mxu0 0.0
    %5500 = vmatmul.mubr.f32.gmra.mrb[0].mxu0 %v1149
    %v5501 = vpop.f32.mrb[0].mxu0
    %v5502 = vadd.f32 0.0, %v5501
    %v5503 = vpop.f32.mrb[0].mxu0
    %v5504 = vadd.f32 0.0, %v5503
    %5505 = vmatprep.mubr.f32.mxu0 0.0
    %5506 = vmatmul.mubr.f32.gmra.mrb[0].mxu0 %v1152
    %v5507 = vpop.f32.mrb[0].mxu0
    %v5508 = vadd.f32 0.0, %v5507
    %v5509 = vpop.f32.mrb[0].mxu0
    %v5510 = vadd.f32 0.0, %v5509
    %5511 = vmatprep.mubr.f32.mxu0 0.0
    %5512 = vmatmul.mubr.f32.gmra.mrb[0].mxu0 %v1155
    %v5513 = vpop.f32.mrb[0].mxu0
    %v5514 = vadd.f32 0.0, %v5513
    %v5515 = vpop.f32.mrb[0].mxu0
    %v5516 = vadd.f32 0.0, %v5515
    %5517 = vmatprep.mubr.f32.mxu0 0.0
    %5518 = vmatmul.mubr.f32.gmra.mrb[0].mxu0 %v1158
    %v5519 = vpop.f32.mrb[0].mxu0
    %v5520 = vadd.f32 0.0, %v5519
    %v5521 = vpop.f32.mrb[0].mxu0
    %v5522 = vadd.f32 0.0, %v5521
    %5523 = vmatprep.mubr.f32.mxu0 0.0
    %5524 = vmatmul.mubr.f32.gmra.mrb[0].mxu0 %v1161
    %v5525 = vpop.f32.mrb[0].mxu0
    %v5526 = vadd.f32 0.0, %v5525
    %v5527 = vpop.f32.mrb[0].mxu0
    %v5528 = vadd.f32 0.0, %v5527
    %5529 = vmatprep.mubr.f32.mxu0 0.0
    %5530 = vmatmul.mubr.f32.gmra.mrb[0].mxu0 %v1164
    %v5531 = vpop.f32.mrb[0].mxu0
    %v5532 = vadd.f32 0.0, %v5531
    %v5533 = vpop.f32.mrb[0].mxu0
    %v5534 = vadd.f32 0.0, %v5533
    %5535 = vmatprep.mubr.f32.mxu0 0.0
    %5536 = vmatmul.mubr.f32.gmra.mrb[0].mxu0 %v1167
    %v5537 = vpop.f32.mrb[0].mxu0
    %v5538 = vadd.f32 0.0, %v5537
    %v5539 = vpop.f32.mrb[0].mxu0
    %v5540 = vadd.f32 0.0, %v5539
    %5541 = vmatprep.mubr.f32.mxu0 0.0
    %5542 = vmatmul.mubr.f32.gmra.mrb[0].mxu0 %v1170
    %v5543 = vpop.f32.mrb[0].mxu0
    %v5544 = vadd.f32 0.0, %v5543
    %v5545 = vpop.f32.mrb[0].mxu0
    %v5546 = vadd.f32 0.0, %v5545
    %5547 = vmatprep.mubr.f32.mxu0 0.0
    %5548 = vmatmul.mubr.f32.gmra.mrb[0].mxu0 %v1173
    %v5549 = vpop.f32.mrb[0].mxu0
    %v5550 = vadd.f32 0.0, %v5549
    %v5551 = vpop.f32.mrb[0].mxu0
    %v5552 = vadd.f32 0.0, %v5551
    %5553 = vmatprep.mubr.f32.mxu0 0.0
    %5554 = vmatmul.mubr.f32.gmra.mrb[0].mxu0 %v1176
    %v5555 = vpop.f32.mrb[0].mxu0
    %v5556 = vadd.f32 0.0, %v5555
    %v5557 = vpop.f32.mrb[0].mxu0
    %v5558 = vadd.f32 0.0, %v5557
    %5559 = vmatprep.mubr.f32.mxu0 0.0
    %5560 = vmatmul.mubr.f32.gmra.mrb[0].mxu0 %v1179
    %v5561 = vpop.f32.mrb[0].mxu0
    %v5562 = vadd.f32 0.0, %v5561
    %v5563 = vpop.f32.mrb[0].mxu0
    %v5564 = vadd.f32 0.0, %v5563
    %5565 = vmatprep.mubr.f32.mxu0 0.0
    %5566 = vmatmul.mubr.f32.gmra.mrb[0].mxu0 %v1182
    %v5567 = vpop.f32.mrb[0].mxu0
    %v5568 = vadd.f32 0.0, %v5567
    %v5569 = vpop.f32.mrb[0].mxu0
    %v5570 = vadd.f32 0.0, %v5569
    %5571 = vmatprep.mubr.f32.mxu0 0.0
    %5572 = vmatmul.mubr.f32.gmra.mrb[0].mxu0 %v1185
    %v5573 = vpop.f32.mrb[0].mxu0
    %v5574 = vadd.f32 0.0, %v5573
    %v5575 = vpop.f32.mrb[0].mxu0
    %v5576 = vadd.f32 0.0, %v5575
    %5577 = vmatprep.mubr.f32.mxu0 0.0
    %5578 = vmatmul.mubr.f32.gmra.mrb[0].mxu0 %v1188
    %v5579 = vpop.f32.mrb[0].mxu0
    %v5580 = vadd.f32 0.0, %v5579
    %v5581 = vpop.f32.mrb[0].mxu0
    %v5582 = vadd.f32 0.0, %v5581
    %5583 = vmatprep.mubr.f32.mxu0 0.0
    %5584 = vmatmul.mubr.f32.gmra.mrb[0].mxu0 %v1191
    %v5585 = vpop.f32.mrb[0].mxu0
    %v5586 = vadd.f32 0.0, %v5585
    %v5587 = vpop.f32.mrb[0].mxu0
    %v5588 = vadd.f32 0.0, %v5587
    %5589 = vmatprep.mubr.f32.mxu0 0.0
    %5590 = vmatmul.mubr.f32.gmra.mrb[0].mxu0 %v1194
    %v5591 = vpop.f32.mrb[0].mxu0
    %v5592 = vadd.f32 0.0, %v5591
    %v5593 = vpop.f32.mrb[0].mxu0
    %v5594 = vadd.f32 0.0, %v5593
    %5595 = vdwg.mxu0
    %5596 = vmatprep.subr.mxu0 0.0
    %5597 = vmatpush1.msra.mxu0 %v5429
    %5598 = vmatprep.subr.mxu0 0.0
    %5599 = vmatpush1.msra.mxu0 0.0
    %5600 = vmatprep.subr.mxu0 0.0
    %5601 = vmatpush1.msra.mxu0 0.0
    %5602 = vmatprep.subr.mxu0 0.0
    %5603 = vmatpush1.msra.mxu0 0.0
    %5604 = vmatprep.subr.mxu0 0.0
    %5605 = vmatpush1.msra.mxu0 0.0
    %5606 = vmatprep.subr.mxu0 0.0
    %5607 = vmatpush1.msra.mxu0 0.0
    %5608 = vmatprep.subr.mxu0 0.0
    %5609 = vmatpush1.msra.mxu0 0.0
    %5610 = vmatprep.subr.mxu0 0.0
    %5611 = vmatpush1.msra.mxu0 0.0
    %5612 = vmatprep.subr.mxu0 0.0
    %5613 = vmatpush1.msra.mxu0 0.0
    %5614 = vmatprep.subr.mxu0 0.0
    %5615 = vmatpush1.msra.mxu0 0.0
    %5616 = vmatprep.subr.mxu0 0.0
    %5617 = vmatpush1.msra.mxu0 0.0
    %5618 = vmatprep.subr.mxu0 0.0
    %5619 = vmatpush1.msra.mxu0 0.0
    %5620 = vmatprep.subr.mxu0 0.0
    %5621 = vmatpush1.msra.mxu0 0.0
    %5622 = vmatprep.subr.mxu0 0.0
    %5623 = vmatpush1.msra.mxu0 0.0
    %5624 = vmatprep.subr.mxu0 0.0
    %5625 = vmatpush1.msra.mxu0 0.0
    %5626 = vmatprep.subr.mxu0 0.0
    %5627 = vmatpush1.msra.mxu0 0.0
    %5628 = vmatprep.subr.mxu0 0.0
    %5629 = vmatpush1.msra.mxu0 0.0
    %5630 = vmatprep.subr.mxu0 0.0
    %5631 = vmatpush1.msra.mxu0 0.0
    %5632 = vmatprep.subr.mxu0 0.0
    %5633 = vmatpush1.msra.mxu0 0.0
    %5634 = vmatprep.subr.mxu0 0.0
    %5635 = vmatpush1.msra.mxu0 0.0
    %5636 = vmatprep.subr.mxu0 0.0
    %5637 = vmatpush1.msra.mxu0 0.0
    %5638 = vmatprep.subr.mxu0 0.0
    %5639 = vmatpush1.msra.mxu0 0.0
    %5640 = vmatprep.subr.mxu0 0.0
    %5641 = vmatpush1.msra.mxu0 0.0
    %5642 = vmatprep.subr.mxu0 0.0
    %5643 = vmatpush1.msra.mxu0 0.0
    %5644 = vmatprep.subr.mxu0 0.0
    %5645 = vmatpush1.msra.mxu0 0.0
    %5646 = vmatprep.subr.mxu0 0.0
    %5647 = vmatpush1.msra.mxu0 0.0
    %5648 = vmatprep.subr.mxu0 0.0
    %5649 = vmatpush1.msra.mxu0 0.0
    %5650 = vmatprep.subr.mxu0 0.0
    %5651 = vmatpush1.msra.mxu0 0.0
    %5652 = vmatprep.subr.mxu0 0.0
    %5653 = vmatpush1.msra.mxu0 0.0
    %5654 = vmatprep.subr.mxu0 0.0
    %5655 = vmatpush1.msra.mxu0 0.0
    %5656 = vmatprep.subr.mxu0 0.0
    %5657 = vmatpush1.msra.mxu0 0.0
    %5658 = vmatprep.subr.mxu0 0.0
    %5659 = vmatpush1.msra.mxu0 0.0
    %5660 = vmatprep.mubr.f32.mxu0 0.0
    %5661 = vmatmul.mubr.f32.gmra.mrb[0].mxu0 %v1149
    %v5662 = vpop.f32.mrb[0].mxu0
    %v5663 = vadd.f32 0.0, %v5662
    %v5664 = vpop.f32.mrb[0].mxu0
    %5665 = vmatprep.mubr.f32.mxu0 0.0
    %5666 = vmatmul.mubr.f32.gmra.mrb[0].mxu0 %v1152
    %v5667 = vpop.f32.mrb[0].mxu0
    %v5668 = vadd.f32 0.0, %v5667
    %v5669 = vpop.f32.mrb[0].mxu0
    %5670 = vmatprep.mubr.f32.mxu0 0.0
    %5671 = vmatmul.mubr.f32.gmra.mrb[0].mxu0 %v1155
    %v5672 = vpop.f32.mrb[0].mxu0
    %v5673 = vadd.f32 0.0, %v5672
    %v5674 = vpop.f32.mrb[0].mxu0
    %5675 = vmatprep.mubr.f32.mxu0 0.0
    %5676 = vmatmul.mubr.f32.gmra.mrb[0].mxu0 %v1158
    %v5677 = vpop.f32.mrb[0].mxu0
    %v5678 = vadd.f32 0.0, %v5677
    %v5679 = vpop.f32.mrb[0].mxu0
    %5680 = vmatprep.mubr.f32.mxu0 0.0
    %5681 = vmatmul.mubr.f32.gmra.mrb[0].mxu0 %v1161
    %v5682 = vpop.f32.mrb[0].mxu0
    %v5683 = vadd.f32 0.0, %v5682
    %v5684 = vpop.f32.mrb[0].mxu0
    %5685 = vmatprep.mubr.f32.mxu0 0.0
    %5686 = vmatmul.mubr.f32.gmra.mrb[0].mxu0 %v1164
    %v5687 = vpop.f32.mrb[0].mxu0
    %v5688 = vadd.f32 0.0, %v5687
    %v5689 = vpop.f32.mrb[0].mxu0
    %5690 = vmatprep.mubr.f32.mxu0 0.0
    %5691 = vmatmul.mubr.f32.gmra.mrb[0].mxu0 %v1167
    %v5692 = vpop.f32.mrb[0].mxu0
    %v5693 = vadd.f32 0.0, %v5692
    %v5694 = vpop.f32.mrb[0].mxu0
    %5695 = vmatprep.mubr.f32.mxu0 0.0
    %5696 = vmatmul.mubr.f32.gmra.mrb[0].mxu0 %v1170
    %v5697 = vpop.f32.mrb[0].mxu0
    %v5698 = vadd.f32 0.0, %v5697
    %v5699 = vpop.f32.mrb[0].mxu0
    %5700 = vmatprep.mubr.f32.mxu0 0.0
    %5701 = vmatmul.mubr.f32.gmra.mrb[0].mxu0 %v1173
    %v5702 = vpop.f32.mrb[0].mxu0
    %v5703 = vadd.f32 0.0, %v5702
    %v5704 = vpop.f32.mrb[0].mxu0
    %5705 = vmatprep.mubr.f32.mxu0 0.0
    %5706 = vmatmul.mubr.f32.gmra.mrb[0].mxu0 %v1176
    %v5707 = vpop.f32.mrb[0].mxu0
    %v5708 = vadd.f32 0.0, %v5707
    %v5709 = vpop.f32.mrb[0].mxu0
    %5710 = vmatprep.mubr.f32.mxu0 0.0
    %5711 = vmatmul.mubr.f32.gmra.mrb[0].mxu0 %v1179
    %v5712 = vpop.f32.mrb[0].mxu0
    %v5713 = vadd.f32 0.0, %v5712
    %v5714 = vpop.f32.mrb[0].mxu0
    %5715 = vmatprep.mubr.f32.mxu0 0.0
    %5716 = vmatmul.mubr.f32.gmra.mrb[0].mxu0 %v1182
    %v5717 = vpop.f32.mrb[0].mxu0
    %v5718 = vadd.f32 0.0, %v5717
    %v5719 = vpop.f32.mrb[0].mxu0
    %5720 = vmatprep.mubr.f32.mxu0 0.0
    %5721 = vmatmul.mubr.f32.gmra.mrb[0].mxu0 %v1185
    %v5722 = vpop.f32.mrb[0].mxu0
    %v5723 = vadd.f32 0.0, %v5722
    %v5724 = vpop.f32.mrb[0].mxu0
    %5725 = vmatprep.mubr.f32.mxu0 0.0
    %5726 = vmatmul.mubr.f32.gmra.mrb[0].mxu0 %v1188
    %v5727 = vpop.f32.mrb[0].mxu0
    %v5728 = vadd.f32 0.0, %v5727
    %v5729 = vpop.f32.mrb[0].mxu0
    %5730 = vmatprep.mubr.f32.mxu0 0.0
    %5731 = vmatmul.mubr.f32.gmra.mrb[0].mxu0 %v1191
    %v5732 = vpop.f32.mrb[0].mxu0
    %v5733 = vadd.f32 0.0, %v5732
    %v5734 = vpop.f32.mrb[0].mxu0
    %5735 = vmatprep.mubr.f32.mxu0 0.0
    %5736 = vmatmul.mubr.f32.gmra.mrb[0].mxu0 %v1194
    %v5737 = vpop.f32.mrb[0].mxu0
    %v5738 = vadd.f32 0.0, %v5737
    %v5739 = vpop.f32.mrb[0].mxu0
    %5740 = vdwg.mxu0
    %v5741 = vadd.f32 %v5185, %v5502
    %v5742 = vadd.f32 %v5187, %v5504
    %v5743 = vadd.f32 %v5346, %v5663
    %v5744 = vadd.f32 %v5191, %v5508
    %v5745 = vadd.f32 %v5193, %v5510
    %v5746 = vadd.f32 %v5351, %v5668
    %v5747 = vadd.f32 %v5197, %v5514
    %v5748 = vadd.f32 %v5199, %v5516
    %v5749 = vadd.f32 %v5356, %v5673
    %v5750 = vadd.f32 %v5203, %v5520
    %v5751 = vadd.f32 %v5205, %v5522
    %v5752 = vadd.f32 %v5361, %v5678
    %v5753 = vadd.f32 %v5209, %v5526
    %v5754 = vadd.f32 %v5211, %v5528
    %v5755 = vadd.f32 %v5366, %v5683
    %v5756 = vadd.f32 %v5215, %v5532
    %v5757 = vadd.f32 %v5217, %v5534
    %v5758 = vadd.f32 %v5371, %v5688
    %v5759 = vadd.f32 %v5221, %v5538
    %v5760 = vadd.f32 %v5223, %v5540
    %v5761 = vadd.f32 %v5376, %v5693
    %v5762 = vadd.f32 %v5227, %v5544
    %v5763 = vadd.f32 %v5229, %v5546
    %v5764 = vadd.f32 %v5381, %v5698
    %v5765 = vadd.f32 %v5233, %v5550
    %v5766 = vadd.f32 %v5235, %v5552
    %v5767 = vadd.f32 %v5386, %v5703
    %v5768 = vadd.f32 %v5239, %v5556
    %v5769 = vadd.f32 %v5241, %v5558
    %v5770 = vadd.f32 %v5391, %v5708
    %v5771 = vadd.f32 %v5245, %v5562
    %v5772 = vadd.f32 %v5247, %v5564
    %v5773 = vadd.f32 %v5396, %v5713
    %v5774 = vadd.f32 %v5251, %v5568
    %v5775 = vadd.f32 %v5253, %v5570
    %v5776 = vadd.f32 %v5401, %v5718
    %v5777 = vadd.f32 %v5257, %v5574
    %v5778 = vadd.f32 %v5259, %v5576
    %v5779 = vadd.f32 %v5406, %v5723
    %v5780 = vadd.f32 %v5263, %v5580
    %v5781 = vadd.f32 %v5265, %v5582
    %v5782 = vadd.f32 %v5411, %v5728
    %v5783 = vadd.f32 %v5269, %v5586
    %v5784 = vadd.f32 %v5271, %v5588
    %v5785 = vadd.f32 %v5416, %v5733
    %v5786 = vadd.f32 %v5275, %v5592
    %v5787 = vadd.f32 %v5277, %v5594
    %v5788 = vadd.f32 %v5421, %v5738
    %v5789 = vadd.f32 %v5741, %v1553
    %v5790 = vadd.f32 %v5742, %v1553
    %v5791 = vadd.f32 %v5743, %v1553
    %v5792 = vadd.f32 %v5744, %v1558
    %v5793 = vadd.f32 %v5745, %v1558
    %v5794 = vadd.f32 %v5746, %v1558
    %v5795 = vadd.f32 %v5747, %v1563
    %v5796 = vadd.f32 %v5748, %v1563
    %v5797 = vadd.f32 %v5749, %v1563
    %v5798 = vadd.f32 %v5750, %v1568
    %v5799 = vadd.f32 %v5751, %v1568
    %v5800 = vadd.f32 %v5752, %v1568
    %v5801 = vadd.f32 %v5753, %v1573
    %v5802 = vadd.f32 %v5754, %v1573
    %v5803 = vadd.f32 %v5755, %v1573
    %v5804 = vadd.f32 %v5756, %v1578
    %v5805 = vadd.f32 %v5757, %v1578
    %v5806 = vadd.f32 %v5758, %v1578
    %v5807 = vadd.f32 %v5759, %v1583
    %v5808 = vadd.f32 %v5760, %v1583
    %v5809 = vadd.f32 %v5761, %v1583
    %v5810 = vadd.f32 %v5762, %v1588
    %v5811 = vadd.f32 %v5763, %v1588
    %v5812 = vadd.f32 %v5764, %v1588
    %v5813 = vadd.f32 %v5765, %v1593
    %v5814 = vadd.f32 %v5766, %v1593
    %v5815 = vadd.f32 %v5767, %v1593
    %v5816 = vadd.f32 %v5768, %v1598
    %v5817 = vadd.f32 %v5769, %v1598
    %v5818 = vadd.f32 %v5770, %v1598
    %v5819 = vadd.f32 %v5771, %v1603
    %v5820 = vadd.f32 %v5772, %v1603
    %v5821 = vadd.f32 %v5773, %v1603
    %v5822 = vadd.f32 %v5774, %v1608
    %v5823 = vadd.f32 %v5775, %v1608
    %v5824 = vadd.f32 %v5776, %v1608
    %v5825 = vadd.f32 %v5777, %v1613
    %v5826 = vadd.f32 %v5778, %v1613
    %v5827 = vadd.f32 %v5779, %v1613
    %v5828 = vadd.f32 %v5780, %v1618
    %v5829 = vadd.f32 %v5781, %v1618
    %v5830 = vadd.f32 %v5782, %v1618
    %v5831 = vadd.f32 %v5783, %v1623
    %v5832 = vadd.f32 %v5784, %v1623
    %v5833 = vadd.f32 %v5785, %v1623
    %v5834 = vadd.f32 %v5786, %v1628
    %v5835 = vadd.f32 %v5787, %v1628
    %v5836 = vadd.f32 %v5788, %v1628
    %v5837 = vmax.f32 %v5789, 0.0
    %v5838 = vmax.f32 %v5790, 0.0
    %v5839 = vmax.f32 %v5791, 0.0
    %v5840 = vmax.f32 %v5792, 0.0
    %v5841 = vmax.f32 %v5793, 0.0
    %v5842 = vmax.f32 %v5794, 0.0
    %v5843 = vmax.f32 %v5795, 0.0
    %v5844 = vmax.f32 %v5796, 0.0
    %v5845 = vmax.f32 %v5797, 0.0
    %v5846 = vmax.f32 %v5798, 0.0
    %v5847 = vmax.f32 %v5799, 0.0
    %v5848 = vmax.f32 %v5800, 0.0
    %v5849 = vmax.f32 %v5801, 0.0
    %v5850 = vmax.f32 %v5802, 0.0
    %v5851 = vmax.f32 %v5803, 0.0
    %v5852 = vmax.f32 %v5804, 0.0
    %v5853 = vmax.f32 %v5805, 0.0
    %v5854 = vmax.f32 %v5806, 0.0
    %v5855 = vmax.f32 %v5807, 0.0
    %v5856 = vmax.f32 %v5808, 0.0
    %v5857 = vmax.f32 %v5809, 0.0
    %v5858 = vmax.f32 %v5810, 0.0
    %v5859 = vmax.f32 %v5811, 0.0
    %v5860 = vmax.f32 %v5812, 0.0
    %v5861 = vmax.f32 %v5813, 0.0
    %v5862 = vmax.f32 %v5814, 0.0
    %v5863 = vmax.f32 %v5815, 0.0
    %v5864 = vmax.f32 %v5816, 0.0
    %v5865 = vmax.f32 %v5817, 0.0
    %v5866 = vmax.f32 %v5818, 0.0
    %v5867 = vmax.f32 %v5819, 0.0
    %v5868 = vmax.f32 %v5820, 0.0
    %v5869 = vmax.f32 %v5821, 0.0
    %v5870 = vmax.f32 %v5822, 0.0
    %v5871 = vmax.f32 %v5823, 0.0
    %v5872 = vmax.f32 %v5824, 0.0
    %v5873 = vmax.f32 %v5825, 0.0
    %v5874 = vmax.f32 %v5826, 0.0
    %v5875 = vmax.f32 %v5827, 0.0
    %v5876 = vmax.f32 %v5828, 0.0
    %v5877 = vmax.f32 %v5829, 0.0
    %v5878 = vmax.f32 %v5830, 0.0
    %v5879 = vmax.f32 %v5831, 0.0
    %v5880 = vmax.f32 %v5832, 0.0
    %v5881 = vmax.f32 %v5833, 0.0
    %v5882 = vmax.f32 %v5834, 0.0
    %v5883 = vmax.f32 %v5835, 0.0
    %v5884 = vmax.f32 %v5836, 0.0
    %5933 = vrot.lane.b32.xlu0 %v5837, 127
    %v5934 = vpop.permute.xlu0 %5933
    %5935 = vrot.lane.b32.xlu0 %v5838, 127
    %v5936 = vpop.permute.xlu0 %5935
    %5937 = vrot.lane.b32.xlu0 %v5839, 127
    %v5938 = vpop.permute.xlu0 %5937
    %5939 = vrot.lane.b32.xlu0 %v5840, 127
    %v5940 = vpop.permute.xlu0 %5939
    %5941 = vrot.lane.b32.xlu0 %v5841, 127
    %v5942 = vpop.permute.xlu0 %5941
    %5943 = vrot.lane.b32.xlu0 %v5842, 127
    %v5944 = vpop.permute.xlu0 %5943
    %5945 = vrot.lane.b32.xlu0 %v5843, 127
    %v5946 = vpop.permute.xlu0 %5945
    %5947 = vrot.lane.b32.xlu0 %v5844, 127
    %v5948 = vpop.permute.xlu0 %5947
    %5949 = vrot.lane.b32.xlu0 %v5845, 127
    %v5950 = vpop.permute.xlu0 %5949
    %5951 = vrot.lane.b32.xlu0 %v5846, 127
    %v5952 = vpop.permute.xlu0 %5951
    %5953 = vrot.lane.b32.xlu0 %v5847, 127
    %v5954 = vpop.permute.xlu0 %5953
    %5955 = vrot.lane.b32.xlu0 %v5848, 127
    %v5956 = vpop.permute.xlu0 %5955
    %5957 = vrot.lane.b32.xlu0 %v5849, 127
    %v5958 = vpop.permute.xlu0 %5957
    %5959 = vrot.lane.b32.xlu0 %v5850, 127
    %v5960 = vpop.permute.xlu0 %5959
    %5961 = vrot.lane.b32.xlu0 %v5851, 127
    %v5962 = vpop.permute.xlu0 %5961
    %5963 = vrot.lane.b32.xlu0 %v5852, 127
    %v5964 = vpop.permute.xlu0 %5963
    %5965 = vrot.lane.b32.xlu0 %v5853, 127
    %v5966 = vpop.permute.xlu0 %5965
    %5967 = vrot.lane.b32.xlu0 %v5854, 127
    %v5968 = vpop.permute.xlu0 %5967
    %5969 = vrot.lane.b32.xlu0 %v5855, 127
    %v5970 = vpop.permute.xlu0 %5969
    %5971 = vrot.lane.b32.xlu0 %v5856, 127
    %v5972 = vpop.permute.xlu0 %5971
    %5973 = vrot.lane.b32.xlu0 %v5857, 127
    %v5974 = vpop.permute.xlu0 %5973
    %5975 = vrot.lane.b32.xlu0 %v5858, 127
    %v5976 = vpop.permute.xlu0 %5975
    %5977 = vrot.lane.b32.xlu0 %v5859, 127
    %v5978 = vpop.permute.xlu0 %5977
    %5979 = vrot.lane.b32.xlu0 %v5860, 127
    %v5980 = vpop.permute.xlu0 %5979
    %5981 = vrot.lane.b32.xlu0 %v5861, 127
    %v5982 = vpop.permute.xlu0 %5981
    %5983 = vrot.lane.b32.xlu0 %v5862, 127
    %v5984 = vpop.permute.xlu0 %5983
    %5985 = vrot.lane.b32.xlu0 %v5863, 127
    %v5986 = vpop.permute.xlu0 %5985
    %5987 = vrot.lane.b32.xlu0 %v5864, 127
    %v5988 = vpop.permute.xlu0 %5987
    %5989 = vrot.lane.b32.xlu0 %v5865, 127
    %v5990 = vpop.permute.xlu0 %5989
    %5991 = vrot.lane.b32.xlu0 %v5866, 127
    %v5992 = vpop.permute.xlu0 %5991
    %5993 = vrot.lane.b32.xlu0 %v5867, 127
    %v5994 = vpop.permute.xlu0 %5993
    %5995 = vrot.lane.b32.xlu0 %v5868, 127
    %v5996 = vpop.permute.xlu0 %5995
    %5997 = vrot.lane.b32.xlu0 %v5869, 127
    %v5998 = vpop.permute.xlu0 %5997
    %5999 = vrot.lane.b32.xlu0 %v5870, 127
    %v6000 = vpop.permute.xlu0 %5999
    %6001 = vrot.lane.b32.xlu0 %v5871, 127
    %v6002 = vpop.permute.xlu0 %6001
    %6003 = vrot.lane.b32.xlu0 %v5872, 127
    %v6004 = vpop.permute.xlu0 %6003
    %6005 = vrot.lane.b32.xlu0 %v5873, 127
    %v6006 = vpop.permute.xlu0 %6005
    %6007 = vrot.lane.b32.xlu0 %v5874, 127
    %v6008 = vpop.permute.xlu0 %6007
    %6009 = vrot.lane.b32.xlu0 %v5875, 127
    %v6010 = vpop.permute.xlu0 %6009
    %6011 = vrot.lane.b32.xlu0 %v5876, 127
    %v6012 = vpop.permute.xlu0 %6011
    %6013 = vrot.lane.b32.xlu0 %v5877, 127
    %v6014 = vpop.permute.xlu0 %6013
    %6015 = vrot.lane.b32.xlu0 %v5878, 127
    %v6016 = vpop.permute.xlu0 %6015
    %6017 = vrot.lane.b32.xlu0 %v5879, 127
    %v6018 = vpop.permute.xlu0 %6017
    %6019 = vrot.lane.b32.xlu0 %v5880, 127
    %v6020 = vpop.permute.xlu0 %6019
    %6021 = vrot.lane.b32.xlu0 %v5881, 127
    %v6022 = vpop.permute.xlu0 %6021
    %6023 = vrot.lane.b32.xlu0 %v5882, 127
    %v6024 = vpop.permute.xlu0 %6023
    %6025 = vrot.lane.b32.xlu0 %v5883, 127
    %v6026 = vpop.permute.xlu0 %6025
    %6027 = vrot.lane.b32.xlu0 %v5884, 127
    %v6028 = vpop.permute.xlu0 %6027
    %v6029 = vsel %vm421, %v5934, %v5936
    %v6030 = vsel %vm421, %v5936, %v5938
    %v6031 = vsel %vm421, %v5940, %v5942
    %v6032 = vsel %vm421, %v5942, %v5944
    %v6033 = vsel %vm421, %v5946, %v5948
    %v6034 = vsel %vm421, %v5948, %v5950
    %v6035 = vsel %vm421, %v5952, %v5954
    %v6036 = vsel %vm421, %v5954, %v5956
    %v6037 = vsel %vm421, %v5958, %v5960
    %v6038 = vsel %vm421, %v5960, %v5962
    %v6039 = vsel %vm421, %v5964, %v5966
    %v6040 = vsel %vm421, %v5966, %v5968
    %v6041 = vsel %vm421, %v5970, %v5972
    %v6042 = vsel %vm421, %v5972, %v5974
    %v6043 = vsel %vm421, %v5976, %v5978
    %v6044 = vsel %vm421, %v5978, %v5980
    %v6045 = vsel %vm421, %v5982, %v5984
    %v6046 = vsel %vm421, %v5984, %v5986
    %v6047 = vsel %vm421, %v5988, %v5990
    %v6048 = vsel %vm421, %v5990, %v5992
    %v6049 = vsel %vm421, %v5994, %v5996
    %v6050 = vsel %vm421, %v5996, %v5998
    %v6051 = vsel %vm421, %v6000, %v6002
    %v6052 = vsel %vm421, %v6002, %v6004
    %v6053 = vsel %vm421, %v6006, %v6008
    %v6054 = vsel %vm421, %v6008, %v6010
    %v6055 = vsel %vm421, %v6012, %v6014
    %v6056 = vsel %vm421, %v6014, %v6016
    %v6057 = vsel %vm421, %v6018, %v6020
    %v6058 = vsel %vm421, %v6020, %v6022
    %v6059 = vsel %vm421, %v6024, %v6026
    %v6060 = vsel %vm421, %v6026, %v6028
    %v6109 = vmax.f32 %v5837, %v6029
    %v6110 = vmax.f32 %v5838, %v6030
    %v6111 = vmax.f32 %v5839, %v5938
    %v6112 = vmax.f32 %v5840, %v6031
    %v6113 = vmax.f32 %v5841, %v6032
    %v6114 = vmax.f32 %v5842, %v5944
    %v6115 = vmax.f32 %v5843, %v6033
    %v6116 = vmax.f32 %v5844, %v6034
    %v6117 = vmax.f32 %v5845, %v5950
    %v6118 = vmax.f32 %v5846, %v6035
    %v6119 = vmax.f32 %v5847, %v6036
    %v6120 = vmax.f32 %v5848, %v5956
    %v6121 = vmax.f32 %v5849, %v6037
    %v6122 = vmax.f32 %v5850, %v6038
    %v6123 = vmax.f32 %v5851, %v5962
    %v6124 = vmax.f32 %v5852, %v6039
    %v6125 = vmax.f32 %v5853, %v6040
    %v6126 = vmax.f32 %v5854, %v5968
    %v6127 = vmax.f32 %v5855, %v6041
    %v6128 = vmax.f32 %v5856, %v6042
    %v6129 = vmax.f32 %v5857, %v5974
    %v6130 = vmax.f32 %v5858, %v6043
    %v6131 = vmax.f32 %v5859, %v6044
    %v6132 = vmax.f32 %v5860, %v5980
    %v6133 = vmax.f32 %v5861, %v6045
    %v6134 = vmax.f32 %v5862, %v6046
    %v6135 = vmax.f32 %v5863, %v5986
    %v6136 = vmax.f32 %v5864, %v6047
    %v6137 = vmax.f32 %v5865, %v6048
    %v6138 = vmax.f32 %v5866, %v5992
    %v6139 = vmax.f32 %v5867, %v6049
    %v6140 = vmax.f32 %v5868, %v6050
    %v6141 = vmax.f32 %v5869, %v5998
    %v6142 = vmax.f32 %v5870, %v6051
    %v6143 = vmax.f32 %v5871, %v6052
    %v6144 = vmax.f32 %v5872, %v6004
    %v6145 = vmax.f32 %v5873, %v6053
    %v6146 = vmax.f32 %v5874, %v6054
    %v6147 = vmax.f32 %v5875, %v6010
    %v6148 = vmax.f32 %v5876, %v6055
    %v6149 = vmax.f32 %v5877, %v6056
    %v6150 = vmax.f32 %v5878, %v6016
    %v6151 = vmax.f32 %v5879, %v6057
    %v6152 = vmax.f32 %v5880, %v6058
    %v6153 = vmax.f32 %v5881, %v6022
    %v6154 = vmax.f32 %v5882, %v6059
    %v6155 = vmax.f32 %v5883, %v6060
    %v6156 = vmax.f32 %v5884, %v6028
    %6157 = vrot.lane.b32.xlu0 %v5837, 126
    %v6158 = vpop.permute.xlu0 %6157
    %6159 = vrot.lane.b32.xlu0 %v5838, 126
    %v6160 = vpop.permute.xlu0 %6159
    %6161 = vrot.lane.b32.xlu0 %v5839, 126
    %v6162 = vpop.permute.xlu0 %6161
    %6163 = vrot.lane.b32.xlu0 %v5840, 126
    %v6164 = vpop.permute.xlu0 %6163
    %6165 = vrot.lane.b32.xlu0 %v5841, 126
    %v6166 = vpop.permute.xlu0 %6165
    %6167 = vrot.lane.b32.xlu0 %v5842, 126
    %v6168 = vpop.permute.xlu0 %6167
    %6169 = vrot.lane.b32.xlu0 %v5843, 126
    %v6170 = vpop.permute.xlu0 %6169
    %6171 = vrot.lane.b32.xlu0 %v5844, 126
    %v6172 = vpop.permute.xlu0 %6171
    %6173 = vrot.lane.b32.xlu0 %v5845, 126
    %v6174 = vpop.permute.xlu0 %6173
    %6175 = vrot.lane.b32.xlu0 %v5846, 126
    %v6176 = vpop.permute.xlu0 %6175
    %6177 = vrot.lane.b32.xlu0 %v5847, 126
    %v6178 = vpop.permute.xlu0 %6177
    %6179 = vrot.lane.b32.xlu0 %v5848, 126
    %v6180 = vpop.permute.xlu0 %6179
    %6181 = vrot.lane.b32.xlu0 %v5849, 126
    %v6182 = vpop.permute.xlu0 %6181
    %6183 = vrot.lane.b32.xlu0 %v5850, 126
    %v6184 = vpop.permute.xlu0 %6183
    %6185 = vrot.lane.b32.xlu0 %v5851, 126
    %v6186 = vpop.permute.xlu0 %6185
    %6187 = vrot.lane.b32.xlu0 %v5852, 126
    %v6188 = vpop.permute.xlu0 %6187
    %6189 = vrot.lane.b32.xlu0 %v5853, 126
    %v6190 = vpop.permute.xlu0 %6189
    %6191 = vrot.lane.b32.xlu0 %v5854, 126
    %v6192 = vpop.permute.xlu0 %6191
    %6193 = vrot.lane.b32.xlu0 %v5855, 126
    %v6194 = vpop.permute.xlu0 %6193
    %6195 = vrot.lane.b32.xlu0 %v5856, 126
    %v6196 = vpop.permute.xlu0 %6195
    %6197 = vrot.lane.b32.xlu0 %v5857, 126
    %v6198 = vpop.permute.xlu0 %6197
    %6199 = vrot.lane.b32.xlu0 %v5858, 126
    %v6200 = vpop.permute.xlu0 %6199
    %6201 = vrot.lane.b32.xlu0 %v5859, 126
    %v6202 = vpop.permute.xlu0 %6201
    %6203 = vrot.lane.b32.xlu0 %v5860, 126
    %v6204 = vpop.permute.xlu0 %6203
    %6205 = vrot.lane.b32.xlu0 %v5861, 126
    %v6206 = vpop.permute.xlu0 %6205
    %6207 = vrot.lane.b32.xlu0 %v5862, 126
    %v6208 = vpop.permute.xlu0 %6207
    %6209 = vrot.lane.b32.xlu0 %v5863, 126
    %v6210 = vpop.permute.xlu0 %6209
    %6211 = vrot.lane.b32.xlu0 %v5864, 126
    %v6212 = vpop.permute.xlu0 %6211
    %6213 = vrot.lane.b32.xlu0 %v5865, 126
    %v6214 = vpop.permute.xlu0 %6213
    %6215 = vrot.lane.b32.xlu0 %v5866, 126
    %v6216 = vpop.permute.xlu0 %6215
    %6217 = vrot.lane.b32.xlu0 %v5867, 126
    %v6218 = vpop.permute.xlu0 %6217
    %6219 = vrot.lane.b32.xlu0 %v5868, 126
    %v6220 = vpop.permute.xlu0 %6219
    %6221 = vrot.lane.b32.xlu0 %v5869, 126
    %v6222 = vpop.permute.xlu0 %6221
    %6223 = vrot.lane.b32.xlu0 %v5870, 126
    %v6224 = vpop.permute.xlu0 %6223
    %6225 = vrot.lane.b32.xlu0 %v5871, 126
    %v6226 = vpop.permute.xlu0 %6225
    %6227 = vrot.lane.b32.xlu0 %v5872, 126
    %v6228 = vpop.permute.xlu0 %6227
    %6229 = vrot.lane.b32.xlu0 %v5873, 126
    %v6230 = vpop.permute.xlu0 %6229
    %6231 = vrot.lane.b32.xlu0 %v5874, 126
    %v6232 = vpop.permute.xlu0 %6231
    %6233 = vrot.lane.b32.xlu0 %v5875, 126
    %v6234 = vpop.permute.xlu0 %6233
    %6235 = vrot.lane.b32.xlu0 %v5876, 126
    %v6236 = vpop.permute.xlu0 %6235
    %6237 = vrot.lane.b32.xlu0 %v5877, 126
    %v6238 = vpop.permute.xlu0 %6237
    %6239 = vrot.lane.b32.xlu0 %v5878, 126
    %v6240 = vpop.permute.xlu0 %6239
    %6241 = vrot.lane.b32.xlu0 %v5879, 126
    %v6242 = vpop.permute.xlu0 %6241
    %6243 = vrot.lane.b32.xlu0 %v5880, 126
    %v6244 = vpop.permute.xlu0 %6243
    %6245 = vrot.lane.b32.xlu0 %v5881, 126
    %v6246 = vpop.permute.xlu0 %6245
    %6247 = vrot.lane.b32.xlu0 %v5882, 126
    %v6248 = vpop.permute.xlu0 %6247
    %6249 = vrot.lane.b32.xlu0 %v5883, 126
    %v6250 = vpop.permute.xlu0 %6249
    %6251 = vrot.lane.b32.xlu0 %v5884, 126
    %v6252 = vpop.permute.xlu0 %6251
    %v6253 = vsel %vm1142, %v6158, %v6160
    %v6254 = vsel %vm1142, %v6160, %v6162
    %v6255 = vsel %vm1142, %v6164, %v6166
    %v6256 = vsel %vm1142, %v6166, %v6168
    %v6257 = vsel %vm1142, %v6170, %v6172
    %v6258 = vsel %vm1142, %v6172, %v6174
    %v6259 = vsel %vm1142, %v6176, %v6178
    %v6260 = vsel %vm1142, %v6178, %v6180
    %v6261 = vsel %vm1142, %v6182, %v6184
    %v6262 = vsel %vm1142, %v6184, %v6186
    %v6263 = vsel %vm1142, %v6188, %v6190
    %v6264 = vsel %vm1142, %v6190, %v6192
    %v6265 = vsel %vm1142, %v6194, %v6196
    %v6266 = vsel %vm1142, %v6196, %v6198
    %v6267 = vsel %vm1142, %v6200, %v6202
    %v6268 = vsel %vm1142, %v6202, %v6204
    %v6269 = vsel %vm1142, %v6206, %v6208
    %v6270 = vsel %vm1142, %v6208, %v6210
    %v6271 = vsel %vm1142, %v6212, %v6214
    %v6272 = vsel %vm1142, %v6214, %v6216
    %v6273 = vsel %vm1142, %v6218, %v6220
    %v6274 = vsel %vm1142, %v6220, %v6222
    %v6275 = vsel %vm1142, %v6224, %v6226
    %v6276 = vsel %vm1142, %v6226, %v6228
    %v6277 = vsel %vm1142, %v6230, %v6232
    %v6278 = vsel %vm1142, %v6232, %v6234
    %v6279 = vsel %vm1142, %v6236, %v6238
    %v6280 = vsel %vm1142, %v6238, %v6240
    %v6281 = vsel %vm1142, %v6242, %v6244
    %v6282 = vsel %vm1142, %v6244, %v6246
    %v6283 = vsel %vm1142, %v6248, %v6250
    %v6284 = vsel %vm1142, %v6250, %v6252
    %v6333 = vmax.f32 %v6109, %v6253
    %v6334 = vmax.f32 %v6110, %v6254
    %v6335 = vmax.f32 %v6111, %v6162
    %v6336 = vmax.f32 %v6112, %v6255
    %v6337 = vmax.f32 %v6113, %v6256
    %v6338 = vmax.f32 %v6114, %v6168
    %v6339 = vmax.f32 %v6115, %v6257
    %v6340 = vmax.f32 %v6116, %v6258
    %v6341 = vmax.f32 %v6117, %v6174
    %v6342 = vmax.f32 %v6118, %v6259
    %v6343 = vmax.f32 %v6119, %v6260
    %v6344 = vmax.f32 %v6120, %v6180
    %v6345 = vmax.f32 %v6121, %v6261
    %v6346 = vmax.f32 %v6122, %v6262
    %v6347 = vmax.f32 %v6123, %v6186
    %v6348 = vmax.f32 %v6124, %v6263
    %v6349 = vmax.f32 %v6125, %v6264
    %v6350 = vmax.f32 %v6126, %v6192
    %v6351 = vmax.f32 %v6127, %v6265
    %v6352 = vmax.f32 %v6128, %v6266
    %v6353 = vmax.f32 %v6129, %v6198
    %v6354 = vmax.f32 %v6130, %v6267
    %v6355 = vmax.f32 %v6131, %v6268
    %v6356 = vmax.f32 %v6132, %v6204
    %v6357 = vmax.f32 %v6133, %v6269
    %v6358 = vmax.f32 %v6134, %v6270
    %v6359 = vmax.f32 %v6135, %v6210
    %v6360 = vmax.f32 %v6136, %v6271
    %v6361 = vmax.f32 %v6137, %v6272
    %v6362 = vmax.f32 %v6138, %v6216
    %v6363 = vmax.f32 %v6139, %v6273
    %v6364 = vmax.f32 %v6140, %v6274
    %v6365 = vmax.f32 %v6141, %v6222
    %v6366 = vmax.f32 %v6142, %v6275
    %v6367 = vmax.f32 %v6143, %v6276
    %v6368 = vmax.f32 %v6144, %v6228
    %v6369 = vmax.f32 %v6145, %v6277
    %v6370 = vmax.f32 %v6146, %v6278
    %v6371 = vmax.f32 %v6147, %v6234
    %v6372 = vmax.f32 %v6148, %v6279
    %v6373 = vmax.f32 %v6149, %v6280
    %v6374 = vmax.f32 %v6150, %v6240
    %v6375 = vmax.f32 %v6151, %v6281
    %v6376 = vmax.f32 %v6152, %v6282
    %v6377 = vmax.f32 %v6153, %v6246
    %v6378 = vmax.f32 %v6154, %v6283
    %v6379 = vmax.f32 %v6155, %v6284
    %v6380 = vmax.f32 %v6156, %v6252
    %v6382 = vsel %vm2222, %v6335, 0
    %v6385 = vsel %vm2222, %v6338, 0
    %v6388 = vsel %vm2222, %v6341, 0
    %v6391 = vsel %vm2222, %v6344, 0
    %v6394 = vsel %vm2222, %v6347, 0
    %v6397 = vsel %vm2222, %v6350, 0
    %v6400 = vsel %vm2222, %v6353, 0
    %v6403 = vsel %vm2222, %v6356, 0
    %v6406 = vsel %vm2222, %v6359, 0
    %v6409 = vsel %vm2222, %v6362, 0
    %v6412 = vsel %vm2222, %v6365, 0
    %v6415 = vsel %vm2222, %v6368, 0
    %v6418 = vsel %vm2222, %v6371, 0
    %v6421 = vsel %vm2222, %v6374, 0
    %v6424 = vsel %vm2222, %v6377, 0
    %v6427 = vsel %vm2222, %v6380, 0
    %6429 = vmatprep.subr.mxu0 %v317
    %6430 = vmatpush1.msra.mxu0 %v316
    %6431 = vmatprep.subr.mxu0 %v319
    %6432 = vmatpush1.msra.mxu0 %v318
    %6433 = vmatprep.subr.mxu0 %v321
    %6434 = vmatpush1.msra.mxu0 %v320
    %6435 = vmatprep.subr.mxu0 %v323
    %6436 = vmatpush1.msra.mxu0 %v322
    %6437 = vmatprep.subr.mxu0 %v325
    %6438 = vmatpush1.msra.mxu0 %v324
    %6439 = vmatprep.subr.mxu0 %v327
    %6440 = vmatpush1.msra.mxu0 %v326
    %6441 = vmatprep.subr.mxu0 %v329
    %6442 = vmatpush1.msra.mxu0 %v328
    %6443 = vmatprep.subr.mxu0 %v331
    %6444 = vmatpush1.msra.mxu0 %v330
    %6445 = vmatprep.subr.mxu0 %v333
    %6446 = vmatpush1.msra.mxu0 %v332
    %6447 = vmatprep.subr.mxu0 %v335
    %6448 = vmatpush1.msra.mxu0 %v334
    %6449 = vmatprep.subr.mxu0 %v337
    %6450 = vmatpush1.msra.mxu0 %v336
    %6451 = vmatprep.subr.mxu0 %v339
    %6452 = vmatpush1.msra.mxu0 %v338
    %6453 = vmatprep.subr.mxu0 %v341
    %6454 = vmatpush1.msra.mxu0 %v340
    %6455 = vmatprep.subr.mxu0 %v343
    %6456 = vmatpush1.msra.mxu0 %v342
    %6457 = vmatprep.subr.mxu0 %v345
    %6458 = vmatpush1.msra.mxu0 %v344
    %6459 = vmatprep.subr.mxu0 %v347
    %6460 = vmatpush1.msra.mxu0 %v346
    %6461 = vmatprep.subr.mxu0 %v349
    %6462 = vmatpush1.msra.mxu0 %v348
    %6463 = vmatprep.subr.mxu0 %v351
    %6464 = vmatpush1.msra.mxu0 %v350
    %6465 = vmatprep.subr.mxu0 %v353
    %6466 = vmatpush1.msra.mxu0 %v352
    %6467 = vmatprep.subr.mxu0 %v355
    %6468 = vmatpush1.msra.mxu0 %v354
    %6469 = vmatprep.subr.mxu0 %v357
    %6470 = vmatpush1.msra.mxu0 %v356
    %6471 = vmatprep.subr.mxu0 %v359
    %6472 = vmatpush1.msra.mxu0 %v358
    %6473 = vmatprep.subr.mxu0 %v361
    %6474 = vmatpush1.msra.mxu0 %v360
    %6475 = vmatprep.subr.mxu0 %v363
    %6476 = vmatpush1.msra.mxu0 %v362
    %6477 = vmatprep.subr.mxu0 %v365
    %6478 = vmatpush1.msra.mxu0 %v364
    %6479 = vmatprep.subr.mxu0 %v367
    %6480 = vmatpush1.msra.mxu0 %v366
    %6481 = vmatprep.subr.mxu0 %v369
    %6482 = vmatpush1.msra.mxu0 %v368
    %6483 = vmatprep.subr.mxu0 %v371
    %6484 = vmatpush1.msra.mxu0 %v370
    %6485 = vmatprep.subr.mxu0 %v373
    %6486 = vmatpush1.msra.mxu0 %v372
    %6487 = vmatprep.subr.mxu0 %v375
    %6488 = vmatpush1.msra.mxu0 %v374
    %6489 = vmatprep.subr.mxu0 %v377
    %6490 = vmatpush1.msra.mxu0 %v376
    %6491 = vmatprep.subr.mxu0 %v379
    %6492 = vmatpush1.msra.mxu0 %v378
    %6493 = vmatprep.mubr.f32.mxu0 %v6334
    %6494 = vmatmul.mubr.f32.gmra.mrb[0].mxu0 %v6333
    %v6495 = vpop.f32.mrb[0].mxu0
    %v6496 = vadd.f32 0.0, %v6495
    %v6497 = vpop.f32.mrb[0].mxu0
    %v6498 = vadd.f32 0.0, %v6497
    %6499 = vmatprep.mubr.f32.mxu0 %v6337
    %6500 = vmatmul.mubr.f32.gmra.mrb[0].mxu0 %v6336
    %v6501 = vpop.f32.mrb[0].mxu0
    %v6502 = vadd.f32 0.0, %v6501
    %v6503 = vpop.f32.mrb[0].mxu0
    %v6504 = vadd.f32 0.0, %v6503
    %6505 = vmatprep.mubr.f32.mxu0 %v6340
    %6506 = vmatmul.mubr.f32.gmra.mrb[0].mxu0 %v6339
    %v6507 = vpop.f32.mrb[0].mxu0
    %v6508 = vadd.f32 0.0, %v6507
    %v6509 = vpop.f32.mrb[0].mxu0
    %v6510 = vadd.f32 0.0, %v6509
    %6511 = vmatprep.mubr.f32.mxu0 %v6343
    %6512 = vmatmul.mubr.f32.gmra.mrb[0].mxu0 %v6342
    %v6513 = vpop.f32.mrb[0].mxu0
    %v6514 = vadd.f32 0.0, %v6513
    %v6515 = vpop.f32.mrb[0].mxu0
    %v6516 = vadd.f32 0.0, %v6515
    %6517 = vmatprep.mubr.f32.mxu0 %v6346
    %6518 = vmatmul.mubr.f32.gmra.mrb[0].mxu0 %v6345
    %v6519 = vpop.f32.mrb[0].mxu0
    %v6520 = vadd.f32 0.0, %v6519
    %v6521 = vpop.f32.mrb[0].mxu0
    %v6522 = vadd.f32 0.0, %v6521
    %6523 = vmatprep.mubr.f32.mxu0 %v6349
    %6524 = vmatmul.mubr.f32.gmra.mrb[0].mxu0 %v6348
    %v6525 = vpop.f32.mrb[0].mxu0
    %v6526 = vadd.f32 0.0, %v6525
    %v6527 = vpop.f32.mrb[0].mxu0
    %v6528 = vadd.f32 0.0, %v6527
    %6529 = vmatprep.mubr.f32.mxu0 %v6352
    %6530 = vmatmul.mubr.f32.gmra.mrb[0].mxu0 %v6351
    %v6531 = vpop.f32.mrb[0].mxu0
    %v6532 = vadd.f32 0.0, %v6531
    %v6533 = vpop.f32.mrb[0].mxu0
    %v6534 = vadd.f32 0.0, %v6533
    %6535 = vmatprep.mubr.f32.mxu0 %v6355
    %6536 = vmatmul.mubr.f32.gmra.mrb[0].mxu0 %v6354
    %v6537 = vpop.f32.mrb[0].mxu0
    %v6538 = vadd.f32 0.0, %v6537
    %v6539 = vpop.f32.mrb[0].mxu0
    %v6540 = vadd.f32 0.0, %v6539
    %6541 = vmatprep.mubr.f32.mxu0 %v6358
    %6542 = vmatmul.mubr.f32.gmra.mrb[0].mxu0 %v6357
    %v6543 = vpop.f32.mrb[0].mxu0
    %v6544 = vadd.f32 0.0, %v6543
    %v6545 = vpop.f32.mrb[0].mxu0
    %v6546 = vadd.f32 0.0, %v6545
    %6547 = vmatprep.mubr.f32.mxu0 %v6361
    %6548 = vmatmul.mubr.f32.gmra.mrb[0].mxu0 %v6360
    %v6549 = vpop.f32.mrb[0].mxu0
    %v6550 = vadd.f32 0.0, %v6549
    %v6551 = vpop.f32.mrb[0].mxu0
    %v6552 = vadd.f32 0.0, %v6551
    %6553 = vmatprep.mubr.f32.mxu0 %v6364
    %6554 = vmatmul.mubr.f32.gmra.mrb[0].mxu0 %v6363
    %v6555 = vpop.f32.mrb[0].mxu0
    %v6556 = vadd.f32 0.0, %v6555
    %v6557 = vpop.f32.mrb[0].mxu0
    %v6558 = vadd.f32 0.0, %v6557
    %6559 = vmatprep.mubr.f32.mxu0 %v6367
    %6560 = vmatmul.mubr.f32.gmra.mrb[0].mxu0 %v6366
    %v6561 = vpop.f32.mrb[0].mxu0
    %v6562 = vadd.f32 0.0, %v6561
    %v6563 = vpop.f32.mrb[0].mxu0
    %v6564 = vadd.f32 0.0, %v6563
    %6565 = vmatprep.mubr.f32.mxu0 %v6370
    %6566 = vmatmul.mubr.f32.gmra.mrb[0].mxu0 %v6369
    %v6567 = vpop.f32.mrb[0].mxu0
    %v6568 = vadd.f32 0.0, %v6567
    %v6569 = vpop.f32.mrb[0].mxu0
    %v6570 = vadd.f32 0.0, %v6569
    %6571 = vmatprep.mubr.f32.mxu0 %v6373
    %6572 = vmatmul.mubr.f32.gmra.mrb[0].mxu0 %v6372
    %v6573 = vpop.f32.mrb[0].mxu0
    %v6574 = vadd.f32 0.0, %v6573
    %v6575 = vpop.f32.mrb[0].mxu0
    %v6576 = vadd.f32 0.0, %v6575
    %6577 = vmatprep.mubr.f32.mxu0 %v6376
    %6578 = vmatmul.mubr.f32.gmra.mrb[0].mxu0 %v6375
    %v6579 = vpop.f32.mrb[0].mxu0
    %v6580 = vadd.f32 0.0, %v6579
    %v6581 = vpop.f32.mrb[0].mxu0
    %v6582 = vadd.f32 0.0, %v6581
    %6583 = vmatprep.mubr.f32.mxu0 %v6379
    %6584 = vmatmul.mubr.f32.gmra.mrb[0].mxu0 %v6378
    %v6585 = vpop.f32.mrb[0].mxu0
    %v6586 = vadd.f32 0.0, %v6585
    %v6587 = vpop.f32.mrb[0].mxu0
    %v6588 = vadd.f32 0.0, %v6587
    %6589 = vdwg.mxu0
    %6590 = vmatprep.subr.mxu0 %v381
    %6591 = vmatpush1.msra.mxu0 %v380
    %6592 = vmatprep.subr.mxu0 %v383
    %6593 = vmatpush1.msra.mxu0 %v382
    %6594 = vmatprep.subr.mxu0 %v385
    %6595 = vmatpush1.msra.mxu0 %v384
    %6596 = vmatprep.subr.mxu0 %v387
    %6597 = vmatpush1.msra.mxu0 %v386
    %6598 = vmatprep.subr.mxu0 %v389
    %6599 = vmatpush1.msra.mxu0 %v388
    %6600 = vmatprep.subr.mxu0 %v2276
    %6601 = vmatpush1.msra.mxu0 %v2273
    %6602 = vmatprep.subr.mxu0 0.0
    %6603 = vmatpush1.msra.mxu0 0.0
    %6604 = vmatprep.subr.mxu0 0.0
    %6605 = vmatpush1.msra.mxu0 0.0
    %6606 = vmatprep.subr.mxu0 0.0
    %6607 = vmatpush1.msra.mxu0 0.0
    %6608 = vmatprep.subr.mxu0 0.0
    %6609 = vmatpush1.msra.mxu0 0.0
    %6610 = vmatprep.subr.mxu0 0.0
    %6611 = vmatpush1.msra.mxu0 0.0
    %6612 = vmatprep.subr.mxu0 0.0
    %6613 = vmatpush1.msra.mxu0 0.0
    %6614 = vmatprep.subr.mxu0 0.0
    %6615 = vmatpush1.msra.mxu0 0.0
    %6616 = vmatprep.subr.mxu0 0.0
    %6617 = vmatpush1.msra.mxu0 0.0
    %6618 = vmatprep.subr.mxu0 0.0
    %6619 = vmatpush1.msra.mxu0 0.0
    %6620 = vmatprep.subr.mxu0 0.0
    %6621 = vmatpush1.msra.mxu0 0.0
    %6622 = vmatprep.subr.mxu0 0.0
    %6623 = vmatpush1.msra.mxu0 0.0
    %6624 = vmatprep.subr.mxu0 0.0
    %6625 = vmatpush1.msra.mxu0 0.0
    %6626 = vmatprep.subr.mxu0 0.0
    %6627 = vmatpush1.msra.mxu0 0.0
    %6628 = vmatprep.subr.mxu0 0.0
    %6629 = vmatpush1.msra.mxu0 0.0
    %6630 = vmatprep.subr.mxu0 0.0
    %6631 = vmatpush1.msra.mxu0 0.0
    %6632 = vmatprep.subr.mxu0 0.0
    %6633 = vmatpush1.msra.mxu0 0.0
    %6634 = vmatprep.subr.mxu0 0.0
    %6635 = vmatpush1.msra.mxu0 0.0
    %6636 = vmatprep.subr.mxu0 0.0
    %6637 = vmatpush1.msra.mxu0 0.0
    %6638 = vmatprep.subr.mxu0 0.0
    %6639 = vmatpush1.msra.mxu0 0.0
    %6640 = vmatprep.subr.mxu0 0.0
    %6641 = vmatpush1.msra.mxu0 0.0
    %6642 = vmatprep.subr.mxu0 0.0
    %6643 = vmatpush1.msra.mxu0 0.0
    %6644 = vmatprep.subr.mxu0 0.0
    %6645 = vmatpush1.msra.mxu0 0.0
    %6646 = vmatprep.subr.mxu0 0.0
    %6647 = vmatpush1.msra.mxu0 0.0
    %6648 = vmatprep.subr.mxu0 0.0
    %6649 = vmatpush1.msra.mxu0 0.0
    %6650 = vmatprep.subr.mxu0 0.0
    %6651 = vmatpush1.msra.mxu0 0.0
    %6652 = vmatprep.subr.mxu0 0.0
    %6653 = vmatpush1.msra.mxu0 0.0
    %6654 = vmatprep.mubr.f32.mxu0 0.0
    %6655 = vmatmul.mubr.f32.gmra.mrb[0].mxu0 %v6382
    %v6656 = vpop.f32.mrb[0].mxu0
    %v6657 = vadd.f32 %v6496, %v6656
    %v6658 = vpop.f32.mrb[0].mxu0
    %v6659 = vadd.f32 %v6498, %v6658
    %6660 = vmatprep.mubr.f32.mxu0 0.0
    %6661 = vmatmul.mubr.f32.gmra.mrb[0].mxu0 %v6385
    %v6662 = vpop.f32.mrb[0].mxu0
    %v6663 = vadd.f32 %v6502, %v6662
    %v6664 = vpop.f32.mrb[0].mxu0
    %v6665 = vadd.f32 %v6504, %v6664
    %6666 = vmatprep.mubr.f32.mxu0 0.0
    %6667 = vmatmul.mubr.f32.gmra.mrb[0].mxu0 %v6388
    %v6668 = vpop.f32.mrb[0].mxu0
    %v6669 = vadd.f32 %v6508, %v6668
    %v6670 = vpop.f32.mrb[0].mxu0
    %v6671 = vadd.f32 %v6510, %v6670
    %6672 = vmatprep.mubr.f32.mxu0 0.0
    %6673 = vmatmul.mubr.f32.gmra.mrb[0].mxu0 %v6391
    %v6674 = vpop.f32.mrb[0].mxu0
    %v6675 = vadd.f32 %v6514, %v6674
    %v6676 = vpop.f32.mrb[0].mxu0
    %v6677 = vadd.f32 %v6516, %v6676
    %6678 = vmatprep.mubr.f32.mxu0 0.0
    %6679 = vmatmul.mubr.f32.gmra.mrb[0].mxu0 %v6394
    %v6680 = vpop.f32.mrb[0].mxu0
    %v6681 = vadd.f32 %v6520, %v6680
    %v6682 = vpop.f32.mrb[0].mxu0
    %v6683 = vadd.f32 %v6522, %v6682
    %6684 = vmatprep.mubr.f32.mxu0 0.0
    %6685 = vmatmul.mubr.f32.gmra.mrb[0].mxu0 %v6397
    %v6686 = vpop.f32.mrb[0].mxu0
    %v6687 = vadd.f32 %v6526, %v6686
    %v6688 = vpop.f32.mrb[0].mxu0
    %v6689 = vadd.f32 %v6528, %v6688
    %6690 = vmatprep.mubr.f32.mxu0 0.0
    %6691 = vmatmul.mubr.f32.gmra.mrb[0].mxu0 %v6400
    %v6692 = vpop.f32.mrb[0].mxu0
    %v6693 = vadd.f32 %v6532, %v6692
    %v6694 = vpop.f32.mrb[0].mxu0
    %v6695 = vadd.f32 %v6534, %v6694
    %6696 = vmatprep.mubr.f32.mxu0 0.0
    %6697 = vmatmul.mubr.f32.gmra.mrb[0].mxu0 %v6403
    %v6698 = vpop.f32.mrb[0].mxu0
    %v6699 = vadd.f32 %v6538, %v6698
    %v6700 = vpop.f32.mrb[0].mxu0
    %v6701 = vadd.f32 %v6540, %v6700
    %6702 = vmatprep.mubr.f32.mxu0 0.0
    %6703 = vmatmul.mubr.f32.gmra.mrb[0].mxu0 %v6406
    %v6704 = vpop.f32.mrb[0].mxu0
    %v6705 = vadd.f32 %v6544, %v6704
    %v6706 = vpop.f32.mrb[0].mxu0
    %v6707 = vadd.f32 %v6546, %v6706
    %6708 = vmatprep.mubr.f32.mxu0 0.0
    %6709 = vmatmul.mubr.f32.gmra.mrb[0].mxu0 %v6409
    %v6710 = vpop.f32.mrb[0].mxu0
    %v6711 = vadd.f32 %v6550, %v6710
    %v6712 = vpop.f32.mrb[0].mxu0
    %v6713 = vadd.f32 %v6552, %v6712
    %6714 = vmatprep.mubr.f32.mxu0 0.0
    %6715 = vmatmul.mubr.f32.gmra.mrb[0].mxu0 %v6412
    %v6716 = vpop.f32.mrb[0].mxu0
    %v6717 = vadd.f32 %v6556, %v6716
    %v6718 = vpop.f32.mrb[0].mxu0
    %v6719 = vadd.f32 %v6558, %v6718
    %6720 = vmatprep.mubr.f32.mxu0 0.0
    %6721 = vmatmul.mubr.f32.gmra.mrb[0].mxu0 %v6415
    %v6722 = vpop.f32.mrb[0].mxu0
    %v6723 = vadd.f32 %v6562, %v6722
    %v6724 = vpop.f32.mrb[0].mxu0
    %v6725 = vadd.f32 %v6564, %v6724
    %6726 = vmatprep.mubr.f32.mxu0 0.0
    %6727 = vmatmul.mubr.f32.gmra.mrb[0].mxu0 %v6418
    %v6728 = vpop.f32.mrb[0].mxu0
    %v6729 = vadd.f32 %v6568, %v6728
    %v6730 = vpop.f32.mrb[0].mxu0
    %v6731 = vadd.f32 %v6570, %v6730
    %6732 = vmatprep.mubr.f32.mxu0 0.0
    %6733 = vmatmul.mubr.f32.gmra.mrb[0].mxu0 %v6421
    %v6734 = vpop.f32.mrb[0].mxu0
    %v6735 = vadd.f32 %v6574, %v6734
    %v6736 = vpop.f32.mrb[0].mxu0
    %v6737 = vadd.f32 %v6576, %v6736
    %6738 = vmatprep.mubr.f32.mxu0 0.0
    %6739 = vmatmul.mubr.f32.gmra.mrb[0].mxu0 %v6424
    %v6740 = vpop.f32.mrb[0].mxu0
    %v6741 = vadd.f32 %v6580, %v6740
    %v6742 = vpop.f32.mrb[0].mxu0
    %v6743 = vadd.f32 %v6582, %v6742
    %6744 = vmatprep.mubr.f32.mxu0 0.0
    %6745 = vmatmul.mubr.f32.gmra.mrb[0].mxu0 %v6427
    %v6746 = vpop.f32.mrb[0].mxu0
    %v6747 = vadd.f32 %v6586, %v6746
    %v6748 = vpop.f32.mrb[0].mxu0
    %v6749 = vadd.f32 %v6588, %v6748
    %6750 = vdwg.mxu0
    %6783 = vrot.lane.b32.xlu0 %v6657, 1
    %v6784 = vpop.permute.xlu0 %6783
    %6785 = vrot.lane.b32.xlu0 %v6659, 1
    %v6786 = vpop.permute.xlu0 %6785
    %6787 = vrot.lane.b32.xlu0 %v6663, 1
    %v6788 = vpop.permute.xlu0 %6787
    %6789 = vrot.lane.b32.xlu0 %v6665, 1
    %v6790 = vpop.permute.xlu0 %6789
    %6791 = vrot.lane.b32.xlu0 %v6669, 1
    %v6792 = vpop.permute.xlu0 %6791
    %6793 = vrot.lane.b32.xlu0 %v6671, 1
    %v6794 = vpop.permute.xlu0 %6793
    %6795 = vrot.lane.b32.xlu0 %v6675, 1
    %v6796 = vpop.permute.xlu0 %6795
    %6797 = vrot.lane.b32.xlu0 %v6677, 1
    %v6798 = vpop.permute.xlu0 %6797
    %6799 = vrot.lane.b32.xlu0 %v6681, 1
    %v6800 = vpop.permute.xlu0 %6799
    %6801 = vrot.lane.b32.xlu0 %v6683, 1
    %v6802 = vpop.permute.xlu0 %6801
    %6803 = vrot.lane.b32.xlu0 %v6687, 1
    %v6804 = vpop.permute.xlu0 %6803
    %6805 = vrot.lane.b32.xlu0 %v6689, 1
    %v6806 = vpop.permute.xlu0 %6805
    %6807 = vrot.lane.b32.xlu0 %v6693, 1
    %v6808 = vpop.permute.xlu0 %6807
    %6809 = vrot.lane.b32.xlu0 %v6695, 1
    %v6810 = vpop.permute.xlu0 %6809
    %6811 = vrot.lane.b32.xlu0 %v6699, 1
    %v6812 = vpop.permute.xlu0 %6811
    %6813 = vrot.lane.b32.xlu0 %v6701, 1
    %v6814 = vpop.permute.xlu0 %6813
    %6815 = vrot.lane.b32.xlu0 %v6705, 1
    %v6816 = vpop.permute.xlu0 %6815
    %6817 = vrot.lane.b32.xlu0 %v6707, 1
    %v6818 = vpop.permute.xlu0 %6817
    %6819 = vrot.lane.b32.xlu0 %v6711, 1
    %v6820 = vpop.permute.xlu0 %6819
    %6821 = vrot.lane.b32.xlu0 %v6713, 1
    %v6822 = vpop.permute.xlu0 %6821
    %6823 = vrot.lane.b32.xlu0 %v6717, 1
    %v6824 = vpop.permute.xlu0 %6823
    %6825 = vrot.lane.b32.xlu0 %v6719, 1
    %v6826 = vpop.permute.xlu0 %6825
    %6827 = vrot.lane.b32.xlu0 %v6723, 1
    %v6828 = vpop.permute.xlu0 %6827
    %6829 = vrot.lane.b32.xlu0 %v6725, 1
    %v6830 = vpop.permute.xlu0 %6829
    %6831 = vrot.lane.b32.xlu0 %v6729, 1
    %v6832 = vpop.permute.xlu0 %6831
    %6833 = vrot.lane.b32.xlu0 %v6731, 1
    %v6834 = vpop.permute.xlu0 %6833
    %6835 = vrot.lane.b32.xlu0 %v6735, 1
    %v6836 = vpop.permute.xlu0 %6835
    %6837 = vrot.lane.b32.xlu0 %v6737, 1
    %v6838 = vpop.permute.xlu0 %6837
    %6839 = vrot.lane.b32.xlu0 %v6741, 1
    %v6840 = vpop.permute.xlu0 %6839
    %6841 = vrot.lane.b32.xlu0 %v6743, 1
    %v6842 = vpop.permute.xlu0 %6841
    %6843 = vrot.lane.b32.xlu0 %v6747, 1
    %v6844 = vpop.permute.xlu0 %6843
    %6845 = vrot.lane.b32.xlu0 %v6749, 1
    %v6846 = vpop.permute.xlu0 %6845
    %v6847 = vsel %vm404, %v6784, %v6786
    %v6848 = vsel %vm404, %v6788, %v6790
    %v6849 = vsel %vm404, %v6792, %v6794
    %v6850 = vsel %vm404, %v6796, %v6798
    %v6851 = vsel %vm404, %v6800, %v6802
    %v6852 = vsel %vm404, %v6804, %v6806
    %v6853 = vsel %vm404, %v6808, %v6810
    %v6854 = vsel %vm404, %v6812, %v6814
    %v6855 = vsel %vm404, %v6816, %v6818
    %v6856 = vsel %vm404, %v6820, %v6822
    %v6857 = vsel %vm404, %v6824, %v6826
    %v6858 = vsel %vm404, %v6828, %v6830
    %v6859 = vsel %vm404, %v6832, %v6834
    %v6860 = vsel %vm404, %v6836, %v6838
    %v6861 = vsel %vm404, %v6840, %v6842
    %v6862 = vsel %vm404, %v6844, %v6846
    %v6895 = vsel %vm404, 0.0, %v6784
    %v6896 = vsel %vm404, 0.0, %v6788
    %v6897 = vsel %vm404, 0.0, %v6792
    %v6898 = vsel %vm404, 0.0, %v6796
    %v6899 = vsel %vm404, 0.0, %v6800
    %v6900 = vsel %vm404, 0.0, %v6804
    %v6901 = vsel %vm404, 0.0, %v6808
    %v6902 = vsel %vm404, 0.0, %v6812
    %v6903 = vsel %vm404, 0.0, %v6816
    %v6904 = vsel %vm404, 0.0, %v6820
    %v6905 = vsel %vm404, 0.0, %v6824
    %v6906 = vsel %vm404, 0.0, %v6828
    %v6907 = vsel %vm404, 0.0, %v6832
    %v6908 = vsel %vm404, 0.0, %v6836
    %v6909 = vsel %vm404, 0.0, %v6840
    %v6910 = vsel %vm404, 0.0, %v6844
    %v6911 = vsel %vm2760, %v6847, 0.0
    %v6912 = vsel %vm2760, %v6848, 0.0
    %v6913 = vsel %vm2760, %v6849, 0.0
    %v6914 = vsel %vm2760, %v6850, 0.0
    %v6915 = vsel %vm2760, %v6851, 0.0
    %v6916 = vsel %vm2760, %v6852, 0.0
    %v6917 = vsel %vm2760, %v6853, 0.0
    %v6918 = vsel %vm2760, %v6854, 0.0
    %v6919 = vsel %vm2760, %v6855, 0.0
    %v6920 = vsel %vm2760, %v6856, 0.0
    %v6921 = vsel %vm2760, %v6857, 0.0
    %v6922 = vsel %vm2760, %v6858, 0.0
    %v6923 = vsel %vm2760, %v6859, 0.0
    %v6924 = vsel %vm2760, %v6860, 0.0
    %v6925 = vsel %vm2760, %v6861, 0.0
    %v6926 = vsel %vm2760, %v6862, 0.0
    %6959 = vrot.lane.b32.xlu0 %v6895, 127
    %v6960 = vpop.permute.xlu0 %6959
    %6961 = vrot.lane.b32.xlu0 %v6911, 127
    %v6962 = vpop.permute.xlu0 %6961
    %6963 = vrot.lane.b32.xlu0 %v6896, 127
    %v6964 = vpop.permute.xlu0 %6963
    %6965 = vrot.lane.b32.xlu0 %v6912, 127
    %v6966 = vpop.permute.xlu0 %6965
    %6967 = vrot.lane.b32.xlu0 %v6897, 127
    %v6968 = vpop.permute.xlu0 %6967
    %6969 = vrot.lane.b32.xlu0 %v6913, 127
    %v6970 = vpop.permute.xlu0 %6969
    %6971 = vrot.lane.b32.xlu0 %v6898, 127
    %v6972 = vpop.permute.xlu0 %6971
    %6973 = vrot.lane.b32.xlu0 %v6914, 127
    %v6974 = vpop.permute.xlu0 %6973
    %6975 = vrot.lane.b32.xlu0 %v6899, 127
    %v6976 = vpop.permute.xlu0 %6975
    %6977 = vrot.lane.b32.xlu0 %v6915, 127
    %v6978 = vpop.permute.xlu0 %6977
    %6979 = vrot.lane.b32.xlu0 %v6900, 127
    %v6980 = vpop.permute.xlu0 %6979
    %6981 = vrot.lane.b32.xlu0 %v6916, 127
    %v6982 = vpop.permute.xlu0 %6981
    %6983 = vrot.lane.b32.xlu0 %v6901, 127
    %v6984 = vpop.permute.xlu0 %6983
    %6985 = vrot.lane.b32.xlu0 %v6917, 127
    %v6986 = vpop.permute.xlu0 %6985
    %6987 = vrot.lane.b32.xlu0 %v6902, 127
    %v6988 = vpop.permute.xlu0 %6987
    %6989 = vrot.lane.b32.xlu0 %v6918, 127
    %v6990 = vpop.permute.xlu0 %6989
    %6991 = vrot.lane.b32.xlu0 %v6903, 127
    %v6992 = vpop.permute.xlu0 %6991
    %6993 = vrot.lane.b32.xlu0 %v6919, 127
    %v6994 = vpop.permute.xlu0 %6993
    %6995 = vrot.lane.b32.xlu0 %v6904, 127
    %v6996 = vpop.permute.xlu0 %6995
    %6997 = vrot.lane.b32.xlu0 %v6920, 127
    %v6998 = vpop.permute.xlu0 %6997
    %6999 = vrot.lane.b32.xlu0 %v6905, 127
    %v7000 = vpop.permute.xlu0 %6999
    %7001 = vrot.lane.b32.xlu0 %v6921, 127
    %v7002 = vpop.permute.xlu0 %7001
    %7003 = vrot.lane.b32.xlu0 %v6906, 127
    %v7004 = vpop.permute.xlu0 %7003
    %7005 = vrot.lane.b32.xlu0 %v6922, 127
    %v7006 = vpop.permute.xlu0 %7005
    %7007 = vrot.lane.b32.xlu0 %v6907, 127
    %v7008 = vpop.permute.xlu0 %7007
    %7009 = vrot.lane.b32.xlu0 %v6923, 127
    %v7010 = vpop.permute.xlu0 %7009
    %7011 = vrot.lane.b32.xlu0 %v6908, 127
    %v7012 = vpop.permute.xlu0 %7011
    %7013 = vrot.lane.b32.xlu0 %v6924, 127
    %v7014 = vpop.permute.xlu0 %7013
    %7015 = vrot.lane.b32.xlu0 %v6909, 127
    %v7016 = vpop.permute.xlu0 %7015
    %7017 = vrot.lane.b32.xlu0 %v6925, 127
    %v7018 = vpop.permute.xlu0 %7017
    %7019 = vrot.lane.b32.xlu0 %v6910, 127
    %v7020 = vpop.permute.xlu0 %7019
    %7021 = vrot.lane.b32.xlu0 %v6926, 127
    %v7022 = vpop.permute.xlu0 %7021
    %v7023 = vsel %vm421, %v6960, %v6962
    %v7024 = vsel %vm421, %v6964, %v6966
    %v7025 = vsel %vm421, %v6968, %v6970
    %v7026 = vsel %vm421, %v6972, %v6974
    %v7027 = vsel %vm421, %v6976, %v6978
    %v7028 = vsel %vm421, %v6980, %v6982
    %v7029 = vsel %vm421, %v6984, %v6986
    %v7030 = vsel %vm421, %v6988, %v6990
    %v7031 = vsel %vm421, %v6992, %v6994
    %v7032 = vsel %vm421, %v6996, %v6998
    %v7033 = vsel %vm421, %v7000, %v7002
    %v7034 = vsel %vm421, %v7004, %v7006
    %v7035 = vsel %vm421, %v7008, %v7010
    %v7036 = vsel %vm421, %v7012, %v7014
    %v7037 = vsel %vm421, %v7016, %v7018
    %v7038 = vsel %vm421, %v7020, %v7022
    %7071 = vmatprep.subr.mxu0 %v6962
    %7072 = vmatpush1.msra.mxu0 %v7023
    %7073 = vmatprep.subr.mxu0 %v6966
    %7074 = vmatpush1.msra.mxu0 %v7024
    %7075 = vmatprep.subr.mxu0 %v6970
    %7076 = vmatpush1.msra.mxu0 %v7025
    %7077 = vmatprep.subr.mxu0 %v6974
    %7078 = vmatpush1.msra.mxu0 %v7026
    %7079 = vmatprep.subr.mxu0 %v6978
    %7080 = vmatpush1.msra.mxu0 %v7027
    %7081 = vmatprep.subr.mxu0 %v6982
    %7082 = vmatpush1.msra.mxu0 %v7028
    %7083 = vmatprep.subr.mxu0 %v6986
    %7084 = vmatpush1.msra.mxu0 %v7029
    %7085 = vmatprep.subr.mxu0 %v6990
    %7086 = vmatpush1.msra.mxu0 %v7030
    %7087 = vmatprep.subr.mxu0 %v6994
    %7088 = vmatpush1.msra.mxu0 %v7031
    %7089 = vmatprep.subr.mxu0 %v6998
    %7090 = vmatpush1.msra.mxu0 %v7032
    %7091 = vmatprep.subr.mxu0 %v7002
    %7092 = vmatpush1.msra.mxu0 %v7033
    %7093 = vmatprep.subr.mxu0 %v7006
    %7094 = vmatpush1.msra.mxu0 %v7034
    %7095 = vmatprep.subr.mxu0 %v7010
    %7096 = vmatpush1.msra.mxu0 %v7035
    %7097 = vmatprep.subr.mxu0 %v7014
    %7098 = vmatpush1.msra.mxu0 %v7036
    %7099 = vmatprep.subr.mxu0 %v7018
    %7100 = vmatpush1.msra.mxu0 %v7037
    %7101 = vmatprep.subr.mxu0 %v7022
    %7102 = vmatpush1.msra.mxu0 %v7038
    %7103 = vmatprep.subr.mxu0 0.0
    %7104 = vmatpush1.msra.mxu0 0.0
    %7105 = vmatprep.subr.mxu0 0.0
    %7106 = vmatpush1.msra.mxu0 0.0
    %7107 = vmatprep.subr.mxu0 0.0
    %7108 = vmatpush1.msra.mxu0 0.0
    %7109 = vmatprep.subr.mxu0 0.0
    %7110 = vmatpush1.msra.mxu0 0.0
    %7111 = vmatprep.subr.mxu0 0.0
    %7112 = vmatpush1.msra.mxu0 0.0
    %7113 = vmatprep.subr.mxu0 0.0
    %7114 = vmatpush1.msra.mxu0 0.0
    %7115 = vmatprep.subr.mxu0 0.0
    %7116 = vmatpush1.msra.mxu0 0.0
    %7117 = vmatprep.subr.mxu0 0.0
    %7118 = vmatpush1.msra.mxu0 0.0
    %7119 = vmatprep.subr.mxu0 0.0
    %7120 = vmatpush1.msra.mxu0 0.0
    %7121 = vmatprep.subr.mxu0 0.0
    %7122 = vmatpush1.msra.mxu0 0.0
    %7123 = vmatprep.subr.mxu0 0.0
    %7124 = vmatpush1.msra.mxu0 0.0
    %7125 = vmatprep.subr.mxu0 0.0
    %7126 = vmatpush1.msra.mxu0 0.0
    %7127 = vmatprep.subr.mxu0 0.0
    %7128 = vmatpush1.msra.mxu0 0.0
    %7129 = vmatprep.subr.mxu0 0.0
    %7130 = vmatpush1.msra.mxu0 0.0
    %7131 = vmatprep.subr.mxu0 0.0
    %7132 = vmatpush1.msra.mxu0 0.0
    %7133 = vmatprep.subr.mxu0 0.0
    %7134 = vmatpush1.msra.mxu0 0.0
    %7135 = vmatprep.mubr.f32.mxu0 0.0
    %7136 = vmatmul.mubr.f32.gmra.mrb[0].mxu0 %v109
    %v7137 = vpop.f32.mrb[0].mxu0
    %v7138 = vadd.f32 0.0, %v7137
    %v7139 = vpop.f32.mrb[0].mxu0
    %v7140 = vadd.f32 0.0, %v7139
    %7141 = vmatprep.mubr.f32.mxu0 0.0
    %7142 = vmatmul.mubr.f32.gmra.mrb[0].mxu0 %v110
    %v7143 = vpop.f32.mrb[0].mxu0
    %v7144 = vadd.f32 0.0, %v7143
    %v7145 = vpop.f32.mrb[0].mxu0
    %v7146 = vadd.f32 0.0, %v7145
    %7147 = vdwg.mxu0
    %7148 = vmatprep.subr.mxu0 %v6911
    %7149 = vmatpush1.msra.mxu0 %v6895
    %7150 = vmatprep.subr.mxu0 %v6912
    %7151 = vmatpush1.msra.mxu0 %v6896
    %7152 = vmatprep.subr.mxu0 %v6913
    %7153 = vmatpush1.msra.mxu0 %v6897
    %7154 = vmatprep.subr.mxu0 %v6914
    %7155 = vmatpush1.msra.mxu0 %v6898
    %7156 = vmatprep.subr.mxu0 %v6915
    %7157 = vmatpush1.msra.mxu0 %v6899
    %7158 = vmatprep.subr.mxu0 %v6916
    %7159 = vmatpush1.msra.mxu0 %v6900
    %7160 = vmatprep.subr.mxu0 %v6917
    %7161 = vmatpush1.msra.mxu0 %v6901
    %7162 = vmatprep.subr.mxu0 %v6918
    %7163 = vmatpush1.msra.mxu0 %v6902
    %7164 = vmatprep.subr.mxu0 %v6919
    %7165 = vmatpush1.msra.mxu0 %v6903
    %7166 = vmatprep.subr.mxu0 %v6920
    %7167 = vmatpush1.msra.mxu0 %v6904
    %7168 = vmatprep.subr.mxu0 %v6921
    %7169 = vmatpush1.msra.mxu0 %v6905
    %7170 = vmatprep.subr.mxu0 %v6922
    %7171 = vmatpush1.msra.mxu0 %v6906
    %7172 = vmatprep.subr.mxu0 %v6923
    %7173 = vmatpush1.msra.mxu0 %v6907
    %7174 = vmatprep.subr.mxu0 %v6924
    %7175 = vmatpush1.msra.mxu0 %v6908
    %7176 = vmatprep.subr.mxu0 %v6925
    %7177 = vmatpush1.msra.mxu0 %v6909
    %7178 = vmatprep.subr.mxu0 %v6926
    %7179 = vmatpush1.msra.mxu0 %v6910
    %7180 = vmatprep.subr.mxu0 0.0
    %7181 = vmatpush1.msra.mxu0 0.0
    %7182 = vmatprep.subr.mxu0 0.0
    %7183 = vmatpush1.msra.mxu0 0.0
    %7184 = vmatprep.subr.mxu0 0.0
    %7185 = vmatpush1.msra.mxu0 0.0
    %7186 = vmatprep.subr.mxu0 0.0
    %7187 = vmatpush1.msra.mxu0 0.0
    %7188 = vmatprep.subr.mxu0 0.0
    %7189 = vmatpush1.msra.mxu0 0.0
    %7190 = vmatprep.subr.mxu0 0.0
    %7191 = vmatpush1.msra.mxu0 0.0
    %7192 = vmatprep.subr.mxu0 0.0
    %7193 = vmatpush1.msra.mxu0 0.0
    %7194 = vmatprep.subr.mxu0 0.0
    %7195 = vmatpush1.msra.mxu0 0.0
    %7196 = vmatprep.subr.mxu0 0.0
    %7197 = vmatpush1.msra.mxu0 0.0
    %7198 = vmatprep.subr.mxu0 0.0
    %7199 = vmatpush1.msra.mxu0 0.0
    %7200 = vmatprep.subr.mxu0 0.0
    %7201 = vmatpush1.msra.mxu0 0.0
    %7202 = vmatprep.subr.mxu0 0.0
    %7203 = vmatpush1.msra.mxu0 0.0
    %7204 = vmatprep.subr.mxu0 0.0
    %7205 = vmatpush1.msra.mxu0 0.0
    %7206 = vmatprep.subr.mxu0 0.0
    %7207 = vmatpush1.msra.mxu0 0.0
    %7208 = vmatprep.subr.mxu0 0.0
    %7209 = vmatpush1.msra.mxu0 0.0
    %7210 = vmatprep.subr.mxu0 0.0
    %7211 = vmatpush1.msra.mxu0 0.0
    %7212 = vmatprep.mubr.f32.mxu0 0.0
    %7213 = vmatmul.mubr.f32.gmra.mrb[0].mxu0 %v106
    %v7214 = vpop.f32.mrb[0].mxu0
    %v7215 = vadd.f32 %v7138, %v7214
    %v7216 = vpop.f32.mrb[0].mxu0
    %v7217 = vadd.f32 %v7140, %v7216
    %7218 = vmatprep.mubr.f32.mxu0 0.0
    %7219 = vmatmul.mubr.f32.gmra.mrb[0].mxu0 %v107
    %v7220 = vpop.f32.mrb[0].mxu0
    %v7221 = vadd.f32 %v7144, %v7220
    %v7222 = vpop.f32.mrb[0].mxu0
    %v7223 = vadd.f32 %v7146, %v7222
    %7224 = vdwg.mxu0
    %v7225 = vadd.f32 %v7215, %v3078
    %v7226 = vadd.f32 %v7217, %v3078
    %v7227 = vadd.f32 %v7221, %v3083
    %v7228 = vadd.f32 %v7223, %v3083
    %v7229 = vmax.f32 %v7225, 0.0
    %v7230 = vmax.f32 %v7226, 0.0
    %v7231 = vmax.f32 %v7227, 0.0
    %v7232 = vmax.f32 %v7228, 0.0
    %7237 = vrot.lane.b32.xlu0 %v7229, 127
    %v7238 = vpop.permute.xlu0 %7237
    %7239 = vrot.lane.b32.xlu0 %v7230, 127
    %v7240 = vpop.permute.xlu0 %7239
    %7241 = vrot.lane.b32.xlu0 %v7231, 127
    %v7242 = vpop.permute.xlu0 %7241
    %7243 = vrot.lane.b32.xlu0 %v7232, 127
    %v7244 = vpop.permute.xlu0 %7243
    %v7245 = vsel %vm421, %v7238, %v7240
    %v7246 = vsel %vm421, %v7242, %v7244
    %v7251 = vmax.f32 %v7229, %v7245
    %v7252 = vmax.f32 %v7230, %v7240
    %v7253 = vmax.f32 %v7231, %v7246
    %v7254 = vmax.f32 %v7232, %v7244
    %v7256 = vsel %vm3115, %v7252, 0
    %v7259 = vsel %vm3115, %v7254, 0
    %7261 = vmatprep.subr.mxu0 0.0
    %7262 = vmatpush1.msra.mxu0 %v316
    %7263 = vmatprep.subr.mxu0 0.0
    %7264 = vmatpush1.msra.mxu0 %v318
    %7265 = vmatprep.subr.mxu0 0.0
    %7266 = vmatpush1.msra.mxu0 %v320
    %7267 = vmatprep.subr.mxu0 0.0
    %7268 = vmatpush1.msra.mxu0 %v322
    %7269 = vmatprep.subr.mxu0 0.0
    %7270 = vmatpush1.msra.mxu0 %v324
    %7271 = vmatprep.subr.mxu0 0.0
    %7272 = vmatpush1.msra.mxu0 %v326
    %7273 = vmatprep.subr.mxu0 0.0
    %7274 = vmatpush1.msra.mxu0 %v328
    %7275 = vmatprep.subr.mxu0 0.0
    %7276 = vmatpush1.msra.mxu0 %v330
    %7277 = vmatprep.subr.mxu0 0.0
    %7278 = vmatpush1.msra.mxu0 %v332
    %7279 = vmatprep.subr.mxu0 0.0
    %7280 = vmatpush1.msra.mxu0 %v334
    %7281 = vmatprep.subr.mxu0 0.0
    %7282 = vmatpush1.msra.mxu0 %v336
    %7283 = vmatprep.subr.mxu0 0.0
    %7284 = vmatpush1.msra.mxu0 %v338
    %7285 = vmatprep.subr.mxu0 0.0
    %7286 = vmatpush1.msra.mxu0 %v340
    %7287 = vmatprep.subr.mxu0 0.0
    %7288 = vmatpush1.msra.mxu0 %v342
    %7289 = vmatprep.subr.mxu0 0.0
    %7290 = vmatpush1.msra.mxu0 %v344
    %7291 = vmatprep.subr.mxu0 0.0
    %7292 = vmatpush1.msra.mxu0 %v346
    %7293 = vmatprep.subr.mxu0 0.0
    %7294 = vmatpush1.msra.mxu0 %v348
    %7295 = vmatprep.subr.mxu0 0.0
    %7296 = vmatpush1.msra.mxu0 %v350
    %7297 = vmatprep.subr.mxu0 0.0
    %7298 = vmatpush1.msra.mxu0 %v3124
    %7299 = vmatprep.subr.mxu0 0.0
    %7300 = vmatpush1.msra.mxu0 0.0
    %7301 = vmatprep.subr.mxu0 0.0
    %7302 = vmatpush1.msra.mxu0 0.0
    %7303 = vmatprep.subr.mxu0 0.0
    %7304 = vmatpush1.msra.mxu0 0.0
    %7305 = vmatprep.subr.mxu0 0.0
    %7306 = vmatpush1.msra.mxu0 0.0
    %7307 = vmatprep.subr.mxu0 0.0
    %7308 = vmatpush1.msra.mxu0 0.0
    %7309 = vmatprep.subr.mxu0 0.0
    %7310 = vmatpush1.msra.mxu0 0.0
    %7311 = vmatprep.subr.mxu0 0.0
    %7312 = vmatpush1.msra.mxu0 0.0
    %7313 = vmatprep.subr.mxu0 0.0
    %7314 = vmatpush1.msra.mxu0 0.0
    %7315 = vmatprep.subr.mxu0 0.0
    %7316 = vmatpush1.msra.mxu0 0.0
    %7317 = vmatprep.subr.mxu0 0.0
    %7318 = vmatpush1.msra.mxu0 0.0
    %7319 = vmatprep.subr.mxu0 0.0
    %7320 = vmatpush1.msra.mxu0 0.0
    %7321 = vmatprep.subr.mxu0 0.0
    %7322 = vmatpush1.msra.mxu0 0.0
    %7323 = vmatprep.subr.mxu0 0.0
    %7324 = vmatpush1.msra.mxu0 0.0
    %7325 = vmatprep.mubr.f32.mxu0 %v7256
    %7326 = vmatmul.mubr.f32.gmra.mrb[0].mxu0 %v7251
    %v7327 = vpop.f32.mrb[0].mxu0
    %v7328 = vadd.f32 0.0, %v7327
    %v7329 = vpop.f32.mrb[0].mxu0
    %7330 = vmatprep.mubr.f32.mxu0 %v7259
    %7331 = vmatmul.mubr.f32.gmra.mrb[0].mxu0 %v7253
    %v7332 = vpop.f32.mrb[0].mxu0
    %v7333 = vadd.f32 0.0, %v7332
    %v7334 = vpop.f32.mrb[0].mxu0
    %7335 = vdwg.mxu0
    %v7337 = vsel %vm404, %v4789, 0.0
    %7339 = vrot.lane.b32.xlu0 %v7337, 127
    %v7340 = vpop.permute.xlu0 %7339
    %v7341 = vsel %vm421, %v4804, %v7340
    %7343 = vmatprep.subr.mxu0 %v7341
    %7344 = vmatpush1.msra.mxu0 %v4807
    %7345 = vmatprep.subr.mxu0 0.0
    %7346 = vmatpush1.msra.mxu0 0.0
    %7347 = vmatprep.subr.mxu0 0.0
    %7348 = vmatpush1.msra.mxu0 0.0
    %7349 = vmatprep.subr.mxu0 0.0
    %7350 = vmatpush1.msra.mxu0 0.0
    %7351 = vmatprep.subr.mxu0 0.0
    %7352 = vmatpush1.msra.mxu0 0.0
    %7353 = vmatprep.subr.mxu0 0.0
    %7354 = vmatpush1.msra.mxu0 0.0
    %7355 = vmatprep.subr.mxu0 0.0
    %7356 = vmatpush1.msra.mxu0 0.0
    %7357 = vmatprep.subr.mxu0 0.0
    %7358 = vmatpush1.msra.mxu0 0.0
    %7359 = vmatprep.subr.mxu0 0.0
    %7360 = vmatpush1.msra.mxu0 0.0
    %7361 = vmatprep.subr.mxu0 0.0
    %7362 = vmatpush1.msra.mxu0 0.0
    %7363 = vmatprep.subr.mxu0 0.0
    %7364 = vmatpush1.msra.mxu0 0.0
    %7365 = vmatprep.subr.mxu0 0.0
    %7366 = vmatpush1.msra.mxu0 0.0
    %7367 = vmatprep.subr.mxu0 0.0
    %7368 = vmatpush1.msra.mxu0 0.0
    %7369 = vmatprep.subr.mxu0 0.0
    %7370 = vmatpush1.msra.mxu0 0.0
    %7371 = vmatprep.subr.mxu0 0.0
    %7372 = vmatpush1.msra.mxu0 0.0
    %7373 = vmatprep.subr.mxu0 0.0
    %7374 = vmatpush1.msra.mxu0 0.0
    %7375 = vmatprep.subr.mxu0 0.0
    %7376 = vmatpush1.msra.mxu0 0.0
    %7377 = vmatprep.subr.mxu0 0.0
    %7378 = vmatpush1.msra.mxu0 0.0
    %7379 = vmatprep.subr.mxu0 0.0
    %7380 = vmatpush1.msra.mxu0 0.0
    %7381 = vmatprep.subr.mxu0 0.0
    %7382 = vmatpush1.msra.mxu0 0.0
    %7383 = vmatprep.subr.mxu0 0.0
    %7384 = vmatpush1.msra.mxu0 0.0
    %7385 = vmatprep.subr.mxu0 0.0
    %7386 = vmatpush1.msra.mxu0 0.0
    %7387 = vmatprep.subr.mxu0 0.0
    %7388 = vmatpush1.msra.mxu0 0.0
    %7389 = vmatprep.subr.mxu0 0.0
    %7390 = vmatpush1.msra.mxu0 0.0
    %7391 = vmatprep.subr.mxu0 0.0
    %7392 = vmatpush1.msra.mxu0 0.0
    %7393 = vmatprep.subr.mxu0 0.0
    %7394 = vmatpush1.msra.mxu0 0.0
    %7395 = vmatprep.subr.mxu0 0.0
    %7396 = vmatpush1.msra.mxu0 0.0
    %7397 = vmatprep.subr.mxu0 0.0
    %7398 = vmatpush1.msra.mxu0 0.0
    %7399 = vmatprep.subr.mxu0 0.0
    %7400 = vmatpush1.msra.mxu0 0.0
    %7401 = vmatprep.subr.mxu0 0.0
    %7402 = vmatpush1.msra.mxu0 0.0
    %7403 = vmatprep.subr.mxu0 0.0
    %7404 = vmatpush1.msra.mxu0 0.0
    %7405 = vmatprep.subr.mxu0 0.0
    %7406 = vmatpush1.msra.mxu0 0.0
    %7407 = vmatprep.mubr.f32.mxu0 0.0
    %7408 = vmatmul.mubr.f32.gmra.mrb[0].mxu0 %v429
    %v7409 = vpop.f32.mrb[0].mxu0
    %v7410 = vadd.f32 0.0, %v7409
    %v7411 = vpop.f32.mrb[0].mxu0
    %v7412 = vadd.f32 0.0, %v7411
    %7413 = vmatprep.mubr.f32.mxu0 0.0
    %7414 = vmatmul.mubr.f32.gmra.mrb[0].mxu0 %v432
    %v7415 = vpop.f32.mrb[0].mxu0
    %v7416 = vadd.f32 0.0, %v7415
    %v7417 = vpop.f32.mrb[0].mxu0
    %v7418 = vadd.f32 0.0, %v7417
    %7419 = vmatprep.mubr.f32.mxu0 0.0
    %7420 = vmatmul.mubr.f32.gmra.mrb[0].mxu0 %v435
    %v7421 = vpop.f32.mrb[0].mxu0
    %v7422 = vadd.f32 0.0, %v7421
    %v7423 = vpop.f32.mrb[0].mxu0
    %v7424 = vadd.f32 0.0, %v7423
    %7425 = vmatprep.mubr.f32.mxu0 0.0
    %7426 = vmatmul.mubr.f32.gmra.mrb[0].mxu0 %v438
    %v7427 = vpop.f32.mrb[0].mxu0
    %v7428 = vadd.f32 0.0, %v7427
    %v7429 = vpop.f32.mrb[0].mxu0
    %v7430 = vadd.f32 0.0, %v7429
    %7431 = vmatprep.mubr.f32.mxu0 0.0
    %7432 = vmatmul.mubr.f32.gmra.mrb[0].mxu0 %v441
    %v7433 = vpop.f32.mrb[0].mxu0
    %v7434 = vadd.f32 0.0, %v7433
    %v7435 = vpop.f32.mrb[0].mxu0
    %v7436 = vadd.f32 0.0, %v7435
    %7437 = vmatprep.mubr.f32.mxu0 0.0
    %7438 = vmatmul.mubr.f32.gmra.mrb[0].mxu0 %v444
    %v7439 = vpop.f32.mrb[0].mxu0
    %v7440 = vadd.f32 0.0, %v7439
    %v7441 = vpop.f32.mrb[0].mxu0
    %v7442 = vadd.f32 0.0, %v7441
    %7443 = vmatprep.mubr.f32.mxu0 0.0
    %7444 = vmatmul.mubr.f32.gmra.mrb[0].mxu0 %v447
    %v7445 = vpop.f32.mrb[0].mxu0
    %v7446 = vadd.f32 0.0, %v7445
    %v7447 = vpop.f32.mrb[0].mxu0
    %v7448 = vadd.f32 0.0, %v7447
    %7449 = vmatprep.mubr.f32.mxu0 0.0
    %7450 = vmatmul.mubr.f32.gmra.mrb[0].mxu0 %v450
    %v7451 = vpop.f32.mrb[0].mxu0
    %v7452 = vadd.f32 0.0, %v7451
    %v7453 = vpop.f32.mrb[0].mxu0
    %v7454 = vadd.f32 0.0, %v7453
    %7455 = vmatprep.mubr.f32.mxu0 0.0
    %7456 = vmatmul.mubr.f32.gmra.mrb[0].mxu0 %v453
    %v7457 = vpop.f32.mrb[0].mxu0
    %v7458 = vadd.f32 0.0, %v7457
    %v7459 = vpop.f32.mrb[0].mxu0
    %v7460 = vadd.f32 0.0, %v7459
    %7461 = vmatprep.mubr.f32.mxu0 0.0
    %7462 = vmatmul.mubr.f32.gmra.mrb[0].mxu0 %v456
    %v7463 = vpop.f32.mrb[0].mxu0
    %v7464 = vadd.f32 0.0, %v7463
    %v7465 = vpop.f32.mrb[0].mxu0
    %v7466 = vadd.f32 0.0, %v7465
    %7467 = vmatprep.mubr.f32.mxu0 0.0
    %7468 = vmatmul.mubr.f32.gmra.mrb[0].mxu0 %v459
    %v7469 = vpop.f32.mrb[0].mxu0
    %v7470 = vadd.f32 0.0, %v7469
    %v7471 = vpop.f32.mrb[0].mxu0
    %v7472 = vadd.f32 0.0, %v7471
    %7473 = vmatprep.mubr.f32.mxu0 0.0
    %7474 = vmatmul.mubr.f32.gmra.mrb[0].mxu0 %v462
    %v7475 = vpop.f32.mrb[0].mxu0
    %v7476 = vadd.f32 0.0, %v7475
    %v7477 = vpop.f32.mrb[0].mxu0
    %v7478 = vadd.f32 0.0, %v7477
    %7479 = vmatprep.mubr.f32.mxu0 0.0
    %7480 = vmatmul.mubr.f32.gmra.mrb[0].mxu0 %v465
    %v7481 = vpop.f32.mrb[0].mxu0
    %v7482 = vadd.f32 0.0, %v7481
    %v7483 = vpop.f32.mrb[0].mxu0
    %v7484 = vadd.f32 0.0, %v7483
    %7485 = vmatprep.mubr.f32.mxu0 0.0
    %7486 = vmatmul.mubr.f32.gmra.mrb[0].mxu0 %v468
    %v7487 = vpop.f32.mrb[0].mxu0
    %v7488 = vadd.f32 0.0, %v7487
    %v7489 = vpop.f32.mrb[0].mxu0
    %v7490 = vadd.f32 0.0, %v7489
    %7491 = vmatprep.mubr.f32.mxu0 0.0
    %7492 = vmatmul.mubr.f32.gmra.mrb[0].mxu0 %v471
    %v7493 = vpop.f32.mrb[0].mxu0
    %v7494 = vadd.f32 0.0, %v7493
    %v7495 = vpop.f32.mrb[0].mxu0
    %v7496 = vadd.f32 0.0, %v7495
    %7497 = vmatprep.mubr.f32.mxu0 0.0
    %7498 = vmatmul.mubr.f32.gmra.mrb[0].mxu0 %v474
    %v7499 = vpop.f32.mrb[0].mxu0
    %v7500 = vadd.f32 0.0, %v7499
    %v7501 = vpop.f32.mrb[0].mxu0
    %v7502 = vadd.f32 0.0, %v7501
    %7503 = vdwg.mxu0
    %7504 = vmatprep.subr.mxu0 %v4792
    %7505 = vmatpush1.msra.mxu0 %v4797
    %7506 = vmatprep.subr.mxu0 0.0
    %7507 = vmatpush1.msra.mxu0 0.0
    %7508 = vmatprep.subr.mxu0 0.0
    %7509 = vmatpush1.msra.mxu0 0.0
    %7510 = vmatprep.subr.mxu0 0.0
    %7511 = vmatpush1.msra.mxu0 0.0
    %7512 = vmatprep.subr.mxu0 0.0
    %7513 = vmatpush1.msra.mxu0 0.0
    %7514 = vmatprep.subr.mxu0 0.0
    %7515 = vmatpush1.msra.mxu0 0.0
    %7516 = vmatprep.subr.mxu0 0.0
    %7517 = vmatpush1.msra.mxu0 0.0
    %7518 = vmatprep.subr.mxu0 0.0
    %7519 = vmatpush1.msra.mxu0 0.0
    %7520 = vmatprep.subr.mxu0 0.0
    %7521 = vmatpush1.msra.mxu0 0.0
    %7522 = vmatprep.subr.mxu0 0.0
    %7523 = vmatpush1.msra.mxu0 0.0
    %7524 = vmatprep.subr.mxu0 0.0
    %7525 = vmatpush1.msra.mxu0 0.0
    %7526 = vmatprep.subr.mxu0 0.0
    %7527 = vmatpush1.msra.mxu0 0.0
    %7528 = vmatprep.subr.mxu0 0.0
    %7529 = vmatpush1.msra.mxu0 0.0
    %7530 = vmatprep.subr.mxu0 0.0
    %7531 = vmatpush1.msra.mxu0 0.0
    %7532 = vmatprep.subr.mxu0 0.0
    %7533 = vmatpush1.msra.mxu0 0.0
    %7534 = vmatprep.subr.mxu0 0.0
    %7535 = vmatpush1.msra.mxu0 0.0
    %7536 = vmatprep.subr.mxu0 0.0
    %7537 = vmatpush1.msra.mxu0 0.0
    %7538 = vmatprep.subr.mxu0 0.0
    %7539 = vmatpush1.msra.mxu0 0.0
    %7540 = vmatprep.subr.mxu0 0.0
    %7541 = vmatpush1.msra.mxu0 0.0
    %7542 = vmatprep.subr.mxu0 0.0
    %7543 = vmatpush1.msra.mxu0 0.0
    %7544 = vmatprep.subr.mxu0 0.0
    %7545 = vmatpush1.msra.mxu0 0.0
    %7546 = vmatprep.subr.mxu0 0.0
    %7547 = vmatpush1.msra.mxu0 0.0
    %7548 = vmatprep.subr.mxu0 0.0
    %7549 = vmatpush1.msra.mxu0 0.0
    %7550 = vmatprep.subr.mxu0 0.0
    %7551 = vmatpush1.msra.mxu0 0.0
    %7552 = vmatprep.subr.mxu0 0.0
    %7553 = vmatpush1.msra.mxu0 0.0
    %7554 = vmatprep.subr.mxu0 0.0
    %7555 = vmatpush1.msra.mxu0 0.0
    %7556 = vmatprep.subr.mxu0 0.0
    %7557 = vmatpush1.msra.mxu0 0.0
    %7558 = vmatprep.subr.mxu0 0.0
    %7559 = vmatpush1.msra.mxu0 0.0
    %7560 = vmatprep.subr.mxu0 0.0
    %7561 = vmatpush1.msra.mxu0 0.0
    %7562 = vmatprep.subr.mxu0 0.0
    %7563 = vmatpush1.msra.mxu0 0.0
    %7564 = vmatprep.subr.mxu0 0.0
    %7565 = vmatpush1.msra.mxu0 0.0
    %7566 = vmatprep.subr.mxu0 0.0
    %7567 = vmatpush1.msra.mxu0 0.0
    %7568 = vmatprep.mubr.f32.mxu0 0.0
    %7569 = vmatmul.mubr.f32.gmra.mrb[0].mxu0 %v783
    %v7570 = vpop.f32.mrb[0].mxu0
    %v7571 = vadd.f32 %v7410, %v7570
    %v7572 = vpop.f32.mrb[0].mxu0
    %v7573 = vadd.f32 %v7412, %v7572
    %7574 = vmatprep.mubr.f32.mxu0 0.0
    %7575 = vmatmul.mubr.f32.gmra.mrb[0].mxu0 %v786
    %v7576 = vpop.f32.mrb[0].mxu0
    %v7577 = vadd.f32 %v7416, %v7576
    %v7578 = vpop.f32.mrb[0].mxu0
    %v7579 = vadd.f32 %v7418, %v7578
    %7580 = vmatprep.mubr.f32.mxu0 0.0
    %7581 = vmatmul.mubr.f32.gmra.mrb[0].mxu0 %v789
    %v7582 = vpop.f32.mrb[0].mxu0
    %v7583 = vadd.f32 %v7422, %v7582
    %v7584 = vpop.f32.mrb[0].mxu0
    %v7585 = vadd.f32 %v7424, %v7584
    %7586 = vmatprep.mubr.f32.mxu0 0.0
    %7587 = vmatmul.mubr.f32.gmra.mrb[0].mxu0 %v792
    %v7588 = vpop.f32.mrb[0].mxu0
    %v7589 = vadd.f32 %v7428, %v7588
    %v7590 = vpop.f32.mrb[0].mxu0
    %v7591 = vadd.f32 %v7430, %v7590
    %7592 = vmatprep.mubr.f32.mxu0 0.0
    %7593 = vmatmul.mubr.f32.gmra.mrb[0].mxu0 %v795
    %v7594 = vpop.f32.mrb[0].mxu0
    %v7595 = vadd.f32 %v7434, %v7594
    %v7596 = vpop.f32.mrb[0].mxu0
    %v7597 = vadd.f32 %v7436, %v7596
    %7598 = vmatprep.mubr.f32.mxu0 0.0
    %7599 = vmatmul.mubr.f32.gmra.mrb[0].mxu0 %v798
    %v7600 = vpop.f32.mrb[0].mxu0
    %v7601 = vadd.f32 %v7440, %v7600
    %v7602 = vpop.f32.mrb[0].mxu0
    %v7603 = vadd.f32 %v7442, %v7602
    %7604 = vmatprep.mubr.f32.mxu0 0.0
    %7605 = vmatmul.mubr.f32.gmra.mrb[0].mxu0 %v801
    %v7606 = vpop.f32.mrb[0].mxu0
    %v7607 = vadd.f32 %v7446, %v7606
    %v7608 = vpop.f32.mrb[0].mxu0
    %v7609 = vadd.f32 %v7448, %v7608
    %7610 = vmatprep.mubr.f32.mxu0 0.0
    %7611 = vmatmul.mubr.f32.gmra.mrb[0].mxu0 %v804
    %v7612 = vpop.f32.mrb[0].mxu0
    %v7613 = vadd.f32 %v7452, %v7612
    %v7614 = vpop.f32.mrb[0].mxu0
    %v7615 = vadd.f32 %v7454, %v7614
    %7616 = vmatprep.mubr.f32.mxu0 0.0
    %7617 = vmatmul.mubr.f32.gmra.mrb[0].mxu0 %v807
    %v7618 = vpop.f32.mrb[0].mxu0
    %v7619 = vadd.f32 %v7458, %v7618
    %v7620 = vpop.f32.mrb[0].mxu0
    %v7621 = vadd.f32 %v7460, %v7620
    %7622 = vmatprep.mubr.f32.mxu0 0.0
    %7623 = vmatmul.mubr.f32.gmra.mrb[0].mxu0 %v810
    %v7624 = vpop.f32.mrb[0].mxu0
    %v7625 = vadd.f32 %v7464, %v7624
    %v7626 = vpop.f32.mrb[0].mxu0
    %v7627 = vadd.f32 %v7466, %v7626
    %7628 = vmatprep.mubr.f32.mxu0 0.0
    %7629 = vmatmul.mubr.f32.gmra.mrb[0].mxu0 %v813
    %v7630 = vpop.f32.mrb[0].mxu0
    %v7631 = vadd.f32 %v7470, %v7630
    %v7632 = vpop.f32.mrb[0].mxu0
    %v7633 = vadd.f32 %v7472, %v7632
    %7634 = vmatprep.mubr.f32.mxu0 0.0
    %7635 = vmatmul.mubr.f32.gmra.mrb[0].mxu0 %v816
    %v7636 = vpop.f32.mrb[0].mxu0
    %v7637 = vadd.f32 %v7476, %v7636
    %v7638 = vpop.f32.mrb[0].mxu0
    %v7639 = vadd.f32 %v7478, %v7638
    %7640 = vmatprep.mubr.f32.mxu0 0.0
    %7641 = vmatmul.mubr.f32.gmra.mrb[0].mxu0 %v819
    %v7642 = vpop.f32.mrb[0].mxu0
    %v7643 = vadd.f32 %v7482, %v7642
    %v7644 = vpop.f32.mrb[0].mxu0
    %v7645 = vadd.f32 %v7484, %v7644
    %7646 = vmatprep.mubr.f32.mxu0 0.0
    %7647 = vmatmul.mubr.f32.gmra.mrb[0].mxu0 %v822
    %v7648 = vpop.f32.mrb[0].mxu0
    %v7649 = vadd.f32 %v7488, %v7648
    %v7650 = vpop.f32.mrb[0].mxu0
    %v7651 = vadd.f32 %v7490, %v7650
    %7652 = vmatprep.mubr.f32.mxu0 0.0
    %7653 = vmatmul.mubr.f32.gmra.mrb[0].mxu0 %v825
    %v7654 = vpop.f32.mrb[0].mxu0
    %v7655 = vadd.f32 %v7494, %v7654
    %v7656 = vpop.f32.mrb[0].mxu0
    %v7657 = vadd.f32 %v7496, %v7656
    %7658 = vmatprep.mubr.f32.mxu0 0.0
    %7659 = vmatmul.mubr.f32.gmra.mrb[0].mxu0 %v828
    %v7660 = vpop.f32.mrb[0].mxu0
    %v7661 = vadd.f32 %v7500, %v7660
    %v7662 = vpop.f32.mrb[0].mxu0
    %v7663 = vadd.f32 %v7502, %v7662
    %7664 = vdwg.mxu0
    %7665 = vrot.lane.b32.xlu0 %v7337, 126
    %v7666 = vpop.permute.xlu0 %7665
    %v7667 = vsel %vm1142, %v5427, %v7666
    %7669 = vmatprep.subr.mxu0 %v7667
    %7670 = vmatpush1.msra.mxu0 %v5430
    %7671 = vmatprep.subr.mxu0 0.0
    %7672 = vmatpush1.msra.mxu0 0.0
    %7673 = vmatprep.subr.mxu0 0.0
    %7674 = vmatpush1.msra.mxu0 0.0
    %7675 = vmatprep.subr.mxu0 0.0
    %7676 = vmatpush1.msra.mxu0 0.0
    %7677 = vmatprep.subr.mxu0 0.0
    %7678 = vmatpush1.msra.mxu0 0.0
    %7679 = vmatprep.subr.mxu0 0.0
    %7680 = vmatpush1.msra.mxu0 0.0
    %7681 = vmatprep.subr.mxu0 0.0
    %7682 = vmatpush1.msra.mxu0 0.0
    %7683 = vmatprep.subr.mxu0 0.0
    %7684 = vmatpush1.msra.mxu0 0.0
    %7685 = vmatprep.subr.mxu0 0.0
    %7686 = vmatpush1.msra.mxu0 0.0
    %7687 = vmatprep.subr.mxu0 0.0
    %7688 = vmatpush1.msra.mxu0 0.0
    %7689 = vmatprep.subr.mxu0 0.0
    %7690 = vmatpush1.msra.mxu0 0.0
    %7691 = vmatprep.subr.mxu0 0.0
    %7692 = vmatpush1.msra.mxu0 0.0
    %7693 = vmatprep.subr.mxu0 0.0
    %7694 = vmatpush1.msra.mxu0 0.0
    %7695 = vmatprep.subr.mxu0 0.0
    %7696 = vmatpush1.msra.mxu0 0.0
    %7697 = vmatprep.subr.mxu0 0.0
    %7698 = vmatpush1.msra.mxu0 0.0
    %7699 = vmatprep.subr.mxu0 0.0
    %7700 = vmatpush1.msra.mxu0 0.0
    %7701 = vmatprep.subr.mxu0 0.0
    %7702 = vmatpush1.msra.mxu0 0.0
    %7703 = vmatprep.subr.mxu0 0.0
    %7704 = vmatpush1.msra.mxu0 0.0
    %7705 = vmatprep.subr.mxu0 0.0
    %7706 = vmatpush1.msra.mxu0 0.0
    %7707 = vmatprep.subr.mxu0 0.0
    %7708 = vmatpush1.msra.mxu0 0.0
    %7709 = vmatprep.subr.mxu0 0.0
    %7710 = vmatpush1.msra.mxu0 0.0
    %7711 = vmatprep.subr.mxu0 0.0
    %7712 = vmatpush1.msra.mxu0 0.0
    %7713 = vmatprep.subr.mxu0 0.0
    %7714 = vmatpush1.msra.mxu0 0.0
    %7715 = vmatprep.subr.mxu0 0.0
    %7716 = vmatpush1.msra.mxu0 0.0
    %7717 = vmatprep.subr.mxu0 0.0
    %7718 = vmatpush1.msra.mxu0 0.0
    %7719 = vmatprep.subr.mxu0 0.0
    %7720 = vmatpush1.msra.mxu0 0.0
    %7721 = vmatprep.subr.mxu0 0.0
    %7722 = vmatpush1.msra.mxu0 0.0
    %7723 = vmatprep.subr.mxu0 0.0
    %7724 = vmatpush1.msra.mxu0 0.0
    %7725 = vmatprep.subr.mxu0 0.0
    %7726 = vmatpush1.msra.mxu0 0.0
    %7727 = vmatprep.subr.mxu0 0.0
    %7728 = vmatpush1.msra.mxu0 0.0
    %7729 = vmatprep.subr.mxu0 0.0
    %7730 = vmatpush1.msra.mxu0 0.0
    %7731 = vmatprep.subr.mxu0 0.0
    %7732 = vmatpush1.msra.mxu0 0.0
    %7733 = vmatprep.mubr.f32.mxu0 0.0
    %7734 = vmatmul.mubr.f32.gmra.mrb[0].mxu0 %v1149
    %v7735 = vpop.f32.mrb[0].mxu0
    %v7736 = vadd.f32 0.0, %v7735
    %v7737 = vpop.f32.mrb[0].mxu0
    %v7738 = vadd.f32 0.0, %v7737
    %7739 = vmatprep.mubr.f32.mxu0 0.0
    %7740 = vmatmul.mubr.f32.gmra.mrb[0].mxu0 %v1152
    %v7741 = vpop.f32.mrb[0].mxu0
    %v7742 = vadd.f32 0.0, %v7741
    %v7743 = vpop.f32.mrb[0].mxu0
    %v7744 = vadd.f32 0.0, %v7743
    %7745 = vmatprep.mubr.f32.mxu0 0.0
    %7746 = vmatmul.mubr.f32.gmra.mrb[0].mxu0 %v1155
    %v7747 = vpop.f32.mrb[0].mxu0
    %v7748 = vadd.f32 0.0, %v7747
    %v7749 = vpop.f32.mrb[0].mxu0
    %v7750 = vadd.f32 0.0, %v7749
    %7751 = vmatprep.mubr.f32.mxu0 0.0
    %7752 = vmatmul.mubr.f32.gmra.mrb[0].mxu0 %v1158
    %v7753 = vpop.f32.mrb[0].mxu0
    %v7754 = vadd.f32 0.0, %v7753
    %v7755 = vpop.f32.mrb[0].mxu0
    %v7756 = vadd.f32 0.0, %v7755
    %7757 = vmatprep.mubr.f32.mxu0 0.0
    %7758 = vmatmul.mubr.f32.gmra.mrb[0].mxu0 %v1161
    %v7759 = vpop.f32.mrb[0].mxu0
    %v7760 = vadd.f32 0.0, %v7759
    %v7761 = vpop.f32.mrb[0].mxu0
    %v7762 = vadd.f32 0.0, %v7761
    %7763 = vmatprep.mubr.f32.mxu0 0.0
    %7764 = vmatmul.mubr.f32.gmra.mrb[0].mxu0 %v1164
    %v7765 = vpop.f32.mrb[0].mxu0
    %v7766 = vadd.f32 0.0, %v7765
    %v7767 = vpop.f32.mrb[0].mxu0
    %v7768 = vadd.f32 0.0, %v7767
    %7769 = vmatprep.mubr.f32.mxu0 0.0
    %7770 = vmatmul.mubr.f32.gmra.mrb[0].mxu0 %v1167
    %v7771 = vpop.f32.mrb[0].mxu0
    %v7772 = vadd.f32 0.0, %v7771
    %v7773 = vpop.f32.mrb[0].mxu0
    %v7774 = vadd.f32 0.0, %v7773
    %7775 = vmatprep.mubr.f32.mxu0 0.0
    %7776 = vmatmul.mubr.f32.gmra.mrb[0].mxu0 %v1170
    %v7777 = vpop.f32.mrb[0].mxu0
    %v7778 = vadd.f32 0.0, %v7777
    %v7779 = vpop.f32.mrb[0].mxu0
    %v7780 = vadd.f32 0.0, %v7779
    %7781 = vmatprep.mubr.f32.mxu0 0.0
    %7782 = vmatmul.mubr.f32.gmra.mrb[0].mxu0 %v1173
    %v7783 = vpop.f32.mrb[0].mxu0
    %v7784 = vadd.f32 0.0, %v7783
    %v7785 = vpop.f32.mrb[0].mxu0
    %v7786 = vadd.f32 0.0, %v7785
    %7787 = vmatprep.mubr.f32.mxu0 0.0
    %7788 = vmatmul.mubr.f32.gmra.mrb[0].mxu0 %v1176
    %v7789 = vpop.f32.mrb[0].mxu0
    %v7790 = vadd.f32 0.0, %v7789
    %v7791 = vpop.f32.mrb[0].mxu0
    %v7792 = vadd.f32 0.0, %v7791
    %7793 = vmatprep.mubr.f32.mxu0 0.0
    %7794 = vmatmul.mubr.f32.gmra.mrb[0].mxu0 %v1179
    %v7795 = vpop.f32.mrb[0].mxu0
    %v7796 = vadd.f32 0.0, %v7795
    %v7797 = vpop.f32.mrb[0].mxu0
    %v7798 = vadd.f32 0.0, %v7797
    %7799 = vmatprep.mubr.f32.mxu0 0.0
    %7800 = vmatmul.mubr.f32.gmra.mrb[0].mxu0 %v1182
    %v7801 = vpop.f32.mrb[0].mxu0
    %v7802 = vadd.f32 0.0, %v7801
    %v7803 = vpop.f32.mrb[0].mxu0
    %v7804 = vadd.f32 0.0, %v7803
    %7805 = vmatprep.mubr.f32.mxu0 0.0
    %7806 = vmatmul.mubr.f32.gmra.mrb[0].mxu0 %v1185
    %v7807 = vpop.f32.mrb[0].mxu0
    %v7808 = vadd.f32 0.0, %v7807
    %v7809 = vpop.f32.mrb[0].mxu0
    %v7810 = vadd.f32 0.0, %v7809
    %7811 = vmatprep.mubr.f32.mxu0 0.0
    %7812 = vmatmul.mubr.f32.gmra.mrb[0].mxu0 %v1188
    %v7813 = vpop.f32.mrb[0].mxu0
    %v7814 = vadd.f32 0.0, %v7813
    %v7815 = vpop.f32.mrb[0].mxu0
    %v7816 = vadd.f32 0.0, %v7815
    %7817 = vmatprep.mubr.f32.mxu0 0.0
    %7818 = vmatmul.mubr.f32.gmra.mrb[0].mxu0 %v1191
    %v7819 = vpop.f32.mrb[0].mxu0
    %v7820 = vadd.f32 0.0, %v7819
    %v7821 = vpop.f32.mrb[0].mxu0
    %v7822 = vadd.f32 0.0, %v7821
    %7823 = vmatprep.mubr.f32.mxu0 0.0
    %7824 = vmatmul.mubr.f32.gmra.mrb[0].mxu0 %v1194
    %v7825 = vpop.f32.mrb[0].mxu0
    %v7826 = vadd.f32 0.0, %v7825
    %v7827 = vpop.f32.mrb[0].mxu0
    %v7828 = vadd.f32 0.0, %v7827
    %7829 = vdwg.mxu0
    %v7830 = vadd.f32 %v7571, %v7736
    %v7831 = vadd.f32 %v7573, %v7738
    %v7832 = vadd.f32 %v7577, %v7742
    %v7833 = vadd.f32 %v7579, %v7744
    %v7834 = vadd.f32 %v7583, %v7748
    %v7835 = vadd.f32 %v7585, %v7750
    %v7836 = vadd.f32 %v7589, %v7754
    %v7837 = vadd.f32 %v7591, %v7756
    %v7838 = vadd.f32 %v7595, %v7760
    %v7839 = vadd.f32 %v7597, %v7762
    %v7840 = vadd.f32 %v7601, %v7766
    %v7841 = vadd.f32 %v7603, %v7768
    %v7842 = vadd.f32 %v7607, %v7772
    %v7843 = vadd.f32 %v7609, %v7774
    %v7844 = vadd.f32 %v7613, %v7778
    %v7845 = vadd.f32 %v7615, %v7780
    %v7846 = vadd.f32 %v7619, %v7784
    %v7847 = vadd.f32 %v7621, %v7786
    %v7848 = vadd.f32 %v7625, %v7790
    %v7849 = vadd.f32 %v7627, %v7792
    %v7850 = vadd.f32 %v7631, %v7796
    %v7851 = vadd.f32 %v7633, %v7798
    %v7852 = vadd.f32 %v7637, %v7802
    %v7853 = vadd.f32 %v7639, %v7804
    %v7854 = vadd.f32 %v7643, %v7808
    %v7855 = vadd.f32 %v7645, %v7810
    %v7856 = vadd.f32 %v7649, %v7814
    %v7857 = vadd.f32 %v7651, %v7816
    %v7858 = vadd.f32 %v7655, %v7820
    %v7859 = vadd.f32 %v7657, %v7822
    %v7860 = vadd.f32 %v7661, %v7826
    %v7861 = vadd.f32 %v7663, %v7828
    %v7862 = vadd.f32 %v7830, %v1553
    %v7863 = vadd.f32 %v7831, %v1553
    %v7864 = vadd.f32 %v7832, %v1558
    %v7865 = vadd.f32 %v7833, %v1558
    %v7866 = vadd.f32 %v7834, %v1563
    %v7867 = vadd.f32 %v7835, %v1563
    %v7868 = vadd.f32 %v7836, %v1568
    %v7869 = vadd.f32 %v7837, %v1568
    %v7870 = vadd.f32 %v7838, %v1573
    %v7871 = vadd.f32 %v7839, %v1573
    %v7872 = vadd.f32 %v7840, %v1578
    %v7873 = vadd.f32 %v7841, %v1578
    %v7874 = vadd.f32 %v7842, %v1583
    %v7875 = vadd.f32 %v7843, %v1583
    %v7876 = vadd.f32 %v7844, %v1588
    %v7877 = vadd.f32 %v7845, %v1588
    %v7878 = vadd.f32 %v7846, %v1593
    %v7879 = vadd.f32 %v7847, %v1593
    %v7880 = vadd.f32 %v7848, %v1598
    %v7881 = vadd.f32 %v7849, %v1598
    %v7882 = vadd.f32 %v7850, %v1603
    %v7883 = vadd.f32 %v7851, %v1603
    %v7884 = vadd.f32 %v7852, %v1608
    %v7885 = vadd.f32 %v7853, %v1608
    %v7886 = vadd.f32 %v7854, %v1613
    %v7887 = vadd.f32 %v7855, %v1613
    %v7888 = vadd.f32 %v7856, %v1618
    %v7889 = vadd.f32 %v7857, %v1618
    %v7890 = vadd.f32 %v7858, %v1623
    %v7891 = vadd.f32 %v7859, %v1623
    %v7892 = vadd.f32 %v7860, %v1628
    %v7893 = vadd.f32 %v7861, %v1628
    %v7894 = vmax.f32 %v7862, 0.0
    %v7895 = vmax.f32 %v7863, 0.0
    %v7896 = vmax.f32 %v7864, 0.0
    %v7897 = vmax.f32 %v7865, 0.0
    %v7898 = vmax.f32 %v7866, 0.0
    %v7899 = vmax.f32 %v7867, 0.0
    %v7900 = vmax.f32 %v7868, 0.0
    %v7901 = vmax.f32 %v7869, 0.0
    %v7902 = vmax.f32 %v7870, 0.0
    %v7903 = vmax.f32 %v7871, 0.0
    %v7904 = vmax.f32 %v7872, 0.0
    %v7905 = vmax.f32 %v7873, 0.0
    %v7906 = vmax.f32 %v7874, 0.0
    %v7907 = vmax.f32 %v7875, 0.0
    %v7908 = vmax.f32 %v7876, 0.0
    %v7909 = vmax.f32 %v7877, 0.0
    %v7910 = vmax.f32 %v7878, 0.0
    %v7911 = vmax.f32 %v7879, 0.0
    %v7912 = vmax.f32 %v7880, 0.0
    %v7913 = vmax.f32 %v7881, 0.0
    %v7914 = vmax.f32 %v7882, 0.0
    %v7915 = vmax.f32 %v7883, 0.0
    %v7916 = vmax.f32 %v7884, 0.0
    %v7917 = vmax.f32 %v7885, 0.0
    %v7918 = vmax.f32 %v7886, 0.0
    %v7919 = vmax.f32 %v7887, 0.0
    %v7920 = vmax.f32 %v7888, 0.0
    %v7921 = vmax.f32 %v7889, 0.0
    %v7922 = vmax.f32 %v7890, 0.0
    %v7923 = vmax.f32 %v7891, 0.0
    %v7924 = vmax.f32 %v7892, 0.0
    %v7925 = vmax.f32 %v7893, 0.0
    %7958 = vrot.lane.b32.xlu0 %v7894, 127
    %v7959 = vpop.permute.xlu0 %7958
    %7960 = vrot.lane.b32.xlu0 %v7895, 127
    %v7961 = vpop.permute.xlu0 %7960
    %7962 = vrot.lane.b32.xlu0 %v7896, 127
    %v7963 = vpop.permute.xlu0 %7962
    %7964 = vrot.lane.b32.xlu0 %v7897, 127
    %v7965 = vpop.permute.xlu0 %7964
    %7966 = vrot.lane.b32.xlu0 %v7898, 127
    %v7967 = vpop.permute.xlu0 %7966
    %7968 = vrot.lane.b32.xlu0 %v7899, 127
    %v7969 = vpop.permute.xlu0 %7968
    %7970 = vrot.lane.b32.xlu0 %v7900, 127
    %v7971 = vpop.permute.xlu0 %7970
    %7972 = vrot.lane.b32.xlu0 %v7901, 127
    %v7973 = vpop.permute.xlu0 %7972
    %7974 = vrot.lane.b32.xlu0 %v7902, 127
    %v7975 = vpop.permute.xlu0 %7974
    %7976 = vrot.lane.b32.xlu0 %v7903, 127
    %v7977 = vpop.permute.xlu0 %7976
    %7978 = vrot.lane.b32.xlu0 %v7904, 127
    %v7979 = vpop.permute.xlu0 %7978
    %7980 = vrot.lane.b32.xlu0 %v7905, 127
    %v7981 = vpop.permute.xlu0 %7980
    %7982 = vrot.lane.b32.xlu0 %v7906, 127
    %v7983 = vpop.permute.xlu0 %7982
    %7984 = vrot.lane.b32.xlu0 %v7907, 127
    %v7985 = vpop.permute.xlu0 %7984
    %7986 = vrot.lane.b32.xlu0 %v7908, 127
    %v7987 = vpop.permute.xlu0 %7986
    %7988 = vrot.lane.b32.xlu0 %v7909, 127
    %v7989 = vpop.permute.xlu0 %7988
    %7990 = vrot.lane.b32.xlu0 %v7910, 127
    %v7991 = vpop.permute.xlu0 %7990
    %7992 = vrot.lane.b32.xlu0 %v7911, 127
    %v7993 = vpop.permute.xlu0 %7992
    %7994 = vrot.lane.b32.xlu0 %v7912, 127
    %v7995 = vpop.permute.xlu0 %7994
    %7996 = vrot.lane.b32.xlu0 %v7913, 127
    %v7997 = vpop.permute.xlu0 %7996
    %7998 = vrot.lane.b32.xlu0 %v7914, 127
    %v7999 = vpop.permute.xlu0 %7998
    %8000 = vrot.lane.b32.xlu0 %v7915, 127
    %v8001 = vpop.permute.xlu0 %8000
    %8002 = vrot.lane.b32.xlu0 %v7916, 127
    %v8003 = vpop.permute.xlu0 %8002
    %8004 = vrot.lane.b32.xlu0 %v7917, 127
    %v8005 = vpop.permute.xlu0 %8004
    %8006 = vrot.lane.b32.xlu0 %v7918, 127
    %v8007 = vpop.permute.xlu0 %8006
    %8008 = vrot.lane.b32.xlu0 %v7919, 127
    %v8009 = vpop.permute.xlu0 %8008
    %8010 = vrot.lane.b32.xlu0 %v7920, 127
    %v8011 = vpop.permute.xlu0 %8010
    %8012 = vrot.lane.b32.xlu0 %v7921, 127
    %v8013 = vpop.permute.xlu0 %8012
    %8014 = vrot.lane.b32.xlu0 %v7922, 127
    %v8015 = vpop.permute.xlu0 %8014
    %8016 = vrot.lane.b32.xlu0 %v7923, 127
    %v8017 = vpop.permute.xlu0 %8016
    %8018 = vrot.lane.b32.xlu0 %v7924, 127
    %v8019 = vpop.permute.xlu0 %8018
    %8020 = vrot.lane.b32.xlu0 %v7925, 127
    %v8021 = vpop.permute.xlu0 %8020
    %v8022 = vsel %vm421, %v7959, %v7961
    %v8023 = vsel %vm421, %v7963, %v7965
    %v8024 = vsel %vm421, %v7967, %v7969
    %v8025 = vsel %vm421, %v7971, %v7973
    %v8026 = vsel %vm421, %v7975, %v7977
    %v8027 = vsel %vm421, %v7979, %v7981
    %v8028 = vsel %vm421, %v7983, %v7985
    %v8029 = vsel %vm421, %v7987, %v7989
    %v8030 = vsel %vm421, %v7991, %v7993
    %v8031 = vsel %vm421, %v7995, %v7997
    %v8032 = vsel %vm421, %v7999, %v8001
    %v8033 = vsel %vm421, %v8003, %v8005
    %v8034 = vsel %vm421, %v8007, %v8009
    %v8035 = vsel %vm421, %v8011, %v8013
    %v8036 = vsel %vm421, %v8015, %v8017
    %v8037 = vsel %vm421, %v8019, %v8021
    %v8070 = vmax.f32 %v7894, %v8022
    %v8071 = vmax.f32 %v7895, %v7961
    %v8072 = vmax.f32 %v7896, %v8023
    %v8073 = vmax.f32 %v7897, %v7965
    %v8074 = vmax.f32 %v7898, %v8024
    %v8075 = vmax.f32 %v7899, %v7969
    %v8076 = vmax.f32 %v7900, %v8025
    %v8077 = vmax.f32 %v7901, %v7973
    %v8078 = vmax.f32 %v7902, %v8026
    %v8079 = vmax.f32 %v7903, %v7977
    %v8080 = vmax.f32 %v7904, %v8027
    %v8081 = vmax.f32 %v7905, %v7981
    %v8082 = vmax.f32 %v7906, %v8028
    %v8083 = vmax.f32 %v7907, %v7985
    %v8084 = vmax.f32 %v7908, %v8029
    %v8085 = vmax.f32 %v7909, %v7989
    %v8086 = vmax.f32 %v7910, %v8030
    %v8087 = vmax.f32 %v7911, %v7993
    %v8088 = vmax.f32 %v7912, %v8031
    %v8089 = vmax.f32 %v7913, %v7997
    %v8090 = vmax.f32 %v7914, %v8032
    %v8091 = vmax.f32 %v7915, %v8001
    %v8092 = vmax.f32 %v7916, %v8033
    %v8093 = vmax.f32 %v7917, %v8005
    %v8094 = vmax.f32 %v7918, %v8034
    %v8095 = vmax.f32 %v7919, %v8009
    %v8096 = vmax.f32 %v7920, %v8035
    %v8097 = vmax.f32 %v7921, %v8013
    %v8098 = vmax.f32 %v7922, %v8036
    %v8099 = vmax.f32 %v7923, %v8017
    %v8100 = vmax.f32 %v7924, %v8037
    %v8101 = vmax.f32 %v7925, %v8021
    %8102 = vrot.lane.b32.xlu0 %v7894, 126
    %v8103 = vpop.permute.xlu0 %8102
    %8104 = vrot.lane.b32.xlu0 %v7895, 126
    %v8105 = vpop.permute.xlu0 %8104
    %8106 = vrot.lane.b32.xlu0 %v7896, 126
    %v8107 = vpop.permute.xlu0 %8106
    %8108 = vrot.lane.b32.xlu0 %v7897, 126
    %v8109 = vpop.permute.xlu0 %8108
    %8110 = vrot.lane.b32.xlu0 %v7898, 126
    %v8111 = vpop.permute.xlu0 %8110
    %8112 = vrot.lane.b32.xlu0 %v7899, 126
    %v8113 = vpop.permute.xlu0 %8112
    %8114 = vrot.lane.b32.xlu0 %v7900, 126
    %v8115 = vpop.permute.xlu0 %8114
    %8116 = vrot.lane.b32.xlu0 %v7901, 126
    %v8117 = vpop.permute.xlu0 %8116
    %8118 = vrot.lane.b32.xlu0 %v7902, 126
    %v8119 = vpop.permute.xlu0 %8118
    %8120 = vrot.lane.b32.xlu0 %v7903, 126
    %v8121 = vpop.permute.xlu0 %8120
    %8122 = vrot.lane.b32.xlu0 %v7904, 126
    %v8123 = vpop.permute.xlu0 %8122
    %8124 = vrot.lane.b32.xlu0 %v7905, 126
    %v8125 = vpop.permute.xlu0 %8124
    %8126 = vrot.lane.b32.xlu0 %v7906, 126
    %v8127 = vpop.permute.xlu0 %8126
    %8128 = vrot.lane.b32.xlu0 %v7907, 126
    %v8129 = vpop.permute.xlu0 %8128
    %8130 = vrot.lane.b32.xlu0 %v7908, 126
    %v8131 = vpop.permute.xlu0 %8130
    %8132 = vrot.lane.b32.xlu0 %v7909, 126
    %v8133 = vpop.permute.xlu0 %8132
    %8134 = vrot.lane.b32.xlu0 %v7910, 126
    %v8135 = vpop.permute.xlu0 %8134
    %8136 = vrot.lane.b32.xlu0 %v7911, 126
    %v8137 = vpop.permute.xlu0 %8136
    %8138 = vrot.lane.b32.xlu0 %v7912, 126
    %v8139 = vpop.permute.xlu0 %8138
    %8140 = vrot.lane.b32.xlu0 %v7913, 126
    %v8141 = vpop.permute.xlu0 %8140
    %8142 = vrot.lane.b32.xlu0 %v7914, 126
    %v8143 = vpop.permute.xlu0 %8142
    %8144 = vrot.lane.b32.xlu0 %v7915, 126
    %v8145 = vpop.permute.xlu0 %8144
    %8146 = vrot.lane.b32.xlu0 %v7916, 126
    %v8147 = vpop.permute.xlu0 %8146
    %8148 = vrot.lane.b32.xlu0 %v7917, 126
    %v8149 = vpop.permute.xlu0 %8148
    %8150 = vrot.lane.b32.xlu0 %v7918, 126
    %v8151 = vpop.permute.xlu0 %8150
    %8152 = vrot.lane.b32.xlu0 %v7919, 126
    %v8153 = vpop.permute.xlu0 %8152
    %8154 = vrot.lane.b32.xlu0 %v7920, 126
    %v8155 = vpop.permute.xlu0 %8154
    %8156 = vrot.lane.b32.xlu0 %v7921, 126
    %v8157 = vpop.permute.xlu0 %8156
    %8158 = vrot.lane.b32.xlu0 %v7922, 126
    %v8159 = vpop.permute.xlu0 %8158
    %8160 = vrot.lane.b32.xlu0 %v7923, 126
    %v8161 = vpop.permute.xlu0 %8160
    %8162 = vrot.lane.b32.xlu0 %v7924, 126
    %v8163 = vpop.permute.xlu0 %8162
    %8164 = vrot.lane.b32.xlu0 %v7925, 126
    %v8165 = vpop.permute.xlu0 %8164
    %v8166 = vsel %vm1142, %v8103, %v8105
    %v8167 = vsel %vm1142, %v8107, %v8109
    %v8168 = vsel %vm1142, %v8111, %v8113
    %v8169 = vsel %vm1142, %v8115, %v8117
    %v8170 = vsel %vm1142, %v8119, %v8121
    %v8171 = vsel %vm1142, %v8123, %v8125
    %v8172 = vsel %vm1142, %v8127, %v8129
    %v8173 = vsel %vm1142, %v8131, %v8133
    %v8174 = vsel %vm1142, %v8135, %v8137
    %v8175 = vsel %vm1142, %v8139, %v8141
    %v8176 = vsel %vm1142, %v8143, %v8145
    %v8177 = vsel %vm1142, %v8147, %v8149
    %v8178 = vsel %vm1142, %v8151, %v8153
    %v8179 = vsel %vm1142, %v8155, %v8157
    %v8180 = vsel %vm1142, %v8159, %v8161
    %v8181 = vsel %vm1142, %v8163, %v8165
    %v8214 = vmax.f32 %v8070, %v8166
    %v8215 = vmax.f32 %v8071, %v8105
    %v8216 = vmax.f32 %v8072, %v8167
    %v8217 = vmax.f32 %v8073, %v8109
    %v8218 = vmax.f32 %v8074, %v8168
    %v8219 = vmax.f32 %v8075, %v8113
    %v8220 = vmax.f32 %v8076, %v8169
    %v8221 = vmax.f32 %v8077, %v8117
    %v8222 = vmax.f32 %v8078, %v8170
    %v8223 = vmax.f32 %v8079, %v8121
    %v8224 = vmax.f32 %v8080, %v8171
    %v8225 = vmax.f32 %v8081, %v8125
    %v8226 = vmax.f32 %v8082, %v8172
    %v8227 = vmax.f32 %v8083, %v8129
    %v8228 = vmax.f32 %v8084, %v8173
    %v8229 = vmax.f32 %v8085, %v8133
    %v8230 = vmax.f32 %v8086, %v8174
    %v8231 = vmax.f32 %v8087, %v8137
    %v8232 = vmax.f32 %v8088, %v8175
    %v8233 = vmax.f32 %v8089, %v8141
    %v8234 = vmax.f32 %v8090, %v8176
    %v8235 = vmax.f32 %v8091, %v8145
    %v8236 = vmax.f32 %v8092, %v8177
    %v8237 = vmax.f32 %v8093, %v8149
    %v8238 = vmax.f32 %v8094, %v8178
    %v8239 = vmax.f32 %v8095, %v8153
    %v8240 = vmax.f32 %v8096, %v8179
    %v8241 = vmax.f32 %v8097, %v8157
    %v8242 = vmax.f32 %v8098, %v8180
    %v8243 = vmax.f32 %v8099, %v8161
    %v8244 = vmax.f32 %v8100, %v8181
    %v8245 = vmax.f32 %v8101, %v8165
    %v8247 = vsel %vm1142, %v8215, 0
    %v8250 = vsel %vm1142, %v8217, 0
    %v8253 = vsel %vm1142, %v8219, 0
    %v8256 = vsel %vm1142, %v8221, 0
    %v8259 = vsel %vm1142, %v8223, 0
    %v8262 = vsel %vm1142, %v8225, 0
    %v8265 = vsel %vm1142, %v8227, 0
    %v8268 = vsel %vm1142, %v8229, 0
    %v8271 = vsel %vm1142, %v8231, 0
    %v8274 = vsel %vm1142, %v8233, 0
    %v8277 = vsel %vm1142, %v8235, 0
    %v8280 = vsel %vm1142, %v8237, 0
    %v8283 = vsel %vm1142, %v8239, 0
    %v8286 = vsel %vm1142, %v8241, 0
    %v8289 = vsel %vm1142, %v8243, 0
    %v8292 = vsel %vm1142, %v8245, 0
    %8294 = vmatprep.subr.mxu0 0.0
    %8295 = vmatpush1.msra.mxu0 %v316
    %8296 = vmatprep.subr.mxu0 0.0
    %8297 = vmatpush1.msra.mxu0 %v318
    %8298 = vmatprep.subr.mxu0 0.0
    %8299 = vmatpush1.msra.mxu0 %v320
    %8300 = vmatprep.subr.mxu0 0.0
    %8301 = vmatpush1.msra.mxu0 %v322
    %8302 = vmatprep.subr.mxu0 0.0
    %8303 = vmatpush1.msra.mxu0 %v324
    %8304 = vmatprep.subr.mxu0 0.0
    %8305 = vmatpush1.msra.mxu0 %v326
    %8306 = vmatprep.subr.mxu0 0.0
    %8307 = vmatpush1.msra.mxu0 %v328
    %8308 = vmatprep.subr.mxu0 0.0
    %8309 = vmatpush1.msra.mxu0 %v330
    %8310 = vmatprep.subr.mxu0 0.0
    %8311 = vmatpush1.msra.mxu0 %v332
    %8312 = vmatprep.subr.mxu0 0.0
    %8313 = vmatpush1.msra.mxu0 %v334
    %8314 = vmatprep.subr.mxu0 0.0
    %8315 = vmatpush1.msra.mxu0 %v336
    %8316 = vmatprep.subr.mxu0 0.0
    %8317 = vmatpush1.msra.mxu0 %v338
    %8318 = vmatprep.subr.mxu0 0.0
    %8319 = vmatpush1.msra.mxu0 %v340
    %8320 = vmatprep.subr.mxu0 0.0
    %8321 = vmatpush1.msra.mxu0 %v342
    %8322 = vmatprep.subr.mxu0 0.0
    %8323 = vmatpush1.msra.mxu0 %v344
    %8324 = vmatprep.subr.mxu0 0.0
    %8325 = vmatpush1.msra.mxu0 %v346
    %8326 = vmatprep.subr.mxu0 0.0
    %8327 = vmatpush1.msra.mxu0 %v348
    %8328 = vmatprep.subr.mxu0 0.0
    %8329 = vmatpush1.msra.mxu0 %v350
    %8330 = vmatprep.subr.mxu0 0.0
    %8331 = vmatpush1.msra.mxu0 %v352
    %8332 = vmatprep.subr.mxu0 0.0
    %8333 = vmatpush1.msra.mxu0 %v354
    %8334 = vmatprep.subr.mxu0 0.0
    %8335 = vmatpush1.msra.mxu0 %v356
    %8336 = vmatprep.subr.mxu0 0.0
    %8337 = vmatpush1.msra.mxu0 %v358
    %8338 = vmatprep.subr.mxu0 0.0
    %8339 = vmatpush1.msra.mxu0 %v360
    %8340 = vmatprep.subr.mxu0 0.0
    %8341 = vmatpush1.msra.mxu0 %v362
    %8342 = vmatprep.subr.mxu0 0.0
    %8343 = vmatpush1.msra.mxu0 %v364
    %8344 = vmatprep.subr.mxu0 0.0
    %8345 = vmatpush1.msra.mxu0 %v366
    %8346 = vmatprep.subr.mxu0 0.0
    %8347 = vmatpush1.msra.mxu0 %v368
    %8348 = vmatprep.subr.mxu0 0.0
    %8349 = vmatpush1.msra.mxu0 %v370
    %8350 = vmatprep.subr.mxu0 0.0
    %8351 = vmatpush1.msra.mxu0 %v372
    %8352 = vmatprep.subr.mxu0 0.0
    %8353 = vmatpush1.msra.mxu0 %v374
    %8354 = vmatprep.subr.mxu0 0.0
    %8355 = vmatpush1.msra.mxu0 %v376
    %8356 = vmatprep.subr.mxu0 0.0
    %8357 = vmatpush1.msra.mxu0 %v4161
    %8358 = vmatprep.mubr.f32.mxu0 %v8247
    %8359 = vmatmul.mubr.f32.gmra.mrb[0].mxu0 %v8214
    %v8360 = vpop.f32.mrb[0].mxu0
    %v8361 = vadd.f32 0.0, %v8360
    %v8362 = vpop.f32.mrb[0].mxu0
    %8363 = vmatprep.mubr.f32.mxu0 %v8250
    %8364 = vmatmul.mubr.f32.gmra.mrb[0].mxu0 %v8216
    %v8365 = vpop.f32.mrb[0].mxu0
    %v8366 = vadd.f32 0.0, %v8365
    %v8367 = vpop.f32.mrb[0].mxu0
    %8368 = vmatprep.mubr.f32.mxu0 %v8253
    %8369 = vmatmul.mubr.f32.gmra.mrb[0].mxu0 %v8218
    %v8370 = vpop.f32.mrb[0].mxu0
    %v8371 = vadd.f32 0.0, %v8370
    %v8372 = vpop.f32.mrb[0].mxu0
    %8373 = vmatprep.mubr.f32.mxu0 %v8256
    %8374 = vmatmul.mubr.f32.gmra.mrb[0].mxu0 %v8220
    %v8375 = vpop.f32.mrb[0].mxu0
    %v8376 = vadd.f32 0.0, %v8375
    %v8377 = vpop.f32.mrb[0].mxu0
    %8378 = vmatprep.mubr.f32.mxu0 %v8259
    %8379 = vmatmul.mubr.f32.gmra.mrb[0].mxu0 %v8222
    %v8380 = vpop.f32.mrb[0].mxu0
    %v8381 = vadd.f32 0.0, %v8380
    %v8382 = vpop.f32.mrb[0].mxu0
    %8383 = vmatprep.mubr.f32.mxu0 %v8262
    %8384 = vmatmul.mubr.f32.gmra.mrb[0].mxu0 %v8224
    %v8385 = vpop.f32.mrb[0].mxu0
    %v8386 = vadd.f32 0.0, %v8385
    %v8387 = vpop.f32.mrb[0].mxu0
    %8388 = vmatprep.mubr.f32.mxu0 %v8265
    %8389 = vmatmul.mubr.f32.gmra.mrb[0].mxu0 %v8226
    %v8390 = vpop.f32.mrb[0].mxu0
    %v8391 = vadd.f32 0.0, %v8390
    %v8392 = vpop.f32.mrb[0].mxu0
    %8393 = vmatprep.mubr.f32.mxu0 %v8268
    %8394 = vmatmul.mubr.f32.gmra.mrb[0].mxu0 %v8228
    %v8395 = vpop.f32.mrb[0].mxu0
    %v8396 = vadd.f32 0.0, %v8395
    %v8397 = vpop.f32.mrb[0].mxu0
    %8398 = vmatprep.mubr.f32.mxu0 %v8271
    %8399 = vmatmul.mubr.f32.gmra.mrb[0].mxu0 %v8230
    %v8400 = vpop.f32.mrb[0].mxu0
    %v8401 = vadd.f32 0.0, %v8400
    %v8402 = vpop.f32.mrb[0].mxu0
    %8403 = vmatprep.mubr.f32.mxu0 %v8274
    %8404 = vmatmul.mubr.f32.gmra.mrb[0].mxu0 %v8232
    %v8405 = vpop.f32.mrb[0].mxu0
    %v8406 = vadd.f32 0.0, %v8405
    %v8407 = vpop.f32.mrb[0].mxu0
    %8408 = vmatprep.mubr.f32.mxu0 %v8277
    %8409 = vmatmul.mubr.f32.gmra.mrb[0].mxu0 %v8234
    %v8410 = vpop.f32.mrb[0].mxu0
    %v8411 = vadd.f32 0.0, %v8410
    %v8412 = vpop.f32.mrb[0].mxu0
    %8413 = vmatprep.mubr.f32.mxu0 %v8280
    %8414 = vmatmul.mubr.f32.gmra.mrb[0].mxu0 %v8236
    %v8415 = vpop.f32.mrb[0].mxu0
    %v8416 = vadd.f32 0.0, %v8415
    %v8417 = vpop.f32.mrb[0].mxu0
    %8418 = vmatprep.mubr.f32.mxu0 %v8283
    %8419 = vmatmul.mubr.f32.gmra.mrb[0].mxu0 %v8238
    %v8420 = vpop.f32.mrb[0].mxu0
    %v8421 = vadd.f32 0.0, %v8420
    %v8422 = vpop.f32.mrb[0].mxu0
    %8423 = vmatprep.mubr.f32.mxu0 %v8286
    %8424 = vmatmul.mubr.f32.gmra.mrb[0].mxu0 %v8240
    %v8425 = vpop.f32.mrb[0].mxu0
    %v8426 = vadd.f32 0.0, %v8425
    %v8427 = vpop.f32.mrb[0].mxu0
    %8428 = vmatprep.mubr.f32.mxu0 %v8289
    %8429 = vmatmul.mubr.f32.gmra.mrb[0].mxu0 %v8242
    %v8430 = vpop.f32.mrb[0].mxu0
    %v8431 = vadd.f32 0.0, %v8430
    %v8432 = vpop.f32.mrb[0].mxu0
    %8433 = vmatprep.mubr.f32.mxu0 %v8292
    %8434 = vmatmul.mubr.f32.gmra.mrb[0].mxu0 %v8244
    %v8435 = vpop.f32.mrb[0].mxu0
    %v8436 = vadd.f32 0.0, %v8435
    %v8437 = vpop.f32.mrb[0].mxu0
    %8438 = vdwg.mxu0
    %8455 = vrot.lane.b32.xlu0 %v8361, 1
    %v8456 = vpop.permute.xlu0 %8455
    %8457 = vrot.lane.b32.xlu0 %v8366, 1
    %v8458 = vpop.permute.xlu0 %8457
    %8459 = vrot.lane.b32.xlu0 %v8371, 1
    %v8460 = vpop.permute.xlu0 %8459
    %8461 = vrot.lane.b32.xlu0 %v8376, 1
    %v8462 = vpop.permute.xlu0 %8461
    %8463 = vrot.lane.b32.xlu0 %v8381, 1
    %v8464 = vpop.permute.xlu0 %8463
    %8465 = vrot.lane.b32.xlu0 %v8386, 1
    %v8466 = vpop.permute.xlu0 %8465
    %8467 = vrot.lane.b32.xlu0 %v8391, 1
    %v8468 = vpop.permute.xlu0 %8467
    %8469 = vrot.lane.b32.xlu0 %v8396, 1
    %v8470 = vpop.permute.xlu0 %8469
    %8471 = vrot.lane.b32.xlu0 %v8401, 1
    %v8472 = vpop.permute.xlu0 %8471
    %8473 = vrot.lane.b32.xlu0 %v8406, 1
    %v8474 = vpop.permute.xlu0 %8473
    %8475 = vrot.lane.b32.xlu0 %v8411, 1
    %v8476 = vpop.permute.xlu0 %8475
    %8477 = vrot.lane.b32.xlu0 %v8416, 1
    %v8478 = vpop.permute.xlu0 %8477
    %8479 = vrot.lane.b32.xlu0 %v8421, 1
    %v8480 = vpop.permute.xlu0 %8479
    %8481 = vrot.lane.b32.xlu0 %v8426, 1
    %v8482 = vpop.permute.xlu0 %8481
    %8483 = vrot.lane.b32.xlu0 %v8431, 1
    %v8484 = vpop.permute.xlu0 %8483
    %8485 = vrot.lane.b32.xlu0 %v8436, 1
    %v8486 = vpop.permute.xlu0 %8485
    %v8503 = vsel %vm404, 0.0, %v8456
    %v8504 = vsel %vm404, 0.0, %v8458
    %v8505 = vsel %vm404, 0.0, %v8460
    %v8506 = vsel %vm404, 0.0, %v8462
    %v8507 = vsel %vm404, 0.0, %v8464
    %v8508 = vsel %vm404, 0.0, %v8466
    %v8509 = vsel %vm404, 0.0, %v8468
    %v8510 = vsel %vm404, 0.0, %v8470
    %v8511 = vsel %vm404, 0.0, %v8472
    %v8512 = vsel %vm404, 0.0, %v8474
    %v8513 = vsel %vm404, 0.0, %v8476
    %v8514 = vsel %vm404, 0.0, %v8478
    %v8515 = vsel %vm404, 0.0, %v8480
    %v8516 = vsel %vm404, 0.0, %v8482
    %v8517 = vsel %vm404, 0.0, %v8484
    %v8518 = vsel %vm404, 0.0, %v8486
    %8535 = vrot.lane.b32.xlu0 %v8503, 127
    %v8536 = vpop.permute.xlu0 %8535
    %8537 = vrot.lane.b32.xlu0 %v8504, 127
    %v8538 = vpop.permute.xlu0 %8537
    %8539 = vrot.lane.b32.xlu0 %v8505, 127
    %v8540 = vpop.permute.xlu0 %8539
    %8541 = vrot.lane.b32.xlu0 %v8506, 127
    %v8542 = vpop.permute.xlu0 %8541
    %8543 = vrot.lane.b32.xlu0 %v8507, 127
    %v8544 = vpop.permute.xlu0 %8543
    %8545 = vrot.lane.b32.xlu0 %v8508, 127
    %v8546 = vpop.permute.xlu0 %8545
    %8547 = vrot.lane.b32.xlu0 %v8509, 127
    %v8548 = vpop.permute.xlu0 %8547
    %8549 = vrot.lane.b32.xlu0 %v8510, 127
    %v8550 = vpop.permute.xlu0 %8549
    %8551 = vrot.lane.b32.xlu0 %v8511, 127
    %v8552 = vpop.permute.xlu0 %8551
    %8553 = vrot.lane.b32.xlu0 %v8512, 127
    %v8554 = vpop.permute.xlu0 %8553
    %8555 = vrot.lane.b32.xlu0 %v8513, 127
    %v8556 = vpop.permute.xlu0 %8555
    %8557 = vrot.lane.b32.xlu0 %v8514, 127
    %v8558 = vpop.permute.xlu0 %8557
    %8559 = vrot.lane.b32.xlu0 %v8515, 127
    %v8560 = vpop.permute.xlu0 %8559
    %8561 = vrot.lane.b32.xlu0 %v8516, 127
    %v8562 = vpop.permute.xlu0 %8561
    %8563 = vrot.lane.b32.xlu0 %v8517, 127
    %v8564 = vpop.permute.xlu0 %8563
    %8565 = vrot.lane.b32.xlu0 %v8518, 127
    %v8566 = vpop.permute.xlu0 %8565
    %v8567 = vsel %vm421, %v8536, %v4408
    %v8568 = vsel %vm421, %v8538, %v4408
    %v8569 = vsel %vm421, %v8540, %v4408
    %v8570 = vsel %vm421, %v8542, %v4408
    %v8571 = vsel %vm421, %v8544, %v4408
    %v8572 = vsel %vm421, %v8546, %v4408
    %v8573 = vsel %vm421, %v8548, %v4408
    %v8574 = vsel %vm421, %v8550, %v4408
    %v8575 = vsel %vm421, %v8552, %v4408
    %v8576 = vsel %vm421, %v8554, %v4408
    %v8577 = vsel %vm421, %v8556, %v4408
    %v8578 = vsel %vm421, %v8558, %v4408
    %v8579 = vsel %vm421, %v8560, %v4408
    %v8580 = vsel %vm421, %v8562, %v4408
    %v8581 = vsel %vm421, %v8564, %v4408
    %v8582 = vsel %vm421, %v8566, %v4408
    %8599 = vmatprep.subr.mxu0 0.0
    %8600 = vmatpush1.msra.mxu0 %v8567
    %8601 = vmatprep.subr.mxu0 0.0
    %8602 = vmatpush1.msra.mxu0 %v8568
    %8603 = vmatprep.subr.mxu0 0.0
    %8604 = vmatpush1.msra.mxu0 %v8569
    %8605 = vmatprep.subr.mxu0 0.0
    %8606 = vmatpush1.msra.mxu0 %v8570
    %8607 = vmatprep.subr.mxu0 0.0
    %8608 = vmatpush1.msra.mxu0 %v8571
    %8609 = vmatprep.subr.mxu0 0.0
    %8610 = vmatpush1.msra.mxu0 %v8572
    %8611 = vmatprep.subr.mxu0 0.0
    %8612 = vmatpush1.msra.mxu0 %v8573
    %8613 = vmatprep.subr.mxu0 0.0
    %8614 = vmatpush1.msra.mxu0 %v8574
    %8615 = vmatprep.subr.mxu0 0.0
    %8616 = vmatpush1.msra.mxu0 %v8575
    %8617 = vmatprep.subr.mxu0 0.0
    %8618 = vmatpush1.msra.mxu0 %v8576
    %8619 = vmatprep.subr.mxu0 0.0
    %8620 = vmatpush1.msra.mxu0 %v8577
    %8621 = vmatprep.subr.mxu0 0.0
    %8622 = vmatpush1.msra.mxu0 %v8578
    %8623 = vmatprep.subr.mxu0 0.0
    %8624 = vmatpush1.msra.mxu0 %v8579
    %8625 = vmatprep.subr.mxu0 0.0
    %8626 = vmatpush1.msra.mxu0 %v8580
    %8627 = vmatprep.subr.mxu0 0.0
    %8628 = vmatpush1.msra.mxu0 %v8581
    %8629 = vmatprep.subr.mxu0 0.0
    %8630 = vmatpush1.msra.mxu0 %v8582
    %8631 = vmatprep.subr.mxu0 0.0
    %8632 = vmatpush1.msra.mxu0 0.0
    %8633 = vmatprep.subr.mxu0 0.0
    %8634 = vmatpush1.msra.mxu0 0.0
    %8635 = vmatprep.subr.mxu0 0.0
    %8636 = vmatpush1.msra.mxu0 0.0
    %8637 = vmatprep.subr.mxu0 0.0
    %8638 = vmatpush1.msra.mxu0 0.0
    %8639 = vmatprep.subr.mxu0 0.0
    %8640 = vmatpush1.msra.mxu0 0.0
    %8641 = vmatprep.subr.mxu0 0.0
    %8642 = vmatpush1.msra.mxu0 0.0
    %8643 = vmatprep.subr.mxu0 0.0
    %8644 = vmatpush1.msra.mxu0 0.0
    %8645 = vmatprep.subr.mxu0 0.0
    %8646 = vmatpush1.msra.mxu0 0.0
    %8647 = vmatprep.subr.mxu0 0.0
    %8648 = vmatpush1.msra.mxu0 0.0
    %8649 = vmatprep.subr.mxu0 0.0
    %8650 = vmatpush1.msra.mxu0 0.0
    %8651 = vmatprep.subr.mxu0 0.0
    %8652 = vmatpush1.msra.mxu0 0.0
    %8653 = vmatprep.subr.mxu0 0.0
    %8654 = vmatpush1.msra.mxu0 0.0
    %8655 = vmatprep.subr.mxu0 0.0
    %8656 = vmatpush1.msra.mxu0 0.0
    %8657 = vmatprep.subr.mxu0 0.0
    %8658 = vmatpush1.msra.mxu0 0.0
    %8659 = vmatprep.subr.mxu0 0.0
    %8660 = vmatpush1.msra.mxu0 0.0
    %8661 = vmatprep.subr.mxu0 0.0
    %8662 = vmatpush1.msra.mxu0 0.0
    %8663 = vmatprep.mubr.f32.mxu0 0.0
    %8664 = vmatmul.mubr.f32.gmra.mrb[0].mxu0 %v109
    %v8665 = vpop.f32.mrb[0].mxu0
    %v8666 = vadd.f32 0.0, %v8665
    %v8667 = vpop.f32.mrb[0].mxu0
    %8668 = vmatprep.mubr.f32.mxu0 0.0
    %8669 = vmatmul.mubr.f32.gmra.mrb[0].mxu0 %v110
    %v8670 = vpop.f32.mrb[0].mxu0
    %v8671 = vadd.f32 0.0, %v8670
    %v8672 = vpop.f32.mrb[0].mxu0
    %8673 = vdwg.mxu0
    %8674 = vmatprep.subr.mxu0 0.0
    %8675 = vmatpush1.msra.mxu0 %v8503
    %8676 = vmatprep.subr.mxu0 0.0
    %8677 = vmatpush1.msra.mxu0 %v8504
    %8678 = vmatprep.subr.mxu0 0.0
    %8679 = vmatpush1.msra.mxu0 %v8505
    %8680 = vmatprep.subr.mxu0 0.0
    %8681 = vmatpush1.msra.mxu0 %v8506
    %8682 = vmatprep.subr.mxu0 0.0
    %8683 = vmatpush1.msra.mxu0 %v8507
    %8684 = vmatprep.subr.mxu0 0.0
    %8685 = vmatpush1.msra.mxu0 %v8508
    %8686 = vmatprep.subr.mxu0 0.0
    %8687 = vmatpush1.msra.mxu0 %v8509
    %8688 = vmatprep.subr.mxu0 0.0
    %8689 = vmatpush1.msra.mxu0 %v8510
    %8690 = vmatprep.subr.mxu0 0.0
    %8691 = vmatpush1.msra.mxu0 %v8511
    %8692 = vmatprep.subr.mxu0 0.0
    %8693 = vmatpush1.msra.mxu0 %v8512
    %8694 = vmatprep.subr.mxu0 0.0
    %8695 = vmatpush1.msra.mxu0 %v8513
    %8696 = vmatprep.subr.mxu0 0.0
    %8697 = vmatpush1.msra.mxu0 %v8514
    %8698 = vmatprep.subr.mxu0 0.0
    %8699 = vmatpush1.msra.mxu0 %v8515
    %8700 = vmatprep.subr.mxu0 0.0
    %8701 = vmatpush1.msra.mxu0 %v8516
    %8702 = vmatprep.subr.mxu0 0.0
    %8703 = vmatpush1.msra.mxu0 %v8517
    %8704 = vmatprep.subr.mxu0 0.0
    %8705 = vmatpush1.msra.mxu0 %v8518
    %8706 = vmatprep.subr.mxu0 0.0
    %8707 = vmatpush1.msra.mxu0 0.0
    %8708 = vmatprep.subr.mxu0 0.0
    %8709 = vmatpush1.msra.mxu0 0.0
    %8710 = vmatprep.subr.mxu0 0.0
    %8711 = vmatpush1.msra.mxu0 0.0
    %8712 = vmatprep.subr.mxu0 0.0
    %8713 = vmatpush1.msra.mxu0 0.0
    %8714 = vmatprep.subr.mxu0 0.0
    %8715 = vmatpush1.msra.mxu0 0.0
    %8716 = vmatprep.subr.mxu0 0.0
    %8717 = vmatpush1.msra.mxu0 0.0
    %8718 = vmatprep.subr.mxu0 0.0
    %8719 = vmatpush1.msra.mxu0 0.0
    %8720 = vmatprep.subr.mxu0 0.0
    %8721 = vmatpush1.msra.mxu0 0.0
    %8722 = vmatprep.subr.mxu0 0.0
    %8723 = vmatpush1.msra.mxu0 0.0
    %8724 = vmatprep.subr.mxu0 0.0
    %8725 = vmatpush1.msra.mxu0 0.0
    %8726 = vmatprep.subr.mxu0 0.0
    %8727 = vmatpush1.msra.mxu0 0.0
    %8728 = vmatprep.subr.mxu0 0.0
    %8729 = vmatpush1.msra.mxu0 0.0
    %8730 = vmatprep.subr.mxu0 0.0
    %8731 = vmatpush1.msra.mxu0 0.0
    %8732 = vmatprep.subr.mxu0 0.0
    %8733 = vmatpush1.msra.mxu0 0.0
    %8734 = vmatprep.subr.mxu0 0.0
    %8735 = vmatpush1.msra.mxu0 0.0
    %8736 = vmatprep.subr.mxu0 0.0
    %8737 = vmatpush1.msra.mxu0 0.0
    %8738 = vmatprep.mubr.f32.mxu0 0.0
    %8739 = vmatmul.mubr.f32.gmra.mrb[0].mxu0 %v106
    %v8740 = vpop.f32.mrb[0].mxu0
    %v8741 = vadd.f32 %v8666, %v8740
    %v8742 = vpop.f32.mrb[0].mxu0
    %8743 = vmatprep.mubr.f32.mxu0 0.0
    %8744 = vmatmul.mubr.f32.gmra.mrb[0].mxu0 %v107
    %v8745 = vpop.f32.mrb[0].mxu0
    %v8746 = vadd.f32 %v8671, %v8745
    %v8747 = vpop.f32.mrb[0].mxu0
    %8748 = vdwg.mxu0
    %v8749 = vadd.f32 %v8741, %v3078
    %v8750 = vadd.f32 %v8746, %v3083
    %v8751 = vmax.f32 %v8749, 0.0
    %v8752 = vmax.f32 %v8750, 0.0
    %8755 = vrot.lane.b32.xlu0 %v8751, 127
    %v8756 = vpop.permute.xlu0 %8755
    %8757 = vrot.lane.b32.xlu0 %v8752, 127
    %v8758 = vpop.permute.xlu0 %8757
    %v8761 = vmax.f32 %v8751, %v8756
    %v8762 = vmax.f32 %v8752, %v8758
    %v8764 = vsel %vm421, %v8761, 0
    %v8767 = vsel %vm421, %v8762, 0
    %8769 = vmatprep.subr.mxu0 0.0
    %8770 = vmatpush1.msra.mxu0 %v316
    %8771 = vmatprep.subr.mxu0 0.0
    %8772 = vmatpush1.msra.mxu0 %v318
    %8773 = vmatprep.subr.mxu0 0.0
    %8774 = vmatpush1.msra.mxu0 %v320
    %8775 = vmatprep.subr.mxu0 0.0
    %8776 = vmatpush1.msra.mxu0 %v322
    %8777 = vmatprep.subr.mxu0 0.0
    %8778 = vmatpush1.msra.mxu0 %v324
    %8779 = vmatprep.subr.mxu0 0.0
    %8780 = vmatpush1.msra.mxu0 %v326
    %8781 = vmatprep.subr.mxu0 0.0
    %8782 = vmatpush1.msra.mxu0 %v328
    %8783 = vmatprep.subr.mxu0 0.0
    %8784 = vmatpush1.msra.mxu0 %v330
    %8785 = vmatprep.subr.mxu0 0.0
    %8786 = vmatpush1.msra.mxu0 %v332
    %8787 = vmatprep.subr.mxu0 0.0
    %8788 = vmatpush1.msra.mxu0 %v334
    %8789 = vmatprep.subr.mxu0 0.0
    %8790 = vmatpush1.msra.mxu0 %v336
    %8791 = vmatprep.subr.mxu0 0.0
    %8792 = vmatpush1.msra.mxu0 %v338
    %8793 = vmatprep.subr.mxu0 0.0
    %8794 = vmatpush1.msra.mxu0 %v340
    %8795 = vmatprep.subr.mxu0 0.0
    %8796 = vmatpush1.msra.mxu0 %v342
    %8797 = vmatprep.subr.mxu0 0.0
    %8798 = vmatpush1.msra.mxu0 %v344
    %8799 = vmatprep.subr.mxu0 0.0
    %8800 = vmatpush1.msra.mxu0 %v4643
    %8801 = vmatprep.subr.mxu0 0.0
    %8802 = vmatpush1.msra.mxu0 0.0
    %8803 = vmatprep.subr.mxu0 0.0
    %8804 = vmatpush1.msra.mxu0 0.0
    %8805 = vmatprep.subr.mxu0 0.0
    %8806 = vmatpush1.msra.mxu0 0.0
    %8807 = vmatprep.subr.mxu0 0.0
    %8808 = vmatpush1.msra.mxu0 0.0
    %8809 = vmatprep.subr.mxu0 0.0
    %8810 = vmatpush1.msra.mxu0 0.0
    %8811 = vmatprep.subr.mxu0 0.0
    %8812 = vmatpush1.msra.mxu0 0.0
    %8813 = vmatprep.subr.mxu0 0.0
    %8814 = vmatpush1.msra.mxu0 0.0
    %8815 = vmatprep.subr.mxu0 0.0
    %8816 = vmatpush1.msra.mxu0 0.0
    %8817 = vmatprep.subr.mxu0 0.0
    %8818 = vmatpush1.msra.mxu0 0.0
    %8819 = vmatprep.subr.mxu0 0.0
    %8820 = vmatpush1.msra.mxu0 0.0
    %8821 = vmatprep.subr.mxu0 0.0
    %8822 = vmatpush1.msra.mxu0 0.0
    %8823 = vmatprep.subr.mxu0 0.0
    %8824 = vmatpush1.msra.mxu0 0.0
    %8825 = vmatprep.subr.mxu0 0.0
    %8826 = vmatpush1.msra.mxu0 0.0
    %8827 = vmatprep.subr.mxu0 0.0
    %8828 = vmatpush1.msra.mxu0 0.0
    %8829 = vmatprep.subr.mxu0 0.0
    %8830 = vmatpush1.msra.mxu0 0.0
    %8831 = vmatprep.subr.mxu0 0.0
    %8832 = vmatpush1.msra.mxu0 0.0
    %8833 = vmatprep.mubr.f32.mxu0 0.0
    %8834 = vmatmul.mubr.f32.gmra.mrb[0].mxu0 %v8764
    %v8835 = vpop.f32.mrb[0].mxu0
    %v8836 = vadd.f32 0.0, %v8835
    %v8837 = vpop.f32.mrb[0].mxu0
    %8838 = vmatprep.mubr.f32.mxu0 0.0
    %8839 = vmatmul.mubr.f32.gmra.mrb[0].mxu0 %v8767
    %v8840 = vpop.f32.mrb[0].mxu0
    %v8841 = vadd.f32 0.0, %v8840
    %v8842 = vpop.f32.mrb[0].mxu0
    %8843 = vdwg.mxu0
    %v8844 = vmul.f32 %v7328, %v111
    %v8845 = vmul.f32 %v7333, %v112
    %v8846 = vsel %vm4722, %v8844, 0.0
    %8847 = vadd.xlane.f32.xlu0 %v8846
    %v8848 = vpop.xlane.xlu0 %8847
    %v8849 = vsel %vm4722, %v8845, 0.0
    %8850 = vadd.xlane.f32.xlu0 %v8849
    %v8851 = vpop.xlane.xlu0 %8850
    %v8852 = vadd.f32 %v8848, %v8851
    %v8853 = vrot.slane %v8852, 4
    %v8854 = vadd.f32 %v8852, %v8853
    %v8855 = vrot.slane %v8854, 2
    %v8856 = vadd.f32 %v8854, %v8855
    %v8857 = vrot.slane %v8856, 1
    %v8858 = vadd.f32 %v8856, %v8857
    %v8859 = vadd.f32 %v8858, %v118
    %v8860 = vmul.f32 %v8836, %v113
    %v8861 = vmul.f32 %v8841, %v114
    %v8862 = vsel %vm4739, %v8860, 0.0
    %8863 = vadd.xlane.f32.xlu0 %v8862
    %v8864 = vpop.xlane.xlu0 %8863
    %v8865 = vsel %vm4739, %v8861, 0.0
    %8866 = vadd.xlane.f32.xlu0 %v8865
    %v8867 = vpop.xlane.xlu0 %8866
    %v8868 = vadd.f32 %v8864, %v8867
    %v8869 = vrot.slane %v8868, 4
    %v8870 = vadd.f32 %v8868, %v8869
    %v8871 = vrot.slane %v8870, 2
    %v8872 = vadd.f32 %v8870, %v8871
    %v8873 = vrot.slane %v8872, 1
    %v8874 = vadd.f32 %v8872, %v8873
    %v8875 = vmul.f32 %v8836, %v116
    %v8876 = vmul.f32 %v8841, %v117
    %v8877 = vsel %vm4739, %v8875, 0.0
    %8878 = vadd.xlane.f32.xlu0 %v8877
    %v8879 = vpop.xlane.xlu0 %8878
    %v8880 = vsel %vm4739, %v8876, 0.0
    %8881 = vadd.xlane.f32.xlu0 %v8880
    %v8882 = vpop.xlane.xlu0 %8881
    %v8883 = vadd.f32 %v8879, %v8882
    %v8884 = vrot.slane %v8883, 4
    %v8885 = vadd.f32 %v8883, %v8884
    %v8886 = vrot.slane %v8885, 2
    %v8887 = vadd.f32 %v8885, %v8886
    %v8888 = vrot.slane %v8887, 1
    %v8889 = vadd.f32 %v8887, %v8888
    %v8890 = vsel %vm404, %v8874, %v8889
    %v8891 = vadd.f32 %v8890, %v119
    %8893 = vset.pattern.permute.xlu0 0
    %8894 = vperm.xlu0 %8893, %v8859
    %v8895 = vpop.permute.xlu0 %8894
    %v8897 = vlaneseq
    %v8898 = vshrl.u32 %v8897, 7
    %v8899 = vsub.s32 0, %v8898
    %v8900 = vrot.slane %v8895, %v8899
    %v8901 = vmul.f32 %v8900, %v8891
    %v8903 = vrot.slane %v8901, 7
    %vm8905 = vcmask 1040384
    %v8906 = vsel %vm8905, %v4779, %v8903
    %vm8907 = vcmask 9216
    %8908 = vst.msk [vmem:[#allocation3] sm:$0x3] %vm8907, %v8906
    // Predicated region
    $region42: #{net_forward.3} parent=1 // pred_check
      _
    $region43: #{net_forward.3} parent=1 // pred_check_branch
      %8910 = sbr.rel (0) target = $region45
    $region44: #{net_forward.3} parent=1 // pred_region
      %s8912 = ssub.s32 32, 32
      %8913 = vsyncadd [#allocation4], %s8912
      %s8915 = sshll.u32 [#allocation3], 4
      %s8916 = int_to_ptr.vmem [resolvable:$true] %s8915
      %8918 = dma.vmem_to_hbm [thread:$0]  %s8916, 32, %s10, [#allocation4]
    $region45: #{net_forward.3} parent=1 // pred_fallthru
      _
    // Predicated region
    $region46: #{net_forward.3} parent=1 // pred_check
      _
    $region47: #{net_forward.3} parent=1 // pred_check_branch
      %8920 = sbr.rel (0) target = $region49
    $region48: #{net_forward.3} parent=1 // pred_region
      %8921 = dma.done [#allocation4], 32
    $region49: #{net_forward.3} parent=1 // pred_fallthru
      _
    %8922 = vsyncpa [#allocation4], 1

</llo_original>
